<compile_context>
chip_gen: v6e
topology: v6e:2x2x1
jax: 0.10.0
libtpu: 0.0.40
codegen_flags: <defaults>
</compile_context>

<pallas_src>
import jax
import jax.numpy as jnp
from jax import lax
from jax.experimental import pallas as pl
from jax.experimental.pallas import tpu as pltpu


# ---------------------------------------------------------------------------
# Pallas kernels
# ---------------------------------------------------------------------------
def _conv3x3_s2_rows_kernel(xee_ref, xeo_ref, hee_ref, heo_ref,
                            xoe_ref, xoo_ref, w_ref, b_ref, o_ref):
    """TH output rows of the 3x3 / stride-2 conv (NHWC, asymmetric pad baked in).

    Quarter planes of the padded input (e = even / o = odd row-or-column):
      xee_ref: (1, TH, Wo+1, C)  even rows 2*oh   of this block, even cols
      xeo_ref: (1, TH, Wo,   C)  even rows 2*oh   of this block, odd  cols
      hee_ref: (1, 1,  Wo+1, C)  even halo row below the block,  even cols
      heo_ref: (1, 1,  Wo,   C)  even halo row below the block,  odd  cols
      xoe_ref: (1, TH, Wo+1, C)  odd  rows 2*oh+1 of this block, even cols
      xoo_ref: (1, TH, Wo,   C)  odd  rows 2*oh+1 of this block, odd  cols
      w_ref  : (9, C, Cout)      tap-major weights, tap = 3*kh + kw
      b_ref  : (1, Cout)
      o_ref  : (1, TH, Wo, Cout)
    """
    _, th, wo, cout = o_ref.shape
    bias = b_ref[...].astype(jnp.float32)                 # (1, Cout)

    for r in range(th):                                   # static unroll
        # input row 2*oh + kh for kh = 0, 1, 2 of output row oh = block*TH + r
        e0, o0 = xee_ref[0, r], xeo_ref[0, r]             # kh = 0: even row oh
        e1, o1 = xoe_ref[0, r], xoo_ref[0, r]             # kh = 1: odd  row oh
        if r + 1 < th:                                    # kh = 2: even row oh+1
            e2, o2 = xee_ref[0, r + 1], xeo_ref[0, r + 1]
        else:
            e2, o2 = hee_ref[0, 0], heo_ref[0, 0]         # block-bottom halo

        acc = jnp.zeros((wo, cout), jnp.float32)
        for kh, (ev, od) in enumerate(((e0, o0), (e1, o1), (e2, o2))):
            # input column of tap kw at output column ow is 2*ow + kw:
            #   kw=0 -> even cols [0:Wo], kw=1 -> odd cols, kw=2 -> even cols [1:Wo+1]
            taps = (ev[0:wo, :], od, ev[1:wo + 1, :])
            for kw in range(3):
                acc = acc + jnp.dot(taps[kw], w_ref[3 * kh + kw],
                                    preferred_element_type=jnp.float32)
        o_ref[0, r] = (acc + bias).astype(o_ref.dtype)


def _avgpool2x2_kernel(x_ref, q_ref, o_ref):
    """2x2 / stride-2 average pool as one matmul with a resident 0/1 pooling matrix.

    x_ref: (TR, 4*Wo)   row = (n, c, oh); lanes = the 2x2*Wo window elements
    q_ref: (4*Wo, Wo)   q[a*2*Wo + 2*ow + b, ow] = 1
    o_ref: (TR, Wo)
    """
    acc = jnp.dot(x_ref[...], q_ref[...], preferred_element_type=jnp.float32)
    o_ref[...] = (acc * 0.25).astype(o_ref.dtype)


# ---------------------------------------------------------------------------
# Wrappers (boundary layout only; the hot loop is inside the kernels)
# ---------------------------------------------------------------------------
def downsample_with_conv(x, w, b, *, max_row_block=8):
    """x: (N, C, H, W) NCHW, w: (Cout, Cin, 3, 3) OIHW, b: (Cout,)."""
    N, C, H, W = x.shape
    Cout = w.shape[0]
    # PyTorch: pad right/bottom by 1, then 3x3 stride-2 "valid" conv.
    Ho = (H - 2) // 2 + 1
    Wo = (W - 2) // 2 + 1

    # Single boundary pass (XLA-fused): NCHW -> NHWC, pad to exactly the rows /
    # cols the conv reads, even/odd split of rows AND columns so that every
    # in-kernel tap is a contiguous unit-stride slice of one quarter plane.
    xh = jnp.transpose(x, (0, 2, 3, 1))                                  # (N, H, W, C)
    xh = jnp.pad(xh, ((0, 0), (0, 2 * Ho + 1 - H), (0, 2 * Wo + 1 - W), (0, 0)))
    xee = xh[:, 0::2, 0::2, :]                                           # (N, Ho+1, Wo+1, C)
    xeo = xh[:, 0::2, 1::2, :]                                           # (N, Ho+1, Wo,   C)
    xoe = xh[:, 1::2, 0::2, :]                                           # (N, Ho,   Wo+1, C)
    xoo = xh[:, 1::2, 1::2, :]                                           # (N, Ho,   Wo,   C)

    # tap-major weights: w2[3*kh + kw, ci, co] = w[co, ci, kh, kw]
    w2 = jnp.transpose(w, (2, 3, 1, 0)).reshape(9, C, Cout)
    b2 = b.reshape(1, Cout)

    # TH output rows per grid step (largest divisor of Ho up to max_row_block).
    th = max(d for d in range(1, min(max_row_block, Ho) + 1) if Ho % d == 0)

    out = pl.pallas_call(
        _conv3x3_s2_rows_kernel,
        out_shape=jax.ShapeDtypeStruct((N, Ho, Wo, Cout), x.dtype),
        grid=(N, Ho // th),
        in_specs=[
            # TH even rows / TH odd rows of the block (main body)
            pl.BlockSpec((1, th, Wo + 1, C), lambda n, i: (n, i, 0, 0)),
            pl.BlockSpec((1, th, Wo, C), lambda n, i: (n, i, 0, 0)),
            # single even halo row below the block (block size 1 -> element idx)
            pl.BlockSpec((1, 1, Wo + 1, C), lambda n, i: (n, (i + 1) * th, 0, 0)),
            pl.BlockSpec((1, 1, Wo, C), lambda n, i: (n, (i + 1) * th, 0, 0)),
            pl.BlockSpec((1, th, Wo + 1, C), lambda n, i: (n, i, 0, 0)),
            pl.BlockSpec((1, th, Wo, C), lambda n, i: (n, i, 0, 0)),
            # resident weights / bias
            pl.BlockSpec((9, C, Cout), lambda n, i: (0, 0, 0)),
            pl.BlockSpec((1, Cout), lambda n, i: (0, 0)),
        ],
        out_specs=pl.BlockSpec((1, th, Wo, Cout), lambda n, i: (n, i, 0, 0)),
        compiler_params=pltpu.CompilerParams(
            dimension_semantics=("parallel", "parallel"),
            vmem_limit_bytes=48 * 1024 * 1024,
        ),
    )(xee, xeo, xee, xeo, xoe, xoo, w2, b2)

    return jnp.transpose(out, (0, 3, 1, 2))                              # back to NCHW


def downsample_no_conv(x, *, block_rows=1024):
    """avg_pool2d(kernel_size=2, stride=2) on an NCHW input."""
    N, C, H, W = x.shape
    Ho, Wo = H // 2, W // 2
    xc = x[:, :, :2 * Ho, :2 * Wo]            # drop odd remainder (no-op when even)
    R = N * C * Ho
    xr = xc.reshape(R, 4 * Wo)                # free contiguous reshape for even H, W

    # Resident 0/1 pooling matrix: column ow selects the four taps of window ow.
    j = jnp.arange(4 * Wo)
    q = (((j[:, None] % (2 * Wo)) // 2) == jnp.arange(Wo)[None, :]).astype(x.dtype)

    tr = min(block_rows, R)
    if tr < R:
        tr = max(8, (tr // 8) * 8)            # sublane-aligned row tile

    out = pl.pallas_call(
        _avgpool2x2_kernel,
        out_shape=jax.ShapeDtypeStruct((R, Wo), x.dtype),
        grid=(pl.cdiv(R, tr),),
        in_specs=[
            pl.BlockSpec((tr, 4 * Wo), lambda i: (i, 0)),
            pl.BlockSpec((4 * Wo, Wo), lambda i: (0, 0)),   # resident
        ],
        out_specs=pl.BlockSpec((tr, Wo), lambda i: (i, 0)),
        compiler_params=pltpu.CompilerParams(
            dimension_semantics=("parallel",),
            vmem_limit_bytes=48 * 1024 * 1024,
        ),
    )(xr, q)
    return out.reshape(N, C, Ho, Wo)


# ---------------------------------------------------------------------------
# Main
# ---------------------------------------------------------------------------
if __name__ == "__main__":
    key = jax.random.PRNGKey(0)
    kx, kw_, kb = jax.random.split(key, 3)

    N, C, H, W = 2, 4, 16, 16                 # small, TPU-friendly toy shapes
    x = jax.random.normal(kx, (N, C, H, W), dtype=jnp.float32)

    # deterministic Conv2d(C, C, 3) parameters (PyTorch-style uniform init)
    fan_in = C * 3 * 3
    bound = 1.0 / jnp.sqrt(float(fan_in))
    w = jax.random.uniform(kw_, (C, C, 3, 3), jnp.float32, -bound, bound)
    b = jax.random.uniform(kb, (C,), jnp.float32, -bound, bound)

    # --- with_conv=True path ---
    y_conv = jax.block_until_ready(jax.jit(downsample_with_conv)(x, w, b))
    assert y_conv.shape == (N, C, H // 2, W // 2)

    y_ref = lax.conv_general_dilated(
        x, w, window_strides=(2, 2), padding=((0, 1), (0, 1)),
        dimension_numbers=("NCHW", "OIHW", "NCHW"),
    ) + b[None, :, None, None]
    assert jnp.allclose(y_conv, y_ref, atol=1e-5, rtol=1e-5), \
        float(jnp.max(jnp.abs(y_conv - y_ref)))

    # --- with_conv=False path ---
    y_pool = jax.block_until_ready(jax.jit(downsample_no_conv)(x))
    y_pool_ref = x.reshape(N, C, H // 2, 2, W // 2, 2).mean(axis=(3, 5))
    assert y_pool.shape == (N, C, H // 2, W // 2)
    assert jnp.allclose(y_pool, y_pool_ref, atol=1e-6, rtol=1e-5)

    print("KERNEL_OK")
</pallas_src>

<mosaic_0001>
module attributes {stable_mosaic.version = 11 : i64} {
  func.func @_conv3x3_s2_rows_kernel(%arg0: i32, %arg1: i32, %arg2: memref<1x8x9x4xf32, #tpu.memory_space<vmem>>, %arg3: memref<1x8x8x4xf32, #tpu.memory_space<vmem>>, %arg4: memref<1x1x9x4xf32, #tpu.memory_space<vmem>>, %arg5: memref<1x1x8x4xf32, #tpu.memory_space<vmem>>, %arg6: memref<1x8x9x4xf32, #tpu.memory_space<vmem>>, %arg7: memref<1x8x8x4xf32, #tpu.memory_space<vmem>>, %arg8: memref<9x4x4xf32, #tpu.memory_space<vmem>>, %arg9: memref<1x4xf32, #tpu.memory_space<vmem>>, %arg10: memref<1x8x8x4xf32, #tpu.memory_space<vmem>>) attributes {dimension_semantics = [#tpu.dimension_semantics<parallel>, #tpu.dimension_semantics<parallel>], iteration_bounds = array<i64: 2, 1>, scalar_prefetch = 0 : i64, scratch_operands = 0 : i64, tpu.core_type = #tpu.core_type<tc>, window_params = [{transform_indices = @transform_0, window_bounds = array<i64: 1, 8, 9, 4>}, {transform_indices = @transform_1, window_bounds = array<i64: 1, 8, 8, 4>}, {transform_indices = @transform_2, window_bounds = array<i64: 1, 1, 9, 4>}, {transform_indices = @transform_3, window_bounds = array<i64: 1, 1, 8, 4>}, {transform_indices = @transform_4, window_bounds = array<i64: 1, 8, 9, 4>}, {transform_indices = @transform_5, window_bounds = array<i64: 1, 8, 8, 4>}, {pipeline_mode = #tpu.pipeline_mode<synchronous>, transform_indices = @transform_6, window_bounds = array<i64: 9, 4, 4>}, {pipeline_mode = #tpu.pipeline_mode<synchronous>, transform_indices = @transform_7, window_bounds = array<i64: 1, 4>}, {transform_indices = @transform_8, window_bounds = array<i64: 1, 8, 8, 4>}]} {
    %c0 = arith.constant 0 : index
    %c0_0 = arith.constant 0 : index
    %0 = vector.load %arg9[%c0, %c0_0] : memref<1x4xf32, #tpu.memory_space<vmem>>, vector<1x4xf32>
    %c0_1 = arith.constant 0 : index
    %c0_2 = arith.constant 0 : index
    %c0_3 = arith.constant 0 : index
    %c0_4 = arith.constant 0 : index
    %1 = vector.load %arg2[%c0_1, %c0_2, %c0_3, %c0_4] : memref<1x8x9x4xf32, #tpu.memory_space<vmem>>, vector<1x1x9x4xf32>
    %2 = vector.shape_cast %1 : vector<1x1x9x4xf32> to vector<9x4xf32>
    %c0_5 = arith.constant 0 : index
    %c0_6 = arith.constant 0 : index
    %c0_7 = arith.constant 0 : index
    %c0_8 = arith.constant 0 : index
    %3 = vector.load %arg3[%c0_5, %c0_6, %c0_7, %c0_8] : memref<1x8x8x4xf32, #tpu.memory_space<vmem>>, vector<1x1x8x4xf32>
    %4 = vector.shape_cast %3 : vector<1x1x8x4xf32> to vector<8x4xf32>
    %c0_9 = arith.constant 0 : index
    %c0_10 = arith.constant 0 : index
    %c0_11 = arith.constant 0 : index
    %c0_12 = arith.constant 0 : index
    %5 = vector.load %arg6[%c0_9, %c0_10, %c0_11, %c0_12] : memref<1x8x9x4xf32, #tpu.memory_space<vmem>>, vector<1x1x9x4xf32>
    %6 = vector.shape_cast %5 : vector<1x1x9x4xf32> to vector<9x4xf32>
    %c0_13 = arith.constant 0 : index
    %c0_14 = arith.constant 0 : index
    %c0_15 = arith.constant 0 : index
    %c0_16 = arith.constant 0 : index
    %7 = vector.load %arg7[%c0_13, %c0_14, %c0_15, %c0_16] : memref<1x8x8x4xf32, #tpu.memory_space<vmem>>, vector<1x1x8x4xf32>
    %8 = vector.shape_cast %7 : vector<1x1x8x4xf32> to vector<8x4xf32>
    %c0_17 = arith.constant 0 : index
    %c1 = arith.constant 1 : index
    %c0_18 = arith.constant 0 : index
    %c0_19 = arith.constant 0 : index
    %9 = vector.load %arg2[%c0_17, %c1, %c0_18, %c0_19] : memref<1x8x9x4xf32, #tpu.memory_space<vmem>>, vector<1x1x9x4xf32>
    %10 = vector.shape_cast %9 : vector<1x1x9x4xf32> to vector<9x4xf32>
    %c0_20 = arith.constant 0 : index
    %c1_21 = arith.constant 1 : index
    %c0_22 = arith.constant 0 : index
    %c0_23 = arith.constant 0 : index
    %11 = vector.load %arg3[%c0_20, %c1_21, %c0_22, %c0_23] : memref<1x8x8x4xf32, #tpu.memory_space<vmem>>, vector<1x1x8x4xf32>
    %12 = vector.shape_cast %11 : vector<1x1x8x4xf32> to vector<8x4xf32>
    %cst = arith.constant 0.000000e+00 : f32
    %13 = vector.broadcast %cst : f32 to vector<8x4xf32>
    %14 = vector.extract_strided_slice %2 {offsets = [0, 0], sizes = [8, 4], strides = [1, 1]} : vector<9x4xf32> to vector<8x4xf32>
    %15 = vector.extract_strided_slice %2 {offsets = [1, 0], sizes = [8, 4], strides = [1, 1]} : vector<9x4xf32> to vector<8x4xf32>
    %c0_24 = arith.constant 0 : index
    %c0_25 = arith.constant 0 : index
    %c0_26 = arith.constant 0 : index
    %16 = vector.load %arg8[%c0_24, %c0_25, %c0_26] : memref<9x4x4xf32, #tpu.memory_space<vmem>>, vector<1x4x4xf32>
    %17 = vector.shape_cast %16 : vector<1x4x4xf32> to vector<4x4xf32>
    %cst_27 = arith.constant dense<0.000000e+00> : vector<8x4xf32>
    %18 = tpu.matmul %14, %17, %cst_27 {dimension_numbers = #tpu.dot_dimension_numbers<[1], [0], [0], [1], [0, 0, 1, 1], [], []>} : vector<8x4xf32>, vector<4x4xf32>, vector<8x4xf32> -> vector<8x4xf32>
    %19 = arith.addf %13, %18 : vector<8x4xf32>
    %c1_28 = arith.constant 1 : index
    %c0_29 = arith.constant 0 : index
    %c0_30 = arith.constant 0 : index
    %20 = vector.load %arg8[%c1_28, %c0_29, %c0_30] : memref<9x4x4xf32, #tpu.memory_space<vmem>>, vector<1x4x4xf32>
    %21 = vector.shape_cast %20 : vector<1x4x4xf32> to vector<4x4xf32>
    %cst_31 = arith.constant dense<0.000000e+00> : vector<8x4xf32>
    %22 = tpu.matmul %4, %21, %cst_31 {dimension_numbers = #tpu.dot_dimension_numbers<[1], [0], [0], [1], [0, 0, 1, 1], [], []>} : vector<8x4xf32>, vector<4x4xf32>, vector<8x4xf32> -> vector<8x4xf32>
    %23 = arith.addf %19, %22 : vector<8x4xf32>
    %c2 = arith.constant 2 : index
    %c0_32 = arith.constant 0 : index
    %c0_33 = arith.constant 0 : index
    %24 = vector.load %arg8[%c2, %c0_32, %c0_33] : memref<9x4x4xf32, #tpu.memory_space<vmem>>, vector<1x4x4xf32>
    %25 = vector.shape_cast %24 : vector<1x4x4xf32> to vector<4x4xf32>
    %cst_34 = arith.constant dense<0.000000e+00> : vector<8x4xf32>
    %26 = tpu.matmul %15, %25, %cst_34 {dimension_numbers = #tpu.dot_dimension_numbers<[1], [0], [0], [1], [0, 0, 1, 1], [], []>} : vector<8x4xf32>, vector<4x4xf32>, vector<8x4xf32> -> vector<8x4xf32>
    %27 = arith.addf %23, %26 : vector<8x4xf32>
    %28 = vector.extract_strided_slice %6 {offsets = [0, 0], sizes = [8, 4], strides = [1, 1]} : vector<9x4xf32> to vector<8x4xf32>
    %29 = vector.extract_strided_slice %6 {offsets = [1, 0], sizes = [8, 4], strides = [1, 1]} : vector<9x4xf32> to vector<8x4xf32>
    %c3 = arith.constant 3 : index
    %c0_35 = arith.constant 0 : index
    %c0_36 = arith.constant 0 : index
    %30 = vector.load %arg8[%c3, %c0_35, %c0_36] : memref<9x4x4xf32, #tpu.memory_space<vmem>>, vector<1x4x4xf32>
    %31 = vector.shape_cast %30 : vector<1x4x4xf32> to vector<4x4xf32>
    %cst_37 = arith.constant dense<0.000000e+00> : vector<8x4xf32>
    %32 = tpu.matmul %28, %31, %cst_37 {dimension_numbers = #tpu.dot_dimension_numbers<[1], [0], [0], [1], [0, 0, 1, 1], [], []>} : vector<8x4xf32>, vector<4x4xf32>, vector<8x4xf32> -> vector<8x4xf32>
    %33 = arith.addf %27, %32 : vector<8x4xf32>
    %c4 = arith.constant 4 : index
    %c0_38 = arith.constant 0 : index
    %c0_39 = arith.constant 0 : index
    %34 = vector.load %arg8[%c4, %c0_38, %c0_39] : memref<9x4x4xf32, #tpu.memory_space<vmem>>, vector<1x4x4xf32>
    %35 = vector.shape_cast %34 : vector<1x4x4xf32> to vector<4x4xf32>
    %cst_40 = arith.constant dense<0.000000e+00> : vector<8x4xf32>
    %36 = tpu.matmul %8, %35, %cst_40 {dimension_numbers = #tpu.dot_dimension_numbers<[1], [0], [0], [1], [0, 0, 1, 1], [], []>} : vector<8x4xf32>, vector<4x4xf32>, vector<8x4xf32> -> vector<8x4xf32>
    %37 = arith.addf %33, %36 : vector<8x4xf32>
    %c5 = arith.constant 5 : index
    %c0_41 = arith.constant 0 : index
    %c0_42 = arith.constant 0 : index
    %38 = vector.load %arg8[%c5, %c0_41, %c0_42] : memref<9x4x4xf32, #tpu.memory_space<vmem>>, vector<1x4x4xf32>
    %39 = vector.shape_cast %38 : vector<1x4x4xf32> to vector<4x4xf32>
    %cst_43 = arith.constant dense<0.000000e+00> : vector<8x4xf32>
    %40 = tpu.matmul %29, %39, %cst_43 {dimension_numbers = #tpu.dot_dimension_numbers<[1], [0], [0], [1], [0, 0, 1, 1], [], []>} : vector<8x4xf32>, vector<4x4xf32>, vector<8x4xf32> -> vector<8x4xf32>
    %41 = arith.addf %37, %40 : vector<8x4xf32>
    %42 = vector.extract_strided_slice %10 {offsets = [0, 0], sizes = [8, 4], strides = [1, 1]} : vector<9x4xf32> to vector<8x4xf32>
    %43 = vector.extract_strided_slice %10 {offsets = [1, 0], sizes = [8, 4], strides = [1, 1]} : vector<9x4xf32> to vector<8x4xf32>
    %c6 = arith.constant 6 : index
    %c0_44 = arith.constant 0 : index
    %c0_45 = arith.constant 0 : index
    %44 = vector.load %arg8[%c6, %c0_44, %c0_45] : memref<9x4x4xf32, #tpu.memory_space<vmem>>, vector<1x4x4xf32>
    %45 = vector.shape_cast %44 : vector<1x4x4xf32> to vector<4x4xf32>
    %cst_46 = arith.constant dense<0.000000e+00> : vector<8x4xf32>
    %46 = tpu.matmul %42, %45, %cst_46 {dimension_numbers = #tpu.dot_dimension_numbers<[1], [0], [0], [1], [0, 0, 1, 1], [], []>} : vector<8x4xf32>, vector<4x4xf32>, vector<8x4xf32> -> vector<8x4xf32>
    %47 = arith.addf %41, %46 : vector<8x4xf32>
    %c7 = arith.constant 7 : index
    %c0_47 = arith.constant 0 : index
    %c0_48 = arith.constant 0 : index
    %48 = vector.load %arg8[%c7, %c0_47, %c0_48] : memref<9x4x4xf32, #tpu.memory_space<vmem>>, vector<1x4x4xf32>
    %49 = vector.shape_cast %48 : vector<1x4x4xf32> to vector<4x4xf32>
    %cst_49 = arith.constant dense<0.000000e+00> : vector<8x4xf32>
    %50 = tpu.matmul %12, %49, %cst_49 {dimension_numbers = #tpu.dot_dimension_numbers<[1], [0], [0], [1], [0, 0, 1, 1], [], []>} : vector<8x4xf32>, vector<4x4xf32>, vector<8x4xf32> -> vector<8x4xf32>
    %51 = arith.addf %47, %50 : vector<8x4xf32>
    %c8 = arith.constant 8 : index
    %c0_50 = arith.constant 0 : index
    %c0_51 = arith.constant 0 : index
    %52 = vector.load %arg8[%c8, %c0_50, %c0_51] : memref<9x4x4xf32, #tpu.memory_space<vmem>>, vector<1x4x4xf32>
    %53 = vector.shape_cast %52 : vector<1x4x4xf32> to vector<4x4xf32>
    %cst_52 = arith.constant dense<0.000000e+00> : vector<8x4xf32>
    %54 = tpu.matmul %43, %53, %cst_52 {dimension_numbers = #tpu.dot_dimension_numbers<[1], [0], [0], [1], [0, 0, 1, 1], [], []>} : vector<8x4xf32>, vector<4x4xf32>, vector<8x4xf32> -> vector<8x4xf32>
    %55 = arith.addf %51, %54 : vector<8x4xf32>
    %56 = vector.broadcast %0 : vector<1x4xf32> to vector<8x4xf32>
    %57 = arith.addf %55, %56 : vector<8x4xf32>
    %c0_53 = arith.constant 0 : index
    %c0_54 = arith.constant 0 : index
    %c0_55 = arith.constant 0 : index
    %c0_56 = arith.constant 0 : index
    %58 = vector.load %arg10[%c0_53, %c0_54, %c0_55, %c0_56] : memref<1x8x8x4xf32, #tpu.memory_space<vmem>>, vector<1x1x8x4xf32>
    %59 = vector.shape_cast %58 : vector<1x1x8x4xf32> to vector<8x4xf32>
    %60 = vector.shape_cast %57 : vector<8x4xf32> to vector<1x1x8x4xf32>
    tpu.vector_store %arg10[%c0_53, %c0_54, %c0_55, %c0_56], %60 {strides = array<i32>} : memref<1x8x8x4xf32, #tpu.memory_space<vmem>>, vector<1x1x8x4xf32>,
    %c0_57 = arith.constant 0 : index
    %c1_58 = arith.constant 1 : index
    %c0_59 = arith.constant 0 : index
    %c0_60 = arith.constant 0 : index
    %61 = vector.load %arg2[%c0_57, %c1_58, %c0_59, %c0_60] : memref<1x8x9x4xf32, #tpu.memory_space<vmem>>, vector<1x1x9x4xf32>
    %62 = vector.shape_cast %61 : vector<1x1x9x4xf32> to vector<9x4xf32>
    %c0_61 = arith.constant 0 : index
    %c1_62 = arith.constant 1 : index
    %c0_63 = arith.constant 0 : index
    %c0_64 = arith.constant 0 : index
    %63 = vector.load %arg3[%c0_61, %c1_62, %c0_63, %c0_64] : memref<1x8x8x4xf32, #tpu.memory_space<vmem>>, vector<1x1x8x4xf32>
    %64 = vector.shape_cast %63 : vector<1x1x8x4xf32> to vector<8x4xf32>
    %c0_65 = arith.constant 0 : index
    %c1_66 = arith.constant 1 : index
    %c0_67 = arith.constant 0 : index
    %c0_68 = arith.constant 0 : index
    %65 = vector.load %arg6[%c0_65, %c1_66, %c0_67, %c0_68] : memref<1x8x9x4xf32, #tpu.memory_space<vmem>>, vector<1x1x9x4xf32>
    %66 = vector.shape_cast %65 : vector<1x1x9x4xf32> to vector<9x4xf32>
    %c0_69 = arith.constant 0 : index
    %c1_70 = arith.constant 1 : index
    %c0_71 = arith.constant 0 : index
    %c0_72 = arith.constant 0 : index
    %67 = vector.load %arg7[%c0_69, %c1_70, %c0_71, %c0_72] : memref<1x8x8x4xf32, #tpu.memory_space<vmem>>, vector<1x1x8x4xf32>
    %68 = vector.shape_cast %67 : vector<1x1x8x4xf32> to vector<8x4xf32>
    %c0_73 = arith.constant 0 : index
    %c2_74 = arith.constant 2 : index
    %c0_75 = arith.constant 0 : index
    %c0_76 = arith.constant 0 : index
    %69 = vector.load %arg2[%c0_73, %c2_74, %c0_75, %c0_76] : memref<1x8x9x4xf32, #tpu.memory_space<vmem>>, vector<1x1x9x4xf32>
    %70 = vector.shape_cast %69 : vector<1x1x9x4xf32> to vector<9x4xf32>
    %c0_77 = arith.constant 0 : index
    %c2_78 = arith.constant 2 : index
    %c0_79 = arith.constant 0 : index
    %c0_80 = arith.constant 0 : index
    %71 = vector.load %arg3[%c0_77, %c2_78, %c0_79, %c0_80] : memref<1x8x8x4xf32, #tpu.memory_space<vmem>>, vector<1x1x8x4xf32>
    %72 = vector.shape_cast %71 : vector<1x1x8x4xf32> to vector<8x4xf32>
    %cst_81 = arith.constant 0.000000e+00 : f32
    %73 = vector.broadcast %cst_81 : f32 to vector<8x4xf32>
    %74 = vector.extract_strided_slice %62 {offsets = [0, 0], sizes = [8, 4], strides = [1, 1]} : vector<9x4xf32> to vector<8x4xf32>
    %75 = vector.extract_strided_slice %62 {offsets = [1, 0], sizes = [8, 4], strides = [1, 1]} : vector<9x4xf32> to vector<8x4xf32>
    %c0_82 = arith.constant 0 : index
    %c0_83 = arith.constant 0 : index
    %c0_84 = arith.constant 0 : index
    %76 = vector.load %arg8[%c0_82, %c0_83, %c0_84] : memref<9x4x4xf32, #tpu.memory_space<vmem>>, vector<1x4x4xf32>
    %77 = vector.shape_cast %76 : vector<1x4x4xf32> to vector<4x4xf32>
    %cst_85 = arith.constant dense<0.000000e+00> : vector<8x4xf32>
    %78 = tpu.matmul %74, %77, %cst_85 {dimension_numbers = #tpu.dot_dimension_numbers<[1], [0], [0], [1], [0, 0, 1, 1], [], []>} : vector<8x4xf32>, vector<4x4xf32>, vector<8x4xf32> -> vector<8x4xf32>
    %79 = arith.addf %73, %78 : vector<8x4xf32>
    %c1_86 = arith.constant 1 : index
    %c0_87 = arith.constant 0 : index
    %c0_88 = arith.constant 0 : index
    %80 = vector.load %arg8[%c1_86, %c0_87, %c0_88] : memref<9x4x4xf32, #tpu.memory_space<vmem>>, vector<1x4x4xf32>
    %81 = vector.shape_cast %80 : vector<1x4x4xf32> to vector<4x4xf32>
    %cst_89 = arith.constant dense<0.000000e+00> : vector<8x4xf32>
    %82 = tpu.matmul %64, %81, %cst_89 {dimension_numbers = #tpu.dot_dimension_numbers<[1], [0], [0], [1], [0, 0, 1, 1], [], []>} : vector<8x4xf32>, vector<4x4xf32>, vector<8x4xf32> -> vector<8x4xf32>
    %83 = arith.addf %79, %82 : vector<8x4xf32>
    %c2_90 = arith.constant 2 : index
    %c0_91 = arith.constant 0 : index
    %c0_92 = arith.constant 0 : index
    %84 = vector.load %arg8[%c2_90, %c0_91, %c0_92] : memref<9x4x4xf32, #tpu.memory_space<vmem>>, vector<1x4x4xf32>
    %85 = vector.shape_cast %84 : vector<1x4x4xf32> to vector<4x4xf32>
    %cst_93 = arith.constant dense<0.000000e+00> : vector<8x4xf32>
    %86 = tpu.matmul %75, %85, %cst_93 {dimension_numbers = #tpu.dot_dimension_numbers<[1], [0], [0], [1], [0, 0, 1, 1], [], []>} : vector<8x4xf32>, vector<4x4xf32>, vector<8x4xf32> -> vector<8x4xf32>
    %87 = arith.addf %83, %86 : vector<8x4xf32>
    %88 = vector.extract_strided_slice %66 {offsets = [0, 0], sizes = [8, 4], strides = [1, 1]} : vector<9x4xf32> to vector<8x4xf32>
    %89 = vector.extract_strided_slice %66 {offsets = [1, 0], sizes = [8, 4], strides = [1, 1]} : vector<9x4xf32> to vector<8x4xf32>
    %c3_94 = arith.constant 3 : index
    %c0_95 = arith.constant 0 : index
    %c0_96 = arith.constant 0 : index
    %90 = vector.load %arg8[%c3_94, %c0_95, %c0_96] : memref<9x4x4xf32, #tpu.memory_space<vmem>>, vector<1x4x4xf32>
    %91 = vector.shape_cast %90 : vector<1x4x4xf32> to vector<4x4xf32>
    %cst_97 = arith.constant dense<0.000000e+00> : vector<8x4xf32>
    %92 = tpu.matmul %88, %91, %cst_97 {dimension_numbers = #tpu.dot_dimension_numbers<[1], [0], [0], [1], [0, 0, 1, 1], [], []>} : vector<8x4xf32>, vector<4x4xf32>, vector<8x4xf32> -> vector<8x4xf32>
    %93 = arith.addf %87, %92 : vector<8x4xf32>
    %c4_98 = arith.constant 4 : index
    %c0_99 = arith.constant 0 : index
    %c0_100 = arith.constant 0 : index
    %94 = vector.load %arg8[%c4_98, %c0_99, %c0_100] : memref<9x4x4xf32, #tpu.memory_space<vmem>>, vector<1x4x4xf32>
    %95 = vector.shape_cast %94 : vector<1x4x4xf32> to vector<4x4xf32>
    %cst_101 = arith.constant dense<0.000000e+00> : vector<8x4xf32>
    %96 = tpu.matmul %68, %95, %cst_101 {dimension_numbers = #tpu.dot_dimension_numbers<[1], [0], [0], [1], [0, 0, 1, 1], [], []>} : vector<8x4xf32>, vector<4x4xf32>, vector<8x4xf32> -> vector<8x4xf32>
    %97 = arith.addf %93, %96 : vector<8x4xf32>
    %c5_102 = arith.constant 5 : index
    %c0_103 = arith.constant 0 : index
    %c0_104 = arith.constant 0 : index
    %98 = vector.load %arg8[%c5_102, %c0_103, %c0_104] : memref<9x4x4xf32, #tpu.memory_space<vmem>>, vector<1x4x4xf32>
    %99 = vector.shape_cast %98 : vector<1x4x4xf32> to vector<4x4xf32>
    %cst_105 = arith.constant dense<0.000000e+00> : vector<8x4xf32>
    %100 = tpu.matmul %89, %99, %cst_105 {dimension_numbers = #tpu.dot_dimension_numbers<[1], [0], [0], [1], [0, 0, 1, 1], [], []>} : vector<8x4xf32>, vector<4x4xf32>, vector<8x4xf32> -> vector<8x4xf32>
    %101 = arith.addf %97, %100 : vector<8x4xf32>
    %102 = vector.extract_strided_slice %70 {offsets = [0, 0], sizes = [8, 4], strides = [1, 1]} : vector<9x4xf32> to vector<8x4xf32>
    %103 = vector.extract_strided_slice %70 {offsets = [1, 0], sizes = [8, 4], strides = [1, 1]} : vector<9x4xf32> to vector<8x4xf32>
    %c6_106 = arith.constant 6 : index
    %c0_107 = arith.constant 0 : index
    %c0_108 = arith.constant 0 : index
    %104 = vector.load %arg8[%c6_106, %c0_107, %c0_108] : memref<9x4x4xf32, #tpu.memory_space<vmem>>, vector<1x4x4xf32>
    %105 = vector.shape_cast %104 : vector<1x4x4xf32> to vector<4x4xf32>
    %cst_109 = arith.constant dense<0.000000e+00> : vector<8x4xf32>
    %106 = tpu.matmul %102, %105, %cst_109 {dimension_numbers = #tpu.dot_dimension_numbers<[1], [0], [0], [1], [0, 0, 1, 1], [], []>} : vector<8x4xf32>, vector<4x4xf32>, vector<8x4xf32> -> vector<8x4xf32>
    %107 = arith.addf %101, %106 : vector<8x4xf32>
    %c7_110 = arith.constant 7 : index
    %c0_111 = arith.constant 0 : index
    %c0_112 = arith.constant 0 : index
    %108 = vector.load %arg8[%c7_110, %c0_111, %c0_112] : memref<9x4x4xf32, #tpu.memory_space<vmem>>, vector<1x4x4xf32>
    %109 = vector.shape_cast %108 : vector<1x4x4xf32> to vector<4x4xf32>
    %cst_113 = arith.constant dense<0.000000e+00> : vector<8x4xf32>
    %110 = tpu.matmul %72, %109, %cst_113 {dimension_numbers = #tpu.dot_dimension_numbers<[1], [0], [0], [1], [0, 0, 1, 1], [], []>} : vector<8x4xf32>, vector<4x4xf32>, vector<8x4xf32> -> vector<8x4xf32>
    %111 = arith.addf %107, %110 : vector<8x4xf32>
    %c8_114 = arith.constant 8 : index
    %c0_115 = arith.constant 0 : index
    %c0_116 = arith.constant 0 : index
    %112 = vector.load %arg8[%c8_114, %c0_115, %c0_116] : memref<9x4x4xf32, #tpu.memory_space<vmem>>, vector<1x4x4xf32>
    %113 = vector.shape_cast %112 : vector<1x4x4xf32> to vector<4x4xf32>
    %cst_117 = arith.constant dense<0.000000e+00> : vector<8x4xf32>
    %114 = tpu.matmul %103, %113, %cst_117 {dimension_numbers = #tpu.dot_dimension_numbers<[1], [0], [0], [1], [0, 0, 1, 1], [], []>} : vector<8x4xf32>, vector<4x4xf32>, vector<8x4xf32> -> vector<8x4xf32>
    %115 = arith.addf %111, %114 : vector<8x4xf32>
    %116 = vector.broadcast %0 : vector<1x4xf32> to vector<8x4xf32>
    %117 = arith.addf %115, %116 : vector<8x4xf32>
    %c0_118 = arith.constant 0 : index
    %c1_119 = arith.constant 1 : index
    %c0_120 = arith.constant 0 : index
    %c0_121 = arith.constant 0 : index
    %118 = vector.load %arg10[%c0_118, %c1_119, %c0_120, %c0_121] : memref<1x8x8x4xf32, #tpu.memory_space<vmem>>, vector<1x1x8x4xf32>
    %119 = vector.shape_cast %118 : vector<1x1x8x4xf32> to vector<8x4xf32>
    %120 = vector.shape_cast %117 : vector<8x4xf32> to vector<1x1x8x4xf32>
    tpu.vector_store %arg10[%c0_118, %c1_119, %c0_120, %c0_121], %120 {strides = array<i32>} : memref<1x8x8x4xf32, #tpu.memory_space<vmem>>, vector<1x1x8x4xf32>,
    %c0_122 = arith.constant 0 : index
    %c2_123 = arith.constant 2 : index
    %c0_124 = arith.constant 0 : index
    %c0_125 = arith.constant 0 : index
    %121 = vector.load %arg2[%c0_122, %c2_123, %c0_124, %c0_125] : memref<1x8x9x4xf32, #tpu.memory_space<vmem>>, vector<1x1x9x4xf32>
    %122 = vector.shape_cast %121 : vector<1x1x9x4xf32> to vector<9x4xf32>
    %c0_126 = arith.constant 0 : index
    %c2_127 = arith.constant 2 : index
    %c0_128 = arith.constant 0 : index
    %c0_129 = arith.constant 0 : index
    %123 = vector.load %arg3[%c0_126, %c2_127, %c0_128, %c0_129] : memref<1x8x8x4xf32, #tpu.memory_space<vmem>>, vector<1x1x8x4xf32>
    %124 = vector.shape_cast %123 : vector<1x1x8x4xf32> to vector<8x4xf32>
    %c0_130 = arith.constant 0 : index
    %c2_131 = arith.constant 2 : index
    %c0_132 = arith.constant 0 : index
    %c0_133 = arith.constant 0 : index
    %125 = vector.load %arg6[%c0_130, %c2_131, %c0_132, %c0_133] : memref<1x8x9x4xf32, #tpu.memory_space<vmem>>, vector<1x1x9x4xf32>
    %126 = vector.shape_cast %125 : vector<1x1x9x4xf32> to vector<9x4xf32>
    %c0_134 = arith.constant 0 : index
    %c2_135 = arith.constant 2 : index
    %c0_136 = arith.constant 0 : index
    %c0_137 = arith.constant 0 : index
    %127 = vector.load %arg7[%c0_134, %c2_135, %c0_136, %c0_137] : memref<1x8x8x4xf32, #tpu.memory_space<vmem>>, vector<1x1x8x4xf32>
    %128 = vector.shape_cast %127 : vector<1x1x8x4xf32> to vector<8x4xf32>
    %c0_138 = arith.constant 0 : index
    %c3_139 = arith.constant 3 : index
    %c0_140 = arith.constant 0 : index
    %c0_141 = arith.constant 0 : index
    %129 = vector.load %arg2[%c0_138, %c3_139, %c0_140, %c0_141] : memref<1x8x9x4xf32, #tpu.memory_space<vmem>>, vector<1x1x9x4xf32>
    %130 = vector.shape_cast %129 : vector<1x1x9x4xf32> to vector<9x4xf32>
    %c0_142 = arith.constant 0 : index
    %c3_143 = arith.constant 3 : index
    %c0_144 = arith.constant 0 : index
    %c0_145 = arith.constant 0 : index
    %131 = vector.load %arg3[%c0_142, %c3_143, %c0_144, %c0_145] : memref<1x8x8x4xf32, #tpu.memory_space<vmem>>, vector<1x1x8x4xf32>
    %132 = vector.shape_cast %131 : vector<1x1x8x4xf32> to vector<8x4xf32>
    %cst_146 = arith.constant 0.000000e+00 : f32
    %133 = vector.broadcast %cst_146 : f32 to vector<8x4xf32>
    %134 = vector.extract_strided_slice %122 {offsets = [0, 0], sizes = [8, 4], strides = [1, 1]} : vector<9x4xf32> to vector<8x4xf32>
    %135 = vector.extract_strided_slice %122 {offsets = [1, 0], sizes = [8, 4], strides = [1, 1]} : vector<9x4xf32> to vector<8x4xf32>
    %c0_147 = arith.constant 0 : index
    %c0_148 = arith.constant 0 : index
    %c0_149 = arith.constant 0 : index
    %136 = vector.load %arg8[%c0_147, %c0_148, %c0_149] : memref<9x4x4xf32, #tpu.memory_space<vmem>>, vector<1x4x4xf32>
    %137 = vector.shape_cast %136 : vector<1x4x4xf32> to vector<4x4xf32>
    %cst_150 = arith.constant dense<0.000000e+00> : vector<8x4xf32>
    %138 = tpu.matmul %134, %137, %cst_150 {dimension_numbers = #tpu.dot_dimension_numbers<[1], [0], [0], [1], [0, 0, 1, 1], [], []>} : vector<8x4xf32>, vector<4x4xf32>, vector<8x4xf32> -> vector<8x4xf32>
    %139 = arith.addf %133, %138 : vector<8x4xf32>
    %c1_151 = arith.constant 1 : index
    %c0_152 = arith.constant 0 : index
    %c0_153 = arith.constant 0 : index
    %140 = vector.load %arg8[%c1_151, %c0_152, %c0_153] : memref<9x4x4xf32, #tpu.memory_space<vmem>>, vector<1x4x4xf32>
    %141 = vector.shape_cast %140 : vector<1x4x4xf32> to vector<4x4xf32>
    %cst_154 = arith.constant dense<0.000000e+00> : vector<8x4xf32>
    %142 = tpu.matmul %124, %141, %cst_154 {dimension_numbers = #tpu.dot_dimension_numbers<[1], [0], [0], [1], [0, 0, 1, 1], [], []>} : vector<8x4xf32>, vector<4x4xf32>, vector<8x4xf32> -> vector<8x4xf32>
    %143 = arith.addf %139, %142 : vector<8x4xf32>
    %c2_155 = arith.constant 2 : index
    %c0_156 = arith.constant 0 : index
    %c0_157 = arith.constant 0 : index
    %144 = vector.load %arg8[%c2_155, %c0_156, %c0_157] : memref<9x4x4xf32, #tpu.memory_space<vmem>>, vector<1x4x4xf32>
    %145 = vector.shape_cast %144 : vector<1x4x4xf32> to vector<4x4xf32>
    %cst_158 = arith.constant dense<0.000000e+00> : vector<8x4xf32>
    %146 = tpu.matmul %135, %145, %cst_158 {dimension_numbers = #tpu.dot_dimension_numbers<[1], [0], [0], [1], [0, 0, 1, 1], [], []>} : vector<8x4xf32>, vector<4x4xf32>, vector<8x4xf32> -> vector<8x4xf32>
    %147 = arith.addf %143, %146 : vector<8x4xf32>
    %148 = vector.extract_strided_slice %126 {offsets = [0, 0], sizes = [8, 4], strides = [1, 1]} : vector<9x4xf32> to vector<8x4xf32>
    %149 = vector.extract_strided_slice %126 {offsets = [1, 0], sizes = [8, 4], strides = [1, 1]} : vector<9x4xf32> to vector<8x4xf32>
    %c3_159 = arith.constant 3 : index
    %c0_160 = arith.constant 0 : index
    %c0_161 = arith.constant 0 : index
    %150 = vector.load %arg8[%c3_159, %c0_160, %c0_161] : memref<9x4x4xf32, #tpu.memory_space<vmem>>, vector<1x4x4xf32>
    %151 = vector.shape_cast %150 : vector<1x4x4xf32> to vector<4x4xf32>
    %cst_162 = arith.constant dense<0.000000e+00> : vector<8x4xf32>
    %152 = tpu.matmul %148, %151, %cst_162 {dimension_numbers = #tpu.dot_dimension_numbers<[1], [0], [0], [1], [0, 0, 1, 1], [], []>} : vector<8x4xf32>, vector<4x4xf32>, vector<8x4xf32> -> vector<8x4xf32>
    %153 = arith.addf %147, %152 : vector<8x4xf32>
    %c4_163 = arith.constant 4 : index
    %c0_164 = arith.constant 0 : index
    %c0_165 = arith.constant 0 : index
    %154 = vector.load %arg8[%c4_163, %c0_164, %c0_165] : memref<9x4x4xf32, #tpu.memory_space<vmem>>, vector<1x4x4xf32>
    %155 = vector.shape_cast %154 : vector<1x4x4xf32> to vector<4x4xf32>
    %cst_166 = arith.constant dense<0.000000e+00> : vector<8x4xf32>
    %156 = tpu.matmul %128, %155, %cst_166 {dimension_numbers = #tpu.dot_dimension_numbers<[1], [0], [0], [1], [0, 0, 1, 1], [], []>} : vector<8x4xf32>, vector<4x4xf32>, vector<8x4xf32> -> vector<8x4xf32>
    %157 = arith.addf %153, %156 : vector<8x4xf32>
    %c5_167 = arith.constant 5 : index
    %c0_168 = arith.constant 0 : index
    %c0_169 = arith.constant 0 : index
    %158 = vector.load %arg8[%c5_167, %c0_168, %c0_169] : memref<9x4x4xf32, #tpu.memory_space<vmem>>, vector<1x4x4xf32>
    %159 = vector.shape_cast %158 : vector<1x4x4xf32> to vector<4x4xf32>
    %cst_170 = arith.constant dense<0.000000e+00> : vector<8x4xf32>
    %160 = tpu.matmul %149, %159, %cst_170 {dimension_numbers = #tpu.dot_dimension_numbers<[1], [0], [0], [1], [0, 0, 1, 1], [], []>} : vector<8x4xf32>, vector<4x4xf32>, vector<8x4xf32> -> vector<8x4xf32>
    %161 = arith.addf %157, %160 : vector<8x4xf32>
    %162 = vector.extract_strided_slice %130 {offsets = [0, 0], sizes = [8, 4], strides = [1, 1]} : vector<9x4xf32> to vector<8x4xf32>
    %163 = vector.extract_strided_slice %130 {offsets = [1, 0], sizes = [8, 4], strides = [1, 1]} : vector<9x4xf32> to vector<8x4xf32>
    %c6_171 = arith.constant 6 : index
    %c0_172 = arith.constant 0 : index
    %c0_173 = arith.constant 0 : index
    %164 = vector.load %arg8[%c6_171, %c0_172, %c0_173] : memref<9x4x4xf32, #tpu.memory_space<vmem>>, vector<1x4x4xf32>
    %165 = vector.shape_cast %164 : vector<1x4x4xf32> to vector<4x4xf32>
    %cst_174 = arith.constant dense<0.000000e+00> : vector<8x4xf32>
    %166 = tpu.matmul %162, %165, %cst_174 {dimension_numbers = #tpu.dot_dimension_numbers<[1], [0], [0], [1], [0, 0, 1, 1], [], []>} : vector<8x4xf32>, vector<4x4xf32>, vector<8x4xf32> -> vector<8x4xf32>
    %167 = arith.addf %161, %166 : vector<8x4xf32>
    %c7_175 = arith.constant 7 : index
    %c0_176 = arith.constant 0 : index
    %c0_177 = arith.constant 0 : index
    %168 = vector.load %arg8[%c7_175, %c0_176, %c0_177] : memref<9x4x4xf32, #tpu.memory_space<vmem>>, vector<1x4x4xf32>
    %169 = vector.shape_cast %168 : vector<1x4x4xf32> to vector<4x4xf32>
    %cst_178 = arith.constant dense<0.000000e+00> : vector<8x4xf32>
    %170 = tpu.matmul %132, %169, %cst_178 {dimension_numbers = #tpu.dot_dimension_numbers<[1], [0], [0], [1], [0, 0, 1, 1], [], []>} : vector<8x4xf32>, vector<4x4xf32>, vector<8x4xf32> -> vector<8x4xf32>
    %171 = arith.addf %167, %170 : vector<8x4xf32>
    %c8_179 = arith.constant 8 : index
    %c0_180 = arith.constant 0 : index
    %c0_181 = arith.constant 0 : index
    %172 = vector.load %arg8[%c8_179, %c0_180, %c0_181] : memref<9x4x4xf32, #tpu.memory_space<vmem>>, vector<1x4x4xf32>
    %173 = vector.shape_cast %172 : vector<1x4x4xf32> to vector<4x4xf32>
    %cst_182 = arith.constant dense<0.000000e+00> : vector<8x4xf32>
    %174 = tpu.matmul %163, %173, %cst_182 {dimension_numbers = #tpu.dot_dimension_numbers<[1], [0], [0], [1], [0, 0, 1, 1], [], []>} : vector<8x4xf32>, vector<4x4xf32>, vector<8x4xf32> -> vector<8x4xf32>
    %175 = arith.addf %171, %174 : vector<8x4xf32>
    %176 = vector.broadcast %0 : vector<1x4xf32> to vector<8x4xf32>
    %177 = arith.addf %175, %176 : vector<8x4xf32>
    %c0_183 = arith.constant 0 : index
    %c2_184 = arith.constant 2 : index
    %c0_185 = arith.constant 0 : index
    %c0_186 = arith.constant 0 : index
    %178 = vector.load %arg10[%c0_183, %c2_184, %c0_185, %c0_186] : memref<1x8x8x4xf32, #tpu.memory_space<vmem>>, vector<1x1x8x4xf32>
    %179 = vector.shape_cast %178 : vector<1x1x8x4xf32> to vector<8x4xf32>
    %180 = vector.shape_cast %177 : vector<8x4xf32> to vector<1x1x8x4xf32>
    tpu.vector_store %arg10[%c0_183, %c2_184, %c0_185, %c0_186], %180 {strides = array<i32>} : memref<1x8x8x4xf32, #tpu.memory_space<vmem>>, vector<1x1x8x4xf32>,
    %c0_187 = arith.constant 0 : index
    %c3_188 = arith.constant 3 : index
    %c0_189 = arith.constant 0 : index
    %c0_190 = arith.constant 0 : index
    %181 = vector.load %arg2[%c0_187, %c3_188, %c0_189, %c0_190] : memref<1x8x9x4xf32, #tpu.memory_space<vmem>>, vector<1x1x9x4xf32>
    %182 = vector.shape_cast %181 : vector<1x1x9x4xf32> to vector<9x4xf32>
    %c0_191 = arith.constant 0 : index
    %c3_192 = arith.constant 3 : index
    %c0_193 = arith.constant 0 : index
    %c0_194 = arith.constant 0 : index
    %183 = vector.load %arg3[%c0_191, %c3_192, %c0_193, %c0_194] : memref<1x8x8x4xf32, #tpu.memory_space<vmem>>, vector<1x1x8x4xf32>
    %184 = vector.shape_cast %183 : vector<1x1x8x4xf32> to vector<8x4xf32>
    %c0_195 = arith.constant 0 : index
    %c3_196 = arith.constant 3 : index
    %c0_197 = arith.constant 0 : index
    %c0_198 = arith.constant 0 : index
    %185 = vector.load %arg6[%c0_195, %c3_196, %c0_197, %c0_198] : memref<1x8x9x4xf32, #tpu.memory_space<vmem>>, vector<1x1x9x4xf32>
    %186 = vector.shape_cast %185 : vector<1x1x9x4xf32> to vector<9x4xf32>
    %c0_199 = arith.constant 0 : index
    %c3_200 = arith.constant 3 : index
    %c0_201 = arith.constant 0 : index
    %c0_202 = arith.constant 0 : index
    %187 = vector.load %arg7[%c0_199, %c3_200, %c0_201, %c0_202] : memref<1x8x8x4xf32, #tpu.memory_space<vmem>>, vector<1x1x8x4xf32>
    %188 = vector.shape_cast %187 : vector<1x1x8x4xf32> to vector<8x4xf32>
    %c0_203 = arith.constant 0 : index
    %c4_204 = arith.constant 4 : index
    %c0_205 = arith.constant 0 : index
    %c0_206 = arith.constant 0 : index
    %189 = vector.load %arg2[%c0_203, %c4_204, %c0_205, %c0_206] : memref<1x8x9x4xf32, #tpu.memory_space<vmem>>, vector<1x1x9x4xf32>
    %190 = vector.shape_cast %189 : vector<1x1x9x4xf32> to vector<9x4xf32>
    %c0_207 = arith.constant 0 : index
    %c4_208 = arith.constant 4 : index
    %c0_209 = arith.constant 0 : index
    %c0_210 = arith.constant 0 : index
    %191 = vector.load %arg3[%c0_207, %c4_208, %c0_209, %c0_210] : memref<1x8x8x4xf32, #tpu.memory_space<vmem>>, vector<1x1x8x4xf32>
    %192 = vector.shape_cast %191 : vector<1x1x8x4xf32> to vector<8x4xf32>
    %cst_211 = arith.constant 0.000000e+00 : f32
    %193 = vector.broadcast %cst_211 : f32 to vector<8x4xf32>
    %194 = vector.extract_strided_slice %182 {offsets = [0, 0], sizes = [8, 4], strides = [1, 1]} : vector<9x4xf32> to vector<8x4xf32>
    %195 = vector.extract_strided_slice %182 {offsets = [1, 0], sizes = [8, 4], strides = [1, 1]} : vector<9x4xf32> to vector<8x4xf32>
    %c0_212 = arith.constant 0 : index
    %c0_213 = arith.constant 0 : index
    %c0_214 = arith.constant 0 : index
    %196 = vector.load %arg8[%c0_212, %c0_213, %c0_214] : memref<9x4x4xf32, #tpu.memory_space<vmem>>, vector<1x4x4xf32>
    %197 = vector.shape_cast %196 : vector<1x4x4xf32> to vector<4x4xf32>
    %cst_215 = arith.constant dense<0.000000e+00> : vector<8x4xf32>
    %198 = tpu.matmul %194, %197, %cst_215 {dimension_numbers = #tpu.dot_dimension_numbers<[1], [0], [0], [1], [0, 0, 1, 1], [], []>} : vector<8x4xf32>, vector<4x4xf32>, vector<8x4xf32> -> vector<8x4xf32>
    %199 = arith.addf %193, %198 : vector<8x4xf32>
    %c1_216 = arith.constant 1 : index
    %c0_217 = arith.constant 0 : index
    %c0_218 = arith.constant 0 : index
    %200 = vector.load %arg8[%c1_216, %c0_217, %c0_218] : memref<9x4x4xf32, #tpu.memory_space<vmem>>, vector<1x4x4xf32>
    %201 = vector.shape_cast %200 : vector<1x4x4xf32> to vector<4x4xf32>
    %cst_219 = arith.constant dense<0.000000e+00> : vector<8x4xf32>
    %202 = tpu.matmul %184, %201, %cst_219 {dimension_numbers = #tpu.dot_dimension_numbers<[1], [0], [0], [1], [0, 0, 1, 1], [], []>} : vector<8x4xf32>, vector<4x4xf32>, vector<8x4xf32> -> vector<8x4xf32>
    %203 = arith.addf %199, %202 : vector<8x4xf32>
    %c2_220 = arith.constant 2 : index
    %c0_221 = arith.constant 0 : index
    %c0_222 = arith.constant 0 : index
    %204 = vector.load %arg8[%c2_220, %c0_221, %c0_222] : memref<9x4x4xf32, #tpu.memory_space<vmem>>, vector<1x4x4xf32>
    %205 = vector.shape_cast %204 : vector<1x4x4xf32> to vector<4x4xf32>
    %cst_223 = arith.constant dense<0.000000e+00> : vector<8x4xf32>
    %206 = tpu.matmul %195, %205, %cst_223 {dimension_numbers = #tpu.dot_dimension_numbers<[1], [0], [0], [1], [0, 0, 1, 1], [], []>} : vector<8x4xf32>, vector<4x4xf32>, vector<8x4xf32> -> vector<8x4xf32>
    %207 = arith.addf %203, %206 : vector<8x4xf32>
    %208 = vector.extract_strided_slice %186 {offsets = [0, 0], sizes = [8, 4], strides = [1, 1]} : vector<9x4xf32> to vector<8x4xf32>
    %209 = vector.extract_strided_slice %186 {offsets = [1, 0], sizes = [8, 4], strides = [1, 1]} : vector<9x4xf32> to vector<8x4xf32>
    %c3_224 = arith.constant 3 : index
    %c0_225 = arith.constant 0 : index
    %c0_226 = arith.constant 0 : index
    %210 = vector.load %arg8[%c3_224, %c0_225, %c0_226] : memref<9x4x4xf32, #tpu.memory_space<vmem>>, vector<1x4x4xf32>
    %211 = vector.shape_cast %210 : vector<1x4x4xf32> to vector<4x4xf32>
    %cst_227 = arith.constant dense<0.000000e+00> : vector<8x4xf32>
    %212 = tpu.matmul %208, %211, %cst_227 {dimension_numbers = #tpu.dot_dimension_numbers<[1], [0], [0], [1], [0, 0, 1, 1], [], []>} : vector<8x4xf32>, vector<4x4xf32>, vector<8x4xf32> -> vector<8x4xf32>
    %213 = arith.addf %207, %212 : vector<8x4xf32>
    %c4_228 = arith.constant 4 : index
    %c0_229 = arith.constant 0 : index
    %c0_230 = arith.constant 0 : index
    %214 = vector.load %arg8[%c4_228, %c0_229, %c0_230] : memref<9x4x4xf32, #tpu.memory_space<vmem>>, vector<1x4x4xf32>
    %215 = vector.shape_cast %214 : vector<1x4x4xf32> to vector<4x4xf32>
    %cst_231 = arith.constant dense<0.000000e+00> : vector<8x4xf32>
    %216 = tpu.matmul %188, %215, %cst_231 {dimension_numbers = #tpu.dot_dimension_numbers<[1], [0], [0], [1], [0, 0, 1, 1], [], []>} : vector<8x4xf32>, vector<4x4xf32>, vector<8x4xf32> -> vector<8x4xf32>
    %217 = arith.addf %213, %216 : vector<8x4xf32>
    %c5_232 = arith.constant 5 : index
    %c0_233 = arith.constant 0 : index
    %c0_234 = arith.constant 0 : index
    %218 = vector.load %arg8[%c5_232, %c0_233, %c0_234] : memref<9x4x4xf32, #tpu.memory_space<vmem>>, vector<1x4x4xf32>
    %219 = vector.shape_cast %218 : vector<1x4x4xf32> to vector<4x4xf32>
    %cst_235 = arith.constant dense<0.000000e+00> : vector<8x4xf32>
    %220 = tpu.matmul %209, %219, %cst_235 {dimension_numbers = #tpu.dot_dimension_numbers<[1], [0], [0], [1], [0, 0, 1, 1], [], []>} : vector<8x4xf32>, vector<4x4xf32>, vector<8x4xf32> -> vector<8x4xf32>
    %221 = arith.addf %217, %220 : vector<8x4xf32>
    %222 = vector.extract_strided_slice %190 {offsets = [0, 0], sizes = [8, 4], strides = [1, 1]} : vector<9x4xf32> to vector<8x4xf32>
    %223 = vector.extract_strided_slice %190 {offsets = [1, 0], sizes = [8, 4], strides = [1, 1]} : vector<9x4xf32> to vector<8x4xf32>
    %c6_236 = arith.constant 6 : index
    %c0_237 = arith.constant 0 : index
    %c0_238 = arith.constant 0 : index
    %224 = vector.load %arg8[%c6_236, %c0_237, %c0_238] : memref<9x4x4xf32, #tpu.memory_space<vmem>>, vector<1x4x4xf32>
    %225 = vector.shape_cast %224 : vector<1x4x4xf32> to vector<4x4xf32>
    %cst_239 = arith.constant dense<0.000000e+00> : vector<8x4xf32>
    %226 = tpu.matmul %222, %225, %cst_239 {dimension_numbers = #tpu.dot_dimension_numbers<[1], [0], [0], [1], [0, 0, 1, 1], [], []>} : vector<8x4xf32>, vector<4x4xf32>, vector<8x4xf32> -> vector<8x4xf32>
    %227 = arith.addf %221, %226 : vector<8x4xf32>
    %c7_240 = arith.constant 7 : index
    %c0_241 = arith.constant 0 : index
    %c0_242 = arith.constant 0 : index
    %228 = vector.load %arg8[%c7_240, %c0_241, %c0_242] : memref<9x4x4xf32, #tpu.memory_space<vmem>>, vector<1x4x4xf32>
    %229 = vector.shape_cast %228 : vector<1x4x4xf32> to vector<4x4xf32>
    %cst_243 = arith.constant dense<0.000000e+00> : vector<8x4xf32>
    %230 = tpu.matmul %192, %229, %cst_243 {dimension_numbers = #tpu.dot_dimension_numbers<[1], [0], [0], [1], [0, 0, 1, 1], [], []>} : vector<8x4xf32>, vector<4x4xf32>, vector<8x4xf32> -> vector<8x4xf32>
    %231 = arith.addf %227, %230 : vector<8x4xf32>
    %c8_244 = arith.constant 8 : index
    %c0_245 = arith.constant 0 : index
    %c0_246 = arith.constant 0 : index
    %232 = vector.load %arg8[%c8_244, %c0_245, %c0_246] : memref<9x4x4xf32, #tpu.memory_space<vmem>>, vector<1x4x4xf32>
    %233 = vector.shape_cast %232 : vector<1x4x4xf32> to vector<4x4xf32>
    %cst_247 = arith.constant dense<0.000000e+00> : vector<8x4xf32>
    %234 = tpu.matmul %223, %233, %cst_247 {dimension_numbers = #tpu.dot_dimension_numbers<[1], [0], [0], [1], [0, 0, 1, 1], [], []>} : vector<8x4xf32>, vector<4x4xf32>, vector<8x4xf32> -> vector<8x4xf32>
    %235 = arith.addf %231, %234 : vector<8x4xf32>
    %236 = vector.broadcast %0 : vector<1x4xf32> to vector<8x4xf32>
    %237 = arith.addf %235, %236 : vector<8x4xf32>
    %c0_248 = arith.constant 0 : index
    %c3_249 = arith.constant 3 : index
    %c0_250 = arith.constant 0 : index
    %c0_251 = arith.constant 0 : index
    %238 = vector.load %arg10[%c0_248, %c3_249, %c0_250, %c0_251] : memref<1x8x8x4xf32, #tpu.memory_space<vmem>>, vector<1x1x8x4xf32>
    %239 = vector.shape_cast %238 : vector<1x1x8x4xf32> to vector<8x4xf32>
    %240 = vector.shape_cast %237 : vector<8x4xf32> to vector<1x1x8x4xf32>
    tpu.vector_store %arg10[%c0_248, %c3_249, %c0_250, %c0_251], %240 {strides = array<i32>} : memref<1x8x8x4xf32, #tpu.memory_space<vmem>>, vector<1x1x8x4xf32>,
    %c0_252 = arith.constant 0 : index
    %c4_253 = arith.constant 4 : index
    %c0_254 = arith.constant 0 : index
    %c0_255 = arith.constant 0 : index
    %241 = vector.load %arg2[%c0_252, %c4_253, %c0_254, %c0_255] : memref<1x8x9x4xf32, #tpu.memory_space<vmem>>, vector<1x1x9x4xf32>
    %242 = vector.shape_cast %241 : vector<1x1x9x4xf32> to vector<9x4xf32>
    %c0_256 = arith.constant 0 : index
    %c4_257 = arith.constant 4 : index
    %c0_258 = arith.constant 0 : index
    %c0_259 = arith.constant 0 : index
    %243 = vector.load %arg3[%c0_256, %c4_257, %c0_258, %c0_259] : memref<1x8x8x4xf32, #tpu.memory_space<vmem>>, vector<1x1x8x4xf32>
    %244 = vector.shape_cast %243 : vector<1x1x8x4xf32> to vector<8x4xf32>
    %c0_260 = arith.constant 0 : index
    %c4_261 = arith.constant 4 : index
    %c0_262 = arith.constant 0 : index
    %c0_263 = arith.constant 0 : index
    %245 = vector.load %arg6[%c0_260, %c4_261, %c0_262, %c0_263] : memref<1x8x9x4xf32, #tpu.memory_space<vmem>>, vector<1x1x9x4xf32>
    %246 = vector.shape_cast %245 : vector<1x1x9x4xf32> to vector<9x4xf32>
    %c0_264 = arith.constant 0 : index
    %c4_265 = arith.constant 4 : index
    %c0_266 = arith.constant 0 : index
    %c0_267 = arith.constant 0 : index
    %247 = vector.load %arg7[%c0_264, %c4_265, %c0_266, %c0_267] : memref<1x8x8x4xf32, #tpu.memory_space<vmem>>, vector<1x1x8x4xf32>
    %248 = vector.shape_cast %247 : vector<1x1x8x4xf32> to vector<8x4xf32>
    %c0_268 = arith.constant 0 : index
    %c5_269 = arith.constant 5 : index
    %c0_270 = arith.constant 0 : index
    %c0_271 = arith.constant 0 : index
    %249 = vector.load %arg2[%c0_268, %c5_269, %c0_270, %c0_271] : memref<1x8x9x4xf32, #tpu.memory_space<vmem>>, vector<1x1x9x4xf32>
    %250 = vector.shape_cast %249 : vector<1x1x9x4xf32> to vector<9x4xf32>
    %c0_272 = arith.constant 0 : index
    %c5_273 = arith.constant 5 : index
    %c0_274 = arith.constant 0 : index
    %c0_275 = arith.constant 0 : index
    %251 = vector.load %arg3[%c0_272, %c5_273, %c0_274, %c0_275] : memref<1x8x8x4xf32, #tpu.memory_space<vmem>>, vector<1x1x8x4xf32>
    %252 = vector.shape_cast %251 : vector<1x1x8x4xf32> to vector<8x4xf32>
    %cst_276 = arith.constant 0.000000e+00 : f32
    %253 = vector.broadcast %cst_276 : f32 to vector<8x4xf32>
    %254 = vector.extract_strided_slice %242 {offsets = [0, 0], sizes = [8, 4], strides = [1, 1]} : vector<9x4xf32> to vector<8x4xf32>
    %255 = vector.extract_strided_slice %242 {offsets = [1, 0], sizes = [8, 4], strides = [1, 1]} : vector<9x4xf32> to vector<8x4xf32>
    %c0_277 = arith.constant 0 : index
    %c0_278 = arith.constant 0 : index
    %c0_279 = arith.constant 0 : index
    %256 = vector.load %arg8[%c0_277, %c0_278, %c0_279] : memref<9x4x4xf32, #tpu.memory_space<vmem>>, vector<1x4x4xf32>
    %257 = vector.shape_cast %256 : vector<1x4x4xf32> to vector<4x4xf32>
    %cst_280 = arith.constant dense<0.000000e+00> : vector<8x4xf32>
    %258 = tpu.matmul %254, %257, %cst_280 {dimension_numbers = #tpu.dot_dimension_numbers<[1], [0], [0], [1], [0, 0, 1, 1], [], []>} : vector<8x4xf32>, vector<4x4xf32>, vector<8x4xf32> -> vector<8x4xf32>
    %259 = arith.addf %253, %258 : vector<8x4xf32>
    %c1_281 = arith.constant 1 : index
    %c0_282 = arith.constant 0 : index
    %c0_283 = arith.constant 0 : index
    %260 = vector.load %arg8[%c1_281, %c0_282, %c0_283] : memref<9x4x4xf32, #tpu.memory_space<vmem>>, vector<1x4x4xf32>
    %261 = vector.shape_cast %260 : vector<1x4x4xf32> to vector<4x4xf32>
    %cst_284 = arith.constant dense<0.000000e+00> : vector<8x4xf32>
    %262 = tpu.matmul %244, %261, %cst_284 {dimension_numbers = #tpu.dot_dimension_numbers<[1], [0], [0], [1], [0, 0, 1, 1], [], []>} : vector<8x4xf32>, vector<4x4xf32>, vector<8x4xf32> -> vector<8x4xf32>
    %263 = arith.addf %259, %262 : vector<8x4xf32>
    %c2_285 = arith.constant 2 : index
    %c0_286 = arith.constant 0 : index
    %c0_287 = arith.constant 0 : index
    %264 = vector.load %arg8[%c2_285, %c0_286, %c0_287] : memref<9x4x4xf32, #tpu.memory_space<vmem>>, vector<1x4x4xf32>
    %265 = vector.shape_cast %264 : vector<1x4x4xf32> to vector<4x4xf32>
    %cst_288 = arith.constant dense<0.000000e+00> : vector<8x4xf32>
    %266 = tpu.matmul %255, %265, %cst_288 {dimension_numbers = #tpu.dot_dimension_numbers<[1], [0], [0], [1], [0, 0, 1, 1], [], []>} : vector<8x4xf32>, vector<4x4xf32>, vector<8x4xf32> -> vector<8x4xf32>
    %267 = arith.addf %263, %266 : vector<8x4xf32>
    %268 = vector.extract_strided_slice %246 {offsets = [0, 0], sizes = [8, 4], strides = [1, 1]} : vector<9x4xf32> to vector<8x4xf32>
    %269 = vector.extract_strided_slice %246 {offsets = [1, 0], sizes = [8, 4], strides = [1, 1]} : vector<9x4xf32> to vector<8x4xf32>
    %c3_289 = arith.constant 3 : index
    %c0_290 = arith.constant 0 : index
    %c0_291 = arith.constant 0 : index
    %270 = vector.load %arg8[%c3_289, %c0_290, %c0_291] : memref<9x4x4xf32, #tpu.memory_space<vmem>>, vector<1x4x4xf32>
    %271 = vector.shape_cast %270 : vector<1x4x4xf32> to vector<4x4xf32>
    %cst_292 = arith.constant dense<0.000000e+00> : vector<8x4xf32>
    %272 = tpu.matmul %268, %271, %cst_292 {dimension_numbers = #tpu.dot_dimension_numbers<[1], [0], [0], [1], [0, 0, 1, 1], [], []>} : vector<8x4xf32>, vector<4x4xf32>, vector<8x4xf32> -> vector<8x4xf32>
    %273 = arith.addf %267, %272 : vector<8x4xf32>
    %c4_293 = arith.constant 4 : index
    %c0_294 = arith.constant 0 : index
    %c0_295 = arith.constant 0 : index
    %274 = vector.load %arg8[%c4_293, %c0_294, %c0_295] : memref<9x4x4xf32, #tpu.memory_space<vmem>>, vector<1x4x4xf32>
    %275 = vector.shape_cast %274 : vector<1x4x4xf32> to vector<4x4xf32>
    %cst_296 = arith.constant dense<0.000000e+00> : vector<8x4xf32>
    %276 = tpu.matmul %248, %275, %cst_296 {dimension_numbers = #tpu.dot_dimension_numbers<[1], [0], [0], [1], [0, 0, 1, 1], [], []>} : vector<8x4xf32>, vector<4x4xf32>, vector<8x4xf32> -> vector<8x4xf32>
    %277 = arith.addf %273, %276 : vector<8x4xf32>
    %c5_297 = arith.constant 5 : index
    %c0_298 = arith.constant 0 : index
    %c0_299 = arith.constant 0 : index
    %278 = vector.load %arg8[%c5_297, %c0_298, %c0_299] : memref<9x4x4xf32, #tpu.memory_space<vmem>>, vector<1x4x4xf32>
    %279 = vector.shape_cast %278 : vector<1x4x4xf32> to vector<4x4xf32>
    %cst_300 = arith.constant dense<0.000000e+00> : vector<8x4xf32>
    %280 = tpu.matmul %269, %279, %cst_300 {dimension_numbers = #tpu.dot_dimension_numbers<[1], [0], [0], [1], [0, 0, 1, 1], [], []>} : vector<8x4xf32>, vector<4x4xf32>, vector<8x4xf32> -> vector<8x4xf32>
    %281 = arith.addf %277, %280 : vector<8x4xf32>
    %282 = vector.extract_strided_slice %250 {offsets = [0, 0], sizes = [8, 4], strides = [1, 1]} : vector<9x4xf32> to vector<8x4xf32>
    %283 = vector.extract_strided_slice %250 {offsets = [1, 0], sizes = [8, 4], strides = [1, 1]} : vector<9x4xf32> to vector<8x4xf32>
    %c6_301 = arith.constant 6 : index
    %c0_302 = arith.constant 0 : index
    %c0_303 = arith.constant 0 : index
    %284 = vector.load %arg8[%c6_301, %c0_302, %c0_303] : memref<9x4x4xf32, #tpu.memory_space<vmem>>, vector<1x4x4xf32>
    %285 = vector.shape_cast %284 : vector<1x4x4xf32> to vector<4x4xf32>
    %cst_304 = arith.constant dense<0.000000e+00> : vector<8x4xf32>
    %286 = tpu.matmul %282, %285, %cst_304 {dimension_numbers = #tpu.dot_dimension_numbers<[1], [0], [0], [1], [0, 0, 1, 1], [], []>} : vector<8x4xf32>, vector<4x4xf32>, vector<8x4xf32> -> vector<8x4xf32>
    %287 = arith.addf %281, %286 : vector<8x4xf32>
    %c7_305 = arith.constant 7 : index
    %c0_306 = arith.constant 0 : index
    %c0_307 = arith.constant 0 : index
    %288 = vector.load %arg8[%c7_305, %c0_306, %c0_307] : memref<9x4x4xf32, #tpu.memory_space<vmem>>, vector<1x4x4xf32>
    %289 = vector.shape_cast %288 : vector<1x4x4xf32> to vector<4x4xf32>
    %cst_308 = arith.constant dense<0.000000e+00> : vector<8x4xf32>
    %290 = tpu.matmul %252, %289, %cst_308 {dimension_numbers = #tpu.dot_dimension_numbers<[1], [0], [0], [1], [0, 0, 1, 1], [], []>} : vector<8x4xf32>, vector<4x4xf32>, vector<8x4xf32> -> vector<8x4xf32>
    %291 = arith.addf %287, %290 : vector<8x4xf32>
    %c8_309 = arith.constant 8 : index
    %c0_310 = arith.constant 0 : index
    %c0_311 = arith.constant 0 : index
    %292 = vector.load %arg8[%c8_309, %c0_310, %c0_311] : memref<9x4x4xf32, #tpu.memory_space<vmem>>, vector<1x4x4xf32>
    %293 = vector.shape_cast %292 : vector<1x4x4xf32> to vector<4x4xf32>
    %cst_312 = arith.constant dense<0.000000e+00> : vector<8x4xf32>
    %294 = tpu.matmul %283, %293, %cst_312 {dimension_numbers = #tpu.dot_dimension_numbers<[1], [0], [0], [1], [0, 0, 1, 1], [], []>} : vector<8x4xf32>, vector<4x4xf32>, vector<8x4xf32> -> vector<8x4xf32>
    %295 = arith.addf %291, %294 : vector<8x4xf32>
    %296 = vector.broadcast %0 : vector<1x4xf32> to vector<8x4xf32>
    %297 = arith.addf %295, %296 : vector<8x4xf32>
    %c0_313 = arith.constant 0 : index
    %c4_314 = arith.constant 4 : index
    %c0_315 = arith.constant 0 : index
    %c0_316 = arith.constant 0 : index
    %298 = vector.load %arg10[%c0_313, %c4_314, %c0_315, %c0_316] : memref<1x8x8x4xf32, #tpu.memory_space<vmem>>, vector<1x1x8x4xf32>
    %299 = vector.shape_cast %298 : vector<1x1x8x4xf32> to vector<8x4xf32>
    %300 = vector.shape_cast %297 : vector<8x4xf32> to vector<1x1x8x4xf32>
    tpu.vector_store %arg10[%c0_313, %c4_314, %c0_315, %c0_316], %300 {strides = array<i32>} : memref<1x8x8x4xf32, #tpu.memory_space<vmem>>, vector<1x1x8x4xf32>,
    %c0_317 = arith.constant 0 : index
    %c5_318 = arith.constant 5 : index
    %c0_319 = arith.constant 0 : index
    %c0_320 = arith.constant 0 : index
    %301 = vector.load %arg2[%c0_317, %c5_318, %c0_319, %c0_320] : memref<1x8x9x4xf32, #tpu.memory_space<vmem>>, vector<1x1x9x4xf32>
    %302 = vector.shape_cast %301 : vector<1x1x9x4xf32> to vector<9x4xf32>
    %c0_321 = arith.constant 0 : index
    %c5_322 = arith.constant 5 : index
    %c0_323 = arith.constant 0 : index
    %c0_324 = arith.constant 0 : index
    %303 = vector.load %arg3[%c0_321, %c5_322, %c0_323, %c0_324] : memref<1x8x8x4xf32, #tpu.memory_space<vmem>>, vector<1x1x8x4xf32>
    %304 = vector.shape_cast %303 : vector<1x1x8x4xf32> to vector<8x4xf32>
    %c0_325 = arith.constant 0 : index
    %c5_326 = arith.constant 5 : index
    %c0_327 = arith.constant 0 : index
    %c0_328 = arith.constant 0 : index
    %305 = vector.load %arg6[%c0_325, %c5_326, %c0_327, %c0_328] : memref<1x8x9x4xf32, #tpu.memory_space<vmem>>, vector<1x1x9x4xf32>
    %306 = vector.shape_cast %305 : vector<1x1x9x4xf32> to vector<9x4xf32>
    %c0_329 = arith.constant 0 : index
    %c5_330 = arith.constant 5 : index
    %c0_331 = arith.constant 0 : index
    %c0_332 = arith.constant 0 : index
    %307 = vector.load %arg7[%c0_329, %c5_330, %c0_331, %c0_332] : memref<1x8x8x4xf32, #tpu.memory_space<vmem>>, vector<1x1x8x4xf32>
    %308 = vector.shape_cast %307 : vector<1x1x8x4xf32> to vector<8x4xf32>
    %c0_333 = arith.constant 0 : index
    %c6_334 = arith.constant 6 : index
    %c0_335 = arith.constant 0 : index
    %c0_336 = arith.constant 0 : index
    %309 = vector.load %arg2[%c0_333, %c6_334, %c0_335, %c0_336] : memref<1x8x9x4xf32, #tpu.memory_space<vmem>>, vector<1x1x9x4xf32>
    %310 = vector.shape_cast %309 : vector<1x1x9x4xf32> to vector<9x4xf32>
    %c0_337 = arith.constant 0 : index
    %c6_338 = arith.constant 6 : index
    %c0_339 = arith.constant 0 : index
    %c0_340 = arith.constant 0 : index
    %311 = vector.load %arg3[%c0_337, %c6_338, %c0_339, %c0_340] : memref<1x8x8x4xf32, #tpu.memory_space<vmem>>, vector<1x1x8x4xf32>
    %312 = vector.shape_cast %311 : vector<1x1x8x4xf32> to vector<8x4xf32>
    %cst_341 = arith.constant 0.000000e+00 : f32
    %313 = vector.broadcast %cst_341 : f32 to vector<8x4xf32>
    %314 = vector.extract_strided_slice %302 {offsets = [0, 0], sizes = [8, 4], strides = [1, 1]} : vector<9x4xf32> to vector<8x4xf32>
    %315 = vector.extract_strided_slice %302 {offsets = [1, 0], sizes = [8, 4], strides = [1, 1]} : vector<9x4xf32> to vector<8x4xf32>
    %c0_342 = arith.constant 0 : index
    %c0_343 = arith.constant 0 : index
    %c0_344 = arith.constant 0 : index
    %316 = vector.load %arg8[%c0_342, %c0_343, %c0_344] : memref<9x4x4xf32, #tpu.memory_space<vmem>>, vector<1x4x4xf32>
    %317 = vector.shape_cast %316 : vector<1x4x4xf32> to vector<4x4xf32>
    %cst_345 = arith.constant dense<0.000000e+00> : vector<8x4xf32>
    %318 = tpu.matmul %314, %317, %cst_345 {dimension_numbers = #tpu.dot_dimension_numbers<[1], [0], [0], [1], [0, 0, 1, 1], [], []>} : vector<8x4xf32>, vector<4x4xf32>, vector<8x4xf32> -> vector<8x4xf32>
    %319 = arith.addf %313, %318 : vector<8x4xf32>
    %c1_346 = arith.constant 1 : index
    %c0_347 = arith.constant 0 : index
    %c0_348 = arith.constant 0 : index
    %320 = vector.load %arg8[%c1_346, %c0_347, %c0_348] : memref<9x4x4xf32, #tpu.memory_space<vmem>>, vector<1x4x4xf32>
    %321 = vector.shape_cast %320 : vector<1x4x4xf32> to vector<4x4xf32>
    %cst_349 = arith.constant dense<0.000000e+00> : vector<8x4xf32>
    %322 = tpu.matmul %304, %321, %cst_349 {dimension_numbers = #tpu.dot_dimension_numbers<[1], [0], [0], [1], [0, 0, 1, 1], [], []>} : vector<8x4xf32>, vector<4x4xf32>, vector<8x4xf32> -> vector<8x4xf32>
    %323 = arith.addf %319, %322 : vector<8x4xf32>
    %c2_350 = arith.constant 2 : index
    %c0_351 = arith.constant 0 : index
    %c0_352 = arith.constant 0 : index
    %324 = vector.load %arg8[%c2_350, %c0_351, %c0_352] : memref<9x4x4xf32, #tpu.memory_space<vmem>>, vector<1x4x4xf32>
    %325 = vector.shape_cast %324 : vector<1x4x4xf32> to vector<4x4xf32>
    %cst_353 = arith.constant dense<0.000000e+00> : vector<8x4xf32>
    %326 = tpu.matmul %315, %325, %cst_353 {dimension_numbers = #tpu.dot_dimension_numbers<[1], [0], [0], [1], [0, 0, 1, 1], [], []>} : vector<8x4xf32>, vector<4x4xf32>, vector<8x4xf32> -> vector<8x4xf32>
    %327 = arith.addf %323, %326 : vector<8x4xf32>
    %328 = vector.extract_strided_slice %306 {offsets = [0, 0], sizes = [8, 4], strides = [1, 1]} : vector<9x4xf32> to vector<8x4xf32>
    %329 = vector.extract_strided_slice %306 {offsets = [1, 0], sizes = [8, 4], strides = [1, 1]} : vector<9x4xf32> to vector<8x4xf32>
    %c3_354 = arith.constant 3 : index
    %c0_355 = arith.constant 0 : index
    %c0_356 = arith.constant 0 : index
    %330 = vector.load %arg8[%c3_354, %c0_355, %c0_356] : memref<9x4x4xf32, #tpu.memory_space<vmem>>, vector<1x4x4xf32>
    %331 = vector.shape_cast %330 : vector<1x4x4xf32> to vector<4x4xf32>
    %cst_357 = arith.constant dense<0.000000e+00> : vector<8x4xf32>
    %332 = tpu.matmul %328, %331, %cst_357 {dimension_numbers = #tpu.dot_dimension_numbers<[1], [0], [0], [1], [0, 0, 1, 1], [], []>} : vector<8x4xf32>, vector<4x4xf32>, vector<8x4xf32> -> vector<8x4xf32>
    %333 = arith.addf %327, %332 : vector<8x4xf32>
    %c4_358 = arith.constant 4 : index
    %c0_359 = arith.constant 0 : index
    %c0_360 = arith.constant 0 : index
    %334 = vector.load %arg8[%c4_358, %c0_359, %c0_360] : memref<9x4x4xf32, #tpu.memory_space<vmem>>, vector<1x4x4xf32>
    %335 = vector.shape_cast %334 : vector<1x4x4xf32> to vector<4x4xf32>
    %cst_361 = arith.constant dense<0.000000e+00> : vector<8x4xf32>
    %336 = tpu.matmul %308, %335, %cst_361 {dimension_numbers = #tpu.dot_dimension_numbers<[1], [0], [0], [1], [0, 0, 1, 1], [], []>} : vector<8x4xf32>, vector<4x4xf32>, vector<8x4xf32> -> vector<8x4xf32>
    %337 = arith.addf %333, %336 : vector<8x4xf32>
    %c5_362 = arith.constant 5 : index
    %c0_363 = arith.constant 0 : index
    %c0_364 = arith.constant 0 : index
    %338 = vector.load %arg8[%c5_362, %c0_363, %c0_364] : memref<9x4x4xf32, #tpu.memory_space<vmem>>, vector<1x4x4xf32>
    %339 = vector.shape_cast %338 : vector<1x4x4xf32> to vector<4x4xf32>
    %cst_365 = arith.constant dense<0.000000e+00> : vector<8x4xf32>
    %340 = tpu.matmul %329, %339, %cst_365 {dimension_numbers = #tpu.dot_dimension_numbers<[1], [0], [0], [1], [0, 0, 1, 1], [], []>} : vector<8x4xf32>, vector<4x4xf32>, vector<8x4xf32> -> vector<8x4xf32>
    %341 = arith.addf %337, %340 : vector<8x4xf32>
    %342 = vector.extract_strided_slice %310 {offsets = [0, 0], sizes = [8, 4], strides = [1, 1]} : vector<9x4xf32> to vector<8x4xf32>
    %343 = vector.extract_strided_slice %310 {offsets = [1, 0], sizes = [8, 4], strides = [1, 1]} : vector<9x4xf32> to vector<8x4xf32>
    %c6_366 = arith.constant 6 : index
    %c0_367 = arith.constant 0 : index
    %c0_368 = arith.constant 0 : index
    %344 = vector.load %arg8[%c6_366, %c0_367, %c0_368] : memref<9x4x4xf32, #tpu.memory_space<vmem>>, vector<1x4x4xf32>
    %345 = vector.shape_cast %344 : vector<1x4x4xf32> to vector<4x4xf32>
    %cst_369 = arith.constant dense<0.000000e+00> : vector<8x4xf32>
    %346 = tpu.matmul %342, %345, %cst_369 {dimension_numbers = #tpu.dot_dimension_numbers<[1], [0], [0], [1], [0, 0, 1, 1], [], []>} : vector<8x4xf32>, vector<4x4xf32>, vector<8x4xf32> -> vector<8x4xf32>
    %347 = arith.addf %341, %346 : vector<8x4xf32>
    %c7_370 = arith.constant 7 : index
    %c0_371 = arith.constant 0 : index
    %c0_372 = arith.constant 0 : index
    %348 = vector.load %arg8[%c7_370, %c0_371, %c0_372] : memref<9x4x4xf32, #tpu.memory_space<vmem>>, vector<1x4x4xf32>
    %349 = vector.shape_cast %348 : vector<1x4x4xf32> to vector<4x4xf32>
    %cst_373 = arith.constant dense<0.000000e+00> : vector<8x4xf32>
    %350 = tpu.matmul %312, %349, %cst_373 {dimension_numbers = #tpu.dot_dimension_numbers<[1], [0], [0], [1], [0, 0, 1, 1], [], []>} : vector<8x4xf32>, vector<4x4xf32>, vector<8x4xf32> -> vector<8x4xf32>
    %351 = arith.addf %347, %350 : vector<8x4xf32>
    %c8_374 = arith.constant 8 : index
    %c0_375 = arith.constant 0 : index
    %c0_376 = arith.constant 0 : index
    %352 = vector.load %arg8[%c8_374, %c0_375, %c0_376] : memref<9x4x4xf32, #tpu.memory_space<vmem>>, vector<1x4x4xf32>
    %353 = vector.shape_cast %352 : vector<1x4x4xf32> to vector<4x4xf32>
    %cst_377 = arith.constant dense<0.000000e+00> : vector<8x4xf32>
    %354 = tpu.matmul %343, %353, %cst_377 {dimension_numbers = #tpu.dot_dimension_numbers<[1], [0], [0], [1], [0, 0, 1, 1], [], []>} : vector<8x4xf32>, vector<4x4xf32>, vector<8x4xf32> -> vector<8x4xf32>
    %355 = arith.addf %351, %354 : vector<8x4xf32>
    %356 = vector.broadcast %0 : vector<1x4xf32> to vector<8x4xf32>
    %357 = arith.addf %355, %356 : vector<8x4xf32>
    %c0_378 = arith.constant 0 : index
    %c5_379 = arith.constant 5 : index
    %c0_380 = arith.constant 0 : index
    %c0_381 = arith.constant 0 : index
    %358 = vector.load %arg10[%c0_378, %c5_379, %c0_380, %c0_381] : memref<1x8x8x4xf32, #tpu.memory_space<vmem>>, vector<1x1x8x4xf32>
    %359 = vector.shape_cast %358 : vector<1x1x8x4xf32> to vector<8x4xf32>
    %360 = vector.shape_cast %357 : vector<8x4xf32> to vector<1x1x8x4xf32>
    tpu.vector_store %arg10[%c0_378, %c5_379, %c0_380, %c0_381], %360 {strides = array<i32>} : memref<1x8x8x4xf32, #tpu.memory_space<vmem>>, vector<1x1x8x4xf32>,
    %c0_382 = arith.constant 0 : index
    %c6_383 = arith.constant 6 : index
    %c0_384 = arith.constant 0 : index
    %c0_385 = arith.constant 0 : index
    %361 = vector.load %arg2[%c0_382, %c6_383, %c0_384, %c0_385] : memref<1x8x9x4xf32, #tpu.memory_space<vmem>>, vector<1x1x9x4xf32>
    %362 = vector.shape_cast %361 : vector<1x1x9x4xf32> to vector<9x4xf32>
    %c0_386 = arith.constant 0 : index
    %c6_387 = arith.constant 6 : index
    %c0_388 = arith.constant 0 : index
    %c0_389 = arith.constant 0 : index
    %363 = vector.load %arg3[%c0_386, %c6_387, %c0_388, %c0_389] : memref<1x8x8x4xf32, #tpu.memory_space<vmem>>, vector<1x1x8x4xf32>
    %364 = vector.shape_cast %363 : vector<1x1x8x4xf32> to vector<8x4xf32>
    %c0_390 = arith.constant 0 : index
    %c6_391 = arith.constant 6 : index
    %c0_392 = arith.constant 0 : index
    %c0_393 = arith.constant 0 : index
    %365 = vector.load %arg6[%c0_390, %c6_391, %c0_392, %c0_393] : memref<1x8x9x4xf32, #tpu.memory_space<vmem>>, vector<1x1x9x4xf32>
    %366 = vector.shape_cast %365 : vector<1x1x9x4xf32> to vector<9x4xf32>
    %c0_394 = arith.constant 0 : index
    %c6_395 = arith.constant 6 : index
    %c0_396 = arith.constant 0 : index
    %c0_397 = arith.constant 0 : index
    %367 = vector.load %arg7[%c0_394, %c6_395, %c0_396, %c0_397] : memref<1x8x8x4xf32, #tpu.memory_space<vmem>>, vector<1x1x8x4xf32>
    %368 = vector.shape_cast %367 : vector<1x1x8x4xf32> to vector<8x4xf32>
    %c0_398 = arith.constant 0 : index
    %c7_399 = arith.constant 7 : index
    %c0_400 = arith.constant 0 : index
    %c0_401 = arith.constant 0 : index
    %369 = vector.load %arg2[%c0_398, %c7_399, %c0_400, %c0_401] : memref<1x8x9x4xf32, #tpu.memory_space<vmem>>, vector<1x1x9x4xf32>
    %370 = vector.shape_cast %369 : vector<1x1x9x4xf32> to vector<9x4xf32>
    %c0_402 = arith.constant 0 : index
    %c7_403 = arith.constant 7 : index
    %c0_404 = arith.constant 0 : index
    %c0_405 = arith.constant 0 : index
    %371 = vector.load %arg3[%c0_402, %c7_403, %c0_404, %c0_405] : memref<1x8x8x4xf32, #tpu.memory_space<vmem>>, vector<1x1x8x4xf32>
    %372 = vector.shape_cast %371 : vector<1x1x8x4xf32> to vector<8x4xf32>
    %cst_406 = arith.constant 0.000000e+00 : f32
    %373 = vector.broadcast %cst_406 : f32 to vector<8x4xf32>
    %374 = vector.extract_strided_slice %362 {offsets = [0, 0], sizes = [8, 4], strides = [1, 1]} : vector<9x4xf32> to vector<8x4xf32>
    %375 = vector.extract_strided_slice %362 {offsets = [1, 0], sizes = [8, 4], strides = [1, 1]} : vector<9x4xf32> to vector<8x4xf32>
    %c0_407 = arith.constant 0 : index
    %c0_408 = arith.constant 0 : index
    %c0_409 = arith.constant 0 : index
    %376 = vector.load %arg8[%c0_407, %c0_408, %c0_409] : memref<9x4x4xf32, #tpu.memory_space<vmem>>, vector<1x4x4xf32>
    %377 = vector.shape_cast %376 : vector<1x4x4xf32> to vector<4x4xf32>
    %cst_410 = arith.constant dense<0.000000e+00> : vector<8x4xf32>
    %378 = tpu.matmul %374, %377, %cst_410 {dimension_numbers = #tpu.dot_dimension_numbers<[1], [0], [0], [1], [0, 0, 1, 1], [], []>} : vector<8x4xf32>, vector<4x4xf32>, vector<8x4xf32> -> vector<8x4xf32>
    %379 = arith.addf %373, %378 : vector<8x4xf32>
    %c1_411 = arith.constant 1 : index
    %c0_412 = arith.constant 0 : index
    %c0_413 = arith.constant 0 : index
    %380 = vector.load %arg8[%c1_411, %c0_412, %c0_413] : memref<9x4x4xf32, #tpu.memory_space<vmem>>, vector<1x4x4xf32>
    %381 = vector.shape_cast %380 : vector<1x4x4xf32> to vector<4x4xf32>
    %cst_414 = arith.constant dense<0.000000e+00> : vector<8x4xf32>
    %382 = tpu.matmul %364, %381, %cst_414 {dimension_numbers = #tpu.dot_dimension_numbers<[1], [0], [0], [1], [0, 0, 1, 1], [], []>} : vector<8x4xf32>, vector<4x4xf32>, vector<8x4xf32> -> vector<8x4xf32>
    %383 = arith.addf %379, %382 : vector<8x4xf32>
    %c2_415 = arith.constant 2 : index
    %c0_416 = arith.constant 0 : index
    %c0_417 = arith.constant 0 : index
    %384 = vector.load %arg8[%c2_415, %c0_416, %c0_417] : memref<9x4x4xf32, #tpu.memory_space<vmem>>, vector<1x4x4xf32>
    %385 = vector.shape_cast %384 : vector<1x4x4xf32> to vector<4x4xf32>
    %cst_418 = arith.constant dense<0.000000e+00> : vector<8x4xf32>
    %386 = tpu.matmul %375, %385, %cst_418 {dimension_numbers = #tpu.dot_dimension_numbers<[1], [0], [0], [1], [0, 0, 1, 1], [], []>} : vector<8x4xf32>, vector<4x4xf32>, vector<8x4xf32> -> vector<8x4xf32>
    %387 = arith.addf %383, %386 : vector<8x4xf32>
    %388 = vector.extract_strided_slice %366 {offsets = [0, 0], sizes = [8, 4], strides = [1, 1]} : vector<9x4xf32> to vector<8x4xf32>
    %389 = vector.extract_strided_slice %366 {offsets = [1, 0], sizes = [8, 4], strides = [1, 1]} : vector<9x4xf32> to vector<8x4xf32>
    %c3_419 = arith.constant 3 : index
    %c0_420 = arith.constant 0 : index
    %c0_421 = arith.constant 0 : index
    %390 = vector.load %arg8[%c3_419, %c0_420, %c0_421] : memref<9x4x4xf32, #tpu.memory_space<vmem>>, vector<1x4x4xf32>
    %391 = vector.shape_cast %390 : vector<1x4x4xf32> to vector<4x4xf32>
    %cst_422 = arith.constant dense<0.000000e+00> : vector<8x4xf32>
    %392 = tpu.matmul %388, %391, %cst_422 {dimension_numbers = #tpu.dot_dimension_numbers<[1], [0], [0], [1], [0, 0, 1, 1], [], []>} : vector<8x4xf32>, vector<4x4xf32>, vector<8x4xf32> -> vector<8x4xf32>
    %393 = arith.addf %387, %392 : vector<8x4xf32>
    %c4_423 = arith.constant 4 : index
    %c0_424 = arith.constant 0 : index
    %c0_425 = arith.constant 0 : index
    %394 = vector.load %arg8[%c4_423, %c0_424, %c0_425] : memref<9x4x4xf32, #tpu.memory_space<vmem>>, vector<1x4x4xf32>
    %395 = vector.shape_cast %394 : vector<1x4x4xf32> to vector<4x4xf32>
    %cst_426 = arith.constant dense<0.000000e+00> : vector<8x4xf32>
    %396 = tpu.matmul %368, %395, %cst_426 {dimension_numbers = #tpu.dot_dimension_numbers<[1], [0], [0], [1], [0, 0, 1, 1], [], []>} : vector<8x4xf32>, vector<4x4xf32>, vector<8x4xf32> -> vector<8x4xf32>
    %397 = arith.addf %393, %396 : vector<8x4xf32>
    %c5_427 = arith.constant 5 : index
    %c0_428 = arith.constant 0 : index
    %c0_429 = arith.constant 0 : index
    %398 = vector.load %arg8[%c5_427, %c0_428, %c0_429] : memref<9x4x4xf32, #tpu.memory_space<vmem>>, vector<1x4x4xf32>
    %399 = vector.shape_cast %398 : vector<1x4x4xf32> to vector<4x4xf32>
    %cst_430 = arith.constant dense<0.000000e+00> : vector<8x4xf32>
    %400 = tpu.matmul %389, %399, %cst_430 {dimension_numbers = #tpu.dot_dimension_numbers<[1], [0], [0], [1], [0, 0, 1, 1], [], []>} : vector<8x4xf32>, vector<4x4xf32>, vector<8x4xf32> -> vector<8x4xf32>
    %401 = arith.addf %397, %400 : vector<8x4xf32>
    %402 = vector.extract_strided_slice %370 {offsets = [0, 0], sizes = [8, 4], strides = [1, 1]} : vector<9x4xf32> to vector<8x4xf32>
    %403 = vector.extract_strided_slice %370 {offsets = [1, 0], sizes = [8, 4], strides = [1, 1]} : vector<9x4xf32> to vector<8x4xf32>
    %c6_431 = arith.constant 6 : index
    %c0_432 = arith.constant 0 : index
    %c0_433 = arith.constant 0 : index
    %404 = vector.load %arg8[%c6_431, %c0_432, %c0_433] : memref<9x4x4xf32, #tpu.memory_space<vmem>>, vector<1x4x4xf32>
    %405 = vector.shape_cast %404 : vector<1x4x4xf32> to vector<4x4xf32>
    %cst_434 = arith.constant dense<0.000000e+00> : vector<8x4xf32>
    %406 = tpu.matmul %402, %405, %cst_434 {dimension_numbers = #tpu.dot_dimension_numbers<[1], [0], [0], [1], [0, 0, 1, 1], [], []>} : vector<8x4xf32>, vector<4x4xf32>, vector<8x4xf32> -> vector<8x4xf32>
    %407 = arith.addf %401, %406 : vector<8x4xf32>
    %c7_435 = arith.constant 7 : index
    %c0_436 = arith.constant 0 : index
    %c0_437 = arith.constant 0 : index
    %408 = vector.load %arg8[%c7_435, %c0_436, %c0_437] : memref<9x4x4xf32, #tpu.memory_space<vmem>>, vector<1x4x4xf32>
    %409 = vector.shape_cast %408 : vector<1x4x4xf32> to vector<4x4xf32>
    %cst_438 = arith.constant dense<0.000000e+00> : vector<8x4xf32>
    %410 = tpu.matmul %372, %409, %cst_438 {dimension_numbers = #tpu.dot_dimension_numbers<[1], [0], [0], [1], [0, 0, 1, 1], [], []>} : vector<8x4xf32>, vector<4x4xf32>, vector<8x4xf32> -> vector<8x4xf32>
    %411 = arith.addf %407, %410 : vector<8x4xf32>
    %c8_439 = arith.constant 8 : index
    %c0_440 = arith.constant 0 : index
    %c0_441 = arith.constant 0 : index
    %412 = vector.load %arg8[%c8_439, %c0_440, %c0_441] : memref<9x4x4xf32, #tpu.memory_space<vmem>>, vector<1x4x4xf32>
    %413 = vector.shape_cast %412 : vector<1x4x4xf32> to vector<4x4xf32>
    %cst_442 = arith.constant dense<0.000000e+00> : vector<8x4xf32>
    %414 = tpu.matmul %403, %413, %cst_442 {dimension_numbers = #tpu.dot_dimension_numbers<[1], [0], [0], [1], [0, 0, 1, 1], [], []>} : vector<8x4xf32>, vector<4x4xf32>, vector<8x4xf32> -> vector<8x4xf32>
    %415 = arith.addf %411, %414 : vector<8x4xf32>
    %416 = vector.broadcast %0 : vector<1x4xf32> to vector<8x4xf32>
    %417 = arith.addf %415, %416 : vector<8x4xf32>
    %c0_443 = arith.constant 0 : index
    %c6_444 = arith.constant 6 : index
    %c0_445 = arith.constant 0 : index
    %c0_446 = arith.constant 0 : index
    %418 = vector.load %arg10[%c0_443, %c6_444, %c0_445, %c0_446] : memref<1x8x8x4xf32, #tpu.memory_space<vmem>>, vector<1x1x8x4xf32>
    %419 = vector.shape_cast %418 : vector<1x1x8x4xf32> to vector<8x4xf32>
    %420 = vector.shape_cast %417 : vector<8x4xf32> to vector<1x1x8x4xf32>
    tpu.vector_store %arg10[%c0_443, %c6_444, %c0_445, %c0_446], %420 {strides = array<i32>} : memref<1x8x8x4xf32, #tpu.memory_space<vmem>>, vector<1x1x8x4xf32>,
    %c0_447 = arith.constant 0 : index
    %c7_448 = arith.constant 7 : index
    %c0_449 = arith.constant 0 : index
    %c0_450 = arith.constant 0 : index
    %421 = vector.load %arg2[%c0_447, %c7_448, %c0_449, %c0_450] : memref<1x8x9x4xf32, #tpu.memory_space<vmem>>, vector<1x1x9x4xf32>
    %422 = vector.shape_cast %421 : vector<1x1x9x4xf32> to vector<9x4xf32>
    %c0_451 = arith.constant 0 : index
    %c7_452 = arith.constant 7 : index
    %c0_453 = arith.constant 0 : index
    %c0_454 = arith.constant 0 : index
    %423 = vector.load %arg3[%c0_451, %c7_452, %c0_453, %c0_454] : memref<1x8x8x4xf32, #tpu.memory_space<vmem>>, vector<1x1x8x4xf32>
    %424 = vector.shape_cast %423 : vector<1x1x8x4xf32> to vector<8x4xf32>
    %c0_455 = arith.constant 0 : index
    %c7_456 = arith.constant 7 : index
    %c0_457 = arith.constant 0 : index
    %c0_458 = arith.constant 0 : index
    %425 = vector.load %arg6[%c0_455, %c7_456, %c0_457, %c0_458] : memref<1x8x9x4xf32, #tpu.memory_space<vmem>>, vector<1x1x9x4xf32>
    %426 = vector.shape_cast %425 : vector<1x1x9x4xf32> to vector<9x4xf32>
    %c0_459 = arith.constant 0 : index
    %c7_460 = arith.constant 7 : index
    %c0_461 = arith.constant 0 : index
    %c0_462 = arith.constant 0 : index
    %427 = vector.load %arg7[%c0_459, %c7_460, %c0_461, %c0_462] : memref<1x8x8x4xf32, #tpu.memory_space<vmem>>, vector<1x1x8x4xf32>
    %428 = vector.shape_cast %427 : vector<1x1x8x4xf32> to vector<8x4xf32>
    %c0_463 = arith.constant 0 : index
    %c0_464 = arith.constant 0 : index
    %c0_465 = arith.constant 0 : index
    %c0_466 = arith.constant 0 : index
    %429 = vector.load %arg4[%c0_463, %c0_464, %c0_465, %c0_466] : memref<1x1x9x4xf32, #tpu.memory_space<vmem>>, vector<1x1x9x4xf32>
    %430 = vector.shape_cast %429 : vector<1x1x9x4xf32> to vector<9x4xf32>
    %c0_467 = arith.constant 0 : index
    %c0_468 = arith.constant 0 : index
    %c0_469 = arith.constant 0 : index
    %c0_470 = arith.constant 0 : index
    %431 = vector.load %arg5[%c0_467, %c0_468, %c0_469, %c0_470] : memref<1x1x8x4xf32, #tpu.memory_space<vmem>>, vector<1x1x8x4xf32>
    %432 = vector.shape_cast %431 : vector<1x1x8x4xf32> to vector<8x4xf32>
    %cst_471 = arith.constant 0.000000e+00 : f32
    %433 = vector.broadcast %cst_471 : f32 to vector<8x4xf32>
    %434 = vector.extract_strided_slice %422 {offsets = [0, 0], sizes = [8, 4], strides = [1, 1]} : vector<9x4xf32> to vector<8x4xf32>
    %435 = vector.extract_strided_slice %422 {offsets = [1, 0], sizes = [8, 4], strides = [1, 1]} : vector<9x4xf32> to vector<8x4xf32>
    %c0_472 = arith.constant 0 : index
    %c0_473 = arith.constant 0 : index
    %c0_474 = arith.constant 0 : index
    %436 = vector.load %arg8[%c0_472, %c0_473, %c0_474] : memref<9x4x4xf32, #tpu.memory_space<vmem>>, vector<1x4x4xf32>
    %437 = vector.shape_cast %436 : vector<1x4x4xf32> to vector<4x4xf32>
    %cst_475 = arith.constant dense<0.000000e+00> : vector<8x4xf32>
    %438 = tpu.matmul %434, %437, %cst_475 {dimension_numbers = #tpu.dot_dimension_numbers<[1], [0], [0], [1], [0, 0, 1, 1], [], []>} : vector<8x4xf32>, vector<4x4xf32>, vector<8x4xf32> -> vector<8x4xf32>
    %439 = arith.addf %433, %438 : vector<8x4xf32>
    %c1_476 = arith.constant 1 : index
    %c0_477 = arith.constant 0 : index
    %c0_478 = arith.constant 0 : index
    %440 = vector.load %arg8[%c1_476, %c0_477, %c0_478] : memref<9x4x4xf32, #tpu.memory_space<vmem>>, vector<1x4x4xf32>
    %441 = vector.shape_cast %440 : vector<1x4x4xf32> to vector<4x4xf32>
    %cst_479 = arith.constant dense<0.000000e+00> : vector<8x4xf32>
    %442 = tpu.matmul %424, %441, %cst_479 {dimension_numbers = #tpu.dot_dimension_numbers<[1], [0], [0], [1], [0, 0, 1, 1], [], []>} : vector<8x4xf32>, vector<4x4xf32>, vector<8x4xf32> -> vector<8x4xf32>
    %443 = arith.addf %439, %442 : vector<8x4xf32>
    %c2_480 = arith.constant 2 : index
    %c0_481 = arith.constant 0 : index
    %c0_482 = arith.constant 0 : index
    %444 = vector.load %arg8[%c2_480, %c0_481, %c0_482] : memref<9x4x4xf32, #tpu.memory_space<vmem>>, vector<1x4x4xf32>
    %445 = vector.shape_cast %444 : vector<1x4x4xf32> to vector<4x4xf32>
    %cst_483 = arith.constant dense<0.000000e+00> : vector<8x4xf32>
    %446 = tpu.matmul %435, %445, %cst_483 {dimension_numbers = #tpu.dot_dimension_numbers<[1], [0], [0], [1], [0, 0, 1, 1], [], []>} : vector<8x4xf32>, vector<4x4xf32>, vector<8x4xf32> -> vector<8x4xf32>
    %447 = arith.addf %443, %446 : vector<8x4xf32>
    %448 = vector.extract_strided_slice %426 {offsets = [0, 0], sizes = [8, 4], strides = [1, 1]} : vector<9x4xf32> to vector<8x4xf32>
    %449 = vector.extract_strided_slice %426 {offsets = [1, 0], sizes = [8, 4], strides = [1, 1]} : vector<9x4xf32> to vector<8x4xf32>
    %c3_484 = arith.constant 3 : index
    %c0_485 = arith.constant 0 : index
    %c0_486 = arith.constant 0 : index
    %450 = vector.load %arg8[%c3_484, %c0_485, %c0_486] : memref<9x4x4xf32, #tpu.memory_space<vmem>>, vector<1x4x4xf32>
    %451 = vector.shape_cast %450 : vector<1x4x4xf32> to vector<4x4xf32>
    %cst_487 = arith.constant dense<0.000000e+00> : vector<8x4xf32>
    %452 = tpu.matmul %448, %451, %cst_487 {dimension_numbers = #tpu.dot_dimension_numbers<[1], [0], [0], [1], [0, 0, 1, 1], [], []>} : vector<8x4xf32>, vector<4x4xf32>, vector<8x4xf32> -> vector<8x4xf32>
    %453 = arith.addf %447, %452 : vector<8x4xf32>
    %c4_488 = arith.constant 4 : index
    %c0_489 = arith.constant 0 : index
    %c0_490 = arith.constant 0 : index
    %454 = vector.load %arg8[%c4_488, %c0_489, %c0_490] : memref<9x4x4xf32, #tpu.memory_space<vmem>>, vector<1x4x4xf32>
    %455 = vector.shape_cast %454 : vector<1x4x4xf32> to vector<4x4xf32>
    %cst_491 = arith.constant dense<0.000000e+00> : vector<8x4xf32>
    %456 = tpu.matmul %428, %455, %cst_491 {dimension_numbers = #tpu.dot_dimension_numbers<[1], [0], [0], [1], [0, 0, 1, 1], [], []>} : vector<8x4xf32>, vector<4x4xf32>, vector<8x4xf32> -> vector<8x4xf32>
    %457 = arith.addf %453, %456 : vector<8x4xf32>
    %c5_492 = arith.constant 5 : index
    %c0_493 = arith.constant 0 : index
    %c0_494 = arith.constant 0 : index
    %458 = vector.load %arg8[%c5_492, %c0_493, %c0_494] : memref<9x4x4xf32, #tpu.memory_space<vmem>>, vector<1x4x4xf32>
    %459 = vector.shape_cast %458 : vector<1x4x4xf32> to vector<4x4xf32>
    %cst_495 = arith.constant dense<0.000000e+00> : vector<8x4xf32>
    %460 = tpu.matmul %449, %459, %cst_495 {dimension_numbers = #tpu.dot_dimension_numbers<[1], [0], [0], [1], [0, 0, 1, 1], [], []>} : vector<8x4xf32>, vector<4x4xf32>, vector<8x4xf32> -> vector<8x4xf32>
    %461 = arith.addf %457, %460 : vector<8x4xf32>
    %462 = vector.extract_strided_slice %430 {offsets = [0, 0], sizes = [8, 4], strides = [1, 1]} : vector<9x4xf32> to vector<8x4xf32>
    %463 = vector.extract_strided_slice %430 {offsets = [1, 0], sizes = [8, 4], strides = [1, 1]} : vector<9x4xf32> to vector<8x4xf32>
    %c6_496 = arith.constant 6 : index
    %c0_497 = arith.constant 0 : index
    %c0_498 = arith.constant 0 : index
    %464 = vector.load %arg8[%c6_496, %c0_497, %c0_498] : memref<9x4x4xf32, #tpu.memory_space<vmem>>, vector<1x4x4xf32>
    %465 = vector.shape_cast %464 : vector<1x4x4xf32> to vector<4x4xf32>
    %cst_499 = arith.constant dense<0.000000e+00> : vector<8x4xf32>
    %466 = tpu.matmul %462, %465, %cst_499 {dimension_numbers = #tpu.dot_dimension_numbers<[1], [0], [0], [1], [0, 0, 1, 1], [], []>} : vector<8x4xf32>, vector<4x4xf32>, vector<8x4xf32> -> vector<8x4xf32>
    %467 = arith.addf %461, %466 : vector<8x4xf32>
    %c7_500 = arith.constant 7 : index
    %c0_501 = arith.constant 0 : index
    %c0_502 = arith.constant 0 : index
    %468 = vector.load %arg8[%c7_500, %c0_501, %c0_502] : memref<9x4x4xf32, #tpu.memory_space<vmem>>, vector<1x4x4xf32>
    %469 = vector.shape_cast %468 : vector<1x4x4xf32> to vector<4x4xf32>
    %cst_503 = arith.constant dense<0.000000e+00> : vector<8x4xf32>
    %470 = tpu.matmul %432, %469, %cst_503 {dimension_numbers = #tpu.dot_dimension_numbers<[1], [0], [0], [1], [0, 0, 1, 1], [], []>} : vector<8x4xf32>, vector<4x4xf32>, vector<8x4xf32> -> vector<8x4xf32>
    %471 = arith.addf %467, %470 : vector<8x4xf32>
    %c8_504 = arith.constant 8 : index
    %c0_505 = arith.constant 0 : index
    %c0_506 = arith.constant 0 : index
    %472 = vector.load %arg8[%c8_504, %c0_505, %c0_506] : memref<9x4x4xf32, #tpu.memory_space<vmem>>, vector<1x4x4xf32>
    %473 = vector.shape_cast %472 : vector<1x4x4xf32> to vector<4x4xf32>
    %cst_507 = arith.constant dense<0.000000e+00> : vector<8x4xf32>
    %474 = tpu.matmul %463, %473, %cst_507 {dimension_numbers = #tpu.dot_dimension_numbers<[1], [0], [0], [1], [0, 0, 1, 1], [], []>} : vector<8x4xf32>, vector<4x4xf32>, vector<8x4xf32> -> vector<8x4xf32>
    %475 = arith.addf %471, %474 : vector<8x4xf32>
    %476 = vector.broadcast %0 : vector<1x4xf32> to vector<8x4xf32>
    %477 = arith.addf %475, %476 : vector<8x4xf32>
    %c0_508 = arith.constant 0 : index
    %c7_509 = arith.constant 7 : index
    %c0_510 = arith.constant 0 : index
    %c0_511 = arith.constant 0 : index
    %478 = vector.load %arg10[%c0_508, %c7_509, %c0_510, %c0_511] : memref<1x8x8x4xf32, #tpu.memory_space<vmem>>, vector<1x1x8x4xf32>
    %479 = vector.shape_cast %478 : vector<1x1x8x4xf32> to vector<8x4xf32>
    %480 = vector.shape_cast %477 : vector<8x4xf32> to vector<1x1x8x4xf32>
    tpu.vector_store %arg10[%c0_508, %c7_509, %c0_510, %c0_511], %480 {strides = array<i32>} : memref<1x8x8x4xf32, #tpu.memory_space<vmem>>, vector<1x1x8x4xf32>,
    return
  }
  func.func @transform_0(%arg0: i32, %arg1: i32) -> (i32, i32, i32, i32) {
    %c0_i32 = arith.constant 0 : i32
    %c0_i32_0 = arith.constant 0 : i32
    %c0_i32_1 = arith.constant 0 : i32
    return %arg0, %arg1, %c0_i32, %c0_i32_0 : i32, i32, i32, i32
  }
  func.func @transform_1(%arg0: i32, %arg1: i32) -> (i32, i32, i32, i32) {
    %c0_i32 = arith.constant 0 : i32
    %c0_i32_0 = arith.constant 0 : i32
    %c0_i32_1 = arith.constant 0 : i32
    return %arg0, %arg1, %c0_i32, %c0_i32_0 : i32, i32, i32, i32
  }
  func.func @transform_2(%arg0: i32, %arg1: i32) -> (i32, i32, i32, i32) {
    %c1_i32 = arith.constant 1 : i32
    %0 = arith.addi %arg1, %c1_i32 : i32
    %c8_i32 = arith.constant 8 : i32
    %1 = arith.muli %0, %c8_i32 : i32
    %c0_i32 = arith.constant 0 : i32
    %c0_i32_0 = arith.constant 0 : i32
    %c0_i32_1 = arith.constant 0 : i32
    return %arg0, %1, %c0_i32, %c0_i32_0 : i32, i32, i32, i32
  }
  func.func @transform_3(%arg0: i32, %arg1: i32) -> (i32, i32, i32, i32) {
    %c1_i32 = arith.constant 1 : i32
    %0 = arith.addi %arg1, %c1_i32 : i32
    %c8_i32 = arith.constant 8 : i32
    %1 = arith.muli %0, %c8_i32 : i32
    %c0_i32 = arith.constant 0 : i32
    %c0_i32_0 = arith.constant 0 : i32
    %c0_i32_1 = arith.constant 0 : i32
    return %arg0, %1, %c0_i32, %c0_i32_0 : i32, i32, i32, i32
  }
  func.func @transform_4(%arg0: i32, %arg1: i32) -> (i32, i32, i32, i32) {
    %c0_i32 = arith.constant 0 : i32
    %c0_i32_0 = arith.constant 0 : i32
    %c0_i32_1 = arith.constant 0 : i32
    return %arg0, %arg1, %c0_i32, %c0_i32_0 : i32, i32, i32, i32
  }
  func.func @transform_5(%arg0: i32, %arg1: i32) -> (i32, i32, i32, i32) {
    %c0_i32 = arith.constant 0 : i32
    %c0_i32_0 = arith.constant 0 : i32
    %c0_i32_1 = arith.constant 0 : i32
    return %arg0, %arg1, %c0_i32, %c0_i32_0 : i32, i32, i32, i32
  }
  func.func @transform_6(%arg0: i32, %arg1: i32) -> (i32, i32, i32) {
    %c0_i32 = arith.constant 0 : i32
    %c0_i32_0 = arith.constant 0 : i32
    %c0_i32_1 = arith.constant 0 : i32
    %c0_i32_2 = arith.constant 0 : i32
    return %c0_i32, %c0_i32_0, %c0_i32_1 : i32, i32, i32
  }
  func.func @transform_7(%arg0: i32, %arg1: i32) -> (i32, i32) {
    %c0_i32 = arith.constant 0 : i32
    %c0_i32_0 = arith.constant 0 : i32
    %c0_i32_1 = arith.constant 0 : i32
    return %c0_i32, %c0_i32_0 : i32, i32
  }
  func.func @transform_8(%arg0: i32, %arg1: i32) -> (i32, i32, i32, i32) {
    %c0_i32 = arith.constant 0 : i32
    %c0_i32_0 = arith.constant 0 : i32
    %c0_i32_1 = arith.constant 0 : i32
    return %arg0, %arg1, %c0_i32, %c0_i32_0 : i32, i32, i32, i32
  }
}

</mosaic_0001>

<llo_original>
// kernel: downsample_with_conv.1
$region0: #{downsample_with_conv.1}
  #allocation0 [shape = 'u32[]', space=smem, size = 0x4, offset = 0x4, fixed_abs, tag = 'smem constant byte address 0x4 - core index']
  #allocation1 [shape = 'u32[144,128]{1,0:T(1,128)}', space=vmem, size = 0x12000, scoped, tag = 'internal scratch']
  %s0 = inlined_call_operand.vmem [shape: f32[2,9,9,4], index: 0, kind: input, shape index: {}, may-alias: {0,2}]
  %s1 = inlined_call_operand.vmem [shape: f32[2,9,8,4], index: 1, kind: input, shape index: {}, may-alias: {1,3}]
  %s2 = inlined_call_operand.vmem [shape: f32[2,9,9,4], index: 2, kind: input, shape index: {}, may-alias: {0,2}]
  %s3 = inlined_call_operand.vmem [shape: f32[2,9,8,4], index: 3, kind: input, shape index: {}, may-alias: {1,3}]
  %s4 = inlined_call_operand.vmem [shape: f32[2,8,9,4], index: 4, kind: input, shape index: {}]
  %s5 = inlined_call_operand.vmem [shape: f32[2,8,8,4], index: 5, kind: input, shape index: {}]
  %s6 = inlined_call_operand.vmem [shape: f32[9,4,4], index: 6, kind: input, shape index: {}]
  %s7 = inlined_call_operand.vmem [shape: f32[1,4], index: 7, kind: input, shape index: {}]
  %s8 = inlined_call_operand.vmem [shape: f32[2,8,8,4], index: 8, kind: output, shape index: {}]
  %s9 = sld [smem:[#allocation0]]
  $region65: #{downsample_with_conv.1} parent=0
    _
  %s11 = ssub.s32 1, %s9
  %s12 = scalar_select 0, %s11, %s9
  loop: start=0, step=1, limit=4
  $region2: #{downsample_with_conv.1} parent=0 // loop_pre_header
    _
  $region3: #{downsample_with_conv.1} parent=0 // loop_header
    %s14 = sphi 0, %s18
    %p15 = scmp.ge.s32.totalorder %s14, 4
    %s21 = sphi 0, %s33
    %s22 = sphi 0, %s29
    %s23 = sphi 0, %s21
    %s24 = sphi 0, %s22
    %s25 = sphi 0, %s23
    %s26 = sphi 0, %s24
    %s38 = sphi 0, %s40
    %s41 = sphi 0, %s38
    %s42 = sphi 0, %s41
    %s58 = sphi 0, %s42
    %s66 = sphi 0, %s68
    %s69 = sphi 0, %s66
    %s70 = sphi 0, %s69
    %s86 = sphi 0, %s70
    %s98 = sphi 0, %s100
    %s101 = sphi 0, %s98
    %s102 = sphi 0, %s101
    %s118 = sphi 0, %s102
    %s130 = sphi 0, %s132
    %s133 = sphi 0, %s130
    %s134 = sphi 0, %s133
    %s150 = sphi 0, %s134
    %s158 = sphi 0, %s160
    %s161 = sphi 0, %s158
    %s162 = sphi 0, %s161
    %s178 = sphi 0, %s162
    %s186 = sphi 0, %s188
    %s189 = sphi 0, %s186
    %s190 = sphi 0, %s189
    %s206 = sphi 0, %s190
    %s210 = sphi 0, %s210
    %s212 = sphi 0, %s210
    %s213 = sphi 0, %s212
    %s227 = sphi 0, %s213
    %s231 = sphi 0, %s231
    %s233 = sphi 0, %s231
    %s234 = sphi 0, %s233
    %s248 = sphi 0, %s234
    %s256 = sphi 0, %s258
    %s259 = sphi 0, %s256
    %s260 = sphi 0, %s259
    %s276 = sphi 0, %s260
  $region4: #{downsample_with_conv.1} parent=0 // loop_header_branch
    %17 = sbr.rel (%p15) target = $region8
  $region5: #{downsample_with_conv.1} parent=0 // loop_body
    %s19 = ssub.s32 %s14, 1
    %s20 = ssub.s32 %s14, 2
    %s27 = sadd.s32 1, %s22
    %p28 = scmp.ge.s32.totalorder %s27, 1
    %s29 = scalar_select %p28, 0, %s27
    %s30 = sadd.s32 1, %s21
    %s31 = scalar_select %p28, %s30, %s21
    %p32 = scmp.ge.s32.totalorder %s31, 2
    %s33 = scalar_select %p32, 0, %s31
    %s34 = ssub.s32 %s21, %s33
    %s35 = ssub.s32 %s22, %s29
    %s36 = sor.u32 %s34, %s35
    %p37 = scmp.eq.s32.totalorder %s36, 0
    %s39 = sadd.s32 %s38, 1
    %s40 = scalar_select %p37, %s38, %s39
    %p43 = pneg %p37
    %p44 = scmp.eq.s32.totalorder %s14, 1
    %p45 = por %p43, %p44
    %p46 = scmp.ne.s32.totalorder %s38, %s41
    %p47 = scmp.eq.s32.totalorder %s14, 0
    %p48 = por %p46, %p47
    %p49 = scmp.ne.s32.totalorder %s38, %s41
    %p50 = scmp.eq.s32.totalorder %s19, 1
    %p51 = por %p49, %p50
    %p52 = scmp.ne.s32.totalorder %s41, %s42
    %p53 = scmp.eq.s32.totalorder %s19, 0
    %p54 = por %p52, %p53
    %p55 = scmp.ne.s32.totalorder %s41, %s42
    %p56 = scmp.eq.s32.totalorder %s20, 1
    %p57 = por %p55, %p56
    %p59 = scmp.ne.s32.totalorder %s42, %s58
    %p60 = scmp.eq.s32.totalorder %s20, 0
    %p61 = por %p59, %p60
    %s62 = ssub.s32 %s21, %s33
    %s63 = ssub.s32 %s22, %s29
    %s64 = sor.u32 %s62, %s63
    %p65 = scmp.eq.s32.totalorder %s64, 0
    %s67 = sadd.s32 %s66, 1
    %s68 = scalar_select %p65, %s66, %s67
    %p71 = pneg %p65
    %p72 = scmp.eq.s32.totalorder %s14, 1
    %p73 = por %p71, %p72
    %p74 = scmp.ne.s32.totalorder %s66, %s69
    %p75 = scmp.eq.s32.totalorder %s14, 0
    %p76 = por %p74, %p75
    %p77 = scmp.ne.s32.totalorder %s66, %s69
    %p78 = scmp.eq.s32.totalorder %s19, 1
    %p79 = por %p77, %p78
    %p80 = scmp.ne.s32.totalorder %s69, %s70
    %p81 = scmp.eq.s32.totalorder %s19, 0
    %p82 = por %p80, %p81
    %p83 = scmp.ne.s32.totalorder %s69, %s70
    %p84 = scmp.eq.s32.totalorder %s20, 1
    %p85 = por %p83, %p84
    %p87 = scmp.ne.s32.totalorder %s70, %s86
    %p88 = scmp.eq.s32.totalorder %s20, 0
    %p89 = por %p87, %p88
    %s90 = sadd.s32 %s22, 1
    %s91 = smul.u32 %s90, 8
    %s92 = sadd.s32 %s29, 1
    %s93 = smul.u32 %s92, 8
    %s94 = ssub.s32 %s21, %s33
    %s95 = ssub.s32 %s91, %s93
    %s96 = sor.u32 %s94, %s95
    %p97 = scmp.eq.s32.totalorder %s96, 0
    %s99 = sadd.s32 %s98, 1
    %s100 = scalar_select %p97, %s98, %s99
    %p103 = pneg %p97
    %p104 = scmp.eq.s32.totalorder %s14, 1
    %p105 = por %p103, %p104
    %p106 = scmp.ne.s32.totalorder %s98, %s101
    %p107 = scmp.eq.s32.totalorder %s14, 0
    %p108 = por %p106, %p107
    %p109 = scmp.ne.s32.totalorder %s98, %s101
    %p110 = scmp.eq.s32.totalorder %s19, 1
    %p111 = por %p109, %p110
    %p112 = scmp.ne.s32.totalorder %s101, %s102
    %p113 = scmp.eq.s32.totalorder %s19, 0
    %p114 = por %p112, %p113
    %p115 = scmp.ne.s32.totalorder %s101, %s102
    %p116 = scmp.eq.s32.totalorder %s20, 1
    %p117 = por %p115, %p116
    %p119 = scmp.ne.s32.totalorder %s102, %s118
    %p120 = scmp.eq.s32.totalorder %s20, 0
    %p121 = por %p119, %p120
    %s122 = sadd.s32 %s22, 1
    %s123 = smul.u32 %s122, 8
    %s124 = sadd.s32 %s29, 1
    %s125 = smul.u32 %s124, 8
    %s126 = ssub.s32 %s21, %s33
    %s127 = ssub.s32 %s123, %s125
    %s128 = sor.u32 %s126, %s127
    %p129 = scmp.eq.s32.totalorder %s128, 0
    %s131 = sadd.s32 %s130, 1
    %s132 = scalar_select %p129, %s130, %s131
    %p135 = pneg %p129
    %p136 = scmp.eq.s32.totalorder %s14, 1
    %p137 = por %p135, %p136
    %p138 = scmp.ne.s32.totalorder %s130, %s133
    %p139 = scmp.eq.s32.totalorder %s14, 0
    %p140 = por %p138, %p139
    %p141 = scmp.ne.s32.totalorder %s130, %s133
    %p142 = scmp.eq.s32.totalorder %s19, 1
    %p143 = por %p141, %p142
    %p144 = scmp.ne.s32.totalorder %s133, %s134
    %p145 = scmp.eq.s32.totalorder %s19, 0
    %p146 = por %p144, %p145
    %p147 = scmp.ne.s32.totalorder %s133, %s134
    %p148 = scmp.eq.s32.totalorder %s20, 1
    %p149 = por %p147, %p148
    %p151 = scmp.ne.s32.totalorder %s134, %s150
    %p152 = scmp.eq.s32.totalorder %s20, 0
    %p153 = por %p151, %p152
    %s154 = ssub.s32 %s21, %s33
    %s155 = ssub.s32 %s22, %s29
    %s156 = sor.u32 %s154, %s155
    %p157 = scmp.eq.s32.totalorder %s156, 0
    %s159 = sadd.s32 %s158, 1
    %s160 = scalar_select %p157, %s158, %s159
    %p163 = pneg %p157
    %p164 = scmp.eq.s32.totalorder %s14, 1
    %p165 = por %p163, %p164
    %p166 = scmp.ne.s32.totalorder %s158, %s161
    %p167 = scmp.eq.s32.totalorder %s14, 0
    %p168 = por %p166, %p167
    %p169 = scmp.ne.s32.totalorder %s158, %s161
    %p170 = scmp.eq.s32.totalorder %s19, 1
    %p171 = por %p169, %p170
    %p172 = scmp.ne.s32.totalorder %s161, %s162
    %p173 = scmp.eq.s32.totalorder %s19, 0
    %p174 = por %p172, %p173
    %p175 = scmp.ne.s32.totalorder %s161, %s162
    %p176 = scmp.eq.s32.totalorder %s20, 1
    %p177 = por %p175, %p176
    %p179 = scmp.ne.s32.totalorder %s162, %s178
    %p180 = scmp.eq.s32.totalorder %s20, 0
    %p181 = por %p179, %p180
    %s182 = ssub.s32 %s21, %s33
    %s183 = ssub.s32 %s22, %s29
    %s184 = sor.u32 %s182, %s183
    %p185 = scmp.eq.s32.totalorder %s184, 0
    %s187 = sadd.s32 %s186, 1
    %s188 = scalar_select %p185, %s186, %s187
    %p191 = pneg %p185
    %p192 = scmp.eq.s32.totalorder %s14, 1
    %p193 = por %p191, %p192
    %p194 = scmp.ne.s32.totalorder %s186, %s189
    %p195 = scmp.eq.s32.totalorder %s14, 0
    %p196 = por %p194, %p195
    %p197 = scmp.ne.s32.totalorder %s186, %s189
    %p198 = scmp.eq.s32.totalorder %s19, 1
    %p199 = por %p197, %p198
    %p200 = scmp.ne.s32.totalorder %s189, %s190
    %p201 = scmp.eq.s32.totalorder %s19, 0
    %p202 = por %p200, %p201
    %p203 = scmp.ne.s32.totalorder %s189, %s190
    %p204 = scmp.eq.s32.totalorder %s20, 1
    %p205 = por %p203, %p204
    %p207 = scmp.ne.s32.totalorder %s190, %s206
    %p208 = scmp.eq.s32.totalorder %s20, 0
    %p209 = por %p207, %p208
    %s211 = sadd.s32 %s210, 1
    %p214 = scmp.eq.s32.totalorder %s14, 1
    %p215 = scmp.ne.s32.totalorder %s210, %s212
    %p216 = scmp.eq.s32.totalorder %s14, 0
    %p217 = por %p215, %p216
    %p218 = scmp.ne.s32.totalorder %s210, %s212
    %p219 = scmp.eq.s32.totalorder %s19, 1
    %p220 = por %p218, %p219
    %p221 = scmp.ne.s32.totalorder %s212, %s213
    %p222 = scmp.eq.s32.totalorder %s19, 0
    %p223 = por %p221, %p222
    %p224 = scmp.ne.s32.totalorder %s212, %s213
    %p225 = scmp.eq.s32.totalorder %s20, 1
    %p226 = por %p224, %p225
    %p228 = scmp.ne.s32.totalorder %s213, %s227
    %p229 = scmp.eq.s32.totalorder %s20, 0
    %p230 = por %p228, %p229
    %s232 = sadd.s32 %s231, 1
    %p235 = scmp.eq.s32.totalorder %s14, 1
    %p236 = scmp.ne.s32.totalorder %s231, %s233
    %p237 = scmp.eq.s32.totalorder %s14, 0
    %p238 = por %p236, %p237
    %p239 = scmp.ne.s32.totalorder %s231, %s233
    %p240 = scmp.eq.s32.totalorder %s19, 1
    %p241 = por %p239, %p240
    %p242 = scmp.ne.s32.totalorder %s233, %s234
    %p243 = scmp.eq.s32.totalorder %s19, 0
    %p244 = por %p242, %p243
    %p245 = scmp.ne.s32.totalorder %s233, %s234
    %p246 = scmp.eq.s32.totalorder %s20, 1
    %p247 = por %p245, %p246
    %p249 = scmp.ne.s32.totalorder %s234, %s248
    %p250 = scmp.eq.s32.totalorder %s20, 0
    %p251 = por %p249, %p250
    %s252 = ssub.s32 %s21, %s33
    %s253 = ssub.s32 %s22, %s29
    %s254 = sor.u32 %s252, %s253
    %p255 = scmp.eq.s32.totalorder %s254, 0
    %s257 = sadd.s32 %s256, 1
    %s258 = scalar_select %p255, %s256, %s257
    %p261 = pneg %p255
    %p262 = scmp.eq.s32.totalorder %s14, 1
    %p263 = por %p261, %p262
    %p264 = scmp.ne.s32.totalorder %s256, %s259
    %p265 = scmp.eq.s32.totalorder %s14, 0
    %p266 = por %p264, %p265
    %p267 = scmp.ne.s32.totalorder %s256, %s259
    %p268 = scmp.eq.s32.totalorder %s19, 1
    %p269 = por %p267, %p268
    %p270 = scmp.ne.s32.totalorder %s259, %s260
    %p271 = scmp.eq.s32.totalorder %s19, 0
    %p272 = por %p270, %p271
    %p273 = scmp.ne.s32.totalorder %s259, %s260
    %p274 = scmp.eq.s32.totalorder %s20, 1
    %p275 = por %p273, %p274
    %p277 = scmp.ne.s32.totalorder %s260, %s276
    %p278 = scmp.eq.s32.totalorder %s20, 0
    %p279 = por %p277, %p278
    %p280 = scmp.le.s32.totalorder 1, %s14
    %p281 = scmp.lt.s32.totalorder %s14, 3
    %p282 = pnand %p280, %p281
    %p283 = pneg %p282
    // Predicated region
    $region9: #{downsample_with_conv.1} parent=5 // pred_check
      _
    $region10: #{downsample_with_conv.1} parent=5 // pred_check_branch
      %285 = sbr.rel (%p282) target = $region12
    $region11: #{downsample_with_conv.1} parent=5 // pred_region
      %s286 = ssub.s32 %s14, 1
      // Predicated region
      $region13: #{downsample_with_conv.1} parent=11 // pred_check
        %p287 = pneg %p223
      $region14: #{downsample_with_conv.1} parent=11 // pred_check_branch
        %289 = sbr.rel (%p287) target = $region16
      $region15: #{downsample_with_conv.1} parent=11 // pred_region
        _
      $region16: #{downsample_with_conv.1} parent=11 // pred_fallthru
        _
      // Predicated region
      $region17: #{downsample_with_conv.1} parent=11 // pred_check
        %p290 = pneg %p244
      $region18: #{downsample_with_conv.1} parent=11 // pred_check_branch
        %292 = sbr.rel (%p290) target = $region20
      $region19: #{downsample_with_conv.1} parent=11 // pred_region
        _
      $region20: #{downsample_with_conv.1} parent=11 // pred_fallthru
        _
    $region12: #{downsample_with_conv.1} parent=5 // pred_fallthru
      _
    %p293 = scmp.lt.s32.totalorder %s14, 2
    // Predicated region
    $region21: #{downsample_with_conv.1} parent=5 // pred_check
      %p294 = pneg %p293
    $region22: #{downsample_with_conv.1} parent=5 // pred_check_branch
      %296 = sbr.rel (%p294) target = $region24
    $region23: #{downsample_with_conv.1} parent=5 // pred_region
      // Predicated region
      $region25: #{downsample_with_conv.1} parent=23 // pred_check
        %p297 = pneg %p48
      $region26: #{downsample_with_conv.1} parent=23 // pred_check_branch
        %299 = sbr.rel (%p297) target = $region28
      $region27: #{downsample_with_conv.1} parent=23 // pred_region
        %s300 = smul.u32 8, %s22
        %s301 = ssub.s32 9, %s300
        %p302 = scmp.lt.s32.totalorder %s301, 8
        %s303 = scalar_select %p302, %s301, 8
        %s304 = smul.u32 128, %s303
        %s305 = smul.u32 %s304, 2
        %p306 = scmp.lt.s32.totalorder %s21, 1
        %s307 = scalar_select %p306, %s21, 1
        %p308 = scmp.lt.s32.totalorder %s300, 8
        %s309 = scalar_select %p308, %s300, 8
        %s310 = smul.addr %s309, 2
        %s311 = smul.addr %s307, 18
        %s312 = sadd.s32 %s310, %s311
        %s313 = smul.addr %s312, 8
        %s314 = scalar_lea.vmem %s0, %s313
        %s315 = smul.u32 8, %s22
        %s316 = ssub.s32 9, %s315
        %p317 = scmp.lt.s32.totalorder %s316, 8
        %s318 = scalar_select %p317, %s316, 8
        %s319 = smul.u32 128, %s318
        %s320 = smul.u32 %s319, 2
      $region28: #{downsample_with_conv.1} parent=23 // pred_fallthru
        _
      // Predicated region
      $region29: #{downsample_with_conv.1} parent=23 // pred_check
        %p321 = pneg %p76
      $region30: #{downsample_with_conv.1} parent=23 // pred_check_branch
        %323 = sbr.rel (%p321) target = $region32
      $region31: #{downsample_with_conv.1} parent=23 // pred_region
        %s324 = smul.u32 8, %s22
        %s325 = ssub.s32 9, %s324
        %p326 = scmp.lt.s32.totalorder %s325, 8
        %s327 = scalar_select %p326, %s325, 8
        %s328 = smul.u32 128, %s327
        %p329 = scmp.lt.s32.totalorder %s21, 1
        %s330 = scalar_select %p329, %s21, 1
        %p331 = scmp.lt.s32.totalorder %s324, 8
        %s332 = scalar_select %p331, %s324, 8
        %s333 = smul.addr %s330, 9
        %s334 = sadd.s32 %s332, %s333
        %s335 = smul.addr %s334, 8
        %s336 = scalar_lea.vmem %s1, %s335
        %s337 = smul.u32 8, %s22
        %s338 = ssub.s32 9, %s337
        %p339 = scmp.lt.s32.totalorder %s338, 8
        %s340 = scalar_select %p339, %s338, 8
        %s341 = smul.u32 128, %s340
      $region32: #{downsample_with_conv.1} parent=23 // pred_fallthru
        _
      // Predicated region
      $region33: #{downsample_with_conv.1} parent=23 // pred_check
        %p342 = pneg %p108
      $region34: #{downsample_with_conv.1} parent=23 // pred_check_branch
        %344 = sbr.rel (%p342) target = $region36
      $region35: #{downsample_with_conv.1} parent=23 // pred_region
        %s345 = sadd.s32 %s22, 1
        %s346 = smul.u32 %s345, 8
        %p347 = scmp.lt.s32.totalorder %s21, 1
        %s348 = scalar_select %p347, %s21, 1
        %p349 = scmp.lt.s32.totalorder %s346, 8
        %s350 = scalar_select %p349, %s346, 8
        %s351 = smul.addr %s350, 2
        %s352 = smul.addr %s348, 18
        %s353 = sadd.s32 %s351, %s352
        %s354 = smul.addr %s353, 8
        %s355 = scalar_lea.vmem %s2, %s354
        %s356 = sadd.s32 %s22, 1
        %s357 = smul.u32 %s356, 8
      $region36: #{downsample_with_conv.1} parent=23 // pred_fallthru
        _
      // Predicated region
      $region37: #{downsample_with_conv.1} parent=23 // pred_check
        %p358 = pneg %p140
      $region38: #{downsample_with_conv.1} parent=23 // pred_check_branch
        %360 = sbr.rel (%p358) target = $region40
      $region39: #{downsample_with_conv.1} parent=23 // pred_region
        %s361 = sadd.s32 %s22, 1
        %s362 = smul.u32 %s361, 8
        %p363 = scmp.lt.s32.totalorder %s21, 1
        %s364 = scalar_select %p363, %s21, 1
        %p365 = scmp.lt.s32.totalorder %s362, 8
        %s366 = scalar_select %p365, %s362, 8
        %s367 = smul.addr %s364, 9
        %s368 = sadd.s32 %s366, %s367
        %s369 = smul.addr %s368, 8
        %s370 = scalar_lea.vmem %s3, %s369
        %s371 = sadd.s32 %s22, 1
        %s372 = smul.u32 %s371, 8
      $region40: #{downsample_with_conv.1} parent=23 // pred_fallthru
        _
      // Predicated region
      $region41: #{downsample_with_conv.1} parent=23 // pred_check
        %p373 = pneg %p168
      $region42: #{downsample_with_conv.1} parent=23 // pred_check_branch
        %375 = sbr.rel (%p373) target = $region44
      $region43: #{downsample_with_conv.1} parent=23 // pred_region
        %s376 = smul.u32 8, %s22
        %p377 = scmp.lt.s32.totalorder %s21, 1
        %s378 = scalar_select %p377, %s21, 1
        %p379 = scmp.lt.s32.totalorder %s376, 7
        %s380 = scalar_select %p379, %s376, 7
        %s381 = smul.addr %s380, 2
        %s382 = smul.addr %s378, 16
        %s383 = sadd.s32 %s381, %s382
        %s384 = smul.addr %s383, 8
        %s385 = scalar_lea.vmem %s4, %s384
        %s386 = smul.u32 8, %s22
      $region44: #{downsample_with_conv.1} parent=23 // pred_fallthru
        _
      // Predicated region
      $region45: #{downsample_with_conv.1} parent=23 // pred_check
        %p387 = pneg %p196
      $region46: #{downsample_with_conv.1} parent=23 // pred_check_branch
        %389 = sbr.rel (%p387) target = $region48
      $region47: #{downsample_with_conv.1} parent=23 // pred_region
        %s390 = smul.u32 8, %s22
        %p391 = scmp.lt.s32.totalorder %s21, 1
        %s392 = scalar_select %p391, %s21, 1
        %p393 = scmp.lt.s32.totalorder %s390, 7
        %s394 = scalar_select %p393, %s390, 7
        %s395 = smul.addr %s392, 8
        %s396 = sadd.s32 %s394, %s395
        %s397 = smul.addr %s396, 8
        %s398 = scalar_lea.vmem %s5, %s397
        %s399 = smul.u32 8, %s22
      $region48: #{downsample_with_conv.1} parent=23 // pred_fallthru
        _
    $region24: #{downsample_with_conv.1} parent=5 // pred_fallthru
      _
    %p400 = scmp.le.s32.totalorder 1, %s14
    %p401 = scmp.lt.s32.totalorder %s14, 3
    %p402 = pnand %p400, %p401
    %p403 = pneg %p402
    // Predicated region
    $region49: #{downsample_with_conv.1} parent=5 // pred_check
      _
    $region50: #{downsample_with_conv.1} parent=5 // pred_check_branch
      %405 = sbr.rel (%p402) target = $region52
    $region51: #{downsample_with_conv.1} parent=5 // pred_region
      %s406 = ssub.s32 %s14, 1
      %s407 = smul.u32 8, %s24
      %s408 = ssub.s32 9, %s407
      %p409 = scmp.lt.s32.totalorder %s408, 8
      %s410 = scalar_select %p409, %s408, 8
      %s411 = smul.u32 128, %s410
      %s412 = smul.u32 %s411, 2
      %p413 = scmp.lt.s32.totalorder %s23, 1
      %s414 = scalar_select %p413, %s23, 1
      %p415 = scmp.lt.s32.totalorder %s407, 8
      %s416 = scalar_select %p415, %s407, 8
      %s417 = smul.addr %s416, 2
      %s418 = smul.addr %s414, 18
      %s419 = sadd.s32 %s417, %s418
      %s420 = smul.addr %s419, 8
      %s421 = scalar_lea.vmem %s0, %s420
      %p422 = pneg %p54
      %p423 = pneg %p51
      %s424 = smul.u32 8, %s24
      %s425 = ssub.s32 9, %s424
      %p426 = scmp.lt.s32.totalorder %s425, 8
      %s427 = scalar_select %p426, %s425, 8
      %s428 = smul.u32 128, %s427
      %p429 = scmp.lt.s32.totalorder %s23, 1
      %s430 = scalar_select %p429, %s23, 1
      %p431 = scmp.lt.s32.totalorder %s424, 8
      %s432 = scalar_select %p431, %s424, 8
      %s433 = smul.addr %s430, 9
      %s434 = sadd.s32 %s432, %s433
      %s435 = smul.addr %s434, 8
      %s436 = scalar_lea.vmem %s1, %s435
      %p437 = pneg %p82
      %p438 = pneg %p79
      %s439 = sadd.s32 %s24, 1
      %s440 = smul.u32 %s439, 8
      %p441 = scmp.lt.s32.totalorder %s23, 1
      %s442 = scalar_select %p441, %s23, 1
      %p443 = scmp.lt.s32.totalorder %s440, 8
      %s444 = scalar_select %p443, %s440, 8
      %s445 = smul.addr %s444, 2
      %s446 = smul.addr %s442, 18
      %s447 = sadd.s32 %s445, %s446
      %s448 = smul.addr %s447, 8
      %s449 = scalar_lea.vmem %s2, %s448
      %p450 = pneg %p114
      %p451 = pneg %p111
      %s452 = sadd.s32 %s24, 1
      %s453 = smul.u32 %s452, 8
      %p454 = scmp.lt.s32.totalorder %s23, 1
      %s455 = scalar_select %p454, %s23, 1
      %p456 = scmp.lt.s32.totalorder %s453, 8
      %s457 = scalar_select %p456, %s453, 8
      %s458 = smul.addr %s455, 9
      %s459 = sadd.s32 %s457, %s458
      %s460 = smul.addr %s459, 8
      %s461 = scalar_lea.vmem %s3, %s460
      %p462 = pneg %p146
      %p463 = pneg %p143
      %s464 = smul.u32 8, %s24
      %p465 = scmp.lt.s32.totalorder %s23, 1
      %s466 = scalar_select %p465, %s23, 1
      %p467 = scmp.lt.s32.totalorder %s464, 7
      %s468 = scalar_select %p467, %s464, 7
      %s469 = smul.addr %s468, 2
      %s470 = smul.addr %s466, 16
      %s471 = sadd.s32 %s469, %s470
      %s472 = smul.addr %s471, 8
      %s473 = scalar_lea.vmem %s4, %s472
      %p474 = pneg %p174
      %p475 = pneg %p171
      %s476 = smul.u32 8, %s24
      %p477 = scmp.lt.s32.totalorder %s23, 1
      %s478 = scalar_select %p477, %s23, 1
      %p479 = scmp.lt.s32.totalorder %s476, 7
      %s480 = scalar_select %p479, %s476, 7
      %s481 = smul.addr %s478, 8
      %s482 = sadd.s32 %s480, %s481
      %s483 = smul.addr %s482, 8
      %s484 = scalar_lea.vmem %s5, %s483
      %p485 = pneg %p202
      %p486 = pneg %p199
      %p487 = pneg %p223
      %p488 = pneg %p220
      %p489 = pneg %p244
      %p490 = pneg %p241
      %p491 = pneg %p272
      %p492 = pneg %p269
      %s493 = smul.u32 8, %s24
      %p494 = scmp.lt.s32.totalorder %s23, 1
      %s495 = scalar_select %p494, %s23, 1
      %p496 = scmp.lt.s32.totalorder %s493, 7
      %s497 = scalar_select %p496, %s493, 7
      %s498 = smul.addr %s495, 8
      %s499 = sadd.s32 %s497, %s498
      %s500 = smul.addr %s499, 8
      %s501 = scalar_lea.vmem %s8, %s500
      %s502 = smul.u32 8, %s24
      %s503 = ssub.s32 9, %s502
      %p504 = scmp.lt.s32.totalorder %s503, 8
      %s505 = scalar_select %p504, %s503, 8
      %s506 = smul.u32 128, %s505
      %s507 = smul.u32 %s506, 2
      %p508 = scmp.lt.s32.totalorder %s23, 1
      %s509 = scalar_select %p508, %s23, 1
      %p510 = scmp.lt.s32.totalorder %s502, 8
      %s511 = scalar_select %p510, %s502, 8
      %s512 = smul.addr %s511, 2
      %s513 = smul.addr %s509, 18
      %s514 = sadd.s32 %s512, %s513
      %s515 = smul.addr %s514, 8
      %s516 = scalar_lea.vmem %s0, %s515
      %s517 = smul.u32 8, %s24
      %s518 = ssub.s32 9, %s517
      %p519 = scmp.lt.s32.totalorder %s518, 8
      %s520 = scalar_select %p519, %s518, 8
      %s521 = smul.u32 128, %s520
      %s522 = smul.u32 %s521, 2
      %s523 = smul.u32 8, %s24
      %s524 = ssub.s32 9, %s523
      %p525 = scmp.lt.s32.totalorder %s524, 8
      %s526 = scalar_select %p525, %s524, 8
      %s527 = smul.u32 128, %s526
      %p528 = scmp.lt.s32.totalorder %s23, 1
      %s529 = scalar_select %p528, %s23, 1
      %p530 = scmp.lt.s32.totalorder %s523, 8
      %s531 = scalar_select %p530, %s523, 8
      %s532 = smul.addr %s529, 9
      %s533 = sadd.s32 %s531, %s532
      %s534 = smul.addr %s533, 8
      %s535 = scalar_lea.vmem %s1, %s534
      %s536 = smul.u32 8, %s24
      %s537 = ssub.s32 9, %s536
      %p538 = scmp.lt.s32.totalorder %s537, 8
      %s539 = scalar_select %p538, %s537, 8
      %s540 = smul.u32 128, %s539
      %s541 = sadd.s32 %s24, 1
      %s542 = smul.u32 %s541, 8
      %p543 = scmp.lt.s32.totalorder %s23, 1
      %s544 = scalar_select %p543, %s23, 1
      %p545 = scmp.lt.s32.totalorder %s542, 8
      %s546 = scalar_select %p545, %s542, 8
      %s547 = smul.addr %s546, 2
      %s548 = smul.addr %s544, 18
      %s549 = sadd.s32 %s547, %s548
      %s550 = smul.addr %s549, 8
      %s551 = scalar_lea.vmem %s2, %s550
      %s552 = sadd.s32 %s24, 1
      %s553 = smul.u32 %s552, 8
      %s554 = sadd.s32 %s24, 1
      %s555 = smul.u32 %s554, 8
      %p556 = scmp.lt.s32.totalorder %s23, 1
      %s557 = scalar_select %p556, %s23, 1
      %p558 = scmp.lt.s32.totalorder %s555, 8
      %s559 = scalar_select %p558, %s555, 8
      %s560 = smul.addr %s557, 9
      %s561 = sadd.s32 %s559, %s560
      %s562 = smul.addr %s561, 8
      %s563 = scalar_lea.vmem %s3, %s562
      %s564 = sadd.s32 %s24, 1
      %s565 = smul.u32 %s564, 8
      %s566 = smul.u32 8, %s24
      %p567 = scmp.lt.s32.totalorder %s23, 1
      %s568 = scalar_select %p567, %s23, 1
      %p569 = scmp.lt.s32.totalorder %s566, 7
      %s570 = scalar_select %p569, %s566, 7
      %s571 = smul.addr %s570, 2
      %s572 = smul.addr %s568, 16
      %s573 = sadd.s32 %s571, %s572
      %s574 = smul.addr %s573, 8
      %s575 = scalar_lea.vmem %s4, %s574
      %s576 = smul.u32 8, %s24
      %s577 = smul.u32 8, %s24
      %p578 = scmp.lt.s32.totalorder %s23, 1
      %s579 = scalar_select %p578, %s23, 1
      %p580 = scmp.lt.s32.totalorder %s577, 7
      %s581 = scalar_select %p580, %s577, 7
      %s582 = smul.addr %s579, 8
      %s583 = sadd.s32 %s581, %s582
      %s584 = smul.addr %s583, 8
      %s585 = scalar_lea.vmem %s5, %s584
      %s586 = smul.u32 8, %s24
      %s587 = smul.u32 8, %s24
      %p588 = scmp.lt.s32.totalorder %s23, 1
      %s589 = scalar_select %p588, %s23, 1
      %p590 = scmp.lt.s32.totalorder %s587, 7
      %s591 = scalar_select %p590, %s587, 7
      %s592 = smul.addr %s589, 8
      %s593 = sadd.s32 %s591, %s592
      %s594 = smul.addr %s593, 8
      %s595 = scalar_lea.vmem %s8, %s594
      %s596 = smul.u32 8, %s24
      %v597 = vld [vmem:[%s7] sm:$0x1]
      %v598 = vld [vmem:[%s516] sm:$0xff]
      %v599 = vld [vmem:[%s516 + $0x8] sm:$0x1]
      %v600 = vld [vmem:[%s535] sm:$0xff]
      %v601 = vld [vmem:[%s575] sm:$0xff]
      %v602 = vld [vmem:[%s575 + $0x8] sm:$0x1]
      %v603 = vld [vmem:[%s585] sm:$0xff]
      %s604 = scalar_lea.vmem %s516, 16
      %v605 = vld [vmem:[%s604] sm:$0xff]
      %v606 = vld [vmem:[%s604 + $0x8] sm:$0x1]
      %s607 = scalar_lea.vmem %s535, 8
      %v608 = vld [vmem:[%s607] sm:$0xff]
      %v609 = vld [vmem:[%s6] sm:$0xf]
      %s610 = scalar_lea.vmem %s6, 4
      %v611 = vld [vmem:[%s610] sm:$0xf]
      %vm612 = vcmask 31744
      %v614 = vsel %vm612, %v600, 0
      %vm616 = vcmask 1043456
      %v618 = vsel %vm616, %v611, 0
      %620 = vmatprep.subr.mxu0 0.0
      %621 = vmatpush1.msra.mxu0 0.0
      %622 = vmatprep.subr.mxu0 0.0
      %623 = vmatpush1.msra.mxu0 0.0
      %624 = vmatprep.subr.mxu0 0.0
      %625 = vmatpush1.msra.mxu0 0.0
      %626 = vmatprep.subr.mxu0 0.0
      %627 = vmatpush1.msra.mxu0 0.0
      %628 = vmatprep.subr.mxu0 0.0
      %629 = vmatpush1.msra.mxu0 0.0
      %630 = vmatprep.subr.mxu0 0.0
      %631 = vmatpush1.msra.mxu0 0.0
      %632 = vmatprep.subr.mxu0 0.0
      %633 = vmatpush1.msra.mxu0 0.0
      %634 = vmatprep.subr.mxu0 0.0
      %635 = vmatpush1.msra.mxu0 0.0
      %636 = vmatprep.subr.mxu0 0.0
      %637 = vmatpush1.msra.mxu0 0.0
      %638 = vmatprep.subr.mxu0 0.0
      %639 = vmatpush1.msra.mxu0 0.0
      %640 = vmatprep.subr.mxu0 0.0
      %641 = vmatpush1.msra.mxu0 0.0
      %642 = vmatprep.subr.mxu0 0.0
      %643 = vmatpush1.msra.mxu0 0.0
      %644 = vmatprep.subr.mxu0 0.0
      %645 = vmatpush1.msra.mxu0 0.0
      %646 = vmatprep.subr.mxu0 0.0
      %647 = vmatpush1.msra.mxu0 0.0
      %648 = vmatprep.subr.mxu0 0.0
      %649 = vmatpush1.msra.mxu0 0.0
      %650 = vmatprep.subr.mxu0 0.0
      %651 = vmatpush1.msra.mxu0 %v618
      %652 = vmatprep.subr.mxu0 0.0
      %653 = vmatpush2.msra.mxu0 0.0
      %654 = vmatprep.subr.mxu0 0.0
      %655 = vmatpush2.msra.mxu0 0.0
      %656 = vmatprep.subr.mxu0 0.0
      %657 = vmatpush2.msra.mxu0 0.0
      %658 = vmatprep.subr.mxu0 0.0
      %659 = vmatpush2.msra.mxu0 0.0
      %660 = vmatprep.subr.mxu0 0.0
      %661 = vmatpush2.msra.mxu0 0.0
      %662 = vmatprep.subr.mxu0 0.0
      %663 = vmatpush2.msra.mxu0 0.0
      %664 = vmatprep.subr.mxu0 0.0
      %665 = vmatpush2.msra.mxu0 0.0
      %666 = vmatprep.subr.mxu0 0.0
      %667 = vmatpush2.msra.mxu0 0.0
      %668 = vmatprep.subr.mxu0 0.0
      %669 = vmatpush2.msra.mxu0 0.0
      %670 = vmatprep.subr.mxu0 0.0
      %671 = vmatpush2.msra.mxu0 0.0
      %672 = vmatprep.subr.mxu0 0.0
      %673 = vmatpush2.msra.mxu0 0.0
      %674 = vmatprep.subr.mxu0 0.0
      %675 = vmatpush2.msra.mxu0 0.0
      %676 = vmatprep.subr.mxu0 0.0
      %677 = vmatpush2.msra.mxu0 0.0
      %678 = vmatprep.subr.mxu0 0.0
      %679 = vmatpush2.msra.mxu0 0.0
      %680 = vmatprep.subr.mxu0 0.0
      %681 = vmatpush2.msra.mxu0 0.0
      %682 = vmatprep.subr.mxu0 0.0
      %683 = vmatpush2.msra.mxu0 0.0
      %684 = vmatprep.mubr.f32.mxu0 0.0
      %685 = vmatmul.mubr.f32.gmra.mxu0 %v614
      %v686 = vpop.f32.mrf.mxu0
      %v687 = vadd.f32 0.0, %v686
      %v688 = vpop.f32.mrf.mxu0
      %689 = vdwg.mxu0
      %v691 = vsel %vm612, %v598, 0
      %v694 = vsel %vm616, %v609, 0
      %696 = vmatprep.subr.mxu0 0.0
      %697 = vmatpush1.msra.mxu0 0.0
      %698 = vmatprep.subr.mxu0 0.0
      %699 = vmatpush1.msra.mxu0 0.0
      %700 = vmatprep.subr.mxu0 0.0
      %701 = vmatpush1.msra.mxu0 0.0
      %702 = vmatprep.subr.mxu0 0.0
      %703 = vmatpush1.msra.mxu0 0.0
      %704 = vmatprep.subr.mxu0 0.0
      %705 = vmatpush1.msra.mxu0 0.0
      %706 = vmatprep.subr.mxu0 0.0
      %707 = vmatpush1.msra.mxu0 0.0
      %708 = vmatprep.subr.mxu0 0.0
      %709 = vmatpush1.msra.mxu0 0.0
      %710 = vmatprep.subr.mxu0 0.0
      %711 = vmatpush1.msra.mxu0 0.0
      %712 = vmatprep.subr.mxu0 0.0
      %713 = vmatpush1.msra.mxu0 0.0
      %714 = vmatprep.subr.mxu0 0.0
      %715 = vmatpush1.msra.mxu0 0.0
      %716 = vmatprep.subr.mxu0 0.0
      %717 = vmatpush1.msra.mxu0 0.0
      %718 = vmatprep.subr.mxu0 0.0
      %719 = vmatpush1.msra.mxu0 0.0
      %720 = vmatprep.subr.mxu0 0.0
      %721 = vmatpush1.msra.mxu0 0.0
      %722 = vmatprep.subr.mxu0 0.0
      %723 = vmatpush1.msra.mxu0 0.0
      %724 = vmatprep.subr.mxu0 0.0
      %725 = vmatpush1.msra.mxu0 0.0
      %726 = vmatprep.subr.mxu0 0.0
      %727 = vmatpush1.msra.mxu0 %v694
      %728 = vmatprep.subr.mxu0 0.0
      %729 = vmatpush2.msra.mxu0 0.0
      %730 = vmatprep.subr.mxu0 0.0
      %731 = vmatpush2.msra.mxu0 0.0
      %732 = vmatprep.subr.mxu0 0.0
      %733 = vmatpush2.msra.mxu0 0.0
      %734 = vmatprep.subr.mxu0 0.0
      %735 = vmatpush2.msra.mxu0 0.0
      %736 = vmatprep.subr.mxu0 0.0
      %737 = vmatpush2.msra.mxu0 0.0
      %738 = vmatprep.subr.mxu0 0.0
      %739 = vmatpush2.msra.mxu0 0.0
      %740 = vmatprep.subr.mxu0 0.0
      %741 = vmatpush2.msra.mxu0 0.0
      %742 = vmatprep.subr.mxu0 0.0
      %743 = vmatpush2.msra.mxu0 0.0
      %744 = vmatprep.subr.mxu0 0.0
      %745 = vmatpush2.msra.mxu0 0.0
      %746 = vmatprep.subr.mxu0 0.0
      %747 = vmatpush2.msra.mxu0 0.0
      %748 = vmatprep.subr.mxu0 0.0
      %749 = vmatpush2.msra.mxu0 0.0
      %750 = vmatprep.subr.mxu0 0.0
      %751 = vmatpush2.msra.mxu0 0.0
      %752 = vmatprep.subr.mxu0 0.0
      %753 = vmatpush2.msra.mxu0 0.0
      %754 = vmatprep.subr.mxu0 0.0
      %755 = vmatpush2.msra.mxu0 0.0
      %756 = vmatprep.subr.mxu0 0.0
      %757 = vmatpush2.msra.mxu0 0.0
      %758 = vmatprep.subr.mxu0 0.0
      %759 = vmatpush2.msra.mxu0 0.0
      %760 = vmatprep.mubr.f32.mxu0 0.0
      %761 = vmatmul.mubr.f32.gmra.mxu0 %v691
      %v762 = vpop.f32.mrf.mxu0
      %v763 = vadd.f32 %v687, %v762
      %v764 = vpop.f32.mrf.mxu0
      %765 = vdwg.mxu0
      %s766 = scalar_lea.vmem %s6, 8
      %v767 = vld [vmem:[%s766] sm:$0xf]
      %vm769 = vcmask 1046528
      %v770 = vrot.slane %v598, 1
      %v771 = vrot.slane %v599, 1
      %v772 = vsel %vm769, %v770, %v771
      %v773 = vsel %vm612, %v772, 0
      %v776 = vsel %vm616, %v767, 0
      %778 = vmatprep.subr.mxu0 0.0
      %779 = vmatpush1.msra.mxu0 0.0
      %780 = vmatprep.subr.mxu0 0.0
      %781 = vmatpush1.msra.mxu0 0.0
      %782 = vmatprep.subr.mxu0 0.0
      %783 = vmatpush1.msra.mxu0 0.0
      %784 = vmatprep.subr.mxu0 0.0
      %785 = vmatpush1.msra.mxu0 0.0
      %786 = vmatprep.subr.mxu0 0.0
      %787 = vmatpush1.msra.mxu0 0.0
      %788 = vmatprep.subr.mxu0 0.0
      %789 = vmatpush1.msra.mxu0 0.0
      %790 = vmatprep.subr.mxu0 0.0
      %791 = vmatpush1.msra.mxu0 0.0
      %792 = vmatprep.subr.mxu0 0.0
      %793 = vmatpush1.msra.mxu0 0.0
      %794 = vmatprep.subr.mxu0 0.0
      %795 = vmatpush1.msra.mxu0 0.0
      %796 = vmatprep.subr.mxu0 0.0
      %797 = vmatpush1.msra.mxu0 0.0
      %798 = vmatprep.subr.mxu0 0.0
      %799 = vmatpush1.msra.mxu0 0.0
      %800 = vmatprep.subr.mxu0 0.0
      %801 = vmatpush1.msra.mxu0 0.0
      %802 = vmatprep.subr.mxu0 0.0
      %803 = vmatpush1.msra.mxu0 0.0
      %804 = vmatprep.subr.mxu0 0.0
      %805 = vmatpush1.msra.mxu0 0.0
      %806 = vmatprep.subr.mxu0 0.0
      %807 = vmatpush1.msra.mxu0 0.0
      %808 = vmatprep.subr.mxu0 0.0
      %809 = vmatpush1.msra.mxu0 %v776
      %810 = vmatprep.subr.mxu0 0.0
      %811 = vmatpush2.msra.mxu0 0.0
      %812 = vmatprep.subr.mxu0 0.0
      %813 = vmatpush2.msra.mxu0 0.0
      %814 = vmatprep.subr.mxu0 0.0
      %815 = vmatpush2.msra.mxu0 0.0
      %816 = vmatprep.subr.mxu0 0.0
      %817 = vmatpush2.msra.mxu0 0.0
      %818 = vmatprep.subr.mxu0 0.0
      %819 = vmatpush2.msra.mxu0 0.0
      %820 = vmatprep.subr.mxu0 0.0
      %821 = vmatpush2.msra.mxu0 0.0
      %822 = vmatprep.subr.mxu0 0.0
      %823 = vmatpush2.msra.mxu0 0.0
      %824 = vmatprep.subr.mxu0 0.0
      %825 = vmatpush2.msra.mxu0 0.0
      %826 = vmatprep.subr.mxu0 0.0
      %827 = vmatpush2.msra.mxu0 0.0
      %828 = vmatprep.subr.mxu0 0.0
      %829 = vmatpush2.msra.mxu0 0.0
      %830 = vmatprep.subr.mxu0 0.0
      %831 = vmatpush2.msra.mxu0 0.0
      %832 = vmatprep.subr.mxu0 0.0
      %833 = vmatpush2.msra.mxu0 0.0
      %834 = vmatprep.subr.mxu0 0.0
      %835 = vmatpush2.msra.mxu0 0.0
      %836 = vmatprep.subr.mxu0 0.0
      %837 = vmatpush2.msra.mxu0 0.0
      %838 = vmatprep.subr.mxu0 0.0
      %839 = vmatpush2.msra.mxu0 0.0
      %840 = vmatprep.subr.mxu0 0.0
      %841 = vmatpush2.msra.mxu0 0.0
      %842 = vmatprep.mubr.f32.mxu0 0.0
      %843 = vmatmul.mubr.f32.gmra.mxu0 %v773
      %v844 = vpop.f32.mrf.mxu0
      %v845 = vadd.f32 0.0, %v844
      %v846 = vpop.f32.mrf.mxu0
      %847 = vdwg.mxu0
      %v848 = vadd.f32 %v763, %v845
      %s849 = scalar_lea.vmem %s6, 12
      %v850 = vld [vmem:[%s849] sm:$0xf]
      %v852 = vsel %vm612, %v601, 0
      %v855 = vsel %vm616, %v850, 0
      %857 = vmatprep.subr.mxu0 0.0
      %858 = vmatpush1.msra.mxu0 0.0
      %859 = vmatprep.subr.mxu0 0.0
      %860 = vmatpush1.msra.mxu0 0.0
      %861 = vmatprep.subr.mxu0 0.0
      %862 = vmatpush1.msra.mxu0 0.0
      %863 = vmatprep.subr.mxu0 0.0
      %864 = vmatpush1.msra.mxu0 0.0
      %865 = vmatprep.subr.mxu0 0.0
      %866 = vmatpush1.msra.mxu0 0.0
      %867 = vmatprep.subr.mxu0 0.0
      %868 = vmatpush1.msra.mxu0 0.0
      %869 = vmatprep.subr.mxu0 0.0
      %870 = vmatpush1.msra.mxu0 0.0
      %871 = vmatprep.subr.mxu0 0.0
      %872 = vmatpush1.msra.mxu0 0.0
      %873 = vmatprep.subr.mxu0 0.0
      %874 = vmatpush1.msra.mxu0 0.0
      %875 = vmatprep.subr.mxu0 0.0
      %876 = vmatpush1.msra.mxu0 0.0
      %877 = vmatprep.subr.mxu0 0.0
      %878 = vmatpush1.msra.mxu0 0.0
      %879 = vmatprep.subr.mxu0 0.0
      %880 = vmatpush1.msra.mxu0 0.0
      %881 = vmatprep.subr.mxu0 0.0
      %882 = vmatpush1.msra.mxu0 0.0
      %883 = vmatprep.subr.mxu0 0.0
      %884 = vmatpush1.msra.mxu0 0.0
      %885 = vmatprep.subr.mxu0 0.0
      %886 = vmatpush1.msra.mxu0 0.0
      %887 = vmatprep.subr.mxu0 0.0
      %888 = vmatpush1.msra.mxu0 %v855
      %889 = vmatprep.subr.mxu0 0.0
      %890 = vmatpush2.msra.mxu0 0.0
      %891 = vmatprep.subr.mxu0 0.0
      %892 = vmatpush2.msra.mxu0 0.0
      %893 = vmatprep.subr.mxu0 0.0
      %894 = vmatpush2.msra.mxu0 0.0
      %895 = vmatprep.subr.mxu0 0.0
      %896 = vmatpush2.msra.mxu0 0.0
      %897 = vmatprep.subr.mxu0 0.0
      %898 = vmatpush2.msra.mxu0 0.0
      %899 = vmatprep.subr.mxu0 0.0
      %900 = vmatpush2.msra.mxu0 0.0
      %901 = vmatprep.subr.mxu0 0.0
      %902 = vmatpush2.msra.mxu0 0.0
      %903 = vmatprep.subr.mxu0 0.0
      %904 = vmatpush2.msra.mxu0 0.0
      %905 = vmatprep.subr.mxu0 0.0
      %906 = vmatpush2.msra.mxu0 0.0
      %907 = vmatprep.subr.mxu0 0.0
      %908 = vmatpush2.msra.mxu0 0.0
      %909 = vmatprep.subr.mxu0 0.0
      %910 = vmatpush2.msra.mxu0 0.0
      %911 = vmatprep.subr.mxu0 0.0
      %912 = vmatpush2.msra.mxu0 0.0
      %913 = vmatprep.subr.mxu0 0.0
      %914 = vmatpush2.msra.mxu0 0.0
      %915 = vmatprep.subr.mxu0 0.0
      %916 = vmatpush2.msra.mxu0 0.0
      %917 = vmatprep.subr.mxu0 0.0
      %918 = vmatpush2.msra.mxu0 0.0
      %919 = vmatprep.subr.mxu0 0.0
      %920 = vmatpush2.msra.mxu0 0.0
      %921 = vmatprep.mubr.f32.mxu0 0.0
      %922 = vmatmul.mubr.f32.gmra.mxu0 %v852
      %v923 = vpop.f32.mrf.mxu0
      %v924 = vadd.f32 0.0, %v923
      %v925 = vpop.f32.mrf.mxu0
      %926 = vdwg.mxu0
      %v927 = vadd.f32 %v848, %v924
      %s928 = scalar_lea.vmem %s6, 16
      %v929 = vld [vmem:[%s928] sm:$0xf]
      %v931 = vsel %vm612, %v603, 0
      %v934 = vsel %vm616, %v929, 0
      %936 = vmatprep.subr.mxu0 0.0
      %937 = vmatpush1.msra.mxu0 0.0
      %938 = vmatprep.subr.mxu0 0.0
      %939 = vmatpush1.msra.mxu0 0.0
      %940 = vmatprep.subr.mxu0 0.0
      %941 = vmatpush1.msra.mxu0 0.0
      %942 = vmatprep.subr.mxu0 0.0
      %943 = vmatpush1.msra.mxu0 0.0
      %944 = vmatprep.subr.mxu0 0.0
      %945 = vmatpush1.msra.mxu0 0.0
      %946 = vmatprep.subr.mxu0 0.0
      %947 = vmatpush1.msra.mxu0 0.0
      %948 = vmatprep.subr.mxu0 0.0
      %949 = vmatpush1.msra.mxu0 0.0
      %950 = vmatprep.subr.mxu0 0.0
      %951 = vmatpush1.msra.mxu0 0.0
      %952 = vmatprep.subr.mxu0 0.0
      %953 = vmatpush1.msra.mxu0 0.0
      %954 = vmatprep.subr.mxu0 0.0
      %955 = vmatpush1.msra.mxu0 0.0
      %956 = vmatprep.subr.mxu0 0.0
      %957 = vmatpush1.msra.mxu0 0.0
      %958 = vmatprep.subr.mxu0 0.0
      %959 = vmatpush1.msra.mxu0 0.0
      %960 = vmatprep.subr.mxu0 0.0
      %961 = vmatpush1.msra.mxu0 0.0
      %962 = vmatprep.subr.mxu0 0.0
      %963 = vmatpush1.msra.mxu0 0.0
      %964 = vmatprep.subr.mxu0 0.0
      %965 = vmatpush1.msra.mxu0 0.0
      %966 = vmatprep.subr.mxu0 0.0
      %967 = vmatpush1.msra.mxu0 %v934
      %968 = vmatprep.subr.mxu0 0.0
      %969 = vmatpush2.msra.mxu0 0.0
      %970 = vmatprep.subr.mxu0 0.0
      %971 = vmatpush2.msra.mxu0 0.0
      %972 = vmatprep.subr.mxu0 0.0
      %973 = vmatpush2.msra.mxu0 0.0
      %974 = vmatprep.subr.mxu0 0.0
      %975 = vmatpush2.msra.mxu0 0.0
      %976 = vmatprep.subr.mxu0 0.0
      %977 = vmatpush2.msra.mxu0 0.0
      %978 = vmatprep.subr.mxu0 0.0
      %979 = vmatpush2.msra.mxu0 0.0
      %980 = vmatprep.subr.mxu0 0.0
      %981 = vmatpush2.msra.mxu0 0.0
      %982 = vmatprep.subr.mxu0 0.0
      %983 = vmatpush2.msra.mxu0 0.0
      %984 = vmatprep.subr.mxu0 0.0
      %985 = vmatpush2.msra.mxu0 0.0
      %986 = vmatprep.subr.mxu0 0.0
      %987 = vmatpush2.msra.mxu0 0.0
      %988 = vmatprep.subr.mxu0 0.0
      %989 = vmatpush2.msra.mxu0 0.0
      %990 = vmatprep.subr.mxu0 0.0
      %991 = vmatpush2.msra.mxu0 0.0
      %992 = vmatprep.subr.mxu0 0.0
      %993 = vmatpush2.msra.mxu0 0.0
      %994 = vmatprep.subr.mxu0 0.0
      %995 = vmatpush2.msra.mxu0 0.0
      %996 = vmatprep.subr.mxu0 0.0
      %997 = vmatpush2.msra.mxu0 0.0
      %998 = vmatprep.subr.mxu0 0.0
      %999 = vmatpush2.msra.mxu0 0.0
      %1000 = vmatprep.mubr.f32.mxu0 0.0
      %1001 = vmatmul.mubr.f32.gmra.mxu0 %v931
      %v1002 = vpop.f32.mrf.mxu0
      %v1003 = vadd.f32 0.0, %v1002
      %v1004 = vpop.f32.mrf.mxu0
      %1005 = vdwg.mxu0
      %v1006 = vadd.f32 %v927, %v1003
      %s1007 = scalar_lea.vmem %s6, 20
      %v1008 = vld [vmem:[%s1007] sm:$0xf]
      %v1010 = vrot.slane %v601, 1
      %v1011 = vrot.slane %v602, 1
      %v1012 = vsel %vm769, %v1010, %v1011
      %v1013 = vsel %vm612, %v1012, 0
      %v1016 = vsel %vm616, %v1008, 0
      %1018 = vmatprep.subr.mxu0 0.0
      %1019 = vmatpush1.msra.mxu0 0.0
      %1020 = vmatprep.subr.mxu0 0.0
      %1021 = vmatpush1.msra.mxu0 0.0
      %1022 = vmatprep.subr.mxu0 0.0
      %1023 = vmatpush1.msra.mxu0 0.0
      %1024 = vmatprep.subr.mxu0 0.0
      %1025 = vmatpush1.msra.mxu0 0.0
      %1026 = vmatprep.subr.mxu0 0.0
      %1027 = vmatpush1.msra.mxu0 0.0
      %1028 = vmatprep.subr.mxu0 0.0
      %1029 = vmatpush1.msra.mxu0 0.0
      %1030 = vmatprep.subr.mxu0 0.0
      %1031 = vmatpush1.msra.mxu0 0.0
      %1032 = vmatprep.subr.mxu0 0.0
      %1033 = vmatpush1.msra.mxu0 0.0
      %1034 = vmatprep.subr.mxu0 0.0
      %1035 = vmatpush1.msra.mxu0 0.0
      %1036 = vmatprep.subr.mxu0 0.0
      %1037 = vmatpush1.msra.mxu0 0.0
      %1038 = vmatprep.subr.mxu0 0.0
      %1039 = vmatpush1.msra.mxu0 0.0
      %1040 = vmatprep.subr.mxu0 0.0
      %1041 = vmatpush1.msra.mxu0 0.0
      %1042 = vmatprep.subr.mxu0 0.0
      %1043 = vmatpush1.msra.mxu0 0.0
      %1044 = vmatprep.subr.mxu0 0.0
      %1045 = vmatpush1.msra.mxu0 0.0
      %1046 = vmatprep.subr.mxu0 0.0
      %1047 = vmatpush1.msra.mxu0 0.0
      %1048 = vmatprep.subr.mxu0 0.0
      %1049 = vmatpush1.msra.mxu0 %v1016
      %1050 = vmatprep.subr.mxu0 0.0
      %1051 = vmatpush2.msra.mxu0 0.0
      %1052 = vmatprep.subr.mxu0 0.0
      %1053 = vmatpush2.msra.mxu0 0.0
      %1054 = vmatprep.subr.mxu0 0.0
      %1055 = vmatpush2.msra.mxu0 0.0
      %1056 = vmatprep.subr.mxu0 0.0
      %1057 = vmatpush2.msra.mxu0 0.0
      %1058 = vmatprep.subr.mxu0 0.0
      %1059 = vmatpush2.msra.mxu0 0.0
      %1060 = vmatprep.subr.mxu0 0.0
      %1061 = vmatpush2.msra.mxu0 0.0
      %1062 = vmatprep.subr.mxu0 0.0
      %1063 = vmatpush2.msra.mxu0 0.0
      %1064 = vmatprep.subr.mxu0 0.0
      %1065 = vmatpush2.msra.mxu0 0.0
      %1066 = vmatprep.subr.mxu0 0.0
      %1067 = vmatpush2.msra.mxu0 0.0
      %1068 = vmatprep.subr.mxu0 0.0
      %1069 = vmatpush2.msra.mxu0 0.0
      %1070 = vmatprep.subr.mxu0 0.0
      %1071 = vmatpush2.msra.mxu0 0.0
      %1072 = vmatprep.subr.mxu0 0.0
      %1073 = vmatpush2.msra.mxu0 0.0
      %1074 = vmatprep.subr.mxu0 0.0
      %1075 = vmatpush2.msra.mxu0 0.0
      %1076 = vmatprep.subr.mxu0 0.0
      %1077 = vmatpush2.msra.mxu0 0.0
      %1078 = vmatprep.subr.mxu0 0.0
      %1079 = vmatpush2.msra.mxu0 0.0
      %1080 = vmatprep.subr.mxu0 0.0
      %1081 = vmatpush2.msra.mxu0 0.0
      %1082 = vmatprep.mubr.f32.mxu0 0.0
      %1083 = vmatmul.mubr.f32.gmra.mxu0 %v1013
      %v1084 = vpop.f32.mrf.mxu0
      %v1085 = vadd.f32 0.0, %v1084
      %v1086 = vpop.f32.mrf.mxu0
      %1087 = vdwg.mxu0
      %v1088 = vadd.f32 %v1006, %v1085
      %s1089 = scalar_lea.vmem %s6, 24
      %v1090 = vld [vmem:[%s1089] sm:$0xf]
      %v1092 = vsel %vm612, %v605, 0
      %v1095 = vsel %vm616, %v1090, 0
      %1097 = vmatprep.subr.mxu0 0.0
      %1098 = vmatpush1.msra.mxu0 0.0
      %1099 = vmatprep.subr.mxu0 0.0
      %1100 = vmatpush1.msra.mxu0 0.0
      %1101 = vmatprep.subr.mxu0 0.0
      %1102 = vmatpush1.msra.mxu0 0.0
      %1103 = vmatprep.subr.mxu0 0.0
      %1104 = vmatpush1.msra.mxu0 0.0
      %1105 = vmatprep.subr.mxu0 0.0
      %1106 = vmatpush1.msra.mxu0 0.0
      %1107 = vmatprep.subr.mxu0 0.0
      %1108 = vmatpush1.msra.mxu0 0.0
      %1109 = vmatprep.subr.mxu0 0.0
      %1110 = vmatpush1.msra.mxu0 0.0
      %1111 = vmatprep.subr.mxu0 0.0
      %1112 = vmatpush1.msra.mxu0 0.0
      %1113 = vmatprep.subr.mxu0 0.0
      %1114 = vmatpush1.msra.mxu0 0.0
      %1115 = vmatprep.subr.mxu0 0.0
      %1116 = vmatpush1.msra.mxu0 0.0
      %1117 = vmatprep.subr.mxu0 0.0
      %1118 = vmatpush1.msra.mxu0 0.0
      %1119 = vmatprep.subr.mxu0 0.0
      %1120 = vmatpush1.msra.mxu0 0.0
      %1121 = vmatprep.subr.mxu0 0.0
      %1122 = vmatpush1.msra.mxu0 0.0
      %1123 = vmatprep.subr.mxu0 0.0
      %1124 = vmatpush1.msra.mxu0 0.0
      %1125 = vmatprep.subr.mxu0 0.0
      %1126 = vmatpush1.msra.mxu0 0.0
      %1127 = vmatprep.subr.mxu0 0.0
      %1128 = vmatpush1.msra.mxu0 %v1095
      %1129 = vmatprep.subr.mxu0 0.0
      %1130 = vmatpush2.msra.mxu0 0.0
      %1131 = vmatprep.subr.mxu0 0.0
      %1132 = vmatpush2.msra.mxu0 0.0
      %1133 = vmatprep.subr.mxu0 0.0
      %1134 = vmatpush2.msra.mxu0 0.0
      %1135 = vmatprep.subr.mxu0 0.0
      %1136 = vmatpush2.msra.mxu0 0.0
      %1137 = vmatprep.subr.mxu0 0.0
      %1138 = vmatpush2.msra.mxu0 0.0
      %1139 = vmatprep.subr.mxu0 0.0
      %1140 = vmatpush2.msra.mxu0 0.0
      %1141 = vmatprep.subr.mxu0 0.0
      %1142 = vmatpush2.msra.mxu0 0.0
      %1143 = vmatprep.subr.mxu0 0.0
      %1144 = vmatpush2.msra.mxu0 0.0
      %1145 = vmatprep.subr.mxu0 0.0
      %1146 = vmatpush2.msra.mxu0 0.0
      %1147 = vmatprep.subr.mxu0 0.0
      %1148 = vmatpush2.msra.mxu0 0.0
      %1149 = vmatprep.subr.mxu0 0.0
      %1150 = vmatpush2.msra.mxu0 0.0
      %1151 = vmatprep.subr.mxu0 0.0
      %1152 = vmatpush2.msra.mxu0 0.0
      %1153 = vmatprep.subr.mxu0 0.0
      %1154 = vmatpush2.msra.mxu0 0.0
      %1155 = vmatprep.subr.mxu0 0.0
      %1156 = vmatpush2.msra.mxu0 0.0
      %1157 = vmatprep.subr.mxu0 0.0
      %1158 = vmatpush2.msra.mxu0 0.0
      %1159 = vmatprep.subr.mxu0 0.0
      %1160 = vmatpush2.msra.mxu0 0.0
      %1161 = vmatprep.mubr.f32.mxu0 0.0
      %1162 = vmatmul.mubr.f32.gmra.mxu0 %v1092
      %v1163 = vpop.f32.mrf.mxu0
      %v1164 = vadd.f32 0.0, %v1163
      %v1165 = vpop.f32.mrf.mxu0
      %1166 = vdwg.mxu0
      %v1167 = vadd.f32 %v1088, %v1164
      %s1168 = scalar_lea.vmem %s6, 28
      %v1169 = vld [vmem:[%s1168] sm:$0xf]
      %v1171 = vsel %vm612, %v608, 0
      %v1174 = vsel %vm616, %v1169, 0
      %1176 = vmatprep.subr.mxu0 0.0
      %1177 = vmatpush1.msra.mxu0 0.0
      %1178 = vmatprep.subr.mxu0 0.0
      %1179 = vmatpush1.msra.mxu0 0.0
      %1180 = vmatprep.subr.mxu0 0.0
      %1181 = vmatpush1.msra.mxu0 0.0
      %1182 = vmatprep.subr.mxu0 0.0
      %1183 = vmatpush1.msra.mxu0 0.0
      %1184 = vmatprep.subr.mxu0 0.0
      %1185 = vmatpush1.msra.mxu0 0.0
      %1186 = vmatprep.subr.mxu0 0.0
      %1187 = vmatpush1.msra.mxu0 0.0
      %1188 = vmatprep.subr.mxu0 0.0
      %1189 = vmatpush1.msra.mxu0 0.0
      %1190 = vmatprep.subr.mxu0 0.0
      %1191 = vmatpush1.msra.mxu0 0.0
      %1192 = vmatprep.subr.mxu0 0.0
      %1193 = vmatpush1.msra.mxu0 0.0
      %1194 = vmatprep.subr.mxu0 0.0
      %1195 = vmatpush1.msra.mxu0 0.0
      %1196 = vmatprep.subr.mxu0 0.0
      %1197 = vmatpush1.msra.mxu0 0.0
      %1198 = vmatprep.subr.mxu0 0.0
      %1199 = vmatpush1.msra.mxu0 0.0
      %1200 = vmatprep.subr.mxu0 0.0
      %1201 = vmatpush1.msra.mxu0 0.0
      %1202 = vmatprep.subr.mxu0 0.0
      %1203 = vmatpush1.msra.mxu0 0.0
      %1204 = vmatprep.subr.mxu0 0.0
      %1205 = vmatpush1.msra.mxu0 0.0
      %1206 = vmatprep.subr.mxu0 0.0
      %1207 = vmatpush1.msra.mxu0 %v1174
      %1208 = vmatprep.subr.mxu0 0.0
      %1209 = vmatpush2.msra.mxu0 0.0
      %1210 = vmatprep.subr.mxu0 0.0
      %1211 = vmatpush2.msra.mxu0 0.0
      %1212 = vmatprep.subr.mxu0 0.0
      %1213 = vmatpush2.msra.mxu0 0.0
      %1214 = vmatprep.subr.mxu0 0.0
      %1215 = vmatpush2.msra.mxu0 0.0
      %1216 = vmatprep.subr.mxu0 0.0
      %1217 = vmatpush2.msra.mxu0 0.0
      %1218 = vmatprep.subr.mxu0 0.0
      %1219 = vmatpush2.msra.mxu0 0.0
      %1220 = vmatprep.subr.mxu0 0.0
      %1221 = vmatpush2.msra.mxu0 0.0
      %1222 = vmatprep.subr.mxu0 0.0
      %1223 = vmatpush2.msra.mxu0 0.0
      %1224 = vmatprep.subr.mxu0 0.0
      %1225 = vmatpush2.msra.mxu0 0.0
      %1226 = vmatprep.subr.mxu0 0.0
      %1227 = vmatpush2.msra.mxu0 0.0
      %1228 = vmatprep.subr.mxu0 0.0
      %1229 = vmatpush2.msra.mxu0 0.0
      %1230 = vmatprep.subr.mxu0 0.0
      %1231 = vmatpush2.msra.mxu0 0.0
      %1232 = vmatprep.subr.mxu0 0.0
      %1233 = vmatpush2.msra.mxu0 0.0
      %1234 = vmatprep.subr.mxu0 0.0
      %1235 = vmatpush2.msra.mxu0 0.0
      %1236 = vmatprep.subr.mxu0 0.0
      %1237 = vmatpush2.msra.mxu0 0.0
      %1238 = vmatprep.subr.mxu0 0.0
      %1239 = vmatpush2.msra.mxu0 0.0
      %1240 = vmatprep.mubr.f32.mxu0 0.0
      %1241 = vmatmul.mubr.f32.gmra.mxu0 %v1171
      %v1242 = vpop.f32.mrf.mxu0
      %v1243 = vadd.f32 0.0, %v1242
      %v1244 = vpop.f32.mrf.mxu0
      %1245 = vdwg.mxu0
      %v1246 = vadd.f32 %v1167, %v1243
      %s1247 = scalar_lea.vmem %s6, 32
      %v1248 = vld [vmem:[%s1247] sm:$0xf]
      %v1250 = vrot.slane %v605, 1
      %v1251 = vrot.slane %v606, 1
      %v1252 = vsel %vm769, %v1250, %v1251
      %v1253 = vsel %vm612, %v1252, 0
      %v1256 = vsel %vm616, %v1248, 0
      %1258 = vmatprep.subr.mxu0 0.0
      %1259 = vmatpush1.msra.mxu0 0.0
      %1260 = vmatprep.subr.mxu0 0.0
      %1261 = vmatpush1.msra.mxu0 0.0
      %1262 = vmatprep.subr.mxu0 0.0
      %1263 = vmatpush1.msra.mxu0 0.0
      %1264 = vmatprep.subr.mxu0 0.0
      %1265 = vmatpush1.msra.mxu0 0.0
      %1266 = vmatprep.subr.mxu0 0.0
      %1267 = vmatpush1.msra.mxu0 0.0
      %1268 = vmatprep.subr.mxu0 0.0
      %1269 = vmatpush1.msra.mxu0 0.0
      %1270 = vmatprep.subr.mxu0 0.0
      %1271 = vmatpush1.msra.mxu0 0.0
      %1272 = vmatprep.subr.mxu0 0.0
      %1273 = vmatpush1.msra.mxu0 0.0
      %1274 = vmatprep.subr.mxu0 0.0
      %1275 = vmatpush1.msra.mxu0 0.0
      %1276 = vmatprep.subr.mxu0 0.0
      %1277 = vmatpush1.msra.mxu0 0.0
      %1278 = vmatprep.subr.mxu0 0.0
      %1279 = vmatpush1.msra.mxu0 0.0
      %1280 = vmatprep.subr.mxu0 0.0
      %1281 = vmatpush1.msra.mxu0 0.0
      %1282 = vmatprep.subr.mxu0 0.0
      %1283 = vmatpush1.msra.mxu0 0.0
      %1284 = vmatprep.subr.mxu0 0.0
      %1285 = vmatpush1.msra.mxu0 0.0
      %1286 = vmatprep.subr.mxu0 0.0
      %1287 = vmatpush1.msra.mxu0 0.0
      %1288 = vmatprep.subr.mxu0 0.0
      %1289 = vmatpush1.msra.mxu0 %v1256
      %1290 = vmatprep.subr.mxu0 0.0
      %1291 = vmatpush2.msra.mxu0 0.0
      %1292 = vmatprep.subr.mxu0 0.0
      %1293 = vmatpush2.msra.mxu0 0.0
      %1294 = vmatprep.subr.mxu0 0.0
      %1295 = vmatpush2.msra.mxu0 0.0
      %1296 = vmatprep.subr.mxu0 0.0
      %1297 = vmatpush2.msra.mxu0 0.0
      %1298 = vmatprep.subr.mxu0 0.0
      %1299 = vmatpush2.msra.mxu0 0.0
      %1300 = vmatprep.subr.mxu0 0.0
      %1301 = vmatpush2.msra.mxu0 0.0
      %1302 = vmatprep.subr.mxu0 0.0
      %1303 = vmatpush2.msra.mxu0 0.0
      %1304 = vmatprep.subr.mxu0 0.0
      %1305 = vmatpush2.msra.mxu0 0.0
      %1306 = vmatprep.subr.mxu0 0.0
      %1307 = vmatpush2.msra.mxu0 0.0
      %1308 = vmatprep.subr.mxu0 0.0
      %1309 = vmatpush2.msra.mxu0 0.0
      %1310 = vmatprep.subr.mxu0 0.0
      %1311 = vmatpush2.msra.mxu0 0.0
      %1312 = vmatprep.subr.mxu0 0.0
      %1313 = vmatpush2.msra.mxu0 0.0
      %1314 = vmatprep.subr.mxu0 0.0
      %1315 = vmatpush2.msra.mxu0 0.0
      %1316 = vmatprep.subr.mxu0 0.0
      %1317 = vmatpush2.msra.mxu0 0.0
      %1318 = vmatprep.subr.mxu0 0.0
      %1319 = vmatpush2.msra.mxu0 0.0
      %1320 = vmatprep.subr.mxu0 0.0
      %1321 = vmatpush2.msra.mxu0 0.0
      %1322 = vmatprep.mubr.f32.mxu0 0.0
      %1323 = vmatmul.mubr.f32.gmra.mxu0 %v1253
      %v1324 = vpop.f32.mrf.mxu0
      %v1325 = vadd.f32 0.0, %v1324
      %v1326 = vpop.f32.mrf.mxu0
      %1327 = vdwg.mxu0
      %v1328 = vadd.f32 %v1246, %v1325
      %v1330 = vlaneseq
      %v1331 = vshrl.u32 %v1330, 7
      %v1332 = vsub.s32 0, %v1331
      %v1333 = vrot.slane %v597, %v1332
      %v1335 = vadd.f32 %v1328, %v1333
      %1336 = vst.msk [vmem:[%s595] sm:$0xff] %vm612, %v1335
      %v1337 = vld [vmem:[%s604] sm:$0xff]
      %v1338 = vld [vmem:[%s604 + $0x8] sm:$0x1]
      %v1339 = vld [vmem:[%s607] sm:$0xff]
      %s1340 = scalar_lea.vmem %s575, 16
      %v1341 = vld [vmem:[%s1340] sm:$0xff]
      %v1342 = vld [vmem:[%s1340 + $0x8] sm:$0x1]
      %s1343 = scalar_lea.vmem %s585, 8
      %v1344 = vld [vmem:[%s1343] sm:$0xff]
      %s1345 = scalar_lea.vmem %s516, 32
      %v1346 = vld [vmem:[%s1345] sm:$0xff]
      %v1347 = vld [vmem:[%s1345 + $0x8] sm:$0x1]
      %s1348 = scalar_lea.vmem %s535, 16
      %v1349 = vld [vmem:[%s1348] sm:$0xff]
      %v1350 = vld [vmem:[%s6] sm:$0xf]
      %v1351 = vld [vmem:[%s610] sm:$0xf]
      %v1353 = vsel %vm612, %v1339, 0
      %v1356 = vsel %vm616, %v1351, 0
      %1358 = vmatprep.subr.mxu0 0.0
      %1359 = vmatpush1.msra.mxu0 0.0
      %1360 = vmatprep.subr.mxu0 0.0
      %1361 = vmatpush1.msra.mxu0 0.0
      %1362 = vmatprep.subr.mxu0 0.0
      %1363 = vmatpush1.msra.mxu0 0.0
      %1364 = vmatprep.subr.mxu0 0.0
      %1365 = vmatpush1.msra.mxu0 0.0
      %1366 = vmatprep.subr.mxu0 0.0
      %1367 = vmatpush1.msra.mxu0 0.0
      %1368 = vmatprep.subr.mxu0 0.0
      %1369 = vmatpush1.msra.mxu0 0.0
      %1370 = vmatprep.subr.mxu0 0.0
      %1371 = vmatpush1.msra.mxu0 0.0
      %1372 = vmatprep.subr.mxu0 0.0
      %1373 = vmatpush1.msra.mxu0 0.0
      %1374 = vmatprep.subr.mxu0 0.0
      %1375 = vmatpush1.msra.mxu0 0.0
      %1376 = vmatprep.subr.mxu0 0.0
      %1377 = vmatpush1.msra.mxu0 0.0
      %1378 = vmatprep.subr.mxu0 0.0
      %1379 = vmatpush1.msra.mxu0 0.0
      %1380 = vmatprep.subr.mxu0 0.0
      %1381 = vmatpush1.msra.mxu0 0.0
      %1382 = vmatprep.subr.mxu0 0.0
      %1383 = vmatpush1.msra.mxu0 0.0
      %1384 = vmatprep.subr.mxu0 0.0
      %1385 = vmatpush1.msra.mxu0 0.0
      %1386 = vmatprep.subr.mxu0 0.0
      %1387 = vmatpush1.msra.mxu0 0.0
      %1388 = vmatprep.subr.mxu0 0.0
      %1389 = vmatpush1.msra.mxu0 %v1356
      %1390 = vmatprep.subr.mxu0 0.0
      %1391 = vmatpush2.msra.mxu0 0.0
      %1392 = vmatprep.subr.mxu0 0.0
      %1393 = vmatpush2.msra.mxu0 0.0
      %1394 = vmatprep.subr.mxu0 0.0
      %1395 = vmatpush2.msra.mxu0 0.0
      %1396 = vmatprep.subr.mxu0 0.0
      %1397 = vmatpush2.msra.mxu0 0.0
      %1398 = vmatprep.subr.mxu0 0.0
      %1399 = vmatpush2.msra.mxu0 0.0
      %1400 = vmatprep.subr.mxu0 0.0
      %1401 = vmatpush2.msra.mxu0 0.0
      %1402 = vmatprep.subr.mxu0 0.0
      %1403 = vmatpush2.msra.mxu0 0.0
      %1404 = vmatprep.subr.mxu0 0.0
      %1405 = vmatpush2.msra.mxu0 0.0
      %1406 = vmatprep.subr.mxu0 0.0
      %1407 = vmatpush2.msra.mxu0 0.0
      %1408 = vmatprep.subr.mxu0 0.0
      %1409 = vmatpush2.msra.mxu0 0.0
      %1410 = vmatprep.subr.mxu0 0.0
      %1411 = vmatpush2.msra.mxu0 0.0
      %1412 = vmatprep.subr.mxu0 0.0
      %1413 = vmatpush2.msra.mxu0 0.0
      %1414 = vmatprep.subr.mxu0 0.0
      %1415 = vmatpush2.msra.mxu0 0.0
      %1416 = vmatprep.subr.mxu0 0.0
      %1417 = vmatpush2.msra.mxu0 0.0
      %1418 = vmatprep.subr.mxu0 0.0
      %1419 = vmatpush2.msra.mxu0 0.0
      %1420 = vmatprep.subr.mxu0 0.0
      %1421 = vmatpush2.msra.mxu0 0.0
      %1422 = vmatprep.mubr.f32.mxu0 0.0
      %1423 = vmatmul.mubr.f32.gmra.mxu0 %v1353
      %v1424 = vpop.f32.mrf.mxu0
      %v1425 = vadd.f32 0.0, %v1424
      %v1426 = vpop.f32.mrf.mxu0
      %1427 = vdwg.mxu0
      %v1429 = vsel %vm612, %v1337, 0
      %v1432 = vsel %vm616, %v1350, 0
      %1434 = vmatprep.subr.mxu0 0.0
      %1435 = vmatpush1.msra.mxu0 0.0
      %1436 = vmatprep.subr.mxu0 0.0
      %1437 = vmatpush1.msra.mxu0 0.0
      %1438 = vmatprep.subr.mxu0 0.0
      %1439 = vmatpush1.msra.mxu0 0.0
      %1440 = vmatprep.subr.mxu0 0.0
      %1441 = vmatpush1.msra.mxu0 0.0
      %1442 = vmatprep.subr.mxu0 0.0
      %1443 = vmatpush1.msra.mxu0 0.0
      %1444 = vmatprep.subr.mxu0 0.0
      %1445 = vmatpush1.msra.mxu0 0.0
      %1446 = vmatprep.subr.mxu0 0.0
      %1447 = vmatpush1.msra.mxu0 0.0
      %1448 = vmatprep.subr.mxu0 0.0
      %1449 = vmatpush1.msra.mxu0 0.0
      %1450 = vmatprep.subr.mxu0 0.0
      %1451 = vmatpush1.msra.mxu0 0.0
      %1452 = vmatprep.subr.mxu0 0.0
      %1453 = vmatpush1.msra.mxu0 0.0
      %1454 = vmatprep.subr.mxu0 0.0
      %1455 = vmatpush1.msra.mxu0 0.0
      %1456 = vmatprep.subr.mxu0 0.0
      %1457 = vmatpush1.msra.mxu0 0.0
      %1458 = vmatprep.subr.mxu0 0.0
      %1459 = vmatpush1.msra.mxu0 0.0
      %1460 = vmatprep.subr.mxu0 0.0
      %1461 = vmatpush1.msra.mxu0 0.0
      %1462 = vmatprep.subr.mxu0 0.0
      %1463 = vmatpush1.msra.mxu0 0.0
      %1464 = vmatprep.subr.mxu0 0.0
      %1465 = vmatpush1.msra.mxu0 %v1432
      %1466 = vmatprep.subr.mxu0 0.0
      %1467 = vmatpush2.msra.mxu0 0.0
      %1468 = vmatprep.subr.mxu0 0.0
      %1469 = vmatpush2.msra.mxu0 0.0
      %1470 = vmatprep.subr.mxu0 0.0
      %1471 = vmatpush2.msra.mxu0 0.0
      %1472 = vmatprep.subr.mxu0 0.0
      %1473 = vmatpush2.msra.mxu0 0.0
      %1474 = vmatprep.subr.mxu0 0.0
      %1475 = vmatpush2.msra.mxu0 0.0
      %1476 = vmatprep.subr.mxu0 0.0
      %1477 = vmatpush2.msra.mxu0 0.0
      %1478 = vmatprep.subr.mxu0 0.0
      %1479 = vmatpush2.msra.mxu0 0.0
      %1480 = vmatprep.subr.mxu0 0.0
      %1481 = vmatpush2.msra.mxu0 0.0
      %1482 = vmatprep.subr.mxu0 0.0
      %1483 = vmatpush2.msra.mxu0 0.0
      %1484 = vmatprep.subr.mxu0 0.0
      %1485 = vmatpush2.msra.mxu0 0.0
      %1486 = vmatprep.subr.mxu0 0.0
      %1487 = vmatpush2.msra.mxu0 0.0
      %1488 = vmatprep.subr.mxu0 0.0
      %1489 = vmatpush2.msra.mxu0 0.0
      %1490 = vmatprep.subr.mxu0 0.0
      %1491 = vmatpush2.msra.mxu0 0.0
      %1492 = vmatprep.subr.mxu0 0.0
      %1493 = vmatpush2.msra.mxu0 0.0
      %1494 = vmatprep.subr.mxu0 0.0
      %1495 = vmatpush2.msra.mxu0 0.0
      %1496 = vmatprep.subr.mxu0 0.0
      %1497 = vmatpush2.msra.mxu0 0.0
      %1498 = vmatprep.mubr.f32.mxu0 0.0
      %1499 = vmatmul.mubr.f32.gmra.mxu0 %v1429
      %v1500 = vpop.f32.mrf.mxu0
      %v1501 = vadd.f32 %v1425, %v1500
      %v1502 = vpop.f32.mrf.mxu0
      %1503 = vdwg.mxu0
      %v1504 = vld [vmem:[%s766] sm:$0xf]
      %v1506 = vrot.slane %v1337, 1
      %v1507 = vrot.slane %v1338, 1
      %v1508 = vsel %vm769, %v1506, %v1507
      %v1509 = vsel %vm612, %v1508, 0
      %v1512 = vsel %vm616, %v1504, 0
      %1514 = vmatprep.subr.mxu0 0.0
      %1515 = vmatpush1.msra.mxu0 0.0
      %1516 = vmatprep.subr.mxu0 0.0
      %1517 = vmatpush1.msra.mxu0 0.0
      %1518 = vmatprep.subr.mxu0 0.0
      %1519 = vmatpush1.msra.mxu0 0.0
      %1520 = vmatprep.subr.mxu0 0.0
      %1521 = vmatpush1.msra.mxu0 0.0
      %1522 = vmatprep.subr.mxu0 0.0
      %1523 = vmatpush1.msra.mxu0 0.0
      %1524 = vmatprep.subr.mxu0 0.0
      %1525 = vmatpush1.msra.mxu0 0.0
      %1526 = vmatprep.subr.mxu0 0.0
      %1527 = vmatpush1.msra.mxu0 0.0
      %1528 = vmatprep.subr.mxu0 0.0
      %1529 = vmatpush1.msra.mxu0 0.0
      %1530 = vmatprep.subr.mxu0 0.0
      %1531 = vmatpush1.msra.mxu0 0.0
      %1532 = vmatprep.subr.mxu0 0.0
      %1533 = vmatpush1.msra.mxu0 0.0
      %1534 = vmatprep.subr.mxu0 0.0
      %1535 = vmatpush1.msra.mxu0 0.0
      %1536 = vmatprep.subr.mxu0 0.0
      %1537 = vmatpush1.msra.mxu0 0.0
      %1538 = vmatprep.subr.mxu0 0.0
      %1539 = vmatpush1.msra.mxu0 0.0
      %1540 = vmatprep.subr.mxu0 0.0
      %1541 = vmatpush1.msra.mxu0 0.0
      %1542 = vmatprep.subr.mxu0 0.0
      %1543 = vmatpush1.msra.mxu0 0.0
      %1544 = vmatprep.subr.mxu0 0.0
      %1545 = vmatpush1.msra.mxu0 %v1512
      %1546 = vmatprep.subr.mxu0 0.0
      %1547 = vmatpush2.msra.mxu0 0.0
      %1548 = vmatprep.subr.mxu0 0.0
      %1549 = vmatpush2.msra.mxu0 0.0
      %1550 = vmatprep.subr.mxu0 0.0
      %1551 = vmatpush2.msra.mxu0 0.0
      %1552 = vmatprep.subr.mxu0 0.0
      %1553 = vmatpush2.msra.mxu0 0.0
      %1554 = vmatprep.subr.mxu0 0.0
      %1555 = vmatpush2.msra.mxu0 0.0
      %1556 = vmatprep.subr.mxu0 0.0
      %1557 = vmatpush2.msra.mxu0 0.0
      %1558 = vmatprep.subr.mxu0 0.0
      %1559 = vmatpush2.msra.mxu0 0.0
      %1560 = vmatprep.subr.mxu0 0.0
      %1561 = vmatpush2.msra.mxu0 0.0
      %1562 = vmatprep.subr.mxu0 0.0
      %1563 = vmatpush2.msra.mxu0 0.0
      %1564 = vmatprep.subr.mxu0 0.0
      %1565 = vmatpush2.msra.mxu0 0.0
      %1566 = vmatprep.subr.mxu0 0.0
      %1567 = vmatpush2.msra.mxu0 0.0
      %1568 = vmatprep.subr.mxu0 0.0
      %1569 = vmatpush2.msra.mxu0 0.0
      %1570 = vmatprep.subr.mxu0 0.0
      %1571 = vmatpush2.msra.mxu0 0.0
      %1572 = vmatprep.subr.mxu0 0.0
      %1573 = vmatpush2.msra.mxu0 0.0
      %1574 = vmatprep.subr.mxu0 0.0
      %1575 = vmatpush2.msra.mxu0 0.0
      %1576 = vmatprep.subr.mxu0 0.0
      %1577 = vmatpush2.msra.mxu0 0.0
      %1578 = vmatprep.mubr.f32.mxu0 0.0
      %1579 = vmatmul.mubr.f32.gmra.mxu0 %v1509
      %v1580 = vpop.f32.mrf.mxu0
      %v1581 = vadd.f32 0.0, %v1580
      %v1582 = vpop.f32.mrf.mxu0
      %1583 = vdwg.mxu0
      %v1584 = vadd.f32 %v1501, %v1581
      %v1585 = vld [vmem:[%s849] sm:$0xf]
      %v1587 = vsel %vm612, %v1341, 0
      %v1590 = vsel %vm616, %v1585, 0
      %1592 = vmatprep.subr.mxu0 0.0
      %1593 = vmatpush1.msra.mxu0 0.0
      %1594 = vmatprep.subr.mxu0 0.0
      %1595 = vmatpush1.msra.mxu0 0.0
      %1596 = vmatprep.subr.mxu0 0.0
      %1597 = vmatpush1.msra.mxu0 0.0
      %1598 = vmatprep.subr.mxu0 0.0
      %1599 = vmatpush1.msra.mxu0 0.0
      %1600 = vmatprep.subr.mxu0 0.0
      %1601 = vmatpush1.msra.mxu0 0.0
      %1602 = vmatprep.subr.mxu0 0.0
      %1603 = vmatpush1.msra.mxu0 0.0
      %1604 = vmatprep.subr.mxu0 0.0
      %1605 = vmatpush1.msra.mxu0 0.0
      %1606 = vmatprep.subr.mxu0 0.0
      %1607 = vmatpush1.msra.mxu0 0.0
      %1608 = vmatprep.subr.mxu0 0.0
      %1609 = vmatpush1.msra.mxu0 0.0
      %1610 = vmatprep.subr.mxu0 0.0
      %1611 = vmatpush1.msra.mxu0 0.0
      %1612 = vmatprep.subr.mxu0 0.0
      %1613 = vmatpush1.msra.mxu0 0.0
      %1614 = vmatprep.subr.mxu0 0.0
      %1615 = vmatpush1.msra.mxu0 0.0
      %1616 = vmatprep.subr.mxu0 0.0
      %1617 = vmatpush1.msra.mxu0 0.0
      %1618 = vmatprep.subr.mxu0 0.0
      %1619 = vmatpush1.msra.mxu0 0.0
      %1620 = vmatprep.subr.mxu0 0.0
      %1621 = vmatpush1.msra.mxu0 0.0
      %1622 = vmatprep.subr.mxu0 0.0
      %1623 = vmatpush1.msra.mxu0 %v1590
      %1624 = vmatprep.subr.mxu0 0.0
      %1625 = vmatpush2.msra.mxu0 0.0
      %1626 = vmatprep.subr.mxu0 0.0
      %1627 = vmatpush2.msra.mxu0 0.0
      %1628 = vmatprep.subr.mxu0 0.0
      %1629 = vmatpush2.msra.mxu0 0.0
      %1630 = vmatprep.subr.mxu0 0.0
      %1631 = vmatpush2.msra.mxu0 0.0
      %1632 = vmatprep.subr.mxu0 0.0
      %1633 = vmatpush2.msra.mxu0 0.0
      %1634 = vmatprep.subr.mxu0 0.0
      %1635 = vmatpush2.msra.mxu0 0.0
      %1636 = vmatprep.subr.mxu0 0.0
      %1637 = vmatpush2.msra.mxu0 0.0
      %1638 = vmatprep.subr.mxu0 0.0
      %1639 = vmatpush2.msra.mxu0 0.0
      %1640 = vmatprep.subr.mxu0 0.0
      %1641 = vmatpush2.msra.mxu0 0.0
      %1642 = vmatprep.subr.mxu0 0.0
      %1643 = vmatpush2.msra.mxu0 0.0
      %1644 = vmatprep.subr.mxu0 0.0
      %1645 = vmatpush2.msra.mxu0 0.0
      %1646 = vmatprep.subr.mxu0 0.0
      %1647 = vmatpush2.msra.mxu0 0.0
      %1648 = vmatprep.subr.mxu0 0.0
      %1649 = vmatpush2.msra.mxu0 0.0
      %1650 = vmatprep.subr.mxu0 0.0
      %1651 = vmatpush2.msra.mxu0 0.0
      %1652 = vmatprep.subr.mxu0 0.0
      %1653 = vmatpush2.msra.mxu0 0.0
      %1654 = vmatprep.subr.mxu0 0.0
      %1655 = vmatpush2.msra.mxu0 0.0
      %1656 = vmatprep.mubr.f32.mxu0 0.0
      %1657 = vmatmul.mubr.f32.gmra.mxu0 %v1587
      %v1658 = vpop.f32.mrf.mxu0
      %v1659 = vadd.f32 0.0, %v1658
      %v1660 = vpop.f32.mrf.mxu0
      %1661 = vdwg.mxu0
      %v1662 = vadd.f32 %v1584, %v1659
      %v1663 = vld [vmem:[%s928] sm:$0xf]
      %v1665 = vsel %vm612, %v1344, 0
      %v1668 = vsel %vm616, %v1663, 0
      %1670 = vmatprep.subr.mxu0 0.0
      %1671 = vmatpush1.msra.mxu0 0.0
      %1672 = vmatprep.subr.mxu0 0.0
      %1673 = vmatpush1.msra.mxu0 0.0
      %1674 = vmatprep.subr.mxu0 0.0
      %1675 = vmatpush1.msra.mxu0 0.0
      %1676 = vmatprep.subr.mxu0 0.0
      %1677 = vmatpush1.msra.mxu0 0.0
      %1678 = vmatprep.subr.mxu0 0.0
      %1679 = vmatpush1.msra.mxu0 0.0
      %1680 = vmatprep.subr.mxu0 0.0
      %1681 = vmatpush1.msra.mxu0 0.0
      %1682 = vmatprep.subr.mxu0 0.0
      %1683 = vmatpush1.msra.mxu0 0.0
      %1684 = vmatprep.subr.mxu0 0.0
      %1685 = vmatpush1.msra.mxu0 0.0
      %1686 = vmatprep.subr.mxu0 0.0
      %1687 = vmatpush1.msra.mxu0 0.0
      %1688 = vmatprep.subr.mxu0 0.0
      %1689 = vmatpush1.msra.mxu0 0.0
      %1690 = vmatprep.subr.mxu0 0.0
      %1691 = vmatpush1.msra.mxu0 0.0
      %1692 = vmatprep.subr.mxu0 0.0
      %1693 = vmatpush1.msra.mxu0 0.0
      %1694 = vmatprep.subr.mxu0 0.0
      %1695 = vmatpush1.msra.mxu0 0.0
      %1696 = vmatprep.subr.mxu0 0.0
      %1697 = vmatpush1.msra.mxu0 0.0
      %1698 = vmatprep.subr.mxu0 0.0
      %1699 = vmatpush1.msra.mxu0 0.0
      %1700 = vmatprep.subr.mxu0 0.0
      %1701 = vmatpush1.msra.mxu0 %v1668
      %1702 = vmatprep.subr.mxu0 0.0
      %1703 = vmatpush2.msra.mxu0 0.0
      %1704 = vmatprep.subr.mxu0 0.0
      %1705 = vmatpush2.msra.mxu0 0.0
      %1706 = vmatprep.subr.mxu0 0.0
      %1707 = vmatpush2.msra.mxu0 0.0
      %1708 = vmatprep.subr.mxu0 0.0
      %1709 = vmatpush2.msra.mxu0 0.0
      %1710 = vmatprep.subr.mxu0 0.0
      %1711 = vmatpush2.msra.mxu0 0.0
      %1712 = vmatprep.subr.mxu0 0.0
      %1713 = vmatpush2.msra.mxu0 0.0
      %1714 = vmatprep.subr.mxu0 0.0
      %1715 = vmatpush2.msra.mxu0 0.0
      %1716 = vmatprep.subr.mxu0 0.0
      %1717 = vmatpush2.msra.mxu0 0.0
      %1718 = vmatprep.subr.mxu0 0.0
      %1719 = vmatpush2.msra.mxu0 0.0
      %1720 = vmatprep.subr.mxu0 0.0
      %1721 = vmatpush2.msra.mxu0 0.0
      %1722 = vmatprep.subr.mxu0 0.0
      %1723 = vmatpush2.msra.mxu0 0.0
      %1724 = vmatprep.subr.mxu0 0.0
      %1725 = vmatpush2.msra.mxu0 0.0
      %1726 = vmatprep.subr.mxu0 0.0
      %1727 = vmatpush2.msra.mxu0 0.0
      %1728 = vmatprep.subr.mxu0 0.0
      %1729 = vmatpush2.msra.mxu0 0.0
      %1730 = vmatprep.subr.mxu0 0.0
      %1731 = vmatpush2.msra.mxu0 0.0
      %1732 = vmatprep.subr.mxu0 0.0
      %1733 = vmatpush2.msra.mxu0 0.0
      %1734 = vmatprep.mubr.f32.mxu0 0.0
      %1735 = vmatmul.mubr.f32.gmra.mxu0 %v1665
      %v1736 = vpop.f32.mrf.mxu0
      %v1737 = vadd.f32 0.0, %v1736
      %v1738 = vpop.f32.mrf.mxu0
      %1739 = vdwg.mxu0
      %v1740 = vadd.f32 %v1662, %v1737
      %v1741 = vld [vmem:[%s1007] sm:$0xf]
      %v1743 = vrot.slane %v1341, 1
      %v1744 = vrot.slane %v1342, 1
      %v1745 = vsel %vm769, %v1743, %v1744
      %v1746 = vsel %vm612, %v1745, 0
      %v1749 = vsel %vm616, %v1741, 0
      %1751 = vmatprep.subr.mxu0 0.0
      %1752 = vmatpush1.msra.mxu0 0.0
      %1753 = vmatprep.subr.mxu0 0.0
      %1754 = vmatpush1.msra.mxu0 0.0
      %1755 = vmatprep.subr.mxu0 0.0
      %1756 = vmatpush1.msra.mxu0 0.0
      %1757 = vmatprep.subr.mxu0 0.0
      %1758 = vmatpush1.msra.mxu0 0.0
      %1759 = vmatprep.subr.mxu0 0.0
      %1760 = vmatpush1.msra.mxu0 0.0
      %1761 = vmatprep.subr.mxu0 0.0
      %1762 = vmatpush1.msra.mxu0 0.0
      %1763 = vmatprep.subr.mxu0 0.0
      %1764 = vmatpush1.msra.mxu0 0.0
      %1765 = vmatprep.subr.mxu0 0.0
      %1766 = vmatpush1.msra.mxu0 0.0
      %1767 = vmatprep.subr.mxu0 0.0
      %1768 = vmatpush1.msra.mxu0 0.0
      %1769 = vmatprep.subr.mxu0 0.0
      %1770 = vmatpush1.msra.mxu0 0.0
      %1771 = vmatprep.subr.mxu0 0.0
      %1772 = vmatpush1.msra.mxu0 0.0
      %1773 = vmatprep.subr.mxu0 0.0
      %1774 = vmatpush1.msra.mxu0 0.0
      %1775 = vmatprep.subr.mxu0 0.0
      %1776 = vmatpush1.msra.mxu0 0.0
      %1777 = vmatprep.subr.mxu0 0.0
      %1778 = vmatpush1.msra.mxu0 0.0
      %1779 = vmatprep.subr.mxu0 0.0
      %1780 = vmatpush1.msra.mxu0 0.0
      %1781 = vmatprep.subr.mxu0 0.0
      %1782 = vmatpush1.msra.mxu0 %v1749
      %1783 = vmatprep.subr.mxu0 0.0
      %1784 = vmatpush2.msra.mxu0 0.0
      %1785 = vmatprep.subr.mxu0 0.0
      %1786 = vmatpush2.msra.mxu0 0.0
      %1787 = vmatprep.subr.mxu0 0.0
      %1788 = vmatpush2.msra.mxu0 0.0
      %1789 = vmatprep.subr.mxu0 0.0
      %1790 = vmatpush2.msra.mxu0 0.0
      %1791 = vmatprep.subr.mxu0 0.0
      %1792 = vmatpush2.msra.mxu0 0.0
      %1793 = vmatprep.subr.mxu0 0.0
      %1794 = vmatpush2.msra.mxu0 0.0
      %1795 = vmatprep.subr.mxu0 0.0
      %1796 = vmatpush2.msra.mxu0 0.0
      %1797 = vmatprep.subr.mxu0 0.0
      %1798 = vmatpush2.msra.mxu0 0.0
      %1799 = vmatprep.subr.mxu0 0.0
      %1800 = vmatpush2.msra.mxu0 0.0
      %1801 = vmatprep.subr.mxu0 0.0
      %1802 = vmatpush2.msra.mxu0 0.0
      %1803 = vmatprep.subr.mxu0 0.0
      %1804 = vmatpush2.msra.mxu0 0.0
      %1805 = vmatprep.subr.mxu0 0.0
      %1806 = vmatpush2.msra.mxu0 0.0
      %1807 = vmatprep.subr.mxu0 0.0
      %1808 = vmatpush2.msra.mxu0 0.0
      %1809 = vmatprep.subr.mxu0 0.0
      %1810 = vmatpush2.msra.mxu0 0.0
      %1811 = vmatprep.subr.mxu0 0.0
      %1812 = vmatpush2.msra.mxu0 0.0
      %1813 = vmatprep.subr.mxu0 0.0
      %1814 = vmatpush2.msra.mxu0 0.0
      %1815 = vmatprep.mubr.f32.mxu0 0.0
      %1816 = vmatmul.mubr.f32.gmra.mxu0 %v1746
      %v1817 = vpop.f32.mrf.mxu0
      %v1818 = vadd.f32 0.0, %v1817
      %v1819 = vpop.f32.mrf.mxu0
      %1820 = vdwg.mxu0
      %v1821 = vadd.f32 %v1740, %v1818
      %v1822 = vld [vmem:[%s1089] sm:$0xf]
      %v1824 = vsel %vm612, %v1346, 0
      %v1827 = vsel %vm616, %v1822, 0
      %1829 = vmatprep.subr.mxu0 0.0
      %1830 = vmatpush1.msra.mxu0 0.0
      %1831 = vmatprep.subr.mxu0 0.0
      %1832 = vmatpush1.msra.mxu0 0.0
      %1833 = vmatprep.subr.mxu0 0.0
      %1834 = vmatpush1.msra.mxu0 0.0
      %1835 = vmatprep.subr.mxu0 0.0
      %1836 = vmatpush1.msra.mxu0 0.0
      %1837 = vmatprep.subr.mxu0 0.0
      %1838 = vmatpush1.msra.mxu0 0.0
      %1839 = vmatprep.subr.mxu0 0.0
      %1840 = vmatpush1.msra.mxu0 0.0
      %1841 = vmatprep.subr.mxu0 0.0
      %1842 = vmatpush1.msra.mxu0 0.0
      %1843 = vmatprep.subr.mxu0 0.0
      %1844 = vmatpush1.msra.mxu0 0.0
      %1845 = vmatprep.subr.mxu0 0.0
      %1846 = vmatpush1.msra.mxu0 0.0
      %1847 = vmatprep.subr.mxu0 0.0
      %1848 = vmatpush1.msra.mxu0 0.0
      %1849 = vmatprep.subr.mxu0 0.0
      %1850 = vmatpush1.msra.mxu0 0.0
      %1851 = vmatprep.subr.mxu0 0.0
      %1852 = vmatpush1.msra.mxu0 0.0
      %1853 = vmatprep.subr.mxu0 0.0
      %1854 = vmatpush1.msra.mxu0 0.0
      %1855 = vmatprep.subr.mxu0 0.0
      %1856 = vmatpush1.msra.mxu0 0.0
      %1857 = vmatprep.subr.mxu0 0.0
      %1858 = vmatpush1.msra.mxu0 0.0
      %1859 = vmatprep.subr.mxu0 0.0
      %1860 = vmatpush1.msra.mxu0 %v1827
      %1861 = vmatprep.subr.mxu0 0.0
      %1862 = vmatpush2.msra.mxu0 0.0
      %1863 = vmatprep.subr.mxu0 0.0
      %1864 = vmatpush2.msra.mxu0 0.0
      %1865 = vmatprep.subr.mxu0 0.0
      %1866 = vmatpush2.msra.mxu0 0.0
      %1867 = vmatprep.subr.mxu0 0.0
      %1868 = vmatpush2.msra.mxu0 0.0
      %1869 = vmatprep.subr.mxu0 0.0
      %1870 = vmatpush2.msra.mxu0 0.0
      %1871 = vmatprep.subr.mxu0 0.0
      %1872 = vmatpush2.msra.mxu0 0.0
      %1873 = vmatprep.subr.mxu0 0.0
      %1874 = vmatpush2.msra.mxu0 0.0
      %1875 = vmatprep.subr.mxu0 0.0
      %1876 = vmatpush2.msra.mxu0 0.0
      %1877 = vmatprep.subr.mxu0 0.0
      %1878 = vmatpush2.msra.mxu0 0.0
      %1879 = vmatprep.subr.mxu0 0.0
      %1880 = vmatpush2.msra.mxu0 0.0
      %1881 = vmatprep.subr.mxu0 0.0
      %1882 = vmatpush2.msra.mxu0 0.0
      %1883 = vmatprep.subr.mxu0 0.0
      %1884 = vmatpush2.msra.mxu0 0.0
      %1885 = vmatprep.subr.mxu0 0.0
      %1886 = vmatpush2.msra.mxu0 0.0
      %1887 = vmatprep.subr.mxu0 0.0
      %1888 = vmatpush2.msra.mxu0 0.0
      %1889 = vmatprep.subr.mxu0 0.0
      %1890 = vmatpush2.msra.mxu0 0.0
      %1891 = vmatprep.subr.mxu0 0.0
      %1892 = vmatpush2.msra.mxu0 0.0
      %1893 = vmatprep.mubr.f32.mxu0 0.0
      %1894 = vmatmul.mubr.f32.gmra.mxu0 %v1824
      %v1895 = vpop.f32.mrf.mxu0
      %v1896 = vadd.f32 0.0, %v1895
      %v1897 = vpop.f32.mrf.mxu0
      %1898 = vdwg.mxu0
      %v1899 = vadd.f32 %v1821, %v1896
      %v1900 = vld [vmem:[%s1168] sm:$0xf]
      %v1902 = vsel %vm612, %v1349, 0
      %v1905 = vsel %vm616, %v1900, 0
      %1907 = vmatprep.subr.mxu0 0.0
      %1908 = vmatpush1.msra.mxu0 0.0
      %1909 = vmatprep.subr.mxu0 0.0
      %1910 = vmatpush1.msra.mxu0 0.0
      %1911 = vmatprep.subr.mxu0 0.0
      %1912 = vmatpush1.msra.mxu0 0.0
      %1913 = vmatprep.subr.mxu0 0.0
      %1914 = vmatpush1.msra.mxu0 0.0
      %1915 = vmatprep.subr.mxu0 0.0
      %1916 = vmatpush1.msra.mxu0 0.0
      %1917 = vmatprep.subr.mxu0 0.0
      %1918 = vmatpush1.msra.mxu0 0.0
      %1919 = vmatprep.subr.mxu0 0.0
      %1920 = vmatpush1.msra.mxu0 0.0
      %1921 = vmatprep.subr.mxu0 0.0
      %1922 = vmatpush1.msra.mxu0 0.0
      %1923 = vmatprep.subr.mxu0 0.0
      %1924 = vmatpush1.msra.mxu0 0.0
      %1925 = vmatprep.subr.mxu0 0.0
      %1926 = vmatpush1.msra.mxu0 0.0
      %1927 = vmatprep.subr.mxu0 0.0
      %1928 = vmatpush1.msra.mxu0 0.0
      %1929 = vmatprep.subr.mxu0 0.0
      %1930 = vmatpush1.msra.mxu0 0.0
      %1931 = vmatprep.subr.mxu0 0.0
      %1932 = vmatpush1.msra.mxu0 0.0
      %1933 = vmatprep.subr.mxu0 0.0
      %1934 = vmatpush1.msra.mxu0 0.0
      %1935 = vmatprep.subr.mxu0 0.0
      %1936 = vmatpush1.msra.mxu0 0.0
      %1937 = vmatprep.subr.mxu0 0.0
      %1938 = vmatpush1.msra.mxu0 %v1905
      %1939 = vmatprep.subr.mxu0 0.0
      %1940 = vmatpush2.msra.mxu0 0.0
      %1941 = vmatprep.subr.mxu0 0.0
      %1942 = vmatpush2.msra.mxu0 0.0
      %1943 = vmatprep.subr.mxu0 0.0
      %1944 = vmatpush2.msra.mxu0 0.0
      %1945 = vmatprep.subr.mxu0 0.0
      %1946 = vmatpush2.msra.mxu0 0.0
      %1947 = vmatprep.subr.mxu0 0.0
      %1948 = vmatpush2.msra.mxu0 0.0
      %1949 = vmatprep.subr.mxu0 0.0
      %1950 = vmatpush2.msra.mxu0 0.0
      %1951 = vmatprep.subr.mxu0 0.0
      %1952 = vmatpush2.msra.mxu0 0.0
      %1953 = vmatprep.subr.mxu0 0.0
      %1954 = vmatpush2.msra.mxu0 0.0
      %1955 = vmatprep.subr.mxu0 0.0
      %1956 = vmatpush2.msra.mxu0 0.0
      %1957 = vmatprep.subr.mxu0 0.0
      %1958 = vmatpush2.msra.mxu0 0.0
      %1959 = vmatprep.subr.mxu0 0.0
      %1960 = vmatpush2.msra.mxu0 0.0
      %1961 = vmatprep.subr.mxu0 0.0
      %1962 = vmatpush2.msra.mxu0 0.0
      %1963 = vmatprep.subr.mxu0 0.0
      %1964 = vmatpush2.msra.mxu0 0.0
      %1965 = vmatprep.subr.mxu0 0.0
      %1966 = vmatpush2.msra.mxu0 0.0
      %1967 = vmatprep.subr.mxu0 0.0
      %1968 = vmatpush2.msra.mxu0 0.0
      %1969 = vmatprep.subr.mxu0 0.0
      %1970 = vmatpush2.msra.mxu0 0.0
      %1971 = vmatprep.mubr.f32.mxu0 0.0
      %1972 = vmatmul.mubr.f32.gmra.mxu0 %v1902
      %v1973 = vpop.f32.mrf.mxu0
      %v1974 = vadd.f32 0.0, %v1973
      %v1975 = vpop.f32.mrf.mxu0
      %1976 = vdwg.mxu0
      %v1977 = vadd.f32 %v1899, %v1974
      %v1978 = vld [vmem:[%s1247] sm:$0xf]
      %v1980 = vrot.slane %v1346, 1
      %v1981 = vrot.slane %v1347, 1
      %v1982 = vsel %vm769, %v1980, %v1981
      %v1983 = vsel %vm612, %v1982, 0
      %v1986 = vsel %vm616, %v1978, 0
      %1988 = vmatprep.subr.mxu0 0.0
      %1989 = vmatpush1.msra.mxu0 0.0
      %1990 = vmatprep.subr.mxu0 0.0
      %1991 = vmatpush1.msra.mxu0 0.0
      %1992 = vmatprep.subr.mxu0 0.0
      %1993 = vmatpush1.msra.mxu0 0.0
      %1994 = vmatprep.subr.mxu0 0.0
      %1995 = vmatpush1.msra.mxu0 0.0
      %1996 = vmatprep.subr.mxu0 0.0
      %1997 = vmatpush1.msra.mxu0 0.0
      %1998 = vmatprep.subr.mxu0 0.0
      %1999 = vmatpush1.msra.mxu0 0.0
      %2000 = vmatprep.subr.mxu0 0.0
      %2001 = vmatpush1.msra.mxu0 0.0
      %2002 = vmatprep.subr.mxu0 0.0
      %2003 = vmatpush1.msra.mxu0 0.0
      %2004 = vmatprep.subr.mxu0 0.0
      %2005 = vmatpush1.msra.mxu0 0.0
      %2006 = vmatprep.subr.mxu0 0.0
      %2007 = vmatpush1.msra.mxu0 0.0
      %2008 = vmatprep.subr.mxu0 0.0
      %2009 = vmatpush1.msra.mxu0 0.0
      %2010 = vmatprep.subr.mxu0 0.0
      %2011 = vmatpush1.msra.mxu0 0.0
      %2012 = vmatprep.subr.mxu0 0.0
      %2013 = vmatpush1.msra.mxu0 0.0
      %2014 = vmatprep.subr.mxu0 0.0
      %2015 = vmatpush1.msra.mxu0 0.0
      %2016 = vmatprep.subr.mxu0 0.0
      %2017 = vmatpush1.msra.mxu0 0.0
      %2018 = vmatprep.subr.mxu0 0.0
      %2019 = vmatpush1.msra.mxu0 %v1986
      %2020 = vmatprep.subr.mxu0 0.0
      %2021 = vmatpush2.msra.mxu0 0.0
      %2022 = vmatprep.subr.mxu0 0.0
      %2023 = vmatpush2.msra.mxu0 0.0
      %2024 = vmatprep.subr.mxu0 0.0
      %2025 = vmatpush2.msra.mxu0 0.0
      %2026 = vmatprep.subr.mxu0 0.0
      %2027 = vmatpush2.msra.mxu0 0.0
      %2028 = vmatprep.subr.mxu0 0.0
      %2029 = vmatpush2.msra.mxu0 0.0
      %2030 = vmatprep.subr.mxu0 0.0
      %2031 = vmatpush2.msra.mxu0 0.0
      %2032 = vmatprep.subr.mxu0 0.0
      %2033 = vmatpush2.msra.mxu0 0.0
      %2034 = vmatprep.subr.mxu0 0.0
      %2035 = vmatpush2.msra.mxu0 0.0
      %2036 = vmatprep.subr.mxu0 0.0
      %2037 = vmatpush2.msra.mxu0 0.0
      %2038 = vmatprep.subr.mxu0 0.0
      %2039 = vmatpush2.msra.mxu0 0.0
      %2040 = vmatprep.subr.mxu0 0.0
      %2041 = vmatpush2.msra.mxu0 0.0
      %2042 = vmatprep.subr.mxu0 0.0
      %2043 = vmatpush2.msra.mxu0 0.0
      %2044 = vmatprep.subr.mxu0 0.0
      %2045 = vmatpush2.msra.mxu0 0.0
      %2046 = vmatprep.subr.mxu0 0.0
      %2047 = vmatpush2.msra.mxu0 0.0
      %2048 = vmatprep.subr.mxu0 0.0
      %2049 = vmatpush2.msra.mxu0 0.0
      %2050 = vmatprep.subr.mxu0 0.0
      %2051 = vmatpush2.msra.mxu0 0.0
      %2052 = vmatprep.mubr.f32.mxu0 0.0
      %2053 = vmatmul.mubr.f32.gmra.mxu0 %v1983
      %v2054 = vpop.f32.mrf.mxu0
      %v2055 = vadd.f32 0.0, %v2054
      %v2056 = vpop.f32.mrf.mxu0
      %2057 = vdwg.mxu0
      %v2058 = vadd.f32 %v1977, %v2055
      %v2059 = vadd.f32 %v2058, %v1333
      %s2060 = scalar_lea.vmem %s595, 8
      %2061 = vst.msk [vmem:[%s2060] sm:$0xff] %vm612, %v2059
      %v2062 = vld [vmem:[%s1345] sm:$0xff]
      %v2063 = vld [vmem:[%s1345 + $0x8] sm:$0x1]
      %v2064 = vld [vmem:[%s1348] sm:$0xff]
      %s2065 = scalar_lea.vmem %s575, 32
      %v2066 = vld [vmem:[%s2065] sm:$0xff]
      %v2067 = vld [vmem:[%s2065 + $0x8] sm:$0x1]
      %s2068 = scalar_lea.vmem %s585, 16
      %v2069 = vld [vmem:[%s2068] sm:$0xff]
      %s2070 = scalar_lea.vmem %s516, 48
      %v2071 = vld [vmem:[%s2070] sm:$0xff]
      %v2072 = vld [vmem:[%s2070 + $0x8] sm:$0x1]
      %s2073 = scalar_lea.vmem %s535, 24
      %v2074 = vld [vmem:[%s2073] sm:$0xff]
      %v2075 = vld [vmem:[%s6] sm:$0xf]
      %v2076 = vld [vmem:[%s610] sm:$0xf]
      %v2078 = vsel %vm612, %v2064, 0
      %v2081 = vsel %vm616, %v2076, 0
      %2083 = vmatprep.subr.mxu0 0.0
      %2084 = vmatpush1.msra.mxu0 0.0
      %2085 = vmatprep.subr.mxu0 0.0
      %2086 = vmatpush1.msra.mxu0 0.0
      %2087 = vmatprep.subr.mxu0 0.0
      %2088 = vmatpush1.msra.mxu0 0.0
      %2089 = vmatprep.subr.mxu0 0.0
      %2090 = vmatpush1.msra.mxu0 0.0
      %2091 = vmatprep.subr.mxu0 0.0
      %2092 = vmatpush1.msra.mxu0 0.0
      %2093 = vmatprep.subr.mxu0 0.0
      %2094 = vmatpush1.msra.mxu0 0.0
      %2095 = vmatprep.subr.mxu0 0.0
      %2096 = vmatpush1.msra.mxu0 0.0
      %2097 = vmatprep.subr.mxu0 0.0
      %2098 = vmatpush1.msra.mxu0 0.0
      %2099 = vmatprep.subr.mxu0 0.0
      %2100 = vmatpush1.msra.mxu0 0.0
      %2101 = vmatprep.subr.mxu0 0.0
      %2102 = vmatpush1.msra.mxu0 0.0
      %2103 = vmatprep.subr.mxu0 0.0
      %2104 = vmatpush1.msra.mxu0 0.0
      %2105 = vmatprep.subr.mxu0 0.0
      %2106 = vmatpush1.msra.mxu0 0.0
      %2107 = vmatprep.subr.mxu0 0.0
      %2108 = vmatpush1.msra.mxu0 0.0
      %2109 = vmatprep.subr.mxu0 0.0
      %2110 = vmatpush1.msra.mxu0 0.0
      %2111 = vmatprep.subr.mxu0 0.0
      %2112 = vmatpush1.msra.mxu0 0.0
      %2113 = vmatprep.subr.mxu0 0.0
      %2114 = vmatpush1.msra.mxu0 %v2081
      %2115 = vmatprep.subr.mxu0 0.0
      %2116 = vmatpush2.msra.mxu0 0.0
      %2117 = vmatprep.subr.mxu0 0.0
      %2118 = vmatpush2.msra.mxu0 0.0
      %2119 = vmatprep.subr.mxu0 0.0
      %2120 = vmatpush2.msra.mxu0 0.0
      %2121 = vmatprep.subr.mxu0 0.0
      %2122 = vmatpush2.msra.mxu0 0.0
      %2123 = vmatprep.subr.mxu0 0.0
      %2124 = vmatpush2.msra.mxu0 0.0
      %2125 = vmatprep.subr.mxu0 0.0
      %2126 = vmatpush2.msra.mxu0 0.0
      %2127 = vmatprep.subr.mxu0 0.0
      %2128 = vmatpush2.msra.mxu0 0.0
      %2129 = vmatprep.subr.mxu0 0.0
      %2130 = vmatpush2.msra.mxu0 0.0
      %2131 = vmatprep.subr.mxu0 0.0
      %2132 = vmatpush2.msra.mxu0 0.0
      %2133 = vmatprep.subr.mxu0 0.0
      %2134 = vmatpush2.msra.mxu0 0.0
      %2135 = vmatprep.subr.mxu0 0.0
      %2136 = vmatpush2.msra.mxu0 0.0
      %2137 = vmatprep.subr.mxu0 0.0
      %2138 = vmatpush2.msra.mxu0 0.0
      %2139 = vmatprep.subr.mxu0 0.0
      %2140 = vmatpush2.msra.mxu0 0.0
      %2141 = vmatprep.subr.mxu0 0.0
      %2142 = vmatpush2.msra.mxu0 0.0
      %2143 = vmatprep.subr.mxu0 0.0
      %2144 = vmatpush2.msra.mxu0 0.0
      %2145 = vmatprep.subr.mxu0 0.0
      %2146 = vmatpush2.msra.mxu0 0.0
      %2147 = vmatprep.mubr.f32.mxu0 0.0
      %2148 = vmatmul.mubr.f32.gmra.mxu0 %v2078
      %v2149 = vpop.f32.mrf.mxu0
      %v2150 = vadd.f32 0.0, %v2149
      %v2151 = vpop.f32.mrf.mxu0
      %2152 = vdwg.mxu0
      %v2154 = vsel %vm612, %v2062, 0
      %v2157 = vsel %vm616, %v2075, 0
      %2159 = vmatprep.subr.mxu0 0.0
      %2160 = vmatpush1.msra.mxu0 0.0
      %2161 = vmatprep.subr.mxu0 0.0
      %2162 = vmatpush1.msra.mxu0 0.0
      %2163 = vmatprep.subr.mxu0 0.0
      %2164 = vmatpush1.msra.mxu0 0.0
      %2165 = vmatprep.subr.mxu0 0.0
      %2166 = vmatpush1.msra.mxu0 0.0
      %2167 = vmatprep.subr.mxu0 0.0
      %2168 = vmatpush1.msra.mxu0 0.0
      %2169 = vmatprep.subr.mxu0 0.0
      %2170 = vmatpush1.msra.mxu0 0.0
      %2171 = vmatprep.subr.mxu0 0.0
      %2172 = vmatpush1.msra.mxu0 0.0
      %2173 = vmatprep.subr.mxu0 0.0
      %2174 = vmatpush1.msra.mxu0 0.0
      %2175 = vmatprep.subr.mxu0 0.0
      %2176 = vmatpush1.msra.mxu0 0.0
      %2177 = vmatprep.subr.mxu0 0.0
      %2178 = vmatpush1.msra.mxu0 0.0
      %2179 = vmatprep.subr.mxu0 0.0
      %2180 = vmatpush1.msra.mxu0 0.0
      %2181 = vmatprep.subr.mxu0 0.0
      %2182 = vmatpush1.msra.mxu0 0.0
      %2183 = vmatprep.subr.mxu0 0.0
      %2184 = vmatpush1.msra.mxu0 0.0
      %2185 = vmatprep.subr.mxu0 0.0
      %2186 = vmatpush1.msra.mxu0 0.0
      %2187 = vmatprep.subr.mxu0 0.0
      %2188 = vmatpush1.msra.mxu0 0.0
      %2189 = vmatprep.subr.mxu0 0.0
      %2190 = vmatpush1.msra.mxu0 %v2157
      %2191 = vmatprep.subr.mxu0 0.0
      %2192 = vmatpush2.msra.mxu0 0.0
      %2193 = vmatprep.subr.mxu0 0.0
      %2194 = vmatpush2.msra.mxu0 0.0
      %2195 = vmatprep.subr.mxu0 0.0
      %2196 = vmatpush2.msra.mxu0 0.0
      %2197 = vmatprep.subr.mxu0 0.0
      %2198 = vmatpush2.msra.mxu0 0.0
      %2199 = vmatprep.subr.mxu0 0.0
      %2200 = vmatpush2.msra.mxu0 0.0
      %2201 = vmatprep.subr.mxu0 0.0
      %2202 = vmatpush2.msra.mxu0 0.0
      %2203 = vmatprep.subr.mxu0 0.0
      %2204 = vmatpush2.msra.mxu0 0.0
      %2205 = vmatprep.subr.mxu0 0.0
      %2206 = vmatpush2.msra.mxu0 0.0
      %2207 = vmatprep.subr.mxu0 0.0
      %2208 = vmatpush2.msra.mxu0 0.0
      %2209 = vmatprep.subr.mxu0 0.0
      %2210 = vmatpush2.msra.mxu0 0.0
      %2211 = vmatprep.subr.mxu0 0.0
      %2212 = vmatpush2.msra.mxu0 0.0
      %2213 = vmatprep.subr.mxu0 0.0
      %2214 = vmatpush2.msra.mxu0 0.0
      %2215 = vmatprep.subr.mxu0 0.0
      %2216 = vmatpush2.msra.mxu0 0.0
      %2217 = vmatprep.subr.mxu0 0.0
      %2218 = vmatpush2.msra.mxu0 0.0
      %2219 = vmatprep.subr.mxu0 0.0
      %2220 = vmatpush2.msra.mxu0 0.0
      %2221 = vmatprep.subr.mxu0 0.0
      %2222 = vmatpush2.msra.mxu0 0.0
      %2223 = vmatprep.mubr.f32.mxu0 0.0
      %2224 = vmatmul.mubr.f32.gmra.mxu0 %v2154
      %v2225 = vpop.f32.mrf.mxu0
      %v2226 = vadd.f32 %v2150, %v2225
      %v2227 = vpop.f32.mrf.mxu0
      %2228 = vdwg.mxu0
      %v2229 = vld [vmem:[%s766] sm:$0xf]
      %v2231 = vrot.slane %v2062, 1
      %v2232 = vrot.slane %v2063, 1
      %v2233 = vsel %vm769, %v2231, %v2232
      %v2234 = vsel %vm612, %v2233, 0
      %v2237 = vsel %vm616, %v2229, 0
      %2239 = vmatprep.subr.mxu0 0.0
      %2240 = vmatpush1.msra.mxu0 0.0
      %2241 = vmatprep.subr.mxu0 0.0
      %2242 = vmatpush1.msra.mxu0 0.0
      %2243 = vmatprep.subr.mxu0 0.0
      %2244 = vmatpush1.msra.mxu0 0.0
      %2245 = vmatprep.subr.mxu0 0.0
      %2246 = vmatpush1.msra.mxu0 0.0
      %2247 = vmatprep.subr.mxu0 0.0
      %2248 = vmatpush1.msra.mxu0 0.0
      %2249 = vmatprep.subr.mxu0 0.0
      %2250 = vmatpush1.msra.mxu0 0.0
      %2251 = vmatprep.subr.mxu0 0.0
      %2252 = vmatpush1.msra.mxu0 0.0
      %2253 = vmatprep.subr.mxu0 0.0
      %2254 = vmatpush1.msra.mxu0 0.0
      %2255 = vmatprep.subr.mxu0 0.0
      %2256 = vmatpush1.msra.mxu0 0.0
      %2257 = vmatprep.subr.mxu0 0.0
      %2258 = vmatpush1.msra.mxu0 0.0
      %2259 = vmatprep.subr.mxu0 0.0
      %2260 = vmatpush1.msra.mxu0 0.0
      %2261 = vmatprep.subr.mxu0 0.0
      %2262 = vmatpush1.msra.mxu0 0.0
      %2263 = vmatprep.subr.mxu0 0.0
      %2264 = vmatpush1.msra.mxu0 0.0
      %2265 = vmatprep.subr.mxu0 0.0
      %2266 = vmatpush1.msra.mxu0 0.0
      %2267 = vmatprep.subr.mxu0 0.0
      %2268 = vmatpush1.msra.mxu0 0.0
      %2269 = vmatprep.subr.mxu0 0.0
      %2270 = vmatpush1.msra.mxu0 %v2237
      %2271 = vmatprep.subr.mxu0 0.0
      %2272 = vmatpush2.msra.mxu0 0.0
      %2273 = vmatprep.subr.mxu0 0.0
      %2274 = vmatpush2.msra.mxu0 0.0
      %2275 = vmatprep.subr.mxu0 0.0
      %2276 = vmatpush2.msra.mxu0 0.0
      %2277 = vmatprep.subr.mxu0 0.0
      %2278 = vmatpush2.msra.mxu0 0.0
      %2279 = vmatprep.subr.mxu0 0.0
      %2280 = vmatpush2.msra.mxu0 0.0
      %2281 = vmatprep.subr.mxu0 0.0
      %2282 = vmatpush2.msra.mxu0 0.0
      %2283 = vmatprep.subr.mxu0 0.0
      %2284 = vmatpush2.msra.mxu0 0.0
      %2285 = vmatprep.subr.mxu0 0.0
      %2286 = vmatpush2.msra.mxu0 0.0
      %2287 = vmatprep.subr.mxu0 0.0
      %2288 = vmatpush2.msra.mxu0 0.0
      %2289 = vmatprep.subr.mxu0 0.0
      %2290 = vmatpush2.msra.mxu0 0.0
      %2291 = vmatprep.subr.mxu0 0.0
      %2292 = vmatpush2.msra.mxu0 0.0
      %2293 = vmatprep.subr.mxu0 0.0
      %2294 = vmatpush2.msra.mxu0 0.0
      %2295 = vmatprep.subr.mxu0 0.0
      %2296 = vmatpush2.msra.mxu0 0.0
      %2297 = vmatprep.subr.mxu0 0.0
      %2298 = vmatpush2.msra.mxu0 0.0
      %2299 = vmatprep.subr.mxu0 0.0
      %2300 = vmatpush2.msra.mxu0 0.0
      %2301 = vmatprep.subr.mxu0 0.0
      %2302 = vmatpush2.msra.mxu0 0.0
      %2303 = vmatprep.mubr.f32.mxu0 0.0
      %2304 = vmatmul.mubr.f32.gmra.mxu0 %v2234
      %v2305 = vpop.f32.mrf.mxu0
      %v2306 = vadd.f32 0.0, %v2305
      %v2307 = vpop.f32.mrf.mxu0
      %2308 = vdwg.mxu0
      %v2309 = vadd.f32 %v2226, %v2306
      %v2310 = vld [vmem:[%s849] sm:$0xf]
      %v2312 = vsel %vm612, %v2066, 0
      %v2315 = vsel %vm616, %v2310, 0
      %2317 = vmatprep.subr.mxu0 0.0
      %2318 = vmatpush1.msra.mxu0 0.0
      %2319 = vmatprep.subr.mxu0 0.0
      %2320 = vmatpush1.msra.mxu0 0.0
      %2321 = vmatprep.subr.mxu0 0.0
      %2322 = vmatpush1.msra.mxu0 0.0
      %2323 = vmatprep.subr.mxu0 0.0
      %2324 = vmatpush1.msra.mxu0 0.0
      %2325 = vmatprep.subr.mxu0 0.0
      %2326 = vmatpush1.msra.mxu0 0.0
      %2327 = vmatprep.subr.mxu0 0.0
      %2328 = vmatpush1.msra.mxu0 0.0
      %2329 = vmatprep.subr.mxu0 0.0
      %2330 = vmatpush1.msra.mxu0 0.0
      %2331 = vmatprep.subr.mxu0 0.0
      %2332 = vmatpush1.msra.mxu0 0.0
      %2333 = vmatprep.subr.mxu0 0.0
      %2334 = vmatpush1.msra.mxu0 0.0
      %2335 = vmatprep.subr.mxu0 0.0
      %2336 = vmatpush1.msra.mxu0 0.0
      %2337 = vmatprep.subr.mxu0 0.0
      %2338 = vmatpush1.msra.mxu0 0.0
      %2339 = vmatprep.subr.mxu0 0.0
      %2340 = vmatpush1.msra.mxu0 0.0
      %2341 = vmatprep.subr.mxu0 0.0
      %2342 = vmatpush1.msra.mxu0 0.0
      %2343 = vmatprep.subr.mxu0 0.0
      %2344 = vmatpush1.msra.mxu0 0.0
      %2345 = vmatprep.subr.mxu0 0.0
      %2346 = vmatpush1.msra.mxu0 0.0
      %2347 = vmatprep.subr.mxu0 0.0
      %2348 = vmatpush1.msra.mxu0 %v2315
      %2349 = vmatprep.subr.mxu0 0.0
      %2350 = vmatpush2.msra.mxu0 0.0
      %2351 = vmatprep.subr.mxu0 0.0
      %2352 = vmatpush2.msra.mxu0 0.0
      %2353 = vmatprep.subr.mxu0 0.0
      %2354 = vmatpush2.msra.mxu0 0.0
      %2355 = vmatprep.subr.mxu0 0.0
      %2356 = vmatpush2.msra.mxu0 0.0
      %2357 = vmatprep.subr.mxu0 0.0
      %2358 = vmatpush2.msra.mxu0 0.0
      %2359 = vmatprep.subr.mxu0 0.0
      %2360 = vmatpush2.msra.mxu0 0.0
      %2361 = vmatprep.subr.mxu0 0.0
      %2362 = vmatpush2.msra.mxu0 0.0
      %2363 = vmatprep.subr.mxu0 0.0
      %2364 = vmatpush2.msra.mxu0 0.0
      %2365 = vmatprep.subr.mxu0 0.0
      %2366 = vmatpush2.msra.mxu0 0.0
      %2367 = vmatprep.subr.mxu0 0.0
      %2368 = vmatpush2.msra.mxu0 0.0
      %2369 = vmatprep.subr.mxu0 0.0
      %2370 = vmatpush2.msra.mxu0 0.0
      %2371 = vmatprep.subr.mxu0 0.0
      %2372 = vmatpush2.msra.mxu0 0.0
      %2373 = vmatprep.subr.mxu0 0.0
      %2374 = vmatpush2.msra.mxu0 0.0
      %2375 = vmatprep.subr.mxu0 0.0
      %2376 = vmatpush2.msra.mxu0 0.0
      %2377 = vmatprep.subr.mxu0 0.0
      %2378 = vmatpush2.msra.mxu0 0.0
      %2379 = vmatprep.subr.mxu0 0.0
      %2380 = vmatpush2.msra.mxu0 0.0
      %2381 = vmatprep.mubr.f32.mxu0 0.0
      %2382 = vmatmul.mubr.f32.gmra.mxu0 %v2312
      %v2383 = vpop.f32.mrf.mxu0
      %v2384 = vadd.f32 0.0, %v2383
      %v2385 = vpop.f32.mrf.mxu0
      %2386 = vdwg.mxu0
      %v2387 = vadd.f32 %v2309, %v2384
      %v2388 = vld [vmem:[%s928] sm:$0xf]
      %v2390 = vsel %vm612, %v2069, 0
      %v2393 = vsel %vm616, %v2388, 0
      %2395 = vmatprep.subr.mxu0 0.0
      %2396 = vmatpush1.msra.mxu0 0.0
      %2397 = vmatprep.subr.mxu0 0.0
      %2398 = vmatpush1.msra.mxu0 0.0
      %2399 = vmatprep.subr.mxu0 0.0
      %2400 = vmatpush1.msra.mxu0 0.0
      %2401 = vmatprep.subr.mxu0 0.0
      %2402 = vmatpush1.msra.mxu0 0.0
      %2403 = vmatprep.subr.mxu0 0.0
      %2404 = vmatpush1.msra.mxu0 0.0
      %2405 = vmatprep.subr.mxu0 0.0
      %2406 = vmatpush1.msra.mxu0 0.0
      %2407 = vmatprep.subr.mxu0 0.0
      %2408 = vmatpush1.msra.mxu0 0.0
      %2409 = vmatprep.subr.mxu0 0.0
      %2410 = vmatpush1.msra.mxu0 0.0
      %2411 = vmatprep.subr.mxu0 0.0
      %2412 = vmatpush1.msra.mxu0 0.0
      %2413 = vmatprep.subr.mxu0 0.0
      %2414 = vmatpush1.msra.mxu0 0.0
      %2415 = vmatprep.subr.mxu0 0.0
      %2416 = vmatpush1.msra.mxu0 0.0
      %2417 = vmatprep.subr.mxu0 0.0
      %2418 = vmatpush1.msra.mxu0 0.0
      %2419 = vmatprep.subr.mxu0 0.0
      %2420 = vmatpush1.msra.mxu0 0.0
      %2421 = vmatprep.subr.mxu0 0.0
      %2422 = vmatpush1.msra.mxu0 0.0
      %2423 = vmatprep.subr.mxu0 0.0
      %2424 = vmatpush1.msra.mxu0 0.0
      %2425 = vmatprep.subr.mxu0 0.0
      %2426 = vmatpush1.msra.mxu0 %v2393
      %2427 = vmatprep.subr.mxu0 0.0
      %2428 = vmatpush2.msra.mxu0 0.0
      %2429 = vmatprep.subr.mxu0 0.0
      %2430 = vmatpush2.msra.mxu0 0.0
      %2431 = vmatprep.subr.mxu0 0.0
      %2432 = vmatpush2.msra.mxu0 0.0
      %2433 = vmatprep.subr.mxu0 0.0
      %2434 = vmatpush2.msra.mxu0 0.0
      %2435 = vmatprep.subr.mxu0 0.0
      %2436 = vmatpush2.msra.mxu0 0.0
      %2437 = vmatprep.subr.mxu0 0.0
      %2438 = vmatpush2.msra.mxu0 0.0
      %2439 = vmatprep.subr.mxu0 0.0
      %2440 = vmatpush2.msra.mxu0 0.0
      %2441 = vmatprep.subr.mxu0 0.0
      %2442 = vmatpush2.msra.mxu0 0.0
      %2443 = vmatprep.subr.mxu0 0.0
      %2444 = vmatpush2.msra.mxu0 0.0
      %2445 = vmatprep.subr.mxu0 0.0
      %2446 = vmatpush2.msra.mxu0 0.0
      %2447 = vmatprep.subr.mxu0 0.0
      %2448 = vmatpush2.msra.mxu0 0.0
      %2449 = vmatprep.subr.mxu0 0.0
      %2450 = vmatpush2.msra.mxu0 0.0
      %2451 = vmatprep.subr.mxu0 0.0
      %2452 = vmatpush2.msra.mxu0 0.0
      %2453 = vmatprep.subr.mxu0 0.0
      %2454 = vmatpush2.msra.mxu0 0.0
      %2455 = vmatprep.subr.mxu0 0.0
      %2456 = vmatpush2.msra.mxu0 0.0
      %2457 = vmatprep.subr.mxu0 0.0
      %2458 = vmatpush2.msra.mxu0 0.0
      %2459 = vmatprep.mubr.f32.mxu0 0.0
      %2460 = vmatmul.mubr.f32.gmra.mxu0 %v2390
      %v2461 = vpop.f32.mrf.mxu0
      %v2462 = vadd.f32 0.0, %v2461
      %v2463 = vpop.f32.mrf.mxu0
      %2464 = vdwg.mxu0
      %v2465 = vadd.f32 %v2387, %v2462
      %v2466 = vld [vmem:[%s1007] sm:$0xf]
      %v2468 = vrot.slane %v2066, 1
      %v2469 = vrot.slane %v2067, 1
      %v2470 = vsel %vm769, %v2468, %v2469
      %v2471 = vsel %vm612, %v2470, 0
      %v2474 = vsel %vm616, %v2466, 0
      %2476 = vmatprep.subr.mxu0 0.0
      %2477 = vmatpush1.msra.mxu0 0.0
      %2478 = vmatprep.subr.mxu0 0.0
      %2479 = vmatpush1.msra.mxu0 0.0
      %2480 = vmatprep.subr.mxu0 0.0
      %2481 = vmatpush1.msra.mxu0 0.0
      %2482 = vmatprep.subr.mxu0 0.0
      %2483 = vmatpush1.msra.mxu0 0.0
      %2484 = vmatprep.subr.mxu0 0.0
      %2485 = vmatpush1.msra.mxu0 0.0
      %2486 = vmatprep.subr.mxu0 0.0
      %2487 = vmatpush1.msra.mxu0 0.0
      %2488 = vmatprep.subr.mxu0 0.0
      %2489 = vmatpush1.msra.mxu0 0.0
      %2490 = vmatprep.subr.mxu0 0.0
      %2491 = vmatpush1.msra.mxu0 0.0
      %2492 = vmatprep.subr.mxu0 0.0
      %2493 = vmatpush1.msra.mxu0 0.0
      %2494 = vmatprep.subr.mxu0 0.0
      %2495 = vmatpush1.msra.mxu0 0.0
      %2496 = vmatprep.subr.mxu0 0.0
      %2497 = vmatpush1.msra.mxu0 0.0
      %2498 = vmatprep.subr.mxu0 0.0
      %2499 = vmatpush1.msra.mxu0 0.0
      %2500 = vmatprep.subr.mxu0 0.0
      %2501 = vmatpush1.msra.mxu0 0.0
      %2502 = vmatprep.subr.mxu0 0.0
      %2503 = vmatpush1.msra.mxu0 0.0
      %2504 = vmatprep.subr.mxu0 0.0
      %2505 = vmatpush1.msra.mxu0 0.0
      %2506 = vmatprep.subr.mxu0 0.0
      %2507 = vmatpush1.msra.mxu0 %v2474
      %2508 = vmatprep.subr.mxu0 0.0
      %2509 = vmatpush2.msra.mxu0 0.0
      %2510 = vmatprep.subr.mxu0 0.0
      %2511 = vmatpush2.msra.mxu0 0.0
      %2512 = vmatprep.subr.mxu0 0.0
      %2513 = vmatpush2.msra.mxu0 0.0
      %2514 = vmatprep.subr.mxu0 0.0
      %2515 = vmatpush2.msra.mxu0 0.0
      %2516 = vmatprep.subr.mxu0 0.0
      %2517 = vmatpush2.msra.mxu0 0.0
      %2518 = vmatprep.subr.mxu0 0.0
      %2519 = vmatpush2.msra.mxu0 0.0
      %2520 = vmatprep.subr.mxu0 0.0
      %2521 = vmatpush2.msra.mxu0 0.0
      %2522 = vmatprep.subr.mxu0 0.0
      %2523 = vmatpush2.msra.mxu0 0.0
      %2524 = vmatprep.subr.mxu0 0.0
      %2525 = vmatpush2.msra.mxu0 0.0
      %2526 = vmatprep.subr.mxu0 0.0
      %2527 = vmatpush2.msra.mxu0 0.0
      %2528 = vmatprep.subr.mxu0 0.0
      %2529 = vmatpush2.msra.mxu0 0.0
      %2530 = vmatprep.subr.mxu0 0.0
      %2531 = vmatpush2.msra.mxu0 0.0
      %2532 = vmatprep.subr.mxu0 0.0
      %2533 = vmatpush2.msra.mxu0 0.0
      %2534 = vmatprep.subr.mxu0 0.0
      %2535 = vmatpush2.msra.mxu0 0.0
      %2536 = vmatprep.subr.mxu0 0.0
      %2537 = vmatpush2.msra.mxu0 0.0
      %2538 = vmatprep.subr.mxu0 0.0
      %2539 = vmatpush2.msra.mxu0 0.0
      %2540 = vmatprep.mubr.f32.mxu0 0.0
      %2541 = vmatmul.mubr.f32.gmra.mxu0 %v2471
      %v2542 = vpop.f32.mrf.mxu0
      %v2543 = vadd.f32 0.0, %v2542
      %v2544 = vpop.f32.mrf.mxu0
      %2545 = vdwg.mxu0
      %v2546 = vadd.f32 %v2465, %v2543
      %v2547 = vld [vmem:[%s1089] sm:$0xf]
      %v2549 = vsel %vm612, %v2071, 0
      %v2552 = vsel %vm616, %v2547, 0
      %2554 = vmatprep.subr.mxu0 0.0
      %2555 = vmatpush1.msra.mxu0 0.0
      %2556 = vmatprep.subr.mxu0 0.0
      %2557 = vmatpush1.msra.mxu0 0.0
      %2558 = vmatprep.subr.mxu0 0.0
      %2559 = vmatpush1.msra.mxu0 0.0
      %2560 = vmatprep.subr.mxu0 0.0
      %2561 = vmatpush1.msra.mxu0 0.0
      %2562 = vmatprep.subr.mxu0 0.0
      %2563 = vmatpush1.msra.mxu0 0.0
      %2564 = vmatprep.subr.mxu0 0.0
      %2565 = vmatpush1.msra.mxu0 0.0
      %2566 = vmatprep.subr.mxu0 0.0
      %2567 = vmatpush1.msra.mxu0 0.0
      %2568 = vmatprep.subr.mxu0 0.0
      %2569 = vmatpush1.msra.mxu0 0.0
      %2570 = vmatprep.subr.mxu0 0.0
      %2571 = vmatpush1.msra.mxu0 0.0
      %2572 = vmatprep.subr.mxu0 0.0
      %2573 = vmatpush1.msra.mxu0 0.0
      %2574 = vmatprep.subr.mxu0 0.0
      %2575 = vmatpush1.msra.mxu0 0.0
      %2576 = vmatprep.subr.mxu0 0.0
      %2577 = vmatpush1.msra.mxu0 0.0
      %2578 = vmatprep.subr.mxu0 0.0
      %2579 = vmatpush1.msra.mxu0 0.0
      %2580 = vmatprep.subr.mxu0 0.0
      %2581 = vmatpush1.msra.mxu0 0.0
      %2582 = vmatprep.subr.mxu0 0.0
      %2583 = vmatpush1.msra.mxu0 0.0
      %2584 = vmatprep.subr.mxu0 0.0
      %2585 = vmatpush1.msra.mxu0 %v2552
      %2586 = vmatprep.subr.mxu0 0.0
      %2587 = vmatpush2.msra.mxu0 0.0
      %2588 = vmatprep.subr.mxu0 0.0
      %2589 = vmatpush2.msra.mxu0 0.0
      %2590 = vmatprep.subr.mxu0 0.0
      %2591 = vmatpush2.msra.mxu0 0.0
      %2592 = vmatprep.subr.mxu0 0.0
      %2593 = vmatpush2.msra.mxu0 0.0
      %2594 = vmatprep.subr.mxu0 0.0
      %2595 = vmatpush2.msra.mxu0 0.0
      %2596 = vmatprep.subr.mxu0 0.0
      %2597 = vmatpush2.msra.mxu0 0.0
      %2598 = vmatprep.subr.mxu0 0.0
      %2599 = vmatpush2.msra.mxu0 0.0
      %2600 = vmatprep.subr.mxu0 0.0
      %2601 = vmatpush2.msra.mxu0 0.0
      %2602 = vmatprep.subr.mxu0 0.0
      %2603 = vmatpush2.msra.mxu0 0.0
      %2604 = vmatprep.subr.mxu0 0.0
      %2605 = vmatpush2.msra.mxu0 0.0
      %2606 = vmatprep.subr.mxu0 0.0
      %2607 = vmatpush2.msra.mxu0 0.0
      %2608 = vmatprep.subr.mxu0 0.0
      %2609 = vmatpush2.msra.mxu0 0.0
      %2610 = vmatprep.subr.mxu0 0.0
      %2611 = vmatpush2.msra.mxu0 0.0
      %2612 = vmatprep.subr.mxu0 0.0
      %2613 = vmatpush2.msra.mxu0 0.0
      %2614 = vmatprep.subr.mxu0 0.0
      %2615 = vmatpush2.msra.mxu0 0.0
      %2616 = vmatprep.subr.mxu0 0.0
      %2617 = vmatpush2.msra.mxu0 0.0
      %2618 = vmatprep.mubr.f32.mxu0 0.0
      %2619 = vmatmul.mubr.f32.gmra.mxu0 %v2549
      %v2620 = vpop.f32.mrf.mxu0
      %v2621 = vadd.f32 0.0, %v2620
      %v2622 = vpop.f32.mrf.mxu0
      %2623 = vdwg.mxu0
      %v2624 = vadd.f32 %v2546, %v2621
      %v2625 = vld [vmem:[%s1168] sm:$0xf]
      %v2627 = vsel %vm612, %v2074, 0
      %v2630 = vsel %vm616, %v2625, 0
      %2632 = vmatprep.subr.mxu0 0.0
      %2633 = vmatpush1.msra.mxu0 0.0
      %2634 = vmatprep.subr.mxu0 0.0
      %2635 = vmatpush1.msra.mxu0 0.0
      %2636 = vmatprep.subr.mxu0 0.0
      %2637 = vmatpush1.msra.mxu0 0.0
      %2638 = vmatprep.subr.mxu0 0.0
      %2639 = vmatpush1.msra.mxu0 0.0
      %2640 = vmatprep.subr.mxu0 0.0
      %2641 = vmatpush1.msra.mxu0 0.0
      %2642 = vmatprep.subr.mxu0 0.0
      %2643 = vmatpush1.msra.mxu0 0.0
      %2644 = vmatprep.subr.mxu0 0.0
      %2645 = vmatpush1.msra.mxu0 0.0
      %2646 = vmatprep.subr.mxu0 0.0
      %2647 = vmatpush1.msra.mxu0 0.0
      %2648 = vmatprep.subr.mxu0 0.0
      %2649 = vmatpush1.msra.mxu0 0.0
      %2650 = vmatprep.subr.mxu0 0.0
      %2651 = vmatpush1.msra.mxu0 0.0
      %2652 = vmatprep.subr.mxu0 0.0
      %2653 = vmatpush1.msra.mxu0 0.0
      %2654 = vmatprep.subr.mxu0 0.0
      %2655 = vmatpush1.msra.mxu0 0.0
      %2656 = vmatprep.subr.mxu0 0.0
      %2657 = vmatpush1.msra.mxu0 0.0
      %2658 = vmatprep.subr.mxu0 0.0
      %2659 = vmatpush1.msra.mxu0 0.0
      %2660 = vmatprep.subr.mxu0 0.0
      %2661 = vmatpush1.msra.mxu0 0.0
      %2662 = vmatprep.subr.mxu0 0.0
      %2663 = vmatpush1.msra.mxu0 %v2630
      %2664 = vmatprep.subr.mxu0 0.0
      %2665 = vmatpush2.msra.mxu0 0.0
      %2666 = vmatprep.subr.mxu0 0.0
      %2667 = vmatpush2.msra.mxu0 0.0
      %2668 = vmatprep.subr.mxu0 0.0
      %2669 = vmatpush2.msra.mxu0 0.0
      %2670 = vmatprep.subr.mxu0 0.0
      %2671 = vmatpush2.msra.mxu0 0.0
      %2672 = vmatprep.subr.mxu0 0.0
      %2673 = vmatpush2.msra.mxu0 0.0
      %2674 = vmatprep.subr.mxu0 0.0
      %2675 = vmatpush2.msra.mxu0 0.0
      %2676 = vmatprep.subr.mxu0 0.0
      %2677 = vmatpush2.msra.mxu0 0.0
      %2678 = vmatprep.subr.mxu0 0.0
      %2679 = vmatpush2.msra.mxu0 0.0
      %2680 = vmatprep.subr.mxu0 0.0
      %2681 = vmatpush2.msra.mxu0 0.0
      %2682 = vmatprep.subr.mxu0 0.0
      %2683 = vmatpush2.msra.mxu0 0.0
      %2684 = vmatprep.subr.mxu0 0.0
      %2685 = vmatpush2.msra.mxu0 0.0
      %2686 = vmatprep.subr.mxu0 0.0
      %2687 = vmatpush2.msra.mxu0 0.0
      %2688 = vmatprep.subr.mxu0 0.0
      %2689 = vmatpush2.msra.mxu0 0.0
      %2690 = vmatprep.subr.mxu0 0.0
      %2691 = vmatpush2.msra.mxu0 0.0
      %2692 = vmatprep.subr.mxu0 0.0
      %2693 = vmatpush2.msra.mxu0 0.0
      %2694 = vmatprep.subr.mxu0 0.0
      %2695 = vmatpush2.msra.mxu0 0.0
      %2696 = vmatprep.mubr.f32.mxu0 0.0
      %2697 = vmatmul.mubr.f32.gmra.mxu0 %v2627
      %v2698 = vpop.f32.mrf.mxu0
      %v2699 = vadd.f32 0.0, %v2698
      %v2700 = vpop.f32.mrf.mxu0
      %2701 = vdwg.mxu0
      %v2702 = vadd.f32 %v2624, %v2699
      %v2703 = vld [vmem:[%s1247] sm:$0xf]
      %v2705 = vrot.slane %v2071, 1
      %v2706 = vrot.slane %v2072, 1
      %v2707 = vsel %vm769, %v2705, %v2706
      %v2708 = vsel %vm612, %v2707, 0
      %v2711 = vsel %vm616, %v2703, 0
      %2713 = vmatprep.subr.mxu0 0.0
      %2714 = vmatpush1.msra.mxu0 0.0
      %2715 = vmatprep.subr.mxu0 0.0
      %2716 = vmatpush1.msra.mxu0 0.0
      %2717 = vmatprep.subr.mxu0 0.0
      %2718 = vmatpush1.msra.mxu0 0.0
      %2719 = vmatprep.subr.mxu0 0.0
      %2720 = vmatpush1.msra.mxu0 0.0
      %2721 = vmatprep.subr.mxu0 0.0
      %2722 = vmatpush1.msra.mxu0 0.0
      %2723 = vmatprep.subr.mxu0 0.0
      %2724 = vmatpush1.msra.mxu0 0.0
      %2725 = vmatprep.subr.mxu0 0.0
      %2726 = vmatpush1.msra.mxu0 0.0
      %2727 = vmatprep.subr.mxu0 0.0
      %2728 = vmatpush1.msra.mxu0 0.0
      %2729 = vmatprep.subr.mxu0 0.0
      %2730 = vmatpush1.msra.mxu0 0.0
      %2731 = vmatprep.subr.mxu0 0.0
      %2732 = vmatpush1.msra.mxu0 0.0
      %2733 = vmatprep.subr.mxu0 0.0
      %2734 = vmatpush1.msra.mxu0 0.0
      %2735 = vmatprep.subr.mxu0 0.0
      %2736 = vmatpush1.msra.mxu0 0.0
      %2737 = vmatprep.subr.mxu0 0.0
      %2738 = vmatpush1.msra.mxu0 0.0
      %2739 = vmatprep.subr.mxu0 0.0
      %2740 = vmatpush1.msra.mxu0 0.0
      %2741 = vmatprep.subr.mxu0 0.0
      %2742 = vmatpush1.msra.mxu0 0.0
      %2743 = vmatprep.subr.mxu0 0.0
      %2744 = vmatpush1.msra.mxu0 %v2711
      %2745 = vmatprep.subr.mxu0 0.0
      %2746 = vmatpush2.msra.mxu0 0.0
      %2747 = vmatprep.subr.mxu0 0.0
      %2748 = vmatpush2.msra.mxu0 0.0
      %2749 = vmatprep.subr.mxu0 0.0
      %2750 = vmatpush2.msra.mxu0 0.0
      %2751 = vmatprep.subr.mxu0 0.0
      %2752 = vmatpush2.msra.mxu0 0.0
      %2753 = vmatprep.subr.mxu0 0.0
      %2754 = vmatpush2.msra.mxu0 0.0
      %2755 = vmatprep.subr.mxu0 0.0
      %2756 = vmatpush2.msra.mxu0 0.0
      %2757 = vmatprep.subr.mxu0 0.0
      %2758 = vmatpush2.msra.mxu0 0.0
      %2759 = vmatprep.subr.mxu0 0.0
      %2760 = vmatpush2.msra.mxu0 0.0
      %2761 = vmatprep.subr.mxu0 0.0
      %2762 = vmatpush2.msra.mxu0 0.0
      %2763 = vmatprep.subr.mxu0 0.0
      %2764 = vmatpush2.msra.mxu0 0.0
      %2765 = vmatprep.subr.mxu0 0.0
      %2766 = vmatpush2.msra.mxu0 0.0
      %2767 = vmatprep.subr.mxu0 0.0
      %2768 = vmatpush2.msra.mxu0 0.0
      %2769 = vmatprep.subr.mxu0 0.0
      %2770 = vmatpush2.msra.mxu0 0.0
      %2771 = vmatprep.subr.mxu0 0.0
      %2772 = vmatpush2.msra.mxu0 0.0
      %2773 = vmatprep.subr.mxu0 0.0
      %2774 = vmatpush2.msra.mxu0 0.0
      %2775 = vmatprep.subr.mxu0 0.0
      %2776 = vmatpush2.msra.mxu0 0.0
      %2777 = vmatprep.mubr.f32.mxu0 0.0
      %2778 = vmatmul.mubr.f32.gmra.mxu0 %v2708
      %v2779 = vpop.f32.mrf.mxu0
      %v2780 = vadd.f32 0.0, %v2779
      %v2781 = vpop.f32.mrf.mxu0
      %2782 = vdwg.mxu0
      %v2783 = vadd.f32 %v2702, %v2780
      %v2784 = vadd.f32 %v2783, %v1333
      %s2785 = scalar_lea.vmem %s595, 16
      %2786 = vst.msk [vmem:[%s2785] sm:$0xff] %vm612, %v2784
      %v2787 = vld [vmem:[%s2070] sm:$0xff]
      %v2788 = vld [vmem:[%s2070 + $0x8] sm:$0x1]
      %v2789 = vld [vmem:[%s2073] sm:$0xff]
      %s2790 = scalar_lea.vmem %s575, 48
      %v2791 = vld [vmem:[%s2790] sm:$0xff]
      %v2792 = vld [vmem:[%s2790 + $0x8] sm:$0x1]
      %s2793 = scalar_lea.vmem %s585, 24
      %v2794 = vld [vmem:[%s2793] sm:$0xff]
      %s2795 = scalar_lea.vmem %s516, 64
      %v2796 = vld [vmem:[%s2795] sm:$0xff]
      %v2797 = vld [vmem:[%s2795 + $0x8] sm:$0x1]
      %s2798 = scalar_lea.vmem %s535, 32
      %v2799 = vld [vmem:[%s2798] sm:$0xff]
      %v2800 = vld [vmem:[%s6] sm:$0xf]
      %v2801 = vld [vmem:[%s610] sm:$0xf]
      %v2803 = vsel %vm612, %v2789, 0
      %v2806 = vsel %vm616, %v2801, 0
      %2808 = vmatprep.subr.mxu0 0.0
      %2809 = vmatpush1.msra.mxu0 0.0
      %2810 = vmatprep.subr.mxu0 0.0
      %2811 = vmatpush1.msra.mxu0 0.0
      %2812 = vmatprep.subr.mxu0 0.0
      %2813 = vmatpush1.msra.mxu0 0.0
      %2814 = vmatprep.subr.mxu0 0.0
      %2815 = vmatpush1.msra.mxu0 0.0
      %2816 = vmatprep.subr.mxu0 0.0
      %2817 = vmatpush1.msra.mxu0 0.0
      %2818 = vmatprep.subr.mxu0 0.0
      %2819 = vmatpush1.msra.mxu0 0.0
      %2820 = vmatprep.subr.mxu0 0.0
      %2821 = vmatpush1.msra.mxu0 0.0
      %2822 = vmatprep.subr.mxu0 0.0
      %2823 = vmatpush1.msra.mxu0 0.0
      %2824 = vmatprep.subr.mxu0 0.0
      %2825 = vmatpush1.msra.mxu0 0.0
      %2826 = vmatprep.subr.mxu0 0.0
      %2827 = vmatpush1.msra.mxu0 0.0
      %2828 = vmatprep.subr.mxu0 0.0
      %2829 = vmatpush1.msra.mxu0 0.0
      %2830 = vmatprep.subr.mxu0 0.0
      %2831 = vmatpush1.msra.mxu0 0.0
      %2832 = vmatprep.subr.mxu0 0.0
      %2833 = vmatpush1.msra.mxu0 0.0
      %2834 = vmatprep.subr.mxu0 0.0
      %2835 = vmatpush1.msra.mxu0 0.0
      %2836 = vmatprep.subr.mxu0 0.0
      %2837 = vmatpush1.msra.mxu0 0.0
      %2838 = vmatprep.subr.mxu0 0.0
      %2839 = vmatpush1.msra.mxu0 %v2806
      %2840 = vmatprep.subr.mxu0 0.0
      %2841 = vmatpush2.msra.mxu0 0.0
      %2842 = vmatprep.subr.mxu0 0.0
      %2843 = vmatpush2.msra.mxu0 0.0
      %2844 = vmatprep.subr.mxu0 0.0
      %2845 = vmatpush2.msra.mxu0 0.0
      %2846 = vmatprep.subr.mxu0 0.0
      %2847 = vmatpush2.msra.mxu0 0.0
      %2848 = vmatprep.subr.mxu0 0.0
      %2849 = vmatpush2.msra.mxu0 0.0
      %2850 = vmatprep.subr.mxu0 0.0
      %2851 = vmatpush2.msra.mxu0 0.0
      %2852 = vmatprep.subr.mxu0 0.0
      %2853 = vmatpush2.msra.mxu0 0.0
      %2854 = vmatprep.subr.mxu0 0.0
      %2855 = vmatpush2.msra.mxu0 0.0
      %2856 = vmatprep.subr.mxu0 0.0
      %2857 = vmatpush2.msra.mxu0 0.0
      %2858 = vmatprep.subr.mxu0 0.0
      %2859 = vmatpush2.msra.mxu0 0.0
      %2860 = vmatprep.subr.mxu0 0.0
      %2861 = vmatpush2.msra.mxu0 0.0
      %2862 = vmatprep.subr.mxu0 0.0
      %2863 = vmatpush2.msra.mxu0 0.0
      %2864 = vmatprep.subr.mxu0 0.0
      %2865 = vmatpush2.msra.mxu0 0.0
      %2866 = vmatprep.subr.mxu0 0.0
      %2867 = vmatpush2.msra.mxu0 0.0
      %2868 = vmatprep.subr.mxu0 0.0
      %2869 = vmatpush2.msra.mxu0 0.0
      %2870 = vmatprep.subr.mxu0 0.0
      %2871 = vmatpush2.msra.mxu0 0.0
      %2872 = vmatprep.mubr.f32.mxu0 0.0
      %2873 = vmatmul.mubr.f32.gmra.mxu0 %v2803
      %v2874 = vpop.f32.mrf.mxu0
      %v2875 = vadd.f32 0.0, %v2874
      %v2876 = vpop.f32.mrf.mxu0
      %2877 = vdwg.mxu0
      %v2879 = vsel %vm612, %v2787, 0
      %v2882 = vsel %vm616, %v2800, 0
      %2884 = vmatprep.subr.mxu0 0.0
      %2885 = vmatpush1.msra.mxu0 0.0
      %2886 = vmatprep.subr.mxu0 0.0
      %2887 = vmatpush1.msra.mxu0 0.0
      %2888 = vmatprep.subr.mxu0 0.0
      %2889 = vmatpush1.msra.mxu0 0.0
      %2890 = vmatprep.subr.mxu0 0.0
      %2891 = vmatpush1.msra.mxu0 0.0
      %2892 = vmatprep.subr.mxu0 0.0
      %2893 = vmatpush1.msra.mxu0 0.0
      %2894 = vmatprep.subr.mxu0 0.0
      %2895 = vmatpush1.msra.mxu0 0.0
      %2896 = vmatprep.subr.mxu0 0.0
      %2897 = vmatpush1.msra.mxu0 0.0
      %2898 = vmatprep.subr.mxu0 0.0
      %2899 = vmatpush1.msra.mxu0 0.0
      %2900 = vmatprep.subr.mxu0 0.0
      %2901 = vmatpush1.msra.mxu0 0.0
      %2902 = vmatprep.subr.mxu0 0.0
      %2903 = vmatpush1.msra.mxu0 0.0
      %2904 = vmatprep.subr.mxu0 0.0
      %2905 = vmatpush1.msra.mxu0 0.0
      %2906 = vmatprep.subr.mxu0 0.0
      %2907 = vmatpush1.msra.mxu0 0.0
      %2908 = vmatprep.subr.mxu0 0.0
      %2909 = vmatpush1.msra.mxu0 0.0
      %2910 = vmatprep.subr.mxu0 0.0
      %2911 = vmatpush1.msra.mxu0 0.0
      %2912 = vmatprep.subr.mxu0 0.0
      %2913 = vmatpush1.msra.mxu0 0.0
      %2914 = vmatprep.subr.mxu0 0.0
      %2915 = vmatpush1.msra.mxu0 %v2882
      %2916 = vmatprep.subr.mxu0 0.0
      %2917 = vmatpush2.msra.mxu0 0.0
      %2918 = vmatprep.subr.mxu0 0.0
      %2919 = vmatpush2.msra.mxu0 0.0
      %2920 = vmatprep.subr.mxu0 0.0
      %2921 = vmatpush2.msra.mxu0 0.0
      %2922 = vmatprep.subr.mxu0 0.0
      %2923 = vmatpush2.msra.mxu0 0.0
      %2924 = vmatprep.subr.mxu0 0.0
      %2925 = vmatpush2.msra.mxu0 0.0
      %2926 = vmatprep.subr.mxu0 0.0
      %2927 = vmatpush2.msra.mxu0 0.0
      %2928 = vmatprep.subr.mxu0 0.0
      %2929 = vmatpush2.msra.mxu0 0.0
      %2930 = vmatprep.subr.mxu0 0.0
      %2931 = vmatpush2.msra.mxu0 0.0
      %2932 = vmatprep.subr.mxu0 0.0
      %2933 = vmatpush2.msra.mxu0 0.0
      %2934 = vmatprep.subr.mxu0 0.0
      %2935 = vmatpush2.msra.mxu0 0.0
      %2936 = vmatprep.subr.mxu0 0.0
      %2937 = vmatpush2.msra.mxu0 0.0
      %2938 = vmatprep.subr.mxu0 0.0
      %2939 = vmatpush2.msra.mxu0 0.0
      %2940 = vmatprep.subr.mxu0 0.0
      %2941 = vmatpush2.msra.mxu0 0.0
      %2942 = vmatprep.subr.mxu0 0.0
      %2943 = vmatpush2.msra.mxu0 0.0
      %2944 = vmatprep.subr.mxu0 0.0
      %2945 = vmatpush2.msra.mxu0 0.0
      %2946 = vmatprep.subr.mxu0 0.0
      %2947 = vmatpush2.msra.mxu0 0.0
      %2948 = vmatprep.mubr.f32.mxu0 0.0
      %2949 = vmatmul.mubr.f32.gmra.mxu0 %v2879
      %v2950 = vpop.f32.mrf.mxu0
      %v2951 = vadd.f32 %v2875, %v2950
      %v2952 = vpop.f32.mrf.mxu0
      %2953 = vdwg.mxu0
      %v2954 = vld [vmem:[%s766] sm:$0xf]
      %v2956 = vrot.slane %v2787, 1
      %v2957 = vrot.slane %v2788, 1
      %v2958 = vsel %vm769, %v2956, %v2957
      %v2959 = vsel %vm612, %v2958, 0
      %v2962 = vsel %vm616, %v2954, 0
      %2964 = vmatprep.subr.mxu0 0.0
      %2965 = vmatpush1.msra.mxu0 0.0
      %2966 = vmatprep.subr.mxu0 0.0
      %2967 = vmatpush1.msra.mxu0 0.0
      %2968 = vmatprep.subr.mxu0 0.0
      %2969 = vmatpush1.msra.mxu0 0.0
      %2970 = vmatprep.subr.mxu0 0.0
      %2971 = vmatpush1.msra.mxu0 0.0
      %2972 = vmatprep.subr.mxu0 0.0
      %2973 = vmatpush1.msra.mxu0 0.0
      %2974 = vmatprep.subr.mxu0 0.0
      %2975 = vmatpush1.msra.mxu0 0.0
      %2976 = vmatprep.subr.mxu0 0.0
      %2977 = vmatpush1.msra.mxu0 0.0
      %2978 = vmatprep.subr.mxu0 0.0
      %2979 = vmatpush1.msra.mxu0 0.0
      %2980 = vmatprep.subr.mxu0 0.0
      %2981 = vmatpush1.msra.mxu0 0.0
      %2982 = vmatprep.subr.mxu0 0.0
      %2983 = vmatpush1.msra.mxu0 0.0
      %2984 = vmatprep.subr.mxu0 0.0
      %2985 = vmatpush1.msra.mxu0 0.0
      %2986 = vmatprep.subr.mxu0 0.0
      %2987 = vmatpush1.msra.mxu0 0.0
      %2988 = vmatprep.subr.mxu0 0.0
      %2989 = vmatpush1.msra.mxu0 0.0
      %2990 = vmatprep.subr.mxu0 0.0
      %2991 = vmatpush1.msra.mxu0 0.0
      %2992 = vmatprep.subr.mxu0 0.0
      %2993 = vmatpush1.msra.mxu0 0.0
      %2994 = vmatprep.subr.mxu0 0.0
      %2995 = vmatpush1.msra.mxu0 %v2962
      %2996 = vmatprep.subr.mxu0 0.0
      %2997 = vmatpush2.msra.mxu0 0.0
      %2998 = vmatprep.subr.mxu0 0.0
      %2999 = vmatpush2.msra.mxu0 0.0
      %3000 = vmatprep.subr.mxu0 0.0
      %3001 = vmatpush2.msra.mxu0 0.0
      %3002 = vmatprep.subr.mxu0 0.0
      %3003 = vmatpush2.msra.mxu0 0.0
      %3004 = vmatprep.subr.mxu0 0.0
      %3005 = vmatpush2.msra.mxu0 0.0
      %3006 = vmatprep.subr.mxu0 0.0
      %3007 = vmatpush2.msra.mxu0 0.0
      %3008 = vmatprep.subr.mxu0 0.0
      %3009 = vmatpush2.msra.mxu0 0.0
      %3010 = vmatprep.subr.mxu0 0.0
      %3011 = vmatpush2.msra.mxu0 0.0
      %3012 = vmatprep.subr.mxu0 0.0
      %3013 = vmatpush2.msra.mxu0 0.0
      %3014 = vmatprep.subr.mxu0 0.0
      %3015 = vmatpush2.msra.mxu0 0.0
      %3016 = vmatprep.subr.mxu0 0.0
      %3017 = vmatpush2.msra.mxu0 0.0
      %3018 = vmatprep.subr.mxu0 0.0
      %3019 = vmatpush2.msra.mxu0 0.0
      %3020 = vmatprep.subr.mxu0 0.0
      %3021 = vmatpush2.msra.mxu0 0.0
      %3022 = vmatprep.subr.mxu0 0.0
      %3023 = vmatpush2.msra.mxu0 0.0
      %3024 = vmatprep.subr.mxu0 0.0
      %3025 = vmatpush2.msra.mxu0 0.0
      %3026 = vmatprep.subr.mxu0 0.0
      %3027 = vmatpush2.msra.mxu0 0.0
      %3028 = vmatprep.mubr.f32.mxu0 0.0
      %3029 = vmatmul.mubr.f32.gmra.mxu0 %v2959
      %v3030 = vpop.f32.mrf.mxu0
      %v3031 = vadd.f32 0.0, %v3030
      %v3032 = vpop.f32.mrf.mxu0
      %3033 = vdwg.mxu0
      %v3034 = vadd.f32 %v2951, %v3031
      %v3035 = vld [vmem:[%s849] sm:$0xf]
      %v3037 = vsel %vm612, %v2791, 0
      %v3040 = vsel %vm616, %v3035, 0
      %3042 = vmatprep.subr.mxu0 0.0
      %3043 = vmatpush1.msra.mxu0 0.0
      %3044 = vmatprep.subr.mxu0 0.0
      %3045 = vmatpush1.msra.mxu0 0.0
      %3046 = vmatprep.subr.mxu0 0.0
      %3047 = vmatpush1.msra.mxu0 0.0
      %3048 = vmatprep.subr.mxu0 0.0
      %3049 = vmatpush1.msra.mxu0 0.0
      %3050 = vmatprep.subr.mxu0 0.0
      %3051 = vmatpush1.msra.mxu0 0.0
      %3052 = vmatprep.subr.mxu0 0.0
      %3053 = vmatpush1.msra.mxu0 0.0
      %3054 = vmatprep.subr.mxu0 0.0
      %3055 = vmatpush1.msra.mxu0 0.0
      %3056 = vmatprep.subr.mxu0 0.0
      %3057 = vmatpush1.msra.mxu0 0.0
      %3058 = vmatprep.subr.mxu0 0.0
      %3059 = vmatpush1.msra.mxu0 0.0
      %3060 = vmatprep.subr.mxu0 0.0
      %3061 = vmatpush1.msra.mxu0 0.0
      %3062 = vmatprep.subr.mxu0 0.0
      %3063 = vmatpush1.msra.mxu0 0.0
      %3064 = vmatprep.subr.mxu0 0.0
      %3065 = vmatpush1.msra.mxu0 0.0
      %3066 = vmatprep.subr.mxu0 0.0
      %3067 = vmatpush1.msra.mxu0 0.0
      %3068 = vmatprep.subr.mxu0 0.0
      %3069 = vmatpush1.msra.mxu0 0.0
      %3070 = vmatprep.subr.mxu0 0.0
      %3071 = vmatpush1.msra.mxu0 0.0
      %3072 = vmatprep.subr.mxu0 0.0
      %3073 = vmatpush1.msra.mxu0 %v3040
      %3074 = vmatprep.subr.mxu0 0.0
      %3075 = vmatpush2.msra.mxu0 0.0
      %3076 = vmatprep.subr.mxu0 0.0
      %3077 = vmatpush2.msra.mxu0 0.0
      %3078 = vmatprep.subr.mxu0 0.0
      %3079 = vmatpush2.msra.mxu0 0.0
      %3080 = vmatprep.subr.mxu0 0.0
      %3081 = vmatpush2.msra.mxu0 0.0
      %3082 = vmatprep.subr.mxu0 0.0
      %3083 = vmatpush2.msra.mxu0 0.0
      %3084 = vmatprep.subr.mxu0 0.0
      %3085 = vmatpush2.msra.mxu0 0.0
      %3086 = vmatprep.subr.mxu0 0.0
      %3087 = vmatpush2.msra.mxu0 0.0
      %3088 = vmatprep.subr.mxu0 0.0
      %3089 = vmatpush2.msra.mxu0 0.0
      %3090 = vmatprep.subr.mxu0 0.0
      %3091 = vmatpush2.msra.mxu0 0.0
      %3092 = vmatprep.subr.mxu0 0.0
      %3093 = vmatpush2.msra.mxu0 0.0
      %3094 = vmatprep.subr.mxu0 0.0
      %3095 = vmatpush2.msra.mxu0 0.0
      %3096 = vmatprep.subr.mxu0 0.0
      %3097 = vmatpush2.msra.mxu0 0.0
      %3098 = vmatprep.subr.mxu0 0.0
      %3099 = vmatpush2.msra.mxu0 0.0
      %3100 = vmatprep.subr.mxu0 0.0
      %3101 = vmatpush2.msra.mxu0 0.0
      %3102 = vmatprep.subr.mxu0 0.0
      %3103 = vmatpush2.msra.mxu0 0.0
      %3104 = vmatprep.subr.mxu0 0.0
      %3105 = vmatpush2.msra.mxu0 0.0
      %3106 = vmatprep.mubr.f32.mxu0 0.0
      %3107 = vmatmul.mubr.f32.gmra.mxu0 %v3037
      %v3108 = vpop.f32.mrf.mxu0
      %v3109 = vadd.f32 0.0, %v3108
      %v3110 = vpop.f32.mrf.mxu0
      %3111 = vdwg.mxu0
      %v3112 = vadd.f32 %v3034, %v3109
      %v3113 = vld [vmem:[%s928] sm:$0xf]
      %v3115 = vsel %vm612, %v2794, 0
      %v3118 = vsel %vm616, %v3113, 0
      %3120 = vmatprep.subr.mxu0 0.0
      %3121 = vmatpush1.msra.mxu0 0.0
      %3122 = vmatprep.subr.mxu0 0.0
      %3123 = vmatpush1.msra.mxu0 0.0
      %3124 = vmatprep.subr.mxu0 0.0
      %3125 = vmatpush1.msra.mxu0 0.0
      %3126 = vmatprep.subr.mxu0 0.0
      %3127 = vmatpush1.msra.mxu0 0.0
      %3128 = vmatprep.subr.mxu0 0.0
      %3129 = vmatpush1.msra.mxu0 0.0
      %3130 = vmatprep.subr.mxu0 0.0
      %3131 = vmatpush1.msra.mxu0 0.0
      %3132 = vmatprep.subr.mxu0 0.0
      %3133 = vmatpush1.msra.mxu0 0.0
      %3134 = vmatprep.subr.mxu0 0.0
      %3135 = vmatpush1.msra.mxu0 0.0
      %3136 = vmatprep.subr.mxu0 0.0
      %3137 = vmatpush1.msra.mxu0 0.0
      %3138 = vmatprep.subr.mxu0 0.0
      %3139 = vmatpush1.msra.mxu0 0.0
      %3140 = vmatprep.subr.mxu0 0.0
      %3141 = vmatpush1.msra.mxu0 0.0
      %3142 = vmatprep.subr.mxu0 0.0
      %3143 = vmatpush1.msra.mxu0 0.0
      %3144 = vmatprep.subr.mxu0 0.0
      %3145 = vmatpush1.msra.mxu0 0.0
      %3146 = vmatprep.subr.mxu0 0.0
      %3147 = vmatpush1.msra.mxu0 0.0
      %3148 = vmatprep.subr.mxu0 0.0
      %3149 = vmatpush1.msra.mxu0 0.0
      %3150 = vmatprep.subr.mxu0 0.0
      %3151 = vmatpush1.msra.mxu0 %v3118
      %3152 = vmatprep.subr.mxu0 0.0
      %3153 = vmatpush2.msra.mxu0 0.0
      %3154 = vmatprep.subr.mxu0 0.0
      %3155 = vmatpush2.msra.mxu0 0.0
      %3156 = vmatprep.subr.mxu0 0.0
      %3157 = vmatpush2.msra.mxu0 0.0
      %3158 = vmatprep.subr.mxu0 0.0
      %3159 = vmatpush2.msra.mxu0 0.0
      %3160 = vmatprep.subr.mxu0 0.0
      %3161 = vmatpush2.msra.mxu0 0.0
      %3162 = vmatprep.subr.mxu0 0.0
      %3163 = vmatpush2.msra.mxu0 0.0
      %3164 = vmatprep.subr.mxu0 0.0
      %3165 = vmatpush2.msra.mxu0 0.0
      %3166 = vmatprep.subr.mxu0 0.0
      %3167 = vmatpush2.msra.mxu0 0.0
      %3168 = vmatprep.subr.mxu0 0.0
      %3169 = vmatpush2.msra.mxu0 0.0
      %3170 = vmatprep.subr.mxu0 0.0
      %3171 = vmatpush2.msra.mxu0 0.0
      %3172 = vmatprep.subr.mxu0 0.0
      %3173 = vmatpush2.msra.mxu0 0.0
      %3174 = vmatprep.subr.mxu0 0.0
      %3175 = vmatpush2.msra.mxu0 0.0
      %3176 = vmatprep.subr.mxu0 0.0
      %3177 = vmatpush2.msra.mxu0 0.0
      %3178 = vmatprep.subr.mxu0 0.0
      %3179 = vmatpush2.msra.mxu0 0.0
      %3180 = vmatprep.subr.mxu0 0.0
      %3181 = vmatpush2.msra.mxu0 0.0
      %3182 = vmatprep.subr.mxu0 0.0
      %3183 = vmatpush2.msra.mxu0 0.0
      %3184 = vmatprep.mubr.f32.mxu0 0.0
      %3185 = vmatmul.mubr.f32.gmra.mxu0 %v3115
      %v3186 = vpop.f32.mrf.mxu0
      %v3187 = vadd.f32 0.0, %v3186
      %v3188 = vpop.f32.mrf.mxu0
      %3189 = vdwg.mxu0
      %v3190 = vadd.f32 %v3112, %v3187
      %v3191 = vld [vmem:[%s1007] sm:$0xf]
      %v3193 = vrot.slane %v2791, 1
      %v3194 = vrot.slane %v2792, 1
      %v3195 = vsel %vm769, %v3193, %v3194
      %v3196 = vsel %vm612, %v3195, 0
      %v3199 = vsel %vm616, %v3191, 0
      %3201 = vmatprep.subr.mxu0 0.0
      %3202 = vmatpush1.msra.mxu0 0.0
      %3203 = vmatprep.subr.mxu0 0.0
      %3204 = vmatpush1.msra.mxu0 0.0
      %3205 = vmatprep.subr.mxu0 0.0
      %3206 = vmatpush1.msra.mxu0 0.0
      %3207 = vmatprep.subr.mxu0 0.0
      %3208 = vmatpush1.msra.mxu0 0.0
      %3209 = vmatprep.subr.mxu0 0.0
      %3210 = vmatpush1.msra.mxu0 0.0
      %3211 = vmatprep.subr.mxu0 0.0
      %3212 = vmatpush1.msra.mxu0 0.0
      %3213 = vmatprep.subr.mxu0 0.0
      %3214 = vmatpush1.msra.mxu0 0.0
      %3215 = vmatprep.subr.mxu0 0.0
      %3216 = vmatpush1.msra.mxu0 0.0
      %3217 = vmatprep.subr.mxu0 0.0
      %3218 = vmatpush1.msra.mxu0 0.0
      %3219 = vmatprep.subr.mxu0 0.0
      %3220 = vmatpush1.msra.mxu0 0.0
      %3221 = vmatprep.subr.mxu0 0.0
      %3222 = vmatpush1.msra.mxu0 0.0
      %3223 = vmatprep.subr.mxu0 0.0
      %3224 = vmatpush1.msra.mxu0 0.0
      %3225 = vmatprep.subr.mxu0 0.0
      %3226 = vmatpush1.msra.mxu0 0.0
      %3227 = vmatprep.subr.mxu0 0.0
      %3228 = vmatpush1.msra.mxu0 0.0
      %3229 = vmatprep.subr.mxu0 0.0
      %3230 = vmatpush1.msra.mxu0 0.0
      %3231 = vmatprep.subr.mxu0 0.0
      %3232 = vmatpush1.msra.mxu0 %v3199
      %3233 = vmatprep.subr.mxu0 0.0
      %3234 = vmatpush2.msra.mxu0 0.0
      %3235 = vmatprep.subr.mxu0 0.0
      %3236 = vmatpush2.msra.mxu0 0.0
      %3237 = vmatprep.subr.mxu0 0.0
      %3238 = vmatpush2.msra.mxu0 0.0
      %3239 = vmatprep.subr.mxu0 0.0
      %3240 = vmatpush2.msra.mxu0 0.0
      %3241 = vmatprep.subr.mxu0 0.0
      %3242 = vmatpush2.msra.mxu0 0.0
      %3243 = vmatprep.subr.mxu0 0.0
      %3244 = vmatpush2.msra.mxu0 0.0
      %3245 = vmatprep.subr.mxu0 0.0
      %3246 = vmatpush2.msra.mxu0 0.0
      %3247 = vmatprep.subr.mxu0 0.0
      %3248 = vmatpush2.msra.mxu0 0.0
      %3249 = vmatprep.subr.mxu0 0.0
      %3250 = vmatpush2.msra.mxu0 0.0
      %3251 = vmatprep.subr.mxu0 0.0
      %3252 = vmatpush2.msra.mxu0 0.0
      %3253 = vmatprep.subr.mxu0 0.0
      %3254 = vmatpush2.msra.mxu0 0.0
      %3255 = vmatprep.subr.mxu0 0.0
      %3256 = vmatpush2.msra.mxu0 0.0
      %3257 = vmatprep.subr.mxu0 0.0
      %3258 = vmatpush2.msra.mxu0 0.0
      %3259 = vmatprep.subr.mxu0 0.0
      %3260 = vmatpush2.msra.mxu0 0.0
      %3261 = vmatprep.subr.mxu0 0.0
      %3262 = vmatpush2.msra.mxu0 0.0
      %3263 = vmatprep.subr.mxu0 0.0
      %3264 = vmatpush2.msra.mxu0 0.0
      %3265 = vmatprep.mubr.f32.mxu0 0.0
      %3266 = vmatmul.mubr.f32.gmra.mxu0 %v3196
      %v3267 = vpop.f32.mrf.mxu0
      %v3268 = vadd.f32 0.0, %v3267
      %v3269 = vpop.f32.mrf.mxu0
      %3270 = vdwg.mxu0
      %v3271 = vadd.f32 %v3190, %v3268
      %v3272 = vld [vmem:[%s1089] sm:$0xf]
      %v3274 = vsel %vm612, %v2796, 0
      %v3277 = vsel %vm616, %v3272, 0
      %3279 = vmatprep.subr.mxu0 0.0
      %3280 = vmatpush1.msra.mxu0 0.0
      %3281 = vmatprep.subr.mxu0 0.0
      %3282 = vmatpush1.msra.mxu0 0.0
      %3283 = vmatprep.subr.mxu0 0.0
      %3284 = vmatpush1.msra.mxu0 0.0
      %3285 = vmatprep.subr.mxu0 0.0
      %3286 = vmatpush1.msra.mxu0 0.0
      %3287 = vmatprep.subr.mxu0 0.0
      %3288 = vmatpush1.msra.mxu0 0.0
      %3289 = vmatprep.subr.mxu0 0.0
      %3290 = vmatpush1.msra.mxu0 0.0
      %3291 = vmatprep.subr.mxu0 0.0
      %3292 = vmatpush1.msra.mxu0 0.0
      %3293 = vmatprep.subr.mxu0 0.0
      %3294 = vmatpush1.msra.mxu0 0.0
      %3295 = vmatprep.subr.mxu0 0.0
      %3296 = vmatpush1.msra.mxu0 0.0
      %3297 = vmatprep.subr.mxu0 0.0
      %3298 = vmatpush1.msra.mxu0 0.0
      %3299 = vmatprep.subr.mxu0 0.0
      %3300 = vmatpush1.msra.mxu0 0.0
      %3301 = vmatprep.subr.mxu0 0.0
      %3302 = vmatpush1.msra.mxu0 0.0
      %3303 = vmatprep.subr.mxu0 0.0
      %3304 = vmatpush1.msra.mxu0 0.0
      %3305 = vmatprep.subr.mxu0 0.0
      %3306 = vmatpush1.msra.mxu0 0.0
      %3307 = vmatprep.subr.mxu0 0.0
      %3308 = vmatpush1.msra.mxu0 0.0
      %3309 = vmatprep.subr.mxu0 0.0
      %3310 = vmatpush1.msra.mxu0 %v3277
      %3311 = vmatprep.subr.mxu0 0.0
      %3312 = vmatpush2.msra.mxu0 0.0
      %3313 = vmatprep.subr.mxu0 0.0
      %3314 = vmatpush2.msra.mxu0 0.0
      %3315 = vmatprep.subr.mxu0 0.0
      %3316 = vmatpush2.msra.mxu0 0.0
      %3317 = vmatprep.subr.mxu0 0.0
      %3318 = vmatpush2.msra.mxu0 0.0
      %3319 = vmatprep.subr.mxu0 0.0
      %3320 = vmatpush2.msra.mxu0 0.0
      %3321 = vmatprep.subr.mxu0 0.0
      %3322 = vmatpush2.msra.mxu0 0.0
      %3323 = vmatprep.subr.mxu0 0.0
      %3324 = vmatpush2.msra.mxu0 0.0
      %3325 = vmatprep.subr.mxu0 0.0
      %3326 = vmatpush2.msra.mxu0 0.0
      %3327 = vmatprep.subr.mxu0 0.0
      %3328 = vmatpush2.msra.mxu0 0.0
      %3329 = vmatprep.subr.mxu0 0.0
      %3330 = vmatpush2.msra.mxu0 0.0
      %3331 = vmatprep.subr.mxu0 0.0
      %3332 = vmatpush2.msra.mxu0 0.0
      %3333 = vmatprep.subr.mxu0 0.0
      %3334 = vmatpush2.msra.mxu0 0.0
      %3335 = vmatprep.subr.mxu0 0.0
      %3336 = vmatpush2.msra.mxu0 0.0
      %3337 = vmatprep.subr.mxu0 0.0
      %3338 = vmatpush2.msra.mxu0 0.0
      %3339 = vmatprep.subr.mxu0 0.0
      %3340 = vmatpush2.msra.mxu0 0.0
      %3341 = vmatprep.subr.mxu0 0.0
      %3342 = vmatpush2.msra.mxu0 0.0
      %3343 = vmatprep.mubr.f32.mxu0 0.0
      %3344 = vmatmul.mubr.f32.gmra.mxu0 %v3274
      %v3345 = vpop.f32.mrf.mxu0
      %v3346 = vadd.f32 0.0, %v3345
      %v3347 = vpop.f32.mrf.mxu0
      %3348 = vdwg.mxu0
      %v3349 = vadd.f32 %v3271, %v3346
      %v3350 = vld [vmem:[%s1168] sm:$0xf]
      %v3352 = vsel %vm612, %v2799, 0
      %v3355 = vsel %vm616, %v3350, 0
      %3357 = vmatprep.subr.mxu0 0.0
      %3358 = vmatpush1.msra.mxu0 0.0
      %3359 = vmatprep.subr.mxu0 0.0
      %3360 = vmatpush1.msra.mxu0 0.0
      %3361 = vmatprep.subr.mxu0 0.0
      %3362 = vmatpush1.msra.mxu0 0.0
      %3363 = vmatprep.subr.mxu0 0.0
      %3364 = vmatpush1.msra.mxu0 0.0
      %3365 = vmatprep.subr.mxu0 0.0
      %3366 = vmatpush1.msra.mxu0 0.0
      %3367 = vmatprep.subr.mxu0 0.0
      %3368 = vmatpush1.msra.mxu0 0.0
      %3369 = vmatprep.subr.mxu0 0.0
      %3370 = vmatpush1.msra.mxu0 0.0
      %3371 = vmatprep.subr.mxu0 0.0
      %3372 = vmatpush1.msra.mxu0 0.0
      %3373 = vmatprep.subr.mxu0 0.0
      %3374 = vmatpush1.msra.mxu0 0.0
      %3375 = vmatprep.subr.mxu0 0.0
      %3376 = vmatpush1.msra.mxu0 0.0
      %3377 = vmatprep.subr.mxu0 0.0
      %3378 = vmatpush1.msra.mxu0 0.0
      %3379 = vmatprep.subr.mxu0 0.0
      %3380 = vmatpush1.msra.mxu0 0.0
      %3381 = vmatprep.subr.mxu0 0.0
      %3382 = vmatpush1.msra.mxu0 0.0
      %3383 = vmatprep.subr.mxu0 0.0
      %3384 = vmatpush1.msra.mxu0 0.0
      %3385 = vmatprep.subr.mxu0 0.0
      %3386 = vmatpush1.msra.mxu0 0.0
      %3387 = vmatprep.subr.mxu0 0.0
      %3388 = vmatpush1.msra.mxu0 %v3355
      %3389 = vmatprep.subr.mxu0 0.0
      %3390 = vmatpush2.msra.mxu0 0.0
      %3391 = vmatprep.subr.mxu0 0.0
      %3392 = vmatpush2.msra.mxu0 0.0
      %3393 = vmatprep.subr.mxu0 0.0
      %3394 = vmatpush2.msra.mxu0 0.0
      %3395 = vmatprep.subr.mxu0 0.0
      %3396 = vmatpush2.msra.mxu0 0.0
      %3397 = vmatprep.subr.mxu0 0.0
      %3398 = vmatpush2.msra.mxu0 0.0
      %3399 = vmatprep.subr.mxu0 0.0
      %3400 = vmatpush2.msra.mxu0 0.0
      %3401 = vmatprep.subr.mxu0 0.0
      %3402 = vmatpush2.msra.mxu0 0.0
      %3403 = vmatprep.subr.mxu0 0.0
      %3404 = vmatpush2.msra.mxu0 0.0
      %3405 = vmatprep.subr.mxu0 0.0
      %3406 = vmatpush2.msra.mxu0 0.0
      %3407 = vmatprep.subr.mxu0 0.0
      %3408 = vmatpush2.msra.mxu0 0.0
      %3409 = vmatprep.subr.mxu0 0.0
      %3410 = vmatpush2.msra.mxu0 0.0
      %3411 = vmatprep.subr.mxu0 0.0
      %3412 = vmatpush2.msra.mxu0 0.0
      %3413 = vmatprep.subr.mxu0 0.0
      %3414 = vmatpush2.msra.mxu0 0.0
      %3415 = vmatprep.subr.mxu0 0.0
      %3416 = vmatpush2.msra.mxu0 0.0
      %3417 = vmatprep.subr.mxu0 0.0
      %3418 = vmatpush2.msra.mxu0 0.0
      %3419 = vmatprep.subr.mxu0 0.0
      %3420 = vmatpush2.msra.mxu0 0.0
      %3421 = vmatprep.mubr.f32.mxu0 0.0
      %3422 = vmatmul.mubr.f32.gmra.mxu0 %v3352
      %v3423 = vpop.f32.mrf.mxu0
      %v3424 = vadd.f32 0.0, %v3423
      %v3425 = vpop.f32.mrf.mxu0
      %3426 = vdwg.mxu0
      %v3427 = vadd.f32 %v3349, %v3424
      %v3428 = vld [vmem:[%s1247] sm:$0xf]
      %v3430 = vrot.slane %v2796, 1
      %v3431 = vrot.slane %v2797, 1
      %v3432 = vsel %vm769, %v3430, %v3431
      %v3433 = vsel %vm612, %v3432, 0
      %v3436 = vsel %vm616, %v3428, 0
      %3438 = vmatprep.subr.mxu0 0.0
      %3439 = vmatpush1.msra.mxu0 0.0
      %3440 = vmatprep.subr.mxu0 0.0
      %3441 = vmatpush1.msra.mxu0 0.0
      %3442 = vmatprep.subr.mxu0 0.0
      %3443 = vmatpush1.msra.mxu0 0.0
      %3444 = vmatprep.subr.mxu0 0.0
      %3445 = vmatpush1.msra.mxu0 0.0
      %3446 = vmatprep.subr.mxu0 0.0
      %3447 = vmatpush1.msra.mxu0 0.0
      %3448 = vmatprep.subr.mxu0 0.0
      %3449 = vmatpush1.msra.mxu0 0.0
      %3450 = vmatprep.subr.mxu0 0.0
      %3451 = vmatpush1.msra.mxu0 0.0
      %3452 = vmatprep.subr.mxu0 0.0
      %3453 = vmatpush1.msra.mxu0 0.0
      %3454 = vmatprep.subr.mxu0 0.0
      %3455 = vmatpush1.msra.mxu0 0.0
      %3456 = vmatprep.subr.mxu0 0.0
      %3457 = vmatpush1.msra.mxu0 0.0
      %3458 = vmatprep.subr.mxu0 0.0
      %3459 = vmatpush1.msra.mxu0 0.0
      %3460 = vmatprep.subr.mxu0 0.0
      %3461 = vmatpush1.msra.mxu0 0.0
      %3462 = vmatprep.subr.mxu0 0.0
      %3463 = vmatpush1.msra.mxu0 0.0
      %3464 = vmatprep.subr.mxu0 0.0
      %3465 = vmatpush1.msra.mxu0 0.0
      %3466 = vmatprep.subr.mxu0 0.0
      %3467 = vmatpush1.msra.mxu0 0.0
      %3468 = vmatprep.subr.mxu0 0.0
      %3469 = vmatpush1.msra.mxu0 %v3436
      %3470 = vmatprep.subr.mxu0 0.0
      %3471 = vmatpush2.msra.mxu0 0.0
      %3472 = vmatprep.subr.mxu0 0.0
      %3473 = vmatpush2.msra.mxu0 0.0
      %3474 = vmatprep.subr.mxu0 0.0
      %3475 = vmatpush2.msra.mxu0 0.0
      %3476 = vmatprep.subr.mxu0 0.0
      %3477 = vmatpush2.msra.mxu0 0.0
      %3478 = vmatprep.subr.mxu0 0.0
      %3479 = vmatpush2.msra.mxu0 0.0
      %3480 = vmatprep.subr.mxu0 0.0
      %3481 = vmatpush2.msra.mxu0 0.0
      %3482 = vmatprep.subr.mxu0 0.0
      %3483 = vmatpush2.msra.mxu0 0.0
      %3484 = vmatprep.subr.mxu0 0.0
      %3485 = vmatpush2.msra.mxu0 0.0
      %3486 = vmatprep.subr.mxu0 0.0
      %3487 = vmatpush2.msra.mxu0 0.0
      %3488 = vmatprep.subr.mxu0 0.0
      %3489 = vmatpush2.msra.mxu0 0.0
      %3490 = vmatprep.subr.mxu0 0.0
      %3491 = vmatpush2.msra.mxu0 0.0
      %3492 = vmatprep.subr.mxu0 0.0
      %3493 = vmatpush2.msra.mxu0 0.0
      %3494 = vmatprep.subr.mxu0 0.0
      %3495 = vmatpush2.msra.mxu0 0.0
      %3496 = vmatprep.subr.mxu0 0.0
      %3497 = vmatpush2.msra.mxu0 0.0
      %3498 = vmatprep.subr.mxu0 0.0
      %3499 = vmatpush2.msra.mxu0 0.0
      %3500 = vmatprep.subr.mxu0 0.0
      %3501 = vmatpush2.msra.mxu0 0.0
      %3502 = vmatprep.mubr.f32.mxu0 0.0
      %3503 = vmatmul.mubr.f32.gmra.mxu0 %v3433
      %v3504 = vpop.f32.mrf.mxu0
      %v3505 = vadd.f32 0.0, %v3504
      %v3506 = vpop.f32.mrf.mxu0
      %3507 = vdwg.mxu0
      %v3508 = vadd.f32 %v3427, %v3505
      %v3509 = vadd.f32 %v3508, %v1333
      %s3510 = scalar_lea.vmem %s595, 24
      %3511 = vst.msk [vmem:[%s3510] sm:$0xff] %vm612, %v3509
      %v3512 = vld [vmem:[%s2795] sm:$0xff]
      %v3513 = vld [vmem:[%s2795 + $0x8] sm:$0x1]
      %v3514 = vld [vmem:[%s2798] sm:$0xff]
      %s3515 = scalar_lea.vmem %s575, 64
      %v3516 = vld [vmem:[%s3515] sm:$0xff]
      %v3517 = vld [vmem:[%s3515 + $0x8] sm:$0x1]
      %s3518 = scalar_lea.vmem %s585, 32
      %v3519 = vld [vmem:[%s3518] sm:$0xff]
      %s3520 = scalar_lea.vmem %s516, 80
      %v3521 = vld [vmem:[%s3520] sm:$0xff]
      %v3522 = vld [vmem:[%s3520 + $0x8] sm:$0x1]
      %s3523 = scalar_lea.vmem %s535, 40
      %v3524 = vld [vmem:[%s3523] sm:$0xff]
      %v3525 = vld [vmem:[%s6] sm:$0xf]
      %v3526 = vld [vmem:[%s610] sm:$0xf]
      %v3528 = vsel %vm612, %v3514, 0
      %v3531 = vsel %vm616, %v3526, 0
      %3533 = vmatprep.subr.mxu0 0.0
      %3534 = vmatpush1.msra.mxu0 0.0
      %3535 = vmatprep.subr.mxu0 0.0
      %3536 = vmatpush1.msra.mxu0 0.0
      %3537 = vmatprep.subr.mxu0 0.0
      %3538 = vmatpush1.msra.mxu0 0.0
      %3539 = vmatprep.subr.mxu0 0.0
      %3540 = vmatpush1.msra.mxu0 0.0
      %3541 = vmatprep.subr.mxu0 0.0
      %3542 = vmatpush1.msra.mxu0 0.0
      %3543 = vmatprep.subr.mxu0 0.0
      %3544 = vmatpush1.msra.mxu0 0.0
      %3545 = vmatprep.subr.mxu0 0.0
      %3546 = vmatpush1.msra.mxu0 0.0
      %3547 = vmatprep.subr.mxu0 0.0
      %3548 = vmatpush1.msra.mxu0 0.0
      %3549 = vmatprep.subr.mxu0 0.0
      %3550 = vmatpush1.msra.mxu0 0.0
      %3551 = vmatprep.subr.mxu0 0.0
      %3552 = vmatpush1.msra.mxu0 0.0
      %3553 = vmatprep.subr.mxu0 0.0
      %3554 = vmatpush1.msra.mxu0 0.0
      %3555 = vmatprep.subr.mxu0 0.0
      %3556 = vmatpush1.msra.mxu0 0.0
      %3557 = vmatprep.subr.mxu0 0.0
      %3558 = vmatpush1.msra.mxu0 0.0
      %3559 = vmatprep.subr.mxu0 0.0
      %3560 = vmatpush1.msra.mxu0 0.0
      %3561 = vmatprep.subr.mxu0 0.0
      %3562 = vmatpush1.msra.mxu0 0.0
      %3563 = vmatprep.subr.mxu0 0.0
      %3564 = vmatpush1.msra.mxu0 %v3531
      %3565 = vmatprep.subr.mxu0 0.0
      %3566 = vmatpush2.msra.mxu0 0.0
      %3567 = vmatprep.subr.mxu0 0.0
      %3568 = vmatpush2.msra.mxu0 0.0
      %3569 = vmatprep.subr.mxu0 0.0
      %3570 = vmatpush2.msra.mxu0 0.0
      %3571 = vmatprep.subr.mxu0 0.0
      %3572 = vmatpush2.msra.mxu0 0.0
      %3573 = vmatprep.subr.mxu0 0.0
      %3574 = vmatpush2.msra.mxu0 0.0
      %3575 = vmatprep.subr.mxu0 0.0
      %3576 = vmatpush2.msra.mxu0 0.0
      %3577 = vmatprep.subr.mxu0 0.0
      %3578 = vmatpush2.msra.mxu0 0.0
      %3579 = vmatprep.subr.mxu0 0.0
      %3580 = vmatpush2.msra.mxu0 0.0
      %3581 = vmatprep.subr.mxu0 0.0
      %3582 = vmatpush2.msra.mxu0 0.0
      %3583 = vmatprep.subr.mxu0 0.0
      %3584 = vmatpush2.msra.mxu0 0.0
      %3585 = vmatprep.subr.mxu0 0.0
      %3586 = vmatpush2.msra.mxu0 0.0
      %3587 = vmatprep.subr.mxu0 0.0
      %3588 = vmatpush2.msra.mxu0 0.0
      %3589 = vmatprep.subr.mxu0 0.0
      %3590 = vmatpush2.msra.mxu0 0.0
      %3591 = vmatprep.subr.mxu0 0.0
      %3592 = vmatpush2.msra.mxu0 0.0
      %3593 = vmatprep.subr.mxu0 0.0
      %3594 = vmatpush2.msra.mxu0 0.0
      %3595 = vmatprep.subr.mxu0 0.0
      %3596 = vmatpush2.msra.mxu0 0.0
      %3597 = vmatprep.mubr.f32.mxu0 0.0
      %3598 = vmatmul.mubr.f32.gmra.mxu0 %v3528
      %v3599 = vpop.f32.mrf.mxu0
      %v3600 = vadd.f32 0.0, %v3599
      %v3601 = vpop.f32.mrf.mxu0
      %3602 = vdwg.mxu0
      %v3604 = vsel %vm612, %v3512, 0
      %v3607 = vsel %vm616, %v3525, 0
      %3609 = vmatprep.subr.mxu0 0.0
      %3610 = vmatpush1.msra.mxu0 0.0
      %3611 = vmatprep.subr.mxu0 0.0
      %3612 = vmatpush1.msra.mxu0 0.0
      %3613 = vmatprep.subr.mxu0 0.0
      %3614 = vmatpush1.msra.mxu0 0.0
      %3615 = vmatprep.subr.mxu0 0.0
      %3616 = vmatpush1.msra.mxu0 0.0
      %3617 = vmatprep.subr.mxu0 0.0
      %3618 = vmatpush1.msra.mxu0 0.0
      %3619 = vmatprep.subr.mxu0 0.0
      %3620 = vmatpush1.msra.mxu0 0.0
      %3621 = vmatprep.subr.mxu0 0.0
      %3622 = vmatpush1.msra.mxu0 0.0
      %3623 = vmatprep.subr.mxu0 0.0
      %3624 = vmatpush1.msra.mxu0 0.0
      %3625 = vmatprep.subr.mxu0 0.0
      %3626 = vmatpush1.msra.mxu0 0.0
      %3627 = vmatprep.subr.mxu0 0.0
      %3628 = vmatpush1.msra.mxu0 0.0
      %3629 = vmatprep.subr.mxu0 0.0
      %3630 = vmatpush1.msra.mxu0 0.0
      %3631 = vmatprep.subr.mxu0 0.0
      %3632 = vmatpush1.msra.mxu0 0.0
      %3633 = vmatprep.subr.mxu0 0.0
      %3634 = vmatpush1.msra.mxu0 0.0
      %3635 = vmatprep.subr.mxu0 0.0
      %3636 = vmatpush1.msra.mxu0 0.0
      %3637 = vmatprep.subr.mxu0 0.0
      %3638 = vmatpush1.msra.mxu0 0.0
      %3639 = vmatprep.subr.mxu0 0.0
      %3640 = vmatpush1.msra.mxu0 %v3607
      %3641 = vmatprep.subr.mxu0 0.0
      %3642 = vmatpush2.msra.mxu0 0.0
      %3643 = vmatprep.subr.mxu0 0.0
      %3644 = vmatpush2.msra.mxu0 0.0
      %3645 = vmatprep.subr.mxu0 0.0
      %3646 = vmatpush2.msra.mxu0 0.0
      %3647 = vmatprep.subr.mxu0 0.0
      %3648 = vmatpush2.msra.mxu0 0.0
      %3649 = vmatprep.subr.mxu0 0.0
      %3650 = vmatpush2.msra.mxu0 0.0
      %3651 = vmatprep.subr.mxu0 0.0
      %3652 = vmatpush2.msra.mxu0 0.0
      %3653 = vmatprep.subr.mxu0 0.0
      %3654 = vmatpush2.msra.mxu0 0.0
      %3655 = vmatprep.subr.mxu0 0.0
      %3656 = vmatpush2.msra.mxu0 0.0
      %3657 = vmatprep.subr.mxu0 0.0
      %3658 = vmatpush2.msra.mxu0 0.0
      %3659 = vmatprep.subr.mxu0 0.0
      %3660 = vmatpush2.msra.mxu0 0.0
      %3661 = vmatprep.subr.mxu0 0.0
      %3662 = vmatpush2.msra.mxu0 0.0
      %3663 = vmatprep.subr.mxu0 0.0
      %3664 = vmatpush2.msra.mxu0 0.0
      %3665 = vmatprep.subr.mxu0 0.0
      %3666 = vmatpush2.msra.mxu0 0.0
      %3667 = vmatprep.subr.mxu0 0.0
      %3668 = vmatpush2.msra.mxu0 0.0
      %3669 = vmatprep.subr.mxu0 0.0
      %3670 = vmatpush2.msra.mxu0 0.0
      %3671 = vmatprep.subr.mxu0 0.0
      %3672 = vmatpush2.msra.mxu0 0.0
      %3673 = vmatprep.mubr.f32.mxu0 0.0
      %3674 = vmatmul.mubr.f32.gmra.mxu0 %v3604
      %v3675 = vpop.f32.mrf.mxu0
      %v3676 = vadd.f32 %v3600, %v3675
      %v3677 = vpop.f32.mrf.mxu0
      %3678 = vdwg.mxu0
      %v3679 = vld [vmem:[%s766] sm:$0xf]
      %v3681 = vrot.slane %v3512, 1
      %v3682 = vrot.slane %v3513, 1
      %v3683 = vsel %vm769, %v3681, %v3682
      %v3684 = vsel %vm612, %v3683, 0
      %v3687 = vsel %vm616, %v3679, 0
      %3689 = vmatprep.subr.mxu0 0.0
      %3690 = vmatpush1.msra.mxu0 0.0
      %3691 = vmatprep.subr.mxu0 0.0
      %3692 = vmatpush1.msra.mxu0 0.0
      %3693 = vmatprep.subr.mxu0 0.0
      %3694 = vmatpush1.msra.mxu0 0.0
      %3695 = vmatprep.subr.mxu0 0.0
      %3696 = vmatpush1.msra.mxu0 0.0
      %3697 = vmatprep.subr.mxu0 0.0
      %3698 = vmatpush1.msra.mxu0 0.0
      %3699 = vmatprep.subr.mxu0 0.0
      %3700 = vmatpush1.msra.mxu0 0.0
      %3701 = vmatprep.subr.mxu0 0.0
      %3702 = vmatpush1.msra.mxu0 0.0
      %3703 = vmatprep.subr.mxu0 0.0
      %3704 = vmatpush1.msra.mxu0 0.0
      %3705 = vmatprep.subr.mxu0 0.0
      %3706 = vmatpush1.msra.mxu0 0.0
      %3707 = vmatprep.subr.mxu0 0.0
      %3708 = vmatpush1.msra.mxu0 0.0
      %3709 = vmatprep.subr.mxu0 0.0
      %3710 = vmatpush1.msra.mxu0 0.0
      %3711 = vmatprep.subr.mxu0 0.0
      %3712 = vmatpush1.msra.mxu0 0.0
      %3713 = vmatprep.subr.mxu0 0.0
      %3714 = vmatpush1.msra.mxu0 0.0
      %3715 = vmatprep.subr.mxu0 0.0
      %3716 = vmatpush1.msra.mxu0 0.0
      %3717 = vmatprep.subr.mxu0 0.0
      %3718 = vmatpush1.msra.mxu0 0.0
      %3719 = vmatprep.subr.mxu0 0.0
      %3720 = vmatpush1.msra.mxu0 %v3687
      %3721 = vmatprep.subr.mxu0 0.0
      %3722 = vmatpush2.msra.mxu0 0.0
      %3723 = vmatprep.subr.mxu0 0.0
      %3724 = vmatpush2.msra.mxu0 0.0
      %3725 = vmatprep.subr.mxu0 0.0
      %3726 = vmatpush2.msra.mxu0 0.0
      %3727 = vmatprep.subr.mxu0 0.0
      %3728 = vmatpush2.msra.mxu0 0.0
      %3729 = vmatprep.subr.mxu0 0.0
      %3730 = vmatpush2.msra.mxu0 0.0
      %3731 = vmatprep.subr.mxu0 0.0
      %3732 = vmatpush2.msra.mxu0 0.0
      %3733 = vmatprep.subr.mxu0 0.0
      %3734 = vmatpush2.msra.mxu0 0.0
      %3735 = vmatprep.subr.mxu0 0.0
      %3736 = vmatpush2.msra.mxu0 0.0
      %3737 = vmatprep.subr.mxu0 0.0
      %3738 = vmatpush2.msra.mxu0 0.0
      %3739 = vmatprep.subr.mxu0 0.0
      %3740 = vmatpush2.msra.mxu0 0.0
      %3741 = vmatprep.subr.mxu0 0.0
      %3742 = vmatpush2.msra.mxu0 0.0
      %3743 = vmatprep.subr.mxu0 0.0
      %3744 = vmatpush2.msra.mxu0 0.0
      %3745 = vmatprep.subr.mxu0 0.0
      %3746 = vmatpush2.msra.mxu0 0.0
      %3747 = vmatprep.subr.mxu0 0.0
      %3748 = vmatpush2.msra.mxu0 0.0
      %3749 = vmatprep.subr.mxu0 0.0
      %3750 = vmatpush2.msra.mxu0 0.0
      %3751 = vmatprep.subr.mxu0 0.0
      %3752 = vmatpush2.msra.mxu0 0.0
      %3753 = vmatprep.mubr.f32.mxu0 0.0
      %3754 = vmatmul.mubr.f32.gmra.mxu0 %v3684
      %v3755 = vpop.f32.mrf.mxu0
      %v3756 = vadd.f32 0.0, %v3755
      %v3757 = vpop.f32.mrf.mxu0
      %3758 = vdwg.mxu0
      %v3759 = vadd.f32 %v3676, %v3756
      %v3760 = vld [vmem:[%s849] sm:$0xf]
      %v3762 = vsel %vm612, %v3516, 0
      %v3765 = vsel %vm616, %v3760, 0
      %3767 = vmatprep.subr.mxu0 0.0
      %3768 = vmatpush1.msra.mxu0 0.0
      %3769 = vmatprep.subr.mxu0 0.0
      %3770 = vmatpush1.msra.mxu0 0.0
      %3771 = vmatprep.subr.mxu0 0.0
      %3772 = vmatpush1.msra.mxu0 0.0
      %3773 = vmatprep.subr.mxu0 0.0
      %3774 = vmatpush1.msra.mxu0 0.0
      %3775 = vmatprep.subr.mxu0 0.0
      %3776 = vmatpush1.msra.mxu0 0.0
      %3777 = vmatprep.subr.mxu0 0.0
      %3778 = vmatpush1.msra.mxu0 0.0
      %3779 = vmatprep.subr.mxu0 0.0
      %3780 = vmatpush1.msra.mxu0 0.0
      %3781 = vmatprep.subr.mxu0 0.0
      %3782 = vmatpush1.msra.mxu0 0.0
      %3783 = vmatprep.subr.mxu0 0.0
      %3784 = vmatpush1.msra.mxu0 0.0
      %3785 = vmatprep.subr.mxu0 0.0
      %3786 = vmatpush1.msra.mxu0 0.0
      %3787 = vmatprep.subr.mxu0 0.0
      %3788 = vmatpush1.msra.mxu0 0.0
      %3789 = vmatprep.subr.mxu0 0.0
      %3790 = vmatpush1.msra.mxu0 0.0
      %3791 = vmatprep.subr.mxu0 0.0
      %3792 = vmatpush1.msra.mxu0 0.0
      %3793 = vmatprep.subr.mxu0 0.0
      %3794 = vmatpush1.msra.mxu0 0.0
      %3795 = vmatprep.subr.mxu0 0.0
      %3796 = vmatpush1.msra.mxu0 0.0
      %3797 = vmatprep.subr.mxu0 0.0
      %3798 = vmatpush1.msra.mxu0 %v3765
      %3799 = vmatprep.subr.mxu0 0.0
      %3800 = vmatpush2.msra.mxu0 0.0
      %3801 = vmatprep.subr.mxu0 0.0
      %3802 = vmatpush2.msra.mxu0 0.0
      %3803 = vmatprep.subr.mxu0 0.0
      %3804 = vmatpush2.msra.mxu0 0.0
      %3805 = vmatprep.subr.mxu0 0.0
      %3806 = vmatpush2.msra.mxu0 0.0
      %3807 = vmatprep.subr.mxu0 0.0
      %3808 = vmatpush2.msra.mxu0 0.0
      %3809 = vmatprep.subr.mxu0 0.0
      %3810 = vmatpush2.msra.mxu0 0.0
      %3811 = vmatprep.subr.mxu0 0.0
      %3812 = vmatpush2.msra.mxu0 0.0
      %3813 = vmatprep.subr.mxu0 0.0
      %3814 = vmatpush2.msra.mxu0 0.0
      %3815 = vmatprep.subr.mxu0 0.0
      %3816 = vmatpush2.msra.mxu0 0.0
      %3817 = vmatprep.subr.mxu0 0.0
      %3818 = vmatpush2.msra.mxu0 0.0
      %3819 = vmatprep.subr.mxu0 0.0
      %3820 = vmatpush2.msra.mxu0 0.0
      %3821 = vmatprep.subr.mxu0 0.0
      %3822 = vmatpush2.msra.mxu0 0.0
      %3823 = vmatprep.subr.mxu0 0.0
      %3824 = vmatpush2.msra.mxu0 0.0
      %3825 = vmatprep.subr.mxu0 0.0
      %3826 = vmatpush2.msra.mxu0 0.0
      %3827 = vmatprep.subr.mxu0 0.0
      %3828 = vmatpush2.msra.mxu0 0.0
      %3829 = vmatprep.subr.mxu0 0.0
      %3830 = vmatpush2.msra.mxu0 0.0
      %3831 = vmatprep.mubr.f32.mxu0 0.0
      %3832 = vmatmul.mubr.f32.gmra.mxu0 %v3762
      %v3833 = vpop.f32.mrf.mxu0
      %v3834 = vadd.f32 0.0, %v3833
      %v3835 = vpop.f32.mrf.mxu0
      %3836 = vdwg.mxu0
      %v3837 = vadd.f32 %v3759, %v3834
      %v3838 = vld [vmem:[%s928] sm:$0xf]
      %v3840 = vsel %vm612, %v3519, 0
      %v3843 = vsel %vm616, %v3838, 0
      %3845 = vmatprep.subr.mxu0 0.0
      %3846 = vmatpush1.msra.mxu0 0.0
      %3847 = vmatprep.subr.mxu0 0.0
      %3848 = vmatpush1.msra.mxu0 0.0
      %3849 = vmatprep.subr.mxu0 0.0
      %3850 = vmatpush1.msra.mxu0 0.0
      %3851 = vmatprep.subr.mxu0 0.0
      %3852 = vmatpush1.msra.mxu0 0.0
      %3853 = vmatprep.subr.mxu0 0.0
      %3854 = vmatpush1.msra.mxu0 0.0
      %3855 = vmatprep.subr.mxu0 0.0
      %3856 = vmatpush1.msra.mxu0 0.0
      %3857 = vmatprep.subr.mxu0 0.0
      %3858 = vmatpush1.msra.mxu0 0.0
      %3859 = vmatprep.subr.mxu0 0.0
      %3860 = vmatpush1.msra.mxu0 0.0
      %3861 = vmatprep.subr.mxu0 0.0
      %3862 = vmatpush1.msra.mxu0 0.0
      %3863 = vmatprep.subr.mxu0 0.0
      %3864 = vmatpush1.msra.mxu0 0.0
      %3865 = vmatprep.subr.mxu0 0.0
      %3866 = vmatpush1.msra.mxu0 0.0
      %3867 = vmatprep.subr.mxu0 0.0
      %3868 = vmatpush1.msra.mxu0 0.0
      %3869 = vmatprep.subr.mxu0 0.0
      %3870 = vmatpush1.msra.mxu0 0.0
      %3871 = vmatprep.subr.mxu0 0.0
      %3872 = vmatpush1.msra.mxu0 0.0
      %3873 = vmatprep.subr.mxu0 0.0
      %3874 = vmatpush1.msra.mxu0 0.0
      %3875 = vmatprep.subr.mxu0 0.0
      %3876 = vmatpush1.msra.mxu0 %v3843
      %3877 = vmatprep.subr.mxu0 0.0
      %3878 = vmatpush2.msra.mxu0 0.0
      %3879 = vmatprep.subr.mxu0 0.0
      %3880 = vmatpush2.msra.mxu0 0.0
      %3881 = vmatprep.subr.mxu0 0.0
      %3882 = vmatpush2.msra.mxu0 0.0
      %3883 = vmatprep.subr.mxu0 0.0
      %3884 = vmatpush2.msra.mxu0 0.0
      %3885 = vmatprep.subr.mxu0 0.0
      %3886 = vmatpush2.msra.mxu0 0.0
      %3887 = vmatprep.subr.mxu0 0.0
      %3888 = vmatpush2.msra.mxu0 0.0
      %3889 = vmatprep.subr.mxu0 0.0
      %3890 = vmatpush2.msra.mxu0 0.0
      %3891 = vmatprep.subr.mxu0 0.0
      %3892 = vmatpush2.msra.mxu0 0.0
      %3893 = vmatprep.subr.mxu0 0.0
      %3894 = vmatpush2.msra.mxu0 0.0
      %3895 = vmatprep.subr.mxu0 0.0
      %3896 = vmatpush2.msra.mxu0 0.0
      %3897 = vmatprep.subr.mxu0 0.0
      %3898 = vmatpush2.msra.mxu0 0.0
      %3899 = vmatprep.subr.mxu0 0.0
      %3900 = vmatpush2.msra.mxu0 0.0
      %3901 = vmatprep.subr.mxu0 0.0
      %3902 = vmatpush2.msra.mxu0 0.0
      %3903 = vmatprep.subr.mxu0 0.0
      %3904 = vmatpush2.msra.mxu0 0.0
      %3905 = vmatprep.subr.mxu0 0.0
      %3906 = vmatpush2.msra.mxu0 0.0
      %3907 = vmatprep.subr.mxu0 0.0
      %3908 = vmatpush2.msra.mxu0 0.0
      %3909 = vmatprep.mubr.f32.mxu0 0.0
      %3910 = vmatmul.mubr.f32.gmra.mxu0 %v3840
      %v3911 = vpop.f32.mrf.mxu0
      %v3912 = vadd.f32 0.0, %v3911
      %v3913 = vpop.f32.mrf.mxu0
      %3914 = vdwg.mxu0
      %v3915 = vadd.f32 %v3837, %v3912
      %v3916 = vld [vmem:[%s1007] sm:$0xf]
      %v3918 = vrot.slane %v3516, 1
      %v3919 = vrot.slane %v3517, 1
      %v3920 = vsel %vm769, %v3918, %v3919
      %v3921 = vsel %vm612, %v3920, 0
      %v3924 = vsel %vm616, %v3916, 0
      %3926 = vmatprep.subr.mxu0 0.0
      %3927 = vmatpush1.msra.mxu0 0.0
      %3928 = vmatprep.subr.mxu0 0.0
      %3929 = vmatpush1.msra.mxu0 0.0
      %3930 = vmatprep.subr.mxu0 0.0
      %3931 = vmatpush1.msra.mxu0 0.0
      %3932 = vmatprep.subr.mxu0 0.0
      %3933 = vmatpush1.msra.mxu0 0.0
      %3934 = vmatprep.subr.mxu0 0.0
      %3935 = vmatpush1.msra.mxu0 0.0
      %3936 = vmatprep.subr.mxu0 0.0
      %3937 = vmatpush1.msra.mxu0 0.0
      %3938 = vmatprep.subr.mxu0 0.0
      %3939 = vmatpush1.msra.mxu0 0.0
      %3940 = vmatprep.subr.mxu0 0.0
      %3941 = vmatpush1.msra.mxu0 0.0
      %3942 = vmatprep.subr.mxu0 0.0
      %3943 = vmatpush1.msra.mxu0 0.0
      %3944 = vmatprep.subr.mxu0 0.0
      %3945 = vmatpush1.msra.mxu0 0.0
      %3946 = vmatprep.subr.mxu0 0.0
      %3947 = vmatpush1.msra.mxu0 0.0
      %3948 = vmatprep.subr.mxu0 0.0
      %3949 = vmatpush1.msra.mxu0 0.0
      %3950 = vmatprep.subr.mxu0 0.0
      %3951 = vmatpush1.msra.mxu0 0.0
      %3952 = vmatprep.subr.mxu0 0.0
      %3953 = vmatpush1.msra.mxu0 0.0
      %3954 = vmatprep.subr.mxu0 0.0
      %3955 = vmatpush1.msra.mxu0 0.0
      %3956 = vmatprep.subr.mxu0 0.0
      %3957 = vmatpush1.msra.mxu0 %v3924
      %3958 = vmatprep.subr.mxu0 0.0
      %3959 = vmatpush2.msra.mxu0 0.0
      %3960 = vmatprep.subr.mxu0 0.0
      %3961 = vmatpush2.msra.mxu0 0.0
      %3962 = vmatprep.subr.mxu0 0.0
      %3963 = vmatpush2.msra.mxu0 0.0
      %3964 = vmatprep.subr.mxu0 0.0
      %3965 = vmatpush2.msra.mxu0 0.0
      %3966 = vmatprep.subr.mxu0 0.0
      %3967 = vmatpush2.msra.mxu0 0.0
      %3968 = vmatprep.subr.mxu0 0.0
      %3969 = vmatpush2.msra.mxu0 0.0
      %3970 = vmatprep.subr.mxu0 0.0
      %3971 = vmatpush2.msra.mxu0 0.0
      %3972 = vmatprep.subr.mxu0 0.0
      %3973 = vmatpush2.msra.mxu0 0.0
      %3974 = vmatprep.subr.mxu0 0.0
      %3975 = vmatpush2.msra.mxu0 0.0
      %3976 = vmatprep.subr.mxu0 0.0
      %3977 = vmatpush2.msra.mxu0 0.0
      %3978 = vmatprep.subr.mxu0 0.0
      %3979 = vmatpush2.msra.mxu0 0.0
      %3980 = vmatprep.subr.mxu0 0.0
      %3981 = vmatpush2.msra.mxu0 0.0
      %3982 = vmatprep.subr.mxu0 0.0
      %3983 = vmatpush2.msra.mxu0 0.0
      %3984 = vmatprep.subr.mxu0 0.0
      %3985 = vmatpush2.msra.mxu0 0.0
      %3986 = vmatprep.subr.mxu0 0.0
      %3987 = vmatpush2.msra.mxu0 0.0
      %3988 = vmatprep.subr.mxu0 0.0
      %3989 = vmatpush2.msra.mxu0 0.0
      %3990 = vmatprep.mubr.f32.mxu0 0.0
      %3991 = vmatmul.mubr.f32.gmra.mxu0 %v3921
      %v3992 = vpop.f32.mrf.mxu0
      %v3993 = vadd.f32 0.0, %v3992
      %v3994 = vpop.f32.mrf.mxu0
      %3995 = vdwg.mxu0
      %v3996 = vadd.f32 %v3915, %v3993
      %v3997 = vld [vmem:[%s1089] sm:$0xf]
      %v3999 = vsel %vm612, %v3521, 0
      %v4002 = vsel %vm616, %v3997, 0
      %4004 = vmatprep.subr.mxu0 0.0
      %4005 = vmatpush1.msra.mxu0 0.0
      %4006 = vmatprep.subr.mxu0 0.0
      %4007 = vmatpush1.msra.mxu0 0.0
      %4008 = vmatprep.subr.mxu0 0.0
      %4009 = vmatpush1.msra.mxu0 0.0
      %4010 = vmatprep.subr.mxu0 0.0
      %4011 = vmatpush1.msra.mxu0 0.0
      %4012 = vmatprep.subr.mxu0 0.0
      %4013 = vmatpush1.msra.mxu0 0.0
      %4014 = vmatprep.subr.mxu0 0.0
      %4015 = vmatpush1.msra.mxu0 0.0
      %4016 = vmatprep.subr.mxu0 0.0
      %4017 = vmatpush1.msra.mxu0 0.0
      %4018 = vmatprep.subr.mxu0 0.0
      %4019 = vmatpush1.msra.mxu0 0.0
      %4020 = vmatprep.subr.mxu0 0.0
      %4021 = vmatpush1.msra.mxu0 0.0
      %4022 = vmatprep.subr.mxu0 0.0
      %4023 = vmatpush1.msra.mxu0 0.0
      %4024 = vmatprep.subr.mxu0 0.0
      %4025 = vmatpush1.msra.mxu0 0.0
      %4026 = vmatprep.subr.mxu0 0.0
      %4027 = vmatpush1.msra.mxu0 0.0
      %4028 = vmatprep.subr.mxu0 0.0
      %4029 = vmatpush1.msra.mxu0 0.0
      %4030 = vmatprep.subr.mxu0 0.0
      %4031 = vmatpush1.msra.mxu0 0.0
      %4032 = vmatprep.subr.mxu0 0.0
      %4033 = vmatpush1.msra.mxu0 0.0
      %4034 = vmatprep.subr.mxu0 0.0
      %4035 = vmatpush1.msra.mxu0 %v4002
      %4036 = vmatprep.subr.mxu0 0.0
      %4037 = vmatpush2.msra.mxu0 0.0
      %4038 = vmatprep.subr.mxu0 0.0
      %4039 = vmatpush2.msra.mxu0 0.0
      %4040 = vmatprep.subr.mxu0 0.0
      %4041 = vmatpush2.msra.mxu0 0.0
      %4042 = vmatprep.subr.mxu0 0.0
      %4043 = vmatpush2.msra.mxu0 0.0
      %4044 = vmatprep.subr.mxu0 0.0
      %4045 = vmatpush2.msra.mxu0 0.0
      %4046 = vmatprep.subr.mxu0 0.0
      %4047 = vmatpush2.msra.mxu0 0.0
      %4048 = vmatprep.subr.mxu0 0.0
      %4049 = vmatpush2.msra.mxu0 0.0
      %4050 = vmatprep.subr.mxu0 0.0
      %4051 = vmatpush2.msra.mxu0 0.0
      %4052 = vmatprep.subr.mxu0 0.0
      %4053 = vmatpush2.msra.mxu0 0.0
      %4054 = vmatprep.subr.mxu0 0.0
      %4055 = vmatpush2.msra.mxu0 0.0
      %4056 = vmatprep.subr.mxu0 0.0
      %4057 = vmatpush2.msra.mxu0 0.0
      %4058 = vmatprep.subr.mxu0 0.0
      %4059 = vmatpush2.msra.mxu0 0.0
      %4060 = vmatprep.subr.mxu0 0.0
      %4061 = vmatpush2.msra.mxu0 0.0
      %4062 = vmatprep.subr.mxu0 0.0
      %4063 = vmatpush2.msra.mxu0 0.0
      %4064 = vmatprep.subr.mxu0 0.0
      %4065 = vmatpush2.msra.mxu0 0.0
      %4066 = vmatprep.subr.mxu0 0.0
      %4067 = vmatpush2.msra.mxu0 0.0
      %4068 = vmatprep.mubr.f32.mxu0 0.0
      %4069 = vmatmul.mubr.f32.gmra.mxu0 %v3999
      %v4070 = vpop.f32.mrf.mxu0
      %v4071 = vadd.f32 0.0, %v4070
      %v4072 = vpop.f32.mrf.mxu0
      %4073 = vdwg.mxu0
      %v4074 = vadd.f32 %v3996, %v4071
      %v4075 = vld [vmem:[%s1168] sm:$0xf]
      %v4077 = vsel %vm612, %v3524, 0
      %v4080 = vsel %vm616, %v4075, 0
      %4082 = vmatprep.subr.mxu0 0.0
      %4083 = vmatpush1.msra.mxu0 0.0
      %4084 = vmatprep.subr.mxu0 0.0
      %4085 = vmatpush1.msra.mxu0 0.0
      %4086 = vmatprep.subr.mxu0 0.0
      %4087 = vmatpush1.msra.mxu0 0.0
      %4088 = vmatprep.subr.mxu0 0.0
      %4089 = vmatpush1.msra.mxu0 0.0
      %4090 = vmatprep.subr.mxu0 0.0
      %4091 = vmatpush1.msra.mxu0 0.0
      %4092 = vmatprep.subr.mxu0 0.0
      %4093 = vmatpush1.msra.mxu0 0.0
      %4094 = vmatprep.subr.mxu0 0.0
      %4095 = vmatpush1.msra.mxu0 0.0
      %4096 = vmatprep.subr.mxu0 0.0
      %4097 = vmatpush1.msra.mxu0 0.0
      %4098 = vmatprep.subr.mxu0 0.0
      %4099 = vmatpush1.msra.mxu0 0.0
      %4100 = vmatprep.subr.mxu0 0.0
      %4101 = vmatpush1.msra.mxu0 0.0
      %4102 = vmatprep.subr.mxu0 0.0
      %4103 = vmatpush1.msra.mxu0 0.0
      %4104 = vmatprep.subr.mxu0 0.0
      %4105 = vmatpush1.msra.mxu0 0.0
      %4106 = vmatprep.subr.mxu0 0.0
      %4107 = vmatpush1.msra.mxu0 0.0
      %4108 = vmatprep.subr.mxu0 0.0
      %4109 = vmatpush1.msra.mxu0 0.0
      %4110 = vmatprep.subr.mxu0 0.0
      %4111 = vmatpush1.msra.mxu0 0.0
      %4112 = vmatprep.subr.mxu0 0.0
      %4113 = vmatpush1.msra.mxu0 %v4080
      %4114 = vmatprep.subr.mxu0 0.0
      %4115 = vmatpush2.msra.mxu0 0.0
      %4116 = vmatprep.subr.mxu0 0.0
      %4117 = vmatpush2.msra.mxu0 0.0
      %4118 = vmatprep.subr.mxu0 0.0
      %4119 = vmatpush2.msra.mxu0 0.0
      %4120 = vmatprep.subr.mxu0 0.0
      %4121 = vmatpush2.msra.mxu0 0.0
      %4122 = vmatprep.subr.mxu0 0.0
      %4123 = vmatpush2.msra.mxu0 0.0
      %4124 = vmatprep.subr.mxu0 0.0
      %4125 = vmatpush2.msra.mxu0 0.0
      %4126 = vmatprep.subr.mxu0 0.0
      %4127 = vmatpush2.msra.mxu0 0.0
      %4128 = vmatprep.subr.mxu0 0.0
      %4129 = vmatpush2.msra.mxu0 0.0
      %4130 = vmatprep.subr.mxu0 0.0
      %4131 = vmatpush2.msra.mxu0 0.0
      %4132 = vmatprep.subr.mxu0 0.0
      %4133 = vmatpush2.msra.mxu0 0.0
      %4134 = vmatprep.subr.mxu0 0.0
      %4135 = vmatpush2.msra.mxu0 0.0
      %4136 = vmatprep.subr.mxu0 0.0
      %4137 = vmatpush2.msra.mxu0 0.0
      %4138 = vmatprep.subr.mxu0 0.0
      %4139 = vmatpush2.msra.mxu0 0.0
      %4140 = vmatprep.subr.mxu0 0.0
      %4141 = vmatpush2.msra.mxu0 0.0
      %4142 = vmatprep.subr.mxu0 0.0
      %4143 = vmatpush2.msra.mxu0 0.0
      %4144 = vmatprep.subr.mxu0 0.0
      %4145 = vmatpush2.msra.mxu0 0.0
      %4146 = vmatprep.mubr.f32.mxu0 0.0
      %4147 = vmatmul.mubr.f32.gmra.mxu0 %v4077
      %v4148 = vpop.f32.mrf.mxu0
      %v4149 = vadd.f32 0.0, %v4148
      %v4150 = vpop.f32.mrf.mxu0
      %4151 = vdwg.mxu0
      %v4152 = vadd.f32 %v4074, %v4149
      %v4153 = vld [vmem:[%s1247] sm:$0xf]
      %v4155 = vrot.slane %v3521, 1
      %v4156 = vrot.slane %v3522, 1
      %v4157 = vsel %vm769, %v4155, %v4156
      %v4158 = vsel %vm612, %v4157, 0
      %v4161 = vsel %vm616, %v4153, 0
      %4163 = vmatprep.subr.mxu0 0.0
      %4164 = vmatpush1.msra.mxu0 0.0
      %4165 = vmatprep.subr.mxu0 0.0
      %4166 = vmatpush1.msra.mxu0 0.0
      %4167 = vmatprep.subr.mxu0 0.0
      %4168 = vmatpush1.msra.mxu0 0.0
      %4169 = vmatprep.subr.mxu0 0.0
      %4170 = vmatpush1.msra.mxu0 0.0
      %4171 = vmatprep.subr.mxu0 0.0
      %4172 = vmatpush1.msra.mxu0 0.0
      %4173 = vmatprep.subr.mxu0 0.0
      %4174 = vmatpush1.msra.mxu0 0.0
      %4175 = vmatprep.subr.mxu0 0.0
      %4176 = vmatpush1.msra.mxu0 0.0
      %4177 = vmatprep.subr.mxu0 0.0
      %4178 = vmatpush1.msra.mxu0 0.0
      %4179 = vmatprep.subr.mxu0 0.0
      %4180 = vmatpush1.msra.mxu0 0.0
      %4181 = vmatprep.subr.mxu0 0.0
      %4182 = vmatpush1.msra.mxu0 0.0
      %4183 = vmatprep.subr.mxu0 0.0
      %4184 = vmatpush1.msra.mxu0 0.0
      %4185 = vmatprep.subr.mxu0 0.0
      %4186 = vmatpush1.msra.mxu0 0.0
      %4187 = vmatprep.subr.mxu0 0.0
      %4188 = vmatpush1.msra.mxu0 0.0
      %4189 = vmatprep.subr.mxu0 0.0
      %4190 = vmatpush1.msra.mxu0 0.0
      %4191 = vmatprep.subr.mxu0 0.0
      %4192 = vmatpush1.msra.mxu0 0.0
      %4193 = vmatprep.subr.mxu0 0.0
      %4194 = vmatpush1.msra.mxu0 %v4161
      %4195 = vmatprep.subr.mxu0 0.0
      %4196 = vmatpush2.msra.mxu0 0.0
      %4197 = vmatprep.subr.mxu0 0.0
      %4198 = vmatpush2.msra.mxu0 0.0
      %4199 = vmatprep.subr.mxu0 0.0
      %4200 = vmatpush2.msra.mxu0 0.0
      %4201 = vmatprep.subr.mxu0 0.0
      %4202 = vmatpush2.msra.mxu0 0.0
      %4203 = vmatprep.subr.mxu0 0.0
      %4204 = vmatpush2.msra.mxu0 0.0
      %4205 = vmatprep.subr.mxu0 0.0
      %4206 = vmatpush2.msra.mxu0 0.0
      %4207 = vmatprep.subr.mxu0 0.0
      %4208 = vmatpush2.msra.mxu0 0.0
      %4209 = vmatprep.subr.mxu0 0.0
      %4210 = vmatpush2.msra.mxu0 0.0
      %4211 = vmatprep.subr.mxu0 0.0
      %4212 = vmatpush2.msra.mxu0 0.0
      %4213 = vmatprep.subr.mxu0 0.0
      %4214 = vmatpush2.msra.mxu0 0.0
      %4215 = vmatprep.subr.mxu0 0.0
      %4216 = vmatpush2.msra.mxu0 0.0
      %4217 = vmatprep.subr.mxu0 0.0
      %4218 = vmatpush2.msra.mxu0 0.0
      %4219 = vmatprep.subr.mxu0 0.0
      %4220 = vmatpush2.msra.mxu0 0.0
      %4221 = vmatprep.subr.mxu0 0.0
      %4222 = vmatpush2.msra.mxu0 0.0
      %4223 = vmatprep.subr.mxu0 0.0
      %4224 = vmatpush2.msra.mxu0 0.0
      %4225 = vmatprep.subr.mxu0 0.0
      %4226 = vmatpush2.msra.mxu0 0.0
      %4227 = vmatprep.mubr.f32.mxu0 0.0
      %4228 = vmatmul.mubr.f32.gmra.mxu0 %v4158
      %v4229 = vpop.f32.mrf.mxu0
      %v4230 = vadd.f32 0.0, %v4229
      %v4231 = vpop.f32.mrf.mxu0
      %4232 = vdwg.mxu0
      %v4233 = vadd.f32 %v4152, %v4230
      %v4234 = vadd.f32 %v4233, %v1333
      %s4235 = scalar_lea.vmem %s595, 32
      %4236 = vst.msk [vmem:[%s4235] sm:$0xff] %vm612, %v4234
      %v4237 = vld [vmem:[%s3520] sm:$0xff]
      %v4238 = vld [vmem:[%s3520 + $0x8] sm:$0x1]
      %v4239 = vld [vmem:[%s3523] sm:$0xff]
      %s4240 = scalar_lea.vmem %s575, 80
      %v4241 = vld [vmem:[%s4240] sm:$0xff]
      %v4242 = vld [vmem:[%s4240 + $0x8] sm:$0x1]
      %s4243 = scalar_lea.vmem %s585, 40
      %v4244 = vld [vmem:[%s4243] sm:$0xff]
      %s4245 = scalar_lea.vmem %s516, 96
      %v4246 = vld [vmem:[%s4245] sm:$0xff]
      %v4247 = vld [vmem:[%s4245 + $0x8] sm:$0x1]
      %s4248 = scalar_lea.vmem %s535, 48
      %v4249 = vld [vmem:[%s4248] sm:$0xff]
      %v4250 = vld [vmem:[%s6] sm:$0xf]
      %v4251 = vld [vmem:[%s610] sm:$0xf]
      %v4253 = vsel %vm612, %v4239, 0
      %v4256 = vsel %vm616, %v4251, 0
      %4258 = vmatprep.subr.mxu0 0.0
      %4259 = vmatpush1.msra.mxu0 0.0
      %4260 = vmatprep.subr.mxu0 0.0
      %4261 = vmatpush1.msra.mxu0 0.0
      %4262 = vmatprep.subr.mxu0 0.0
      %4263 = vmatpush1.msra.mxu0 0.0
      %4264 = vmatprep.subr.mxu0 0.0
      %4265 = vmatpush1.msra.mxu0 0.0
      %4266 = vmatprep.subr.mxu0 0.0
      %4267 = vmatpush1.msra.mxu0 0.0
      %4268 = vmatprep.subr.mxu0 0.0
      %4269 = vmatpush1.msra.mxu0 0.0
      %4270 = vmatprep.subr.mxu0 0.0
      %4271 = vmatpush1.msra.mxu0 0.0
      %4272 = vmatprep.subr.mxu0 0.0
      %4273 = vmatpush1.msra.mxu0 0.0
      %4274 = vmatprep.subr.mxu0 0.0
      %4275 = vmatpush1.msra.mxu0 0.0
      %4276 = vmatprep.subr.mxu0 0.0
      %4277 = vmatpush1.msra.mxu0 0.0
      %4278 = vmatprep.subr.mxu0 0.0
      %4279 = vmatpush1.msra.mxu0 0.0
      %4280 = vmatprep.subr.mxu0 0.0
      %4281 = vmatpush1.msra.mxu0 0.0
      %4282 = vmatprep.subr.mxu0 0.0
      %4283 = vmatpush1.msra.mxu0 0.0
      %4284 = vmatprep.subr.mxu0 0.0
      %4285 = vmatpush1.msra.mxu0 0.0
      %4286 = vmatprep.subr.mxu0 0.0
      %4287 = vmatpush1.msra.mxu0 0.0
      %4288 = vmatprep.subr.mxu0 0.0
      %4289 = vmatpush1.msra.mxu0 %v4256
      %4290 = vmatprep.subr.mxu0 0.0
      %4291 = vmatpush2.msra.mxu0 0.0
      %4292 = vmatprep.subr.mxu0 0.0
      %4293 = vmatpush2.msra.mxu0 0.0
      %4294 = vmatprep.subr.mxu0 0.0
      %4295 = vmatpush2.msra.mxu0 0.0
      %4296 = vmatprep.subr.mxu0 0.0
      %4297 = vmatpush2.msra.mxu0 0.0
      %4298 = vmatprep.subr.mxu0 0.0
      %4299 = vmatpush2.msra.mxu0 0.0
      %4300 = vmatprep.subr.mxu0 0.0
      %4301 = vmatpush2.msra.mxu0 0.0
      %4302 = vmatprep.subr.mxu0 0.0
      %4303 = vmatpush2.msra.mxu0 0.0
      %4304 = vmatprep.subr.mxu0 0.0
      %4305 = vmatpush2.msra.mxu0 0.0
      %4306 = vmatprep.subr.mxu0 0.0
      %4307 = vmatpush2.msra.mxu0 0.0
      %4308 = vmatprep.subr.mxu0 0.0
      %4309 = vmatpush2.msra.mxu0 0.0
      %4310 = vmatprep.subr.mxu0 0.0
      %4311 = vmatpush2.msra.mxu0 0.0
      %4312 = vmatprep.subr.mxu0 0.0
      %4313 = vmatpush2.msra.mxu0 0.0
      %4314 = vmatprep.subr.mxu0 0.0
      %4315 = vmatpush2.msra.mxu0 0.0
      %4316 = vmatprep.subr.mxu0 0.0
      %4317 = vmatpush2.msra.mxu0 0.0
      %4318 = vmatprep.subr.mxu0 0.0
      %4319 = vmatpush2.msra.mxu0 0.0
      %4320 = vmatprep.subr.mxu0 0.0
      %4321 = vmatpush2.msra.mxu0 0.0
      %4322 = vmatprep.mubr.f32.mxu0 0.0
      %4323 = vmatmul.mubr.f32.gmra.mxu0 %v4253
      %v4324 = vpop.f32.mrf.mxu0
      %v4325 = vadd.f32 0.0, %v4324
      %v4326 = vpop.f32.mrf.mxu0
      %4327 = vdwg.mxu0
      %v4329 = vsel %vm612, %v4237, 0
      %v4332 = vsel %vm616, %v4250, 0
      %4334 = vmatprep.subr.mxu0 0.0
      %4335 = vmatpush1.msra.mxu0 0.0
      %4336 = vmatprep.subr.mxu0 0.0
      %4337 = vmatpush1.msra.mxu0 0.0
      %4338 = vmatprep.subr.mxu0 0.0
      %4339 = vmatpush1.msra.mxu0 0.0
      %4340 = vmatprep.subr.mxu0 0.0
      %4341 = vmatpush1.msra.mxu0 0.0
      %4342 = vmatprep.subr.mxu0 0.0
      %4343 = vmatpush1.msra.mxu0 0.0
      %4344 = vmatprep.subr.mxu0 0.0
      %4345 = vmatpush1.msra.mxu0 0.0
      %4346 = vmatprep.subr.mxu0 0.0
      %4347 = vmatpush1.msra.mxu0 0.0
      %4348 = vmatprep.subr.mxu0 0.0
      %4349 = vmatpush1.msra.mxu0 0.0
      %4350 = vmatprep.subr.mxu0 0.0
      %4351 = vmatpush1.msra.mxu0 0.0
      %4352 = vmatprep.subr.mxu0 0.0
      %4353 = vmatpush1.msra.mxu0 0.0
      %4354 = vmatprep.subr.mxu0 0.0
      %4355 = vmatpush1.msra.mxu0 0.0
      %4356 = vmatprep.subr.mxu0 0.0
      %4357 = vmatpush1.msra.mxu0 0.0
      %4358 = vmatprep.subr.mxu0 0.0
      %4359 = vmatpush1.msra.mxu0 0.0
      %4360 = vmatprep.subr.mxu0 0.0
      %4361 = vmatpush1.msra.mxu0 0.0
      %4362 = vmatprep.subr.mxu0 0.0
      %4363 = vmatpush1.msra.mxu0 0.0
      %4364 = vmatprep.subr.mxu0 0.0
      %4365 = vmatpush1.msra.mxu0 %v4332
      %4366 = vmatprep.subr.mxu0 0.0
      %4367 = vmatpush2.msra.mxu0 0.0
      %4368 = vmatprep.subr.mxu0 0.0
      %4369 = vmatpush2.msra.mxu0 0.0
      %4370 = vmatprep.subr.mxu0 0.0
      %4371 = vmatpush2.msra.mxu0 0.0
      %4372 = vmatprep.subr.mxu0 0.0
      %4373 = vmatpush2.msra.mxu0 0.0
      %4374 = vmatprep.subr.mxu0 0.0
      %4375 = vmatpush2.msra.mxu0 0.0
      %4376 = vmatprep.subr.mxu0 0.0
      %4377 = vmatpush2.msra.mxu0 0.0
      %4378 = vmatprep.subr.mxu0 0.0
      %4379 = vmatpush2.msra.mxu0 0.0
      %4380 = vmatprep.subr.mxu0 0.0
      %4381 = vmatpush2.msra.mxu0 0.0
      %4382 = vmatprep.subr.mxu0 0.0
      %4383 = vmatpush2.msra.mxu0 0.0
      %4384 = vmatprep.subr.mxu0 0.0
      %4385 = vmatpush2.msra.mxu0 0.0
      %4386 = vmatprep.subr.mxu0 0.0
      %4387 = vmatpush2.msra.mxu0 0.0
      %4388 = vmatprep.subr.mxu0 0.0
      %4389 = vmatpush2.msra.mxu0 0.0
      %4390 = vmatprep.subr.mxu0 0.0
      %4391 = vmatpush2.msra.mxu0 0.0
      %4392 = vmatprep.subr.mxu0 0.0
      %4393 = vmatpush2.msra.mxu0 0.0
      %4394 = vmatprep.subr.mxu0 0.0
      %4395 = vmatpush2.msra.mxu0 0.0
      %4396 = vmatprep.subr.mxu0 0.0
      %4397 = vmatpush2.msra.mxu0 0.0
      %4398 = vmatprep.mubr.f32.mxu0 0.0
      %4399 = vmatmul.mubr.f32.gmra.mxu0 %v4329
      %v4400 = vpop.f32.mrf.mxu0
      %v4401 = vadd.f32 %v4325, %v4400
      %v4402 = vpop.f32.mrf.mxu0
      %4403 = vdwg.mxu0
      %v4404 = vld [vmem:[%s766] sm:$0xf]
      %v4406 = vrot.slane %v4237, 1
      %v4407 = vrot.slane %v4238, 1
      %v4408 = vsel %vm769, %v4406, %v4407
      %v4409 = vsel %vm612, %v4408, 0
      %v4412 = vsel %vm616, %v4404, 0
      %4414 = vmatprep.subr.mxu0 0.0
      %4415 = vmatpush1.msra.mxu0 0.0
      %4416 = vmatprep.subr.mxu0 0.0
      %4417 = vmatpush1.msra.mxu0 0.0
      %4418 = vmatprep.subr.mxu0 0.0
      %4419 = vmatpush1.msra.mxu0 0.0
      %4420 = vmatprep.subr.mxu0 0.0
      %4421 = vmatpush1.msra.mxu0 0.0
      %4422 = vmatprep.subr.mxu0 0.0
      %4423 = vmatpush1.msra.mxu0 0.0
      %4424 = vmatprep.subr.mxu0 0.0
      %4425 = vmatpush1.msra.mxu0 0.0
      %4426 = vmatprep.subr.mxu0 0.0
      %4427 = vmatpush1.msra.mxu0 0.0
      %4428 = vmatprep.subr.mxu0 0.0
      %4429 = vmatpush1.msra.mxu0 0.0
      %4430 = vmatprep.subr.mxu0 0.0
      %4431 = vmatpush1.msra.mxu0 0.0
      %4432 = vmatprep.subr.mxu0 0.0
      %4433 = vmatpush1.msra.mxu0 0.0
      %4434 = vmatprep.subr.mxu0 0.0
      %4435 = vmatpush1.msra.mxu0 0.0
      %4436 = vmatprep.subr.mxu0 0.0
      %4437 = vmatpush1.msra.mxu0 0.0
      %4438 = vmatprep.subr.mxu0 0.0
      %4439 = vmatpush1.msra.mxu0 0.0
      %4440 = vmatprep.subr.mxu0 0.0
      %4441 = vmatpush1.msra.mxu0 0.0
      %4442 = vmatprep.subr.mxu0 0.0
      %4443 = vmatpush1.msra.mxu0 0.0
      %4444 = vmatprep.subr.mxu0 0.0
      %4445 = vmatpush1.msra.mxu0 %v4412
      %4446 = vmatprep.subr.mxu0 0.0
      %4447 = vmatpush2.msra.mxu0 0.0
      %4448 = vmatprep.subr.mxu0 0.0
      %4449 = vmatpush2.msra.mxu0 0.0
      %4450 = vmatprep.subr.mxu0 0.0
      %4451 = vmatpush2.msra.mxu0 0.0
      %4452 = vmatprep.subr.mxu0 0.0
      %4453 = vmatpush2.msra.mxu0 0.0
      %4454 = vmatprep.subr.mxu0 0.0
      %4455 = vmatpush2.msra.mxu0 0.0
      %4456 = vmatprep.subr.mxu0 0.0
      %4457 = vmatpush2.msra.mxu0 0.0
      %4458 = vmatprep.subr.mxu0 0.0
      %4459 = vmatpush2.msra.mxu0 0.0
      %4460 = vmatprep.subr.mxu0 0.0
      %4461 = vmatpush2.msra.mxu0 0.0
      %4462 = vmatprep.subr.mxu0 0.0
      %4463 = vmatpush2.msra.mxu0 0.0
      %4464 = vmatprep.subr.mxu0 0.0
      %4465 = vmatpush2.msra.mxu0 0.0
      %4466 = vmatprep.subr.mxu0 0.0
      %4467 = vmatpush2.msra.mxu0 0.0
      %4468 = vmatprep.subr.mxu0 0.0
      %4469 = vmatpush2.msra.mxu0 0.0
      %4470 = vmatprep.subr.mxu0 0.0
      %4471 = vmatpush2.msra.mxu0 0.0
      %4472 = vmatprep.subr.mxu0 0.0
      %4473 = vmatpush2.msra.mxu0 0.0
      %4474 = vmatprep.subr.mxu0 0.0
      %4475 = vmatpush2.msra.mxu0 0.0
      %4476 = vmatprep.subr.mxu0 0.0
      %4477 = vmatpush2.msra.mxu0 0.0
      %4478 = vmatprep.mubr.f32.mxu0 0.0
      %4479 = vmatmul.mubr.f32.gmra.mxu0 %v4409
      %v4480 = vpop.f32.mrf.mxu0
      %v4481 = vadd.f32 0.0, %v4480
      %v4482 = vpop.f32.mrf.mxu0
      %4483 = vdwg.mxu0
      %v4484 = vadd.f32 %v4401, %v4481
      %v4485 = vld [vmem:[%s849] sm:$0xf]
      %v4487 = vsel %vm612, %v4241, 0
      %v4490 = vsel %vm616, %v4485, 0
      %4492 = vmatprep.subr.mxu0 0.0
      %4493 = vmatpush1.msra.mxu0 0.0
      %4494 = vmatprep.subr.mxu0 0.0
      %4495 = vmatpush1.msra.mxu0 0.0
      %4496 = vmatprep.subr.mxu0 0.0
      %4497 = vmatpush1.msra.mxu0 0.0
      %4498 = vmatprep.subr.mxu0 0.0
      %4499 = vmatpush1.msra.mxu0 0.0
      %4500 = vmatprep.subr.mxu0 0.0
      %4501 = vmatpush1.msra.mxu0 0.0
      %4502 = vmatprep.subr.mxu0 0.0
      %4503 = vmatpush1.msra.mxu0 0.0
      %4504 = vmatprep.subr.mxu0 0.0
      %4505 = vmatpush1.msra.mxu0 0.0
      %4506 = vmatprep.subr.mxu0 0.0
      %4507 = vmatpush1.msra.mxu0 0.0
      %4508 = vmatprep.subr.mxu0 0.0
      %4509 = vmatpush1.msra.mxu0 0.0
      %4510 = vmatprep.subr.mxu0 0.0
      %4511 = vmatpush1.msra.mxu0 0.0
      %4512 = vmatprep.subr.mxu0 0.0
      %4513 = vmatpush1.msra.mxu0 0.0
      %4514 = vmatprep.subr.mxu0 0.0
      %4515 = vmatpush1.msra.mxu0 0.0
      %4516 = vmatprep.subr.mxu0 0.0
      %4517 = vmatpush1.msra.mxu0 0.0
      %4518 = vmatprep.subr.mxu0 0.0
      %4519 = vmatpush1.msra.mxu0 0.0
      %4520 = vmatprep.subr.mxu0 0.0
      %4521 = vmatpush1.msra.mxu0 0.0
      %4522 = vmatprep.subr.mxu0 0.0
      %4523 = vmatpush1.msra.mxu0 %v4490
      %4524 = vmatprep.subr.mxu0 0.0
      %4525 = vmatpush2.msra.mxu0 0.0
      %4526 = vmatprep.subr.mxu0 0.0
      %4527 = vmatpush2.msra.mxu0 0.0
      %4528 = vmatprep.subr.mxu0 0.0
      %4529 = vmatpush2.msra.mxu0 0.0
      %4530 = vmatprep.subr.mxu0 0.0
      %4531 = vmatpush2.msra.mxu0 0.0
      %4532 = vmatprep.subr.mxu0 0.0
      %4533 = vmatpush2.msra.mxu0 0.0
      %4534 = vmatprep.subr.mxu0 0.0
      %4535 = vmatpush2.msra.mxu0 0.0
      %4536 = vmatprep.subr.mxu0 0.0
      %4537 = vmatpush2.msra.mxu0 0.0
      %4538 = vmatprep.subr.mxu0 0.0
      %4539 = vmatpush2.msra.mxu0 0.0
      %4540 = vmatprep.subr.mxu0 0.0
      %4541 = vmatpush2.msra.mxu0 0.0
      %4542 = vmatprep.subr.mxu0 0.0
      %4543 = vmatpush2.msra.mxu0 0.0
      %4544 = vmatprep.subr.mxu0 0.0
      %4545 = vmatpush2.msra.mxu0 0.0
      %4546 = vmatprep.subr.mxu0 0.0
      %4547 = vmatpush2.msra.mxu0 0.0
      %4548 = vmatprep.subr.mxu0 0.0
      %4549 = vmatpush2.msra.mxu0 0.0
      %4550 = vmatprep.subr.mxu0 0.0
      %4551 = vmatpush2.msra.mxu0 0.0
      %4552 = vmatprep.subr.mxu0 0.0
      %4553 = vmatpush2.msra.mxu0 0.0
      %4554 = vmatprep.subr.mxu0 0.0
      %4555 = vmatpush2.msra.mxu0 0.0
      %4556 = vmatprep.mubr.f32.mxu0 0.0
      %4557 = vmatmul.mubr.f32.gmra.mxu0 %v4487
      %v4558 = vpop.f32.mrf.mxu0
      %v4559 = vadd.f32 0.0, %v4558
      %v4560 = vpop.f32.mrf.mxu0
      %4561 = vdwg.mxu0
      %v4562 = vadd.f32 %v4484, %v4559
      %v4563 = vld [vmem:[%s928] sm:$0xf]
      %v4565 = vsel %vm612, %v4244, 0
      %v4568 = vsel %vm616, %v4563, 0
      %4570 = vmatprep.subr.mxu0 0.0
      %4571 = vmatpush1.msra.mxu0 0.0
      %4572 = vmatprep.subr.mxu0 0.0
      %4573 = vmatpush1.msra.mxu0 0.0
      %4574 = vmatprep.subr.mxu0 0.0
      %4575 = vmatpush1.msra.mxu0 0.0
      %4576 = vmatprep.subr.mxu0 0.0
      %4577 = vmatpush1.msra.mxu0 0.0
      %4578 = vmatprep.subr.mxu0 0.0
      %4579 = vmatpush1.msra.mxu0 0.0
      %4580 = vmatprep.subr.mxu0 0.0
      %4581 = vmatpush1.msra.mxu0 0.0
      %4582 = vmatprep.subr.mxu0 0.0
      %4583 = vmatpush1.msra.mxu0 0.0
      %4584 = vmatprep.subr.mxu0 0.0
      %4585 = vmatpush1.msra.mxu0 0.0
      %4586 = vmatprep.subr.mxu0 0.0
      %4587 = vmatpush1.msra.mxu0 0.0
      %4588 = vmatprep.subr.mxu0 0.0
      %4589 = vmatpush1.msra.mxu0 0.0
      %4590 = vmatprep.subr.mxu0 0.0
      %4591 = vmatpush1.msra.mxu0 0.0
      %4592 = vmatprep.subr.mxu0 0.0
      %4593 = vmatpush1.msra.mxu0 0.0
      %4594 = vmatprep.subr.mxu0 0.0
      %4595 = vmatpush1.msra.mxu0 0.0
      %4596 = vmatprep.subr.mxu0 0.0
      %4597 = vmatpush1.msra.mxu0 0.0
      %4598 = vmatprep.subr.mxu0 0.0
      %4599 = vmatpush1.msra.mxu0 0.0
      %4600 = vmatprep.subr.mxu0 0.0
      %4601 = vmatpush1.msra.mxu0 %v4568
      %4602 = vmatprep.subr.mxu0 0.0
      %4603 = vmatpush2.msra.mxu0 0.0
      %4604 = vmatprep.subr.mxu0 0.0
      %4605 = vmatpush2.msra.mxu0 0.0
      %4606 = vmatprep.subr.mxu0 0.0
      %4607 = vmatpush2.msra.mxu0 0.0
      %4608 = vmatprep.subr.mxu0 0.0
      %4609 = vmatpush2.msra.mxu0 0.0
      %4610 = vmatprep.subr.mxu0 0.0
      %4611 = vmatpush2.msra.mxu0 0.0
      %4612 = vmatprep.subr.mxu0 0.0
      %4613 = vmatpush2.msra.mxu0 0.0
      %4614 = vmatprep.subr.mxu0 0.0
      %4615 = vmatpush2.msra.mxu0 0.0
      %4616 = vmatprep.subr.mxu0 0.0
      %4617 = vmatpush2.msra.mxu0 0.0
      %4618 = vmatprep.subr.mxu0 0.0
      %4619 = vmatpush2.msra.mxu0 0.0
      %4620 = vmatprep.subr.mxu0 0.0
      %4621 = vmatpush2.msra.mxu0 0.0
      %4622 = vmatprep.subr.mxu0 0.0
      %4623 = vmatpush2.msra.mxu0 0.0
      %4624 = vmatprep.subr.mxu0 0.0
      %4625 = vmatpush2.msra.mxu0 0.0
      %4626 = vmatprep.subr.mxu0 0.0
      %4627 = vmatpush2.msra.mxu0 0.0
      %4628 = vmatprep.subr.mxu0 0.0
      %4629 = vmatpush2.msra.mxu0 0.0
      %4630 = vmatprep.subr.mxu0 0.0
      %4631 = vmatpush2.msra.mxu0 0.0
      %4632 = vmatprep.subr.mxu0 0.0
      %4633 = vmatpush2.msra.mxu0 0.0
      %4634 = vmatprep.mubr.f32.mxu0 0.0
      %4635 = vmatmul.mubr.f32.gmra.mxu0 %v4565
      %v4636 = vpop.f32.mrf.mxu0
      %v4637 = vadd.f32 0.0, %v4636
      %v4638 = vpop.f32.mrf.mxu0
      %4639 = vdwg.mxu0
      %v4640 = vadd.f32 %v4562, %v4637
      %v4641 = vld [vmem:[%s1007] sm:$0xf]
      %v4643 = vrot.slane %v4241, 1
      %v4644 = vrot.slane %v4242, 1
      %v4645 = vsel %vm769, %v4643, %v4644
      %v4646 = vsel %vm612, %v4645, 0
      %v4649 = vsel %vm616, %v4641, 0
      %4651 = vmatprep.subr.mxu0 0.0
      %4652 = vmatpush1.msra.mxu0 0.0
      %4653 = vmatprep.subr.mxu0 0.0
      %4654 = vmatpush1.msra.mxu0 0.0
      %4655 = vmatprep.subr.mxu0 0.0
      %4656 = vmatpush1.msra.mxu0 0.0
      %4657 = vmatprep.subr.mxu0 0.0
      %4658 = vmatpush1.msra.mxu0 0.0
      %4659 = vmatprep.subr.mxu0 0.0
      %4660 = vmatpush1.msra.mxu0 0.0
      %4661 = vmatprep.subr.mxu0 0.0
      %4662 = vmatpush1.msra.mxu0 0.0
      %4663 = vmatprep.subr.mxu0 0.0
      %4664 = vmatpush1.msra.mxu0 0.0
      %4665 = vmatprep.subr.mxu0 0.0
      %4666 = vmatpush1.msra.mxu0 0.0
      %4667 = vmatprep.subr.mxu0 0.0
      %4668 = vmatpush1.msra.mxu0 0.0
      %4669 = vmatprep.subr.mxu0 0.0
      %4670 = vmatpush1.msra.mxu0 0.0
      %4671 = vmatprep.subr.mxu0 0.0
      %4672 = vmatpush1.msra.mxu0 0.0
      %4673 = vmatprep.subr.mxu0 0.0
      %4674 = vmatpush1.msra.mxu0 0.0
      %4675 = vmatprep.subr.mxu0 0.0
      %4676 = vmatpush1.msra.mxu0 0.0
      %4677 = vmatprep.subr.mxu0 0.0
      %4678 = vmatpush1.msra.mxu0 0.0
      %4679 = vmatprep.subr.mxu0 0.0
      %4680 = vmatpush1.msra.mxu0 0.0
      %4681 = vmatprep.subr.mxu0 0.0
      %4682 = vmatpush1.msra.mxu0 %v4649
      %4683 = vmatprep.subr.mxu0 0.0
      %4684 = vmatpush2.msra.mxu0 0.0
      %4685 = vmatprep.subr.mxu0 0.0
      %4686 = vmatpush2.msra.mxu0 0.0
      %4687 = vmatprep.subr.mxu0 0.0
      %4688 = vmatpush2.msra.mxu0 0.0
      %4689 = vmatprep.subr.mxu0 0.0
      %4690 = vmatpush2.msra.mxu0 0.0
      %4691 = vmatprep.subr.mxu0 0.0
      %4692 = vmatpush2.msra.mxu0 0.0
      %4693 = vmatprep.subr.mxu0 0.0
      %4694 = vmatpush2.msra.mxu0 0.0
      %4695 = vmatprep.subr.mxu0 0.0
      %4696 = vmatpush2.msra.mxu0 0.0
      %4697 = vmatprep.subr.mxu0 0.0
      %4698 = vmatpush2.msra.mxu0 0.0
      %4699 = vmatprep.subr.mxu0 0.0
      %4700 = vmatpush2.msra.mxu0 0.0
      %4701 = vmatprep.subr.mxu0 0.0
      %4702 = vmatpush2.msra.mxu0 0.0
      %4703 = vmatprep.subr.mxu0 0.0
      %4704 = vmatpush2.msra.mxu0 0.0
      %4705 = vmatprep.subr.mxu0 0.0
      %4706 = vmatpush2.msra.mxu0 0.0
      %4707 = vmatprep.subr.mxu0 0.0
      %4708 = vmatpush2.msra.mxu0 0.0
      %4709 = vmatprep.subr.mxu0 0.0
      %4710 = vmatpush2.msra.mxu0 0.0
      %4711 = vmatprep.subr.mxu0 0.0
      %4712 = vmatpush2.msra.mxu0 0.0
      %4713 = vmatprep.subr.mxu0 0.0
      %4714 = vmatpush2.msra.mxu0 0.0
      %4715 = vmatprep.mubr.f32.mxu0 0.0
      %4716 = vmatmul.mubr.f32.gmra.mxu0 %v4646
      %v4717 = vpop.f32.mrf.mxu0
      %v4718 = vadd.f32 0.0, %v4717
      %v4719 = vpop.f32.mrf.mxu0
      %4720 = vdwg.mxu0
      %v4721 = vadd.f32 %v4640, %v4718
      %v4722 = vld [vmem:[%s1089] sm:$0xf]
      %v4724 = vsel %vm612, %v4246, 0
      %v4727 = vsel %vm616, %v4722, 0
      %4729 = vmatprep.subr.mxu0 0.0
      %4730 = vmatpush1.msra.mxu0 0.0
      %4731 = vmatprep.subr.mxu0 0.0
      %4732 = vmatpush1.msra.mxu0 0.0
      %4733 = vmatprep.subr.mxu0 0.0
      %4734 = vmatpush1.msra.mxu0 0.0
      %4735 = vmatprep.subr.mxu0 0.0
      %4736 = vmatpush1.msra.mxu0 0.0
      %4737 = vmatprep.subr.mxu0 0.0
      %4738 = vmatpush1.msra.mxu0 0.0
      %4739 = vmatprep.subr.mxu0 0.0
      %4740 = vmatpush1.msra.mxu0 0.0
      %4741 = vmatprep.subr.mxu0 0.0
      %4742 = vmatpush1.msra.mxu0 0.0
      %4743 = vmatprep.subr.mxu0 0.0
      %4744 = vmatpush1.msra.mxu0 0.0
      %4745 = vmatprep.subr.mxu0 0.0
      %4746 = vmatpush1.msra.mxu0 0.0
      %4747 = vmatprep.subr.mxu0 0.0
      %4748 = vmatpush1.msra.mxu0 0.0
      %4749 = vmatprep.subr.mxu0 0.0
      %4750 = vmatpush1.msra.mxu0 0.0
      %4751 = vmatprep.subr.mxu0 0.0
      %4752 = vmatpush1.msra.mxu0 0.0
      %4753 = vmatprep.subr.mxu0 0.0
      %4754 = vmatpush1.msra.mxu0 0.0
      %4755 = vmatprep.subr.mxu0 0.0
      %4756 = vmatpush1.msra.mxu0 0.0
      %4757 = vmatprep.subr.mxu0 0.0
      %4758 = vmatpush1.msra.mxu0 0.0
      %4759 = vmatprep.subr.mxu0 0.0
      %4760 = vmatpush1.msra.mxu0 %v4727
      %4761 = vmatprep.subr.mxu0 0.0
      %4762 = vmatpush2.msra.mxu0 0.0
      %4763 = vmatprep.subr.mxu0 0.0
      %4764 = vmatpush2.msra.mxu0 0.0
      %4765 = vmatprep.subr.mxu0 0.0
      %4766 = vmatpush2.msra.mxu0 0.0
      %4767 = vmatprep.subr.mxu0 0.0
      %4768 = vmatpush2.msra.mxu0 0.0
      %4769 = vmatprep.subr.mxu0 0.0
      %4770 = vmatpush2.msra.mxu0 0.0
      %4771 = vmatprep.subr.mxu0 0.0
      %4772 = vmatpush2.msra.mxu0 0.0
      %4773 = vmatprep.subr.mxu0 0.0
      %4774 = vmatpush2.msra.mxu0 0.0
      %4775 = vmatprep.subr.mxu0 0.0
      %4776 = vmatpush2.msra.mxu0 0.0
      %4777 = vmatprep.subr.mxu0 0.0
      %4778 = vmatpush2.msra.mxu0 0.0
      %4779 = vmatprep.subr.mxu0 0.0
      %4780 = vmatpush2.msra.mxu0 0.0
      %4781 = vmatprep.subr.mxu0 0.0
      %4782 = vmatpush2.msra.mxu0 0.0
      %4783 = vmatprep.subr.mxu0 0.0
      %4784 = vmatpush2.msra.mxu0 0.0
      %4785 = vmatprep.subr.mxu0 0.0
      %4786 = vmatpush2.msra.mxu0 0.0
      %4787 = vmatprep.subr.mxu0 0.0
      %4788 = vmatpush2.msra.mxu0 0.0
      %4789 = vmatprep.subr.mxu0 0.0
      %4790 = vmatpush2.msra.mxu0 0.0
      %4791 = vmatprep.subr.mxu0 0.0
      %4792 = vmatpush2.msra.mxu0 0.0
      %4793 = vmatprep.mubr.f32.mxu0 0.0
      %4794 = vmatmul.mubr.f32.gmra.mxu0 %v4724
      %v4795 = vpop.f32.mrf.mxu0
      %v4796 = vadd.f32 0.0, %v4795
      %v4797 = vpop.f32.mrf.mxu0
      %4798 = vdwg.mxu0
      %v4799 = vadd.f32 %v4721, %v4796
      %v4800 = vld [vmem:[%s1168] sm:$0xf]
      %v4802 = vsel %vm612, %v4249, 0
      %v4805 = vsel %vm616, %v4800, 0
      %4807 = vmatprep.subr.mxu0 0.0
      %4808 = vmatpush1.msra.mxu0 0.0
      %4809 = vmatprep.subr.mxu0 0.0
      %4810 = vmatpush1.msra.mxu0 0.0
      %4811 = vmatprep.subr.mxu0 0.0
      %4812 = vmatpush1.msra.mxu0 0.0
      %4813 = vmatprep.subr.mxu0 0.0
      %4814 = vmatpush1.msra.mxu0 0.0
      %4815 = vmatprep.subr.mxu0 0.0
      %4816 = vmatpush1.msra.mxu0 0.0
      %4817 = vmatprep.subr.mxu0 0.0
      %4818 = vmatpush1.msra.mxu0 0.0
      %4819 = vmatprep.subr.mxu0 0.0
      %4820 = vmatpush1.msra.mxu0 0.0
      %4821 = vmatprep.subr.mxu0 0.0
      %4822 = vmatpush1.msra.mxu0 0.0
      %4823 = vmatprep.subr.mxu0 0.0
      %4824 = vmatpush1.msra.mxu0 0.0
      %4825 = vmatprep.subr.mxu0 0.0
      %4826 = vmatpush1.msra.mxu0 0.0
      %4827 = vmatprep.subr.mxu0 0.0
      %4828 = vmatpush1.msra.mxu0 0.0
      %4829 = vmatprep.subr.mxu0 0.0
      %4830 = vmatpush1.msra.mxu0 0.0
      %4831 = vmatprep.subr.mxu0 0.0
      %4832 = vmatpush1.msra.mxu0 0.0
      %4833 = vmatprep.subr.mxu0 0.0
      %4834 = vmatpush1.msra.mxu0 0.0
      %4835 = vmatprep.subr.mxu0 0.0
      %4836 = vmatpush1.msra.mxu0 0.0
      %4837 = vmatprep.subr.mxu0 0.0
      %4838 = vmatpush1.msra.mxu0 %v4805
      %4839 = vmatprep.subr.mxu0 0.0
      %4840 = vmatpush2.msra.mxu0 0.0
      %4841 = vmatprep.subr.mxu0 0.0
      %4842 = vmatpush2.msra.mxu0 0.0
      %4843 = vmatprep.subr.mxu0 0.0
      %4844 = vmatpush2.msra.mxu0 0.0
      %4845 = vmatprep.subr.mxu0 0.0
      %4846 = vmatpush2.msra.mxu0 0.0
      %4847 = vmatprep.subr.mxu0 0.0
      %4848 = vmatpush2.msra.mxu0 0.0
      %4849 = vmatprep.subr.mxu0 0.0
      %4850 = vmatpush2.msra.mxu0 0.0
      %4851 = vmatprep.subr.mxu0 0.0
      %4852 = vmatpush2.msra.mxu0 0.0
      %4853 = vmatprep.subr.mxu0 0.0
      %4854 = vmatpush2.msra.mxu0 0.0
      %4855 = vmatprep.subr.mxu0 0.0
      %4856 = vmatpush2.msra.mxu0 0.0
      %4857 = vmatprep.subr.mxu0 0.0
      %4858 = vmatpush2.msra.mxu0 0.0
      %4859 = vmatprep.subr.mxu0 0.0
      %4860 = vmatpush2.msra.mxu0 0.0
      %4861 = vmatprep.subr.mxu0 0.0
      %4862 = vmatpush2.msra.mxu0 0.0
      %4863 = vmatprep.subr.mxu0 0.0
      %4864 = vmatpush2.msra.mxu0 0.0
      %4865 = vmatprep.subr.mxu0 0.0
      %4866 = vmatpush2.msra.mxu0 0.0
      %4867 = vmatprep.subr.mxu0 0.0
      %4868 = vmatpush2.msra.mxu0 0.0
      %4869 = vmatprep.subr.mxu0 0.0
      %4870 = vmatpush2.msra.mxu0 0.0
      %4871 = vmatprep.mubr.f32.mxu0 0.0
      %4872 = vmatmul.mubr.f32.gmra.mxu0 %v4802
      %v4873 = vpop.f32.mrf.mxu0
      %v4874 = vadd.f32 0.0, %v4873
      %v4875 = vpop.f32.mrf.mxu0
      %4876 = vdwg.mxu0
      %v4877 = vadd.f32 %v4799, %v4874
      %v4878 = vld [vmem:[%s1247] sm:$0xf]
      %v4880 = vrot.slane %v4246, 1
      %v4881 = vrot.slane %v4247, 1
      %v4882 = vsel %vm769, %v4880, %v4881
      %v4883 = vsel %vm612, %v4882, 0
      %v4886 = vsel %vm616, %v4878, 0
      %4888 = vmatprep.subr.mxu0 0.0
      %4889 = vmatpush1.msra.mxu0 0.0
      %4890 = vmatprep.subr.mxu0 0.0
      %4891 = vmatpush1.msra.mxu0 0.0
      %4892 = vmatprep.subr.mxu0 0.0
      %4893 = vmatpush1.msra.mxu0 0.0
      %4894 = vmatprep.subr.mxu0 0.0
      %4895 = vmatpush1.msra.mxu0 0.0
      %4896 = vmatprep.subr.mxu0 0.0
      %4897 = vmatpush1.msra.mxu0 0.0
      %4898 = vmatprep.subr.mxu0 0.0
      %4899 = vmatpush1.msra.mxu0 0.0
      %4900 = vmatprep.subr.mxu0 0.0
      %4901 = vmatpush1.msra.mxu0 0.0
      %4902 = vmatprep.subr.mxu0 0.0
      %4903 = vmatpush1.msra.mxu0 0.0
      %4904 = vmatprep.subr.mxu0 0.0
      %4905 = vmatpush1.msra.mxu0 0.0
      %4906 = vmatprep.subr.mxu0 0.0
      %4907 = vmatpush1.msra.mxu0 0.0
      %4908 = vmatprep.subr.mxu0 0.0
      %4909 = vmatpush1.msra.mxu0 0.0
      %4910 = vmatprep.subr.mxu0 0.0
      %4911 = vmatpush1.msra.mxu0 0.0
      %4912 = vmatprep.subr.mxu0 0.0
      %4913 = vmatpush1.msra.mxu0 0.0
      %4914 = vmatprep.subr.mxu0 0.0
      %4915 = vmatpush1.msra.mxu0 0.0
      %4916 = vmatprep.subr.mxu0 0.0
      %4917 = vmatpush1.msra.mxu0 0.0
      %4918 = vmatprep.subr.mxu0 0.0
      %4919 = vmatpush1.msra.mxu0 %v4886
      %4920 = vmatprep.subr.mxu0 0.0
      %4921 = vmatpush2.msra.mxu0 0.0
      %4922 = vmatprep.subr.mxu0 0.0
      %4923 = vmatpush2.msra.mxu0 0.0
      %4924 = vmatprep.subr.mxu0 0.0
      %4925 = vmatpush2.msra.mxu0 0.0
      %4926 = vmatprep.subr.mxu0 0.0
      %4927 = vmatpush2.msra.mxu0 0.0
      %4928 = vmatprep.subr.mxu0 0.0
      %4929 = vmatpush2.msra.mxu0 0.0
      %4930 = vmatprep.subr.mxu0 0.0
      %4931 = vmatpush2.msra.mxu0 0.0
      %4932 = vmatprep.subr.mxu0 0.0
      %4933 = vmatpush2.msra.mxu0 0.0
      %4934 = vmatprep.subr.mxu0 0.0
      %4935 = vmatpush2.msra.mxu0 0.0
      %4936 = vmatprep.subr.mxu0 0.0
      %4937 = vmatpush2.msra.mxu0 0.0
      %4938 = vmatprep.subr.mxu0 0.0
      %4939 = vmatpush2.msra.mxu0 0.0
      %4940 = vmatprep.subr.mxu0 0.0
      %4941 = vmatpush2.msra.mxu0 0.0
      %4942 = vmatprep.subr.mxu0 0.0
      %4943 = vmatpush2.msra.mxu0 0.0
      %4944 = vmatprep.subr.mxu0 0.0
      %4945 = vmatpush2.msra.mxu0 0.0
      %4946 = vmatprep.subr.mxu0 0.0
      %4947 = vmatpush2.msra.mxu0 0.0
      %4948 = vmatprep.subr.mxu0 0.0
      %4949 = vmatpush2.msra.mxu0 0.0
      %4950 = vmatprep.subr.mxu0 0.0
      %4951 = vmatpush2.msra.mxu0 0.0
      %4952 = vmatprep.mubr.f32.mxu0 0.0
      %4953 = vmatmul.mubr.f32.gmra.mxu0 %v4883
      %v4954 = vpop.f32.mrf.mxu0
      %v4955 = vadd.f32 0.0, %v4954
      %v4956 = vpop.f32.mrf.mxu0
      %4957 = vdwg.mxu0
      %v4958 = vadd.f32 %v4877, %v4955
      %v4959 = vadd.f32 %v4958, %v1333
      %s4960 = scalar_lea.vmem %s595, 40
      %4961 = vst.msk [vmem:[%s4960] sm:$0xff] %vm612, %v4959
      %v4962 = vld [vmem:[%s4245] sm:$0xff]
      %v4963 = vld [vmem:[%s4245 + $0x8] sm:$0x1]
      %v4964 = vld [vmem:[%s4248] sm:$0xff]
      %s4965 = scalar_lea.vmem %s575, 96
      %v4966 = vld [vmem:[%s4965] sm:$0xff]
      %v4967 = vld [vmem:[%s4965 + $0x8] sm:$0x1]
      %s4968 = scalar_lea.vmem %s585, 48
      %v4969 = vld [vmem:[%s4968] sm:$0xff]
      %s4970 = scalar_lea.vmem %s516, 112
      %v4971 = vld [vmem:[%s4970] sm:$0xff]
      %v4972 = vld [vmem:[%s4970 + $0x8] sm:$0x1]
      %s4973 = scalar_lea.vmem %s535, 56
      %v4974 = vld [vmem:[%s4973] sm:$0xff]
      %v4975 = vld [vmem:[%s6] sm:$0xf]
      %v4976 = vld [vmem:[%s610] sm:$0xf]
      %v4978 = vsel %vm612, %v4964, 0
      %v4981 = vsel %vm616, %v4976, 0
      %4983 = vmatprep.subr.mxu0 0.0
      %4984 = vmatpush1.msra.mxu0 0.0
      %4985 = vmatprep.subr.mxu0 0.0
      %4986 = vmatpush1.msra.mxu0 0.0
      %4987 = vmatprep.subr.mxu0 0.0
      %4988 = vmatpush1.msra.mxu0 0.0
      %4989 = vmatprep.subr.mxu0 0.0
      %4990 = vmatpush1.msra.mxu0 0.0
      %4991 = vmatprep.subr.mxu0 0.0
      %4992 = vmatpush1.msra.mxu0 0.0
      %4993 = vmatprep.subr.mxu0 0.0
      %4994 = vmatpush1.msra.mxu0 0.0
      %4995 = vmatprep.subr.mxu0 0.0
      %4996 = vmatpush1.msra.mxu0 0.0
      %4997 = vmatprep.subr.mxu0 0.0
      %4998 = vmatpush1.msra.mxu0 0.0
      %4999 = vmatprep.subr.mxu0 0.0
      %5000 = vmatpush1.msra.mxu0 0.0
      %5001 = vmatprep.subr.mxu0 0.0
      %5002 = vmatpush1.msra.mxu0 0.0
      %5003 = vmatprep.subr.mxu0 0.0
      %5004 = vmatpush1.msra.mxu0 0.0
      %5005 = vmatprep.subr.mxu0 0.0
      %5006 = vmatpush1.msra.mxu0 0.0
      %5007 = vmatprep.subr.mxu0 0.0
      %5008 = vmatpush1.msra.mxu0 0.0
      %5009 = vmatprep.subr.mxu0 0.0
      %5010 = vmatpush1.msra.mxu0 0.0
      %5011 = vmatprep.subr.mxu0 0.0
      %5012 = vmatpush1.msra.mxu0 0.0
      %5013 = vmatprep.subr.mxu0 0.0
      %5014 = vmatpush1.msra.mxu0 %v4981
      %5015 = vmatprep.subr.mxu0 0.0
      %5016 = vmatpush2.msra.mxu0 0.0
      %5017 = vmatprep.subr.mxu0 0.0
      %5018 = vmatpush2.msra.mxu0 0.0
      %5019 = vmatprep.subr.mxu0 0.0
      %5020 = vmatpush2.msra.mxu0 0.0
      %5021 = vmatprep.subr.mxu0 0.0
      %5022 = vmatpush2.msra.mxu0 0.0
      %5023 = vmatprep.subr.mxu0 0.0
      %5024 = vmatpush2.msra.mxu0 0.0
      %5025 = vmatprep.subr.mxu0 0.0
      %5026 = vmatpush2.msra.mxu0 0.0
      %5027 = vmatprep.subr.mxu0 0.0
      %5028 = vmatpush2.msra.mxu0 0.0
      %5029 = vmatprep.subr.mxu0 0.0
      %5030 = vmatpush2.msra.mxu0 0.0
      %5031 = vmatprep.subr.mxu0 0.0
      %5032 = vmatpush2.msra.mxu0 0.0
      %5033 = vmatprep.subr.mxu0 0.0
      %5034 = vmatpush2.msra.mxu0 0.0
      %5035 = vmatprep.subr.mxu0 0.0
      %5036 = vmatpush2.msra.mxu0 0.0
      %5037 = vmatprep.subr.mxu0 0.0
      %5038 = vmatpush2.msra.mxu0 0.0
      %5039 = vmatprep.subr.mxu0 0.0
      %5040 = vmatpush2.msra.mxu0 0.0
      %5041 = vmatprep.subr.mxu0 0.0
      %5042 = vmatpush2.msra.mxu0 0.0
      %5043 = vmatprep.subr.mxu0 0.0
      %5044 = vmatpush2.msra.mxu0 0.0
      %5045 = vmatprep.subr.mxu0 0.0
      %5046 = vmatpush2.msra.mxu0 0.0
      %5047 = vmatprep.mubr.f32.mxu0 0.0
      %5048 = vmatmul.mubr.f32.gmra.mxu0 %v4978
      %v5049 = vpop.f32.mrf.mxu0
      %v5050 = vadd.f32 0.0, %v5049
      %v5051 = vpop.f32.mrf.mxu0
      %5052 = vdwg.mxu0
      %v5054 = vsel %vm612, %v4962, 0
      %v5057 = vsel %vm616, %v4975, 0
      %5059 = vmatprep.subr.mxu0 0.0
      %5060 = vmatpush1.msra.mxu0 0.0
      %5061 = vmatprep.subr.mxu0 0.0
      %5062 = vmatpush1.msra.mxu0 0.0
      %5063 = vmatprep.subr.mxu0 0.0
      %5064 = vmatpush1.msra.mxu0 0.0
      %5065 = vmatprep.subr.mxu0 0.0
      %5066 = vmatpush1.msra.mxu0 0.0
      %5067 = vmatprep.subr.mxu0 0.0
      %5068 = vmatpush1.msra.mxu0 0.0
      %5069 = vmatprep.subr.mxu0 0.0
      %5070 = vmatpush1.msra.mxu0 0.0
      %5071 = vmatprep.subr.mxu0 0.0
      %5072 = vmatpush1.msra.mxu0 0.0
      %5073 = vmatprep.subr.mxu0 0.0
      %5074 = vmatpush1.msra.mxu0 0.0
      %5075 = vmatprep.subr.mxu0 0.0
      %5076 = vmatpush1.msra.mxu0 0.0
      %5077 = vmatprep.subr.mxu0 0.0
      %5078 = vmatpush1.msra.mxu0 0.0
      %5079 = vmatprep.subr.mxu0 0.0
      %5080 = vmatpush1.msra.mxu0 0.0
      %5081 = vmatprep.subr.mxu0 0.0
      %5082 = vmatpush1.msra.mxu0 0.0
      %5083 = vmatprep.subr.mxu0 0.0
      %5084 = vmatpush1.msra.mxu0 0.0
      %5085 = vmatprep.subr.mxu0 0.0
      %5086 = vmatpush1.msra.mxu0 0.0
      %5087 = vmatprep.subr.mxu0 0.0
      %5088 = vmatpush1.msra.mxu0 0.0
      %5089 = vmatprep.subr.mxu0 0.0
      %5090 = vmatpush1.msra.mxu0 %v5057
      %5091 = vmatprep.subr.mxu0 0.0
      %5092 = vmatpush2.msra.mxu0 0.0
      %5093 = vmatprep.subr.mxu0 0.0
      %5094 = vmatpush2.msra.mxu0 0.0
      %5095 = vmatprep.subr.mxu0 0.0
      %5096 = vmatpush2.msra.mxu0 0.0
      %5097 = vmatprep.subr.mxu0 0.0
      %5098 = vmatpush2.msra.mxu0 0.0
      %5099 = vmatprep.subr.mxu0 0.0
      %5100 = vmatpush2.msra.mxu0 0.0
      %5101 = vmatprep.subr.mxu0 0.0
      %5102 = vmatpush2.msra.mxu0 0.0
      %5103 = vmatprep.subr.mxu0 0.0
      %5104 = vmatpush2.msra.mxu0 0.0
      %5105 = vmatprep.subr.mxu0 0.0
      %5106 = vmatpush2.msra.mxu0 0.0
      %5107 = vmatprep.subr.mxu0 0.0
      %5108 = vmatpush2.msra.mxu0 0.0
      %5109 = vmatprep.subr.mxu0 0.0
      %5110 = vmatpush2.msra.mxu0 0.0
      %5111 = vmatprep.subr.mxu0 0.0
      %5112 = vmatpush2.msra.mxu0 0.0
      %5113 = vmatprep.subr.mxu0 0.0
      %5114 = vmatpush2.msra.mxu0 0.0
      %5115 = vmatprep.subr.mxu0 0.0
      %5116 = vmatpush2.msra.mxu0 0.0
      %5117 = vmatprep.subr.mxu0 0.0
      %5118 = vmatpush2.msra.mxu0 0.0
      %5119 = vmatprep.subr.mxu0 0.0
      %5120 = vmatpush2.msra.mxu0 0.0
      %5121 = vmatprep.subr.mxu0 0.0
      %5122 = vmatpush2.msra.mxu0 0.0
      %5123 = vmatprep.mubr.f32.mxu0 0.0
      %5124 = vmatmul.mubr.f32.gmra.mxu0 %v5054
      %v5125 = vpop.f32.mrf.mxu0
      %v5126 = vadd.f32 %v5050, %v5125
      %v5127 = vpop.f32.mrf.mxu0
      %5128 = vdwg.mxu0
      %v5129 = vld [vmem:[%s766] sm:$0xf]
      %v5131 = vrot.slane %v4962, 1
      %v5132 = vrot.slane %v4963, 1
      %v5133 = vsel %vm769, %v5131, %v5132
      %v5134 = vsel %vm612, %v5133, 0
      %v5137 = vsel %vm616, %v5129, 0
      %5139 = vmatprep.subr.mxu0 0.0
      %5140 = vmatpush1.msra.mxu0 0.0
      %5141 = vmatprep.subr.mxu0 0.0
      %5142 = vmatpush1.msra.mxu0 0.0
      %5143 = vmatprep.subr.mxu0 0.0
      %5144 = vmatpush1.msra.mxu0 0.0
      %5145 = vmatprep.subr.mxu0 0.0
      %5146 = vmatpush1.msra.mxu0 0.0
      %5147 = vmatprep.subr.mxu0 0.0
      %5148 = vmatpush1.msra.mxu0 0.0
      %5149 = vmatprep.subr.mxu0 0.0
      %5150 = vmatpush1.msra.mxu0 0.0
      %5151 = vmatprep.subr.mxu0 0.0
      %5152 = vmatpush1.msra.mxu0 0.0
      %5153 = vmatprep.subr.mxu0 0.0
      %5154 = vmatpush1.msra.mxu0 0.0
      %5155 = vmatprep.subr.mxu0 0.0
      %5156 = vmatpush1.msra.mxu0 0.0
      %5157 = vmatprep.subr.mxu0 0.0
      %5158 = vmatpush1.msra.mxu0 0.0
      %5159 = vmatprep.subr.mxu0 0.0
      %5160 = vmatpush1.msra.mxu0 0.0
      %5161 = vmatprep.subr.mxu0 0.0
      %5162 = vmatpush1.msra.mxu0 0.0
      %5163 = vmatprep.subr.mxu0 0.0
      %5164 = vmatpush1.msra.mxu0 0.0
      %5165 = vmatprep.subr.mxu0 0.0
      %5166 = vmatpush1.msra.mxu0 0.0
      %5167 = vmatprep.subr.mxu0 0.0
      %5168 = vmatpush1.msra.mxu0 0.0
      %5169 = vmatprep.subr.mxu0 0.0
      %5170 = vmatpush1.msra.mxu0 %v5137
      %5171 = vmatprep.subr.mxu0 0.0
      %5172 = vmatpush2.msra.mxu0 0.0
      %5173 = vmatprep.subr.mxu0 0.0
      %5174 = vmatpush2.msra.mxu0 0.0
      %5175 = vmatprep.subr.mxu0 0.0
      %5176 = vmatpush2.msra.mxu0 0.0
      %5177 = vmatprep.subr.mxu0 0.0
      %5178 = vmatpush2.msra.mxu0 0.0
      %5179 = vmatprep.subr.mxu0 0.0
      %5180 = vmatpush2.msra.mxu0 0.0
      %5181 = vmatprep.subr.mxu0 0.0
      %5182 = vmatpush2.msra.mxu0 0.0
      %5183 = vmatprep.subr.mxu0 0.0
      %5184 = vmatpush2.msra.mxu0 0.0
      %5185 = vmatprep.subr.mxu0 0.0
      %5186 = vmatpush2.msra.mxu0 0.0
      %5187 = vmatprep.subr.mxu0 0.0
      %5188 = vmatpush2.msra.mxu0 0.0
      %5189 = vmatprep.subr.mxu0 0.0
      %5190 = vmatpush2.msra.mxu0 0.0
      %5191 = vmatprep.subr.mxu0 0.0
      %5192 = vmatpush2.msra.mxu0 0.0
      %5193 = vmatprep.subr.mxu0 0.0
      %5194 = vmatpush2.msra.mxu0 0.0
      %5195 = vmatprep.subr.mxu0 0.0
      %5196 = vmatpush2.msra.mxu0 0.0
      %5197 = vmatprep.subr.mxu0 0.0
      %5198 = vmatpush2.msra.mxu0 0.0
      %5199 = vmatprep.subr.mxu0 0.0
      %5200 = vmatpush2.msra.mxu0 0.0
      %5201 = vmatprep.subr.mxu0 0.0
      %5202 = vmatpush2.msra.mxu0 0.0
      %5203 = vmatprep.mubr.f32.mxu0 0.0
      %5204 = vmatmul.mubr.f32.gmra.mxu0 %v5134
      %v5205 = vpop.f32.mrf.mxu0
      %v5206 = vadd.f32 0.0, %v5205
      %v5207 = vpop.f32.mrf.mxu0
      %5208 = vdwg.mxu0
      %v5209 = vadd.f32 %v5126, %v5206
      %v5210 = vld [vmem:[%s849] sm:$0xf]
      %v5212 = vsel %vm612, %v4966, 0
      %v5215 = vsel %vm616, %v5210, 0
      %5217 = vmatprep.subr.mxu0 0.0
      %5218 = vmatpush1.msra.mxu0 0.0
      %5219 = vmatprep.subr.mxu0 0.0
      %5220 = vmatpush1.msra.mxu0 0.0
      %5221 = vmatprep.subr.mxu0 0.0
      %5222 = vmatpush1.msra.mxu0 0.0
      %5223 = vmatprep.subr.mxu0 0.0
      %5224 = vmatpush1.msra.mxu0 0.0
      %5225 = vmatprep.subr.mxu0 0.0
      %5226 = vmatpush1.msra.mxu0 0.0
      %5227 = vmatprep.subr.mxu0 0.0
      %5228 = vmatpush1.msra.mxu0 0.0
      %5229 = vmatprep.subr.mxu0 0.0
      %5230 = vmatpush1.msra.mxu0 0.0
      %5231 = vmatprep.subr.mxu0 0.0
      %5232 = vmatpush1.msra.mxu0 0.0
      %5233 = vmatprep.subr.mxu0 0.0
      %5234 = vmatpush1.msra.mxu0 0.0
      %5235 = vmatprep.subr.mxu0 0.0
      %5236 = vmatpush1.msra.mxu0 0.0
      %5237 = vmatprep.subr.mxu0 0.0
      %5238 = vmatpush1.msra.mxu0 0.0
      %5239 = vmatprep.subr.mxu0 0.0
      %5240 = vmatpush1.msra.mxu0 0.0
      %5241 = vmatprep.subr.mxu0 0.0
      %5242 = vmatpush1.msra.mxu0 0.0
      %5243 = vmatprep.subr.mxu0 0.0
      %5244 = vmatpush1.msra.mxu0 0.0
      %5245 = vmatprep.subr.mxu0 0.0
      %5246 = vmatpush1.msra.mxu0 0.0
      %5247 = vmatprep.subr.mxu0 0.0
      %5248 = vmatpush1.msra.mxu0 %v5215
      %5249 = vmatprep.subr.mxu0 0.0
      %5250 = vmatpush2.msra.mxu0 0.0
      %5251 = vmatprep.subr.mxu0 0.0
      %5252 = vmatpush2.msra.mxu0 0.0
      %5253 = vmatprep.subr.mxu0 0.0
      %5254 = vmatpush2.msra.mxu0 0.0
      %5255 = vmatprep.subr.mxu0 0.0
      %5256 = vmatpush2.msra.mxu0 0.0
      %5257 = vmatprep.subr.mxu0 0.0
      %5258 = vmatpush2.msra.mxu0 0.0
      %5259 = vmatprep.subr.mxu0 0.0
      %5260 = vmatpush2.msra.mxu0 0.0
      %5261 = vmatprep.subr.mxu0 0.0
      %5262 = vmatpush2.msra.mxu0 0.0
      %5263 = vmatprep.subr.mxu0 0.0
      %5264 = vmatpush2.msra.mxu0 0.0
      %5265 = vmatprep.subr.mxu0 0.0
      %5266 = vmatpush2.msra.mxu0 0.0
      %5267 = vmatprep.subr.mxu0 0.0
      %5268 = vmatpush2.msra.mxu0 0.0
      %5269 = vmatprep.subr.mxu0 0.0
      %5270 = vmatpush2.msra.mxu0 0.0
      %5271 = vmatprep.subr.mxu0 0.0
      %5272 = vmatpush2.msra.mxu0 0.0
      %5273 = vmatprep.subr.mxu0 0.0
      %5274 = vmatpush2.msra.mxu0 0.0
      %5275 = vmatprep.subr.mxu0 0.0
      %5276 = vmatpush2.msra.mxu0 0.0
      %5277 = vmatprep.subr.mxu0 0.0
      %5278 = vmatpush2.msra.mxu0 0.0
      %5279 = vmatprep.subr.mxu0 0.0
      %5280 = vmatpush2.msra.mxu0 0.0
      %5281 = vmatprep.mubr.f32.mxu0 0.0
      %5282 = vmatmul.mubr.f32.gmra.mxu0 %v5212
      %v5283 = vpop.f32.mrf.mxu0
      %v5284 = vadd.f32 0.0, %v5283
      %v5285 = vpop.f32.mrf.mxu0
      %5286 = vdwg.mxu0
      %v5287 = vadd.f32 %v5209, %v5284
      %v5288 = vld [vmem:[%s928] sm:$0xf]
      %v5290 = vsel %vm612, %v4969, 0
      %v5293 = vsel %vm616, %v5288, 0
      %5295 = vmatprep.subr.mxu0 0.0
      %5296 = vmatpush1.msra.mxu0 0.0
      %5297 = vmatprep.subr.mxu0 0.0
      %5298 = vmatpush1.msra.mxu0 0.0
      %5299 = vmatprep.subr.mxu0 0.0
      %5300 = vmatpush1.msra.mxu0 0.0
      %5301 = vmatprep.subr.mxu0 0.0
      %5302 = vmatpush1.msra.mxu0 0.0
      %5303 = vmatprep.subr.mxu0 0.0
      %5304 = vmatpush1.msra.mxu0 0.0
      %5305 = vmatprep.subr.mxu0 0.0
      %5306 = vmatpush1.msra.mxu0 0.0
      %5307 = vmatprep.subr.mxu0 0.0
      %5308 = vmatpush1.msra.mxu0 0.0
      %5309 = vmatprep.subr.mxu0 0.0
      %5310 = vmatpush1.msra.mxu0 0.0
      %5311 = vmatprep.subr.mxu0 0.0
      %5312 = vmatpush1.msra.mxu0 0.0
      %5313 = vmatprep.subr.mxu0 0.0
      %5314 = vmatpush1.msra.mxu0 0.0
      %5315 = vmatprep.subr.mxu0 0.0
      %5316 = vmatpush1.msra.mxu0 0.0
      %5317 = vmatprep.subr.mxu0 0.0
      %5318 = vmatpush1.msra.mxu0 0.0
      %5319 = vmatprep.subr.mxu0 0.0
      %5320 = vmatpush1.msra.mxu0 0.0
      %5321 = vmatprep.subr.mxu0 0.0
      %5322 = vmatpush1.msra.mxu0 0.0
      %5323 = vmatprep.subr.mxu0 0.0
      %5324 = vmatpush1.msra.mxu0 0.0
      %5325 = vmatprep.subr.mxu0 0.0
      %5326 = vmatpush1.msra.mxu0 %v5293
      %5327 = vmatprep.subr.mxu0 0.0
      %5328 = vmatpush2.msra.mxu0 0.0
      %5329 = vmatprep.subr.mxu0 0.0
      %5330 = vmatpush2.msra.mxu0 0.0
      %5331 = vmatprep.subr.mxu0 0.0
      %5332 = vmatpush2.msra.mxu0 0.0
      %5333 = vmatprep.subr.mxu0 0.0
      %5334 = vmatpush2.msra.mxu0 0.0
      %5335 = vmatprep.subr.mxu0 0.0
      %5336 = vmatpush2.msra.mxu0 0.0
      %5337 = vmatprep.subr.mxu0 0.0
      %5338 = vmatpush2.msra.mxu0 0.0
      %5339 = vmatprep.subr.mxu0 0.0
      %5340 = vmatpush2.msra.mxu0 0.0
      %5341 = vmatprep.subr.mxu0 0.0
      %5342 = vmatpush2.msra.mxu0 0.0
      %5343 = vmatprep.subr.mxu0 0.0
      %5344 = vmatpush2.msra.mxu0 0.0
      %5345 = vmatprep.subr.mxu0 0.0
      %5346 = vmatpush2.msra.mxu0 0.0
      %5347 = vmatprep.subr.mxu0 0.0
      %5348 = vmatpush2.msra.mxu0 0.0
      %5349 = vmatprep.subr.mxu0 0.0
      %5350 = vmatpush2.msra.mxu0 0.0
      %5351 = vmatprep.subr.mxu0 0.0
      %5352 = vmatpush2.msra.mxu0 0.0
      %5353 = vmatprep.subr.mxu0 0.0
      %5354 = vmatpush2.msra.mxu0 0.0
      %5355 = vmatprep.subr.mxu0 0.0
      %5356 = vmatpush2.msra.mxu0 0.0
      %5357 = vmatprep.subr.mxu0 0.0
      %5358 = vmatpush2.msra.mxu0 0.0
      %5359 = vmatprep.mubr.f32.mxu0 0.0
      %5360 = vmatmul.mubr.f32.gmra.mxu0 %v5290
      %v5361 = vpop.f32.mrf.mxu0
      %v5362 = vadd.f32 0.0, %v5361
      %v5363 = vpop.f32.mrf.mxu0
      %5364 = vdwg.mxu0
      %v5365 = vadd.f32 %v5287, %v5362
      %v5366 = vld [vmem:[%s1007] sm:$0xf]
      %v5368 = vrot.slane %v4966, 1
      %v5369 = vrot.slane %v4967, 1
      %v5370 = vsel %vm769, %v5368, %v5369
      %v5371 = vsel %vm612, %v5370, 0
      %v5374 = vsel %vm616, %v5366, 0
      %5376 = vmatprep.subr.mxu0 0.0
      %5377 = vmatpush1.msra.mxu0 0.0
      %5378 = vmatprep.subr.mxu0 0.0
      %5379 = vmatpush1.msra.mxu0 0.0
      %5380 = vmatprep.subr.mxu0 0.0
      %5381 = vmatpush1.msra.mxu0 0.0
      %5382 = vmatprep.subr.mxu0 0.0
      %5383 = vmatpush1.msra.mxu0 0.0
      %5384 = vmatprep.subr.mxu0 0.0
      %5385 = vmatpush1.msra.mxu0 0.0
      %5386 = vmatprep.subr.mxu0 0.0
      %5387 = vmatpush1.msra.mxu0 0.0
      %5388 = vmatprep.subr.mxu0 0.0
      %5389 = vmatpush1.msra.mxu0 0.0
      %5390 = vmatprep.subr.mxu0 0.0
      %5391 = vmatpush1.msra.mxu0 0.0
      %5392 = vmatprep.subr.mxu0 0.0
      %5393 = vmatpush1.msra.mxu0 0.0
      %5394 = vmatprep.subr.mxu0 0.0
      %5395 = vmatpush1.msra.mxu0 0.0
      %5396 = vmatprep.subr.mxu0 0.0
      %5397 = vmatpush1.msra.mxu0 0.0
      %5398 = vmatprep.subr.mxu0 0.0
      %5399 = vmatpush1.msra.mxu0 0.0
      %5400 = vmatprep.subr.mxu0 0.0
      %5401 = vmatpush1.msra.mxu0 0.0
      %5402 = vmatprep.subr.mxu0 0.0
      %5403 = vmatpush1.msra.mxu0 0.0
      %5404 = vmatprep.subr.mxu0 0.0
      %5405 = vmatpush1.msra.mxu0 0.0
      %5406 = vmatprep.subr.mxu0 0.0
      %5407 = vmatpush1.msra.mxu0 %v5374
      %5408 = vmatprep.subr.mxu0 0.0
      %5409 = vmatpush2.msra.mxu0 0.0
      %5410 = vmatprep.subr.mxu0 0.0
      %5411 = vmatpush2.msra.mxu0 0.0
      %5412 = vmatprep.subr.mxu0 0.0
      %5413 = vmatpush2.msra.mxu0 0.0
      %5414 = vmatprep.subr.mxu0 0.0
      %5415 = vmatpush2.msra.mxu0 0.0
      %5416 = vmatprep.subr.mxu0 0.0
      %5417 = vmatpush2.msra.mxu0 0.0
      %5418 = vmatprep.subr.mxu0 0.0
      %5419 = vmatpush2.msra.mxu0 0.0
      %5420 = vmatprep.subr.mxu0 0.0
      %5421 = vmatpush2.msra.mxu0 0.0
      %5422 = vmatprep.subr.mxu0 0.0
      %5423 = vmatpush2.msra.mxu0 0.0
      %5424 = vmatprep.subr.mxu0 0.0
      %5425 = vmatpush2.msra.mxu0 0.0
      %5426 = vmatprep.subr.mxu0 0.0
      %5427 = vmatpush2.msra.mxu0 0.0
      %5428 = vmatprep.subr.mxu0 0.0
      %5429 = vmatpush2.msra.mxu0 0.0
      %5430 = vmatprep.subr.mxu0 0.0
      %5431 = vmatpush2.msra.mxu0 0.0
      %5432 = vmatprep.subr.mxu0 0.0
      %5433 = vmatpush2.msra.mxu0 0.0
      %5434 = vmatprep.subr.mxu0 0.0
      %5435 = vmatpush2.msra.mxu0 0.0
      %5436 = vmatprep.subr.mxu0 0.0
      %5437 = vmatpush2.msra.mxu0 0.0
      %5438 = vmatprep.subr.mxu0 0.0
      %5439 = vmatpush2.msra.mxu0 0.0
      %5440 = vmatprep.mubr.f32.mxu0 0.0
      %5441 = vmatmul.mubr.f32.gmra.mxu0 %v5371
      %v5442 = vpop.f32.mrf.mxu0
      %v5443 = vadd.f32 0.0, %v5442
      %v5444 = vpop.f32.mrf.mxu0
      %5445 = vdwg.mxu0
      %v5446 = vadd.f32 %v5365, %v5443
      %v5447 = vld [vmem:[%s1089] sm:$0xf]
      %v5449 = vsel %vm612, %v4971, 0
      %v5452 = vsel %vm616, %v5447, 0
      %5454 = vmatprep.subr.mxu0 0.0
      %5455 = vmatpush1.msra.mxu0 0.0
      %5456 = vmatprep.subr.mxu0 0.0
      %5457 = vmatpush1.msra.mxu0 0.0
      %5458 = vmatprep.subr.mxu0 0.0
      %5459 = vmatpush1.msra.mxu0 0.0
      %5460 = vmatprep.subr.mxu0 0.0
      %5461 = vmatpush1.msra.mxu0 0.0
      %5462 = vmatprep.subr.mxu0 0.0
      %5463 = vmatpush1.msra.mxu0 0.0
      %5464 = vmatprep.subr.mxu0 0.0
      %5465 = vmatpush1.msra.mxu0 0.0
      %5466 = vmatprep.subr.mxu0 0.0
      %5467 = vmatpush1.msra.mxu0 0.0
      %5468 = vmatprep.subr.mxu0 0.0
      %5469 = vmatpush1.msra.mxu0 0.0
      %5470 = vmatprep.subr.mxu0 0.0
      %5471 = vmatpush1.msra.mxu0 0.0
      %5472 = vmatprep.subr.mxu0 0.0
      %5473 = vmatpush1.msra.mxu0 0.0
      %5474 = vmatprep.subr.mxu0 0.0
      %5475 = vmatpush1.msra.mxu0 0.0
      %5476 = vmatprep.subr.mxu0 0.0
      %5477 = vmatpush1.msra.mxu0 0.0
      %5478 = vmatprep.subr.mxu0 0.0
      %5479 = vmatpush1.msra.mxu0 0.0
      %5480 = vmatprep.subr.mxu0 0.0
      %5481 = vmatpush1.msra.mxu0 0.0
      %5482 = vmatprep.subr.mxu0 0.0
      %5483 = vmatpush1.msra.mxu0 0.0
      %5484 = vmatprep.subr.mxu0 0.0
      %5485 = vmatpush1.msra.mxu0 %v5452
      %5486 = vmatprep.subr.mxu0 0.0
      %5487 = vmatpush2.msra.mxu0 0.0
      %5488 = vmatprep.subr.mxu0 0.0
      %5489 = vmatpush2.msra.mxu0 0.0
      %5490 = vmatprep.subr.mxu0 0.0
      %5491 = vmatpush2.msra.mxu0 0.0
      %5492 = vmatprep.subr.mxu0 0.0
      %5493 = vmatpush2.msra.mxu0 0.0
      %5494 = vmatprep.subr.mxu0 0.0
      %5495 = vmatpush2.msra.mxu0 0.0
      %5496 = vmatprep.subr.mxu0 0.0
      %5497 = vmatpush2.msra.mxu0 0.0
      %5498 = vmatprep.subr.mxu0 0.0
      %5499 = vmatpush2.msra.mxu0 0.0
      %5500 = vmatprep.subr.mxu0 0.0
      %5501 = vmatpush2.msra.mxu0 0.0
      %5502 = vmatprep.subr.mxu0 0.0
      %5503 = vmatpush2.msra.mxu0 0.0
      %5504 = vmatprep.subr.mxu0 0.0
      %5505 = vmatpush2.msra.mxu0 0.0
      %5506 = vmatprep.subr.mxu0 0.0
      %5507 = vmatpush2.msra.mxu0 0.0
      %5508 = vmatprep.subr.mxu0 0.0
      %5509 = vmatpush2.msra.mxu0 0.0
      %5510 = vmatprep.subr.mxu0 0.0
      %5511 = vmatpush2.msra.mxu0 0.0
      %5512 = vmatprep.subr.mxu0 0.0
      %5513 = vmatpush2.msra.mxu0 0.0
      %5514 = vmatprep.subr.mxu0 0.0
      %5515 = vmatpush2.msra.mxu0 0.0
      %5516 = vmatprep.subr.mxu0 0.0
      %5517 = vmatpush2.msra.mxu0 0.0
      %5518 = vmatprep.mubr.f32.mxu0 0.0
      %5519 = vmatmul.mubr.f32.gmra.mxu0 %v5449
      %v5520 = vpop.f32.mrf.mxu0
      %v5521 = vadd.f32 0.0, %v5520
      %v5522 = vpop.f32.mrf.mxu0
      %5523 = vdwg.mxu0
      %v5524 = vadd.f32 %v5446, %v5521
      %v5525 = vld [vmem:[%s1168] sm:$0xf]
      %v5527 = vsel %vm612, %v4974, 0
      %v5530 = vsel %vm616, %v5525, 0
      %5532 = vmatprep.subr.mxu0 0.0
      %5533 = vmatpush1.msra.mxu0 0.0
      %5534 = vmatprep.subr.mxu0 0.0
      %5535 = vmatpush1.msra.mxu0 0.0
      %5536 = vmatprep.subr.mxu0 0.0
      %5537 = vmatpush1.msra.mxu0 0.0
      %5538 = vmatprep.subr.mxu0 0.0
      %5539 = vmatpush1.msra.mxu0 0.0
      %5540 = vmatprep.subr.mxu0 0.0
      %5541 = vmatpush1.msra.mxu0 0.0
      %5542 = vmatprep.subr.mxu0 0.0
      %5543 = vmatpush1.msra.mxu0 0.0
      %5544 = vmatprep.subr.mxu0 0.0
      %5545 = vmatpush1.msra.mxu0 0.0
      %5546 = vmatprep.subr.mxu0 0.0
      %5547 = vmatpush1.msra.mxu0 0.0
      %5548 = vmatprep.subr.mxu0 0.0
      %5549 = vmatpush1.msra.mxu0 0.0
      %5550 = vmatprep.subr.mxu0 0.0
      %5551 = vmatpush1.msra.mxu0 0.0
      %5552 = vmatprep.subr.mxu0 0.0
      %5553 = vmatpush1.msra.mxu0 0.0
      %5554 = vmatprep.subr.mxu0 0.0
      %5555 = vmatpush1.msra.mxu0 0.0
      %5556 = vmatprep.subr.mxu0 0.0
      %5557 = vmatpush1.msra.mxu0 0.0
      %5558 = vmatprep.subr.mxu0 0.0
      %5559 = vmatpush1.msra.mxu0 0.0
      %5560 = vmatprep.subr.mxu0 0.0
      %5561 = vmatpush1.msra.mxu0 0.0
      %5562 = vmatprep.subr.mxu0 0.0
      %5563 = vmatpush1.msra.mxu0 %v5530
      %5564 = vmatprep.subr.mxu0 0.0
      %5565 = vmatpush2.msra.mxu0 0.0
      %5566 = vmatprep.subr.mxu0 0.0
      %5567 = vmatpush2.msra.mxu0 0.0
      %5568 = vmatprep.subr.mxu0 0.0
      %5569 = vmatpush2.msra.mxu0 0.0
      %5570 = vmatprep.subr.mxu0 0.0
      %5571 = vmatpush2.msra.mxu0 0.0
      %5572 = vmatprep.subr.mxu0 0.0
      %5573 = vmatpush2.msra.mxu0 0.0
      %5574 = vmatprep.subr.mxu0 0.0
      %5575 = vmatpush2.msra.mxu0 0.0
      %5576 = vmatprep.subr.mxu0 0.0
      %5577 = vmatpush2.msra.mxu0 0.0
      %5578 = vmatprep.subr.mxu0 0.0
      %5579 = vmatpush2.msra.mxu0 0.0
      %5580 = vmatprep.subr.mxu0 0.0
      %5581 = vmatpush2.msra.mxu0 0.0
      %5582 = vmatprep.subr.mxu0 0.0
      %5583 = vmatpush2.msra.mxu0 0.0
      %5584 = vmatprep.subr.mxu0 0.0
      %5585 = vmatpush2.msra.mxu0 0.0
      %5586 = vmatprep.subr.mxu0 0.0
      %5587 = vmatpush2.msra.mxu0 0.0
      %5588 = vmatprep.subr.mxu0 0.0
      %5589 = vmatpush2.msra.mxu0 0.0
      %5590 = vmatprep.subr.mxu0 0.0
      %5591 = vmatpush2.msra.mxu0 0.0
      %5592 = vmatprep.subr.mxu0 0.0
      %5593 = vmatpush2.msra.mxu0 0.0
      %5594 = vmatprep.subr.mxu0 0.0
      %5595 = vmatpush2.msra.mxu0 0.0
      %5596 = vmatprep.mubr.f32.mxu0 0.0
      %5597 = vmatmul.mubr.f32.gmra.mxu0 %v5527
      %v5598 = vpop.f32.mrf.mxu0
      %v5599 = vadd.f32 0.0, %v5598
      %v5600 = vpop.f32.mrf.mxu0
      %5601 = vdwg.mxu0
      %v5602 = vadd.f32 %v5524, %v5599
      %v5603 = vld [vmem:[%s1247] sm:$0xf]
      %v5605 = vrot.slane %v4971, 1
      %v5606 = vrot.slane %v4972, 1
      %v5607 = vsel %vm769, %v5605, %v5606
      %v5608 = vsel %vm612, %v5607, 0
      %v5611 = vsel %vm616, %v5603, 0
      %5613 = vmatprep.subr.mxu0 0.0
      %5614 = vmatpush1.msra.mxu0 0.0
      %5615 = vmatprep.subr.mxu0 0.0
      %5616 = vmatpush1.msra.mxu0 0.0
      %5617 = vmatprep.subr.mxu0 0.0
      %5618 = vmatpush1.msra.mxu0 0.0
      %5619 = vmatprep.subr.mxu0 0.0
      %5620 = vmatpush1.msra.mxu0 0.0
      %5621 = vmatprep.subr.mxu0 0.0
      %5622 = vmatpush1.msra.mxu0 0.0
      %5623 = vmatprep.subr.mxu0 0.0
      %5624 = vmatpush1.msra.mxu0 0.0
      %5625 = vmatprep.subr.mxu0 0.0
      %5626 = vmatpush1.msra.mxu0 0.0
      %5627 = vmatprep.subr.mxu0 0.0
      %5628 = vmatpush1.msra.mxu0 0.0
      %5629 = vmatprep.subr.mxu0 0.0
      %5630 = vmatpush1.msra.mxu0 0.0
      %5631 = vmatprep.subr.mxu0 0.0
      %5632 = vmatpush1.msra.mxu0 0.0
      %5633 = vmatprep.subr.mxu0 0.0
      %5634 = vmatpush1.msra.mxu0 0.0
      %5635 = vmatprep.subr.mxu0 0.0
      %5636 = vmatpush1.msra.mxu0 0.0
      %5637 = vmatprep.subr.mxu0 0.0
      %5638 = vmatpush1.msra.mxu0 0.0
      %5639 = vmatprep.subr.mxu0 0.0
      %5640 = vmatpush1.msra.mxu0 0.0
      %5641 = vmatprep.subr.mxu0 0.0
      %5642 = vmatpush1.msra.mxu0 0.0
      %5643 = vmatprep.subr.mxu0 0.0
      %5644 = vmatpush1.msra.mxu0 %v5611
      %5645 = vmatprep.subr.mxu0 0.0
      %5646 = vmatpush2.msra.mxu0 0.0
      %5647 = vmatprep.subr.mxu0 0.0
      %5648 = vmatpush2.msra.mxu0 0.0
      %5649 = vmatprep.subr.mxu0 0.0
      %5650 = vmatpush2.msra.mxu0 0.0
      %5651 = vmatprep.subr.mxu0 0.0
      %5652 = vmatpush2.msra.mxu0 0.0
      %5653 = vmatprep.subr.mxu0 0.0
      %5654 = vmatpush2.msra.mxu0 0.0
      %5655 = vmatprep.subr.mxu0 0.0
      %5656 = vmatpush2.msra.mxu0 0.0
      %5657 = vmatprep.subr.mxu0 0.0
      %5658 = vmatpush2.msra.mxu0 0.0
      %5659 = vmatprep.subr.mxu0 0.0
      %5660 = vmatpush2.msra.mxu0 0.0
      %5661 = vmatprep.subr.mxu0 0.0
      %5662 = vmatpush2.msra.mxu0 0.0
      %5663 = vmatprep.subr.mxu0 0.0
      %5664 = vmatpush2.msra.mxu0 0.0
      %5665 = vmatprep.subr.mxu0 0.0
      %5666 = vmatpush2.msra.mxu0 0.0
      %5667 = vmatprep.subr.mxu0 0.0
      %5668 = vmatpush2.msra.mxu0 0.0
      %5669 = vmatprep.subr.mxu0 0.0
      %5670 = vmatpush2.msra.mxu0 0.0
      %5671 = vmatprep.subr.mxu0 0.0
      %5672 = vmatpush2.msra.mxu0 0.0
      %5673 = vmatprep.subr.mxu0 0.0
      %5674 = vmatpush2.msra.mxu0 0.0
      %5675 = vmatprep.subr.mxu0 0.0
      %5676 = vmatpush2.msra.mxu0 0.0
      %5677 = vmatprep.mubr.f32.mxu0 0.0
      %5678 = vmatmul.mubr.f32.gmra.mxu0 %v5608
      %v5679 = vpop.f32.mrf.mxu0
      %v5680 = vadd.f32 0.0, %v5679
      %v5681 = vpop.f32.mrf.mxu0
      %5682 = vdwg.mxu0
      %v5683 = vadd.f32 %v5602, %v5680
      %v5684 = vadd.f32 %v5683, %v1333
      %s5685 = scalar_lea.vmem %s595, 48
      %5686 = vst.msk [vmem:[%s5685] sm:$0xff] %vm612, %v5684
      %v5687 = vld [vmem:[%s4970] sm:$0xff]
      %v5688 = vld [vmem:[%s4970 + $0x8] sm:$0x1]
      %v5689 = vld [vmem:[%s4973] sm:$0xff]
      %s5690 = scalar_lea.vmem %s575, 112
      %v5691 = vld [vmem:[%s5690] sm:$0xff]
      %v5692 = vld [vmem:[%s5690 + $0x8] sm:$0x1]
      %s5693 = scalar_lea.vmem %s585, 56
      %v5694 = vld [vmem:[%s5693] sm:$0xff]
      %v5695 = vld [vmem:[%s551] sm:$0xff]
      %v5696 = vld [vmem:[%s551 + $0x8] sm:$0x1]
      %v5697 = vld [vmem:[%s563] sm:$0xff]
      %v5698 = vld [vmem:[%s6] sm:$0xf]
      %v5699 = vld [vmem:[%s610] sm:$0xf]
      %v5701 = vsel %vm612, %v5689, 0
      %v5704 = vsel %vm616, %v5699, 0
      %5706 = vmatprep.subr.mxu0 0.0
      %5707 = vmatpush1.msra.mxu0 0.0
      %5708 = vmatprep.subr.mxu0 0.0
      %5709 = vmatpush1.msra.mxu0 0.0
      %5710 = vmatprep.subr.mxu0 0.0
      %5711 = vmatpush1.msra.mxu0 0.0
      %5712 = vmatprep.subr.mxu0 0.0
      %5713 = vmatpush1.msra.mxu0 0.0
      %5714 = vmatprep.subr.mxu0 0.0
      %5715 = vmatpush1.msra.mxu0 0.0
      %5716 = vmatprep.subr.mxu0 0.0
      %5717 = vmatpush1.msra.mxu0 0.0
      %5718 = vmatprep.subr.mxu0 0.0
      %5719 = vmatpush1.msra.mxu0 0.0
      %5720 = vmatprep.subr.mxu0 0.0
      %5721 = vmatpush1.msra.mxu0 0.0
      %5722 = vmatprep.subr.mxu0 0.0
      %5723 = vmatpush1.msra.mxu0 0.0
      %5724 = vmatprep.subr.mxu0 0.0
      %5725 = vmatpush1.msra.mxu0 0.0
      %5726 = vmatprep.subr.mxu0 0.0
      %5727 = vmatpush1.msra.mxu0 0.0
      %5728 = vmatprep.subr.mxu0 0.0
      %5729 = vmatpush1.msra.mxu0 0.0
      %5730 = vmatprep.subr.mxu0 0.0
      %5731 = vmatpush1.msra.mxu0 0.0
      %5732 = vmatprep.subr.mxu0 0.0
      %5733 = vmatpush1.msra.mxu0 0.0
      %5734 = vmatprep.subr.mxu0 0.0
      %5735 = vmatpush1.msra.mxu0 0.0
      %5736 = vmatprep.subr.mxu0 0.0
      %5737 = vmatpush1.msra.mxu0 %v5704
      %5738 = vmatprep.subr.mxu0 0.0
      %5739 = vmatpush2.msra.mxu0 0.0
      %5740 = vmatprep.subr.mxu0 0.0
      %5741 = vmatpush2.msra.mxu0 0.0
      %5742 = vmatprep.subr.mxu0 0.0
      %5743 = vmatpush2.msra.mxu0 0.0
      %5744 = vmatprep.subr.mxu0 0.0
      %5745 = vmatpush2.msra.mxu0 0.0
      %5746 = vmatprep.subr.mxu0 0.0
      %5747 = vmatpush2.msra.mxu0 0.0
      %5748 = vmatprep.subr.mxu0 0.0
      %5749 = vmatpush2.msra.mxu0 0.0
      %5750 = vmatprep.subr.mxu0 0.0
      %5751 = vmatpush2.msra.mxu0 0.0
      %5752 = vmatprep.subr.mxu0 0.0
      %5753 = vmatpush2.msra.mxu0 0.0
      %5754 = vmatprep.subr.mxu0 0.0
      %5755 = vmatpush2.msra.mxu0 0.0
      %5756 = vmatprep.subr.mxu0 0.0
      %5757 = vmatpush2.msra.mxu0 0.0
      %5758 = vmatprep.subr.mxu0 0.0
      %5759 = vmatpush2.msra.mxu0 0.0
      %5760 = vmatprep.subr.mxu0 0.0
      %5761 = vmatpush2.msra.mxu0 0.0
      %5762 = vmatprep.subr.mxu0 0.0
      %5763 = vmatpush2.msra.mxu0 0.0
      %5764 = vmatprep.subr.mxu0 0.0
      %5765 = vmatpush2.msra.mxu0 0.0
      %5766 = vmatprep.subr.mxu0 0.0
      %5767 = vmatpush2.msra.mxu0 0.0
      %5768 = vmatprep.subr.mxu0 0.0
      %5769 = vmatpush2.msra.mxu0 0.0
      %5770 = vmatprep.mubr.f32.mxu0 0.0
      %5771 = vmatmul.mubr.f32.gmra.mxu0 %v5701
      %v5772 = vpop.f32.mrf.mxu0
      %v5773 = vadd.f32 0.0, %v5772
      %v5774 = vpop.f32.mrf.mxu0
      %5775 = vdwg.mxu0
      %v5777 = vsel %vm612, %v5687, 0
      %v5780 = vsel %vm616, %v5698, 0
      %5782 = vmatprep.subr.mxu0 0.0
      %5783 = vmatpush1.msra.mxu0 0.0
      %5784 = vmatprep.subr.mxu0 0.0
      %5785 = vmatpush1.msra.mxu0 0.0
      %5786 = vmatprep.subr.mxu0 0.0
      %5787 = vmatpush1.msra.mxu0 0.0
      %5788 = vmatprep.subr.mxu0 0.0
      %5789 = vmatpush1.msra.mxu0 0.0
      %5790 = vmatprep.subr.mxu0 0.0
      %5791 = vmatpush1.msra.mxu0 0.0
      %5792 = vmatprep.subr.mxu0 0.0
      %5793 = vmatpush1.msra.mxu0 0.0
      %5794 = vmatprep.subr.mxu0 0.0
      %5795 = vmatpush1.msra.mxu0 0.0
      %5796 = vmatprep.subr.mxu0 0.0
      %5797 = vmatpush1.msra.mxu0 0.0
      %5798 = vmatprep.subr.mxu0 0.0
      %5799 = vmatpush1.msra.mxu0 0.0
      %5800 = vmatprep.subr.mxu0 0.0
      %5801 = vmatpush1.msra.mxu0 0.0
      %5802 = vmatprep.subr.mxu0 0.0
      %5803 = vmatpush1.msra.mxu0 0.0
      %5804 = vmatprep.subr.mxu0 0.0
      %5805 = vmatpush1.msra.mxu0 0.0
      %5806 = vmatprep.subr.mxu0 0.0
      %5807 = vmatpush1.msra.mxu0 0.0
      %5808 = vmatprep.subr.mxu0 0.0
      %5809 = vmatpush1.msra.mxu0 0.0
      %5810 = vmatprep.subr.mxu0 0.0
      %5811 = vmatpush1.msra.mxu0 0.0
      %5812 = vmatprep.subr.mxu0 0.0
      %5813 = vmatpush1.msra.mxu0 %v5780
      %5814 = vmatprep.subr.mxu0 0.0
      %5815 = vmatpush2.msra.mxu0 0.0
      %5816 = vmatprep.subr.mxu0 0.0
      %5817 = vmatpush2.msra.mxu0 0.0
      %5818 = vmatprep.subr.mxu0 0.0
      %5819 = vmatpush2.msra.mxu0 0.0
      %5820 = vmatprep.subr.mxu0 0.0
      %5821 = vmatpush2.msra.mxu0 0.0
      %5822 = vmatprep.subr.mxu0 0.0
      %5823 = vmatpush2.msra.mxu0 0.0
      %5824 = vmatprep.subr.mxu0 0.0
      %5825 = vmatpush2.msra.mxu0 0.0
      %5826 = vmatprep.subr.mxu0 0.0
      %5827 = vmatpush2.msra.mxu0 0.0
      %5828 = vmatprep.subr.mxu0 0.0
      %5829 = vmatpush2.msra.mxu0 0.0
      %5830 = vmatprep.subr.mxu0 0.0
      %5831 = vmatpush2.msra.mxu0 0.0
      %5832 = vmatprep.subr.mxu0 0.0
      %5833 = vmatpush2.msra.mxu0 0.0
      %5834 = vmatprep.subr.mxu0 0.0
      %5835 = vmatpush2.msra.mxu0 0.0
      %5836 = vmatprep.subr.mxu0 0.0
      %5837 = vmatpush2.msra.mxu0 0.0
      %5838 = vmatprep.subr.mxu0 0.0
      %5839 = vmatpush2.msra.mxu0 0.0
      %5840 = vmatprep.subr.mxu0 0.0
      %5841 = vmatpush2.msra.mxu0 0.0
      %5842 = vmatprep.subr.mxu0 0.0
      %5843 = vmatpush2.msra.mxu0 0.0
      %5844 = vmatprep.subr.mxu0 0.0
      %5845 = vmatpush2.msra.mxu0 0.0
      %5846 = vmatprep.mubr.f32.mxu0 0.0
      %5847 = vmatmul.mubr.f32.gmra.mxu0 %v5777
      %v5848 = vpop.f32.mrf.mxu0
      %v5849 = vadd.f32 %v5773, %v5848
      %v5850 = vpop.f32.mrf.mxu0
      %5851 = vdwg.mxu0
      %v5852 = vld [vmem:[%s766] sm:$0xf]
      %v5854 = vrot.slane %v5687, 1
      %v5855 = vrot.slane %v5688, 1
      %v5856 = vsel %vm769, %v5854, %v5855
      %v5857 = vsel %vm612, %v5856, 0
      %v5860 = vsel %vm616, %v5852, 0
      %5862 = vmatprep.subr.mxu0 0.0
      %5863 = vmatpush1.msra.mxu0 0.0
      %5864 = vmatprep.subr.mxu0 0.0
      %5865 = vmatpush1.msra.mxu0 0.0
      %5866 = vmatprep.subr.mxu0 0.0
      %5867 = vmatpush1.msra.mxu0 0.0
      %5868 = vmatprep.subr.mxu0 0.0
      %5869 = vmatpush1.msra.mxu0 0.0
      %5870 = vmatprep.subr.mxu0 0.0
      %5871 = vmatpush1.msra.mxu0 0.0
      %5872 = vmatprep.subr.mxu0 0.0
      %5873 = vmatpush1.msra.mxu0 0.0
      %5874 = vmatprep.subr.mxu0 0.0
      %5875 = vmatpush1.msra.mxu0 0.0
      %5876 = vmatprep.subr.mxu0 0.0
      %5877 = vmatpush1.msra.mxu0 0.0
      %5878 = vmatprep.subr.mxu0 0.0
      %5879 = vmatpush1.msra.mxu0 0.0
      %5880 = vmatprep.subr.mxu0 0.0
      %5881 = vmatpush1.msra.mxu0 0.0
      %5882 = vmatprep.subr.mxu0 0.0
      %5883 = vmatpush1.msra.mxu0 0.0
      %5884 = vmatprep.subr.mxu0 0.0
      %5885 = vmatpush1.msra.mxu0 0.0
      %5886 = vmatprep.subr.mxu0 0.0
      %5887 = vmatpush1.msra.mxu0 0.0
      %5888 = vmatprep.subr.mxu0 0.0
      %5889 = vmatpush1.msra.mxu0 0.0
      %5890 = vmatprep.subr.mxu0 0.0
      %5891 = vmatpush1.msra.mxu0 0.0
      %5892 = vmatprep.subr.mxu0 0.0
      %5893 = vmatpush1.msra.mxu0 %v5860
      %5894 = vmatprep.subr.mxu0 0.0
      %5895 = vmatpush2.msra.mxu0 0.0
      %5896 = vmatprep.subr.mxu0 0.0
      %5897 = vmatpush2.msra.mxu0 0.0
      %5898 = vmatprep.subr.mxu0 0.0
      %5899 = vmatpush2.msra.mxu0 0.0
      %5900 = vmatprep.subr.mxu0 0.0
      %5901 = vmatpush2.msra.mxu0 0.0
      %5902 = vmatprep.subr.mxu0 0.0
      %5903 = vmatpush2.msra.mxu0 0.0
      %5904 = vmatprep.subr.mxu0 0.0
      %5905 = vmatpush2.msra.mxu0 0.0
      %5906 = vmatprep.subr.mxu0 0.0
      %5907 = vmatpush2.msra.mxu0 0.0
      %5908 = vmatprep.subr.mxu0 0.0
      %5909 = vmatpush2.msra.mxu0 0.0
      %5910 = vmatprep.subr.mxu0 0.0
      %5911 = vmatpush2.msra.mxu0 0.0
      %5912 = vmatprep.subr.mxu0 0.0
      %5913 = vmatpush2.msra.mxu0 0.0
      %5914 = vmatprep.subr.mxu0 0.0
      %5915 = vmatpush2.msra.mxu0 0.0
      %5916 = vmatprep.subr.mxu0 0.0
      %5917 = vmatpush2.msra.mxu0 0.0
      %5918 = vmatprep.subr.mxu0 0.0
      %5919 = vmatpush2.msra.mxu0 0.0
      %5920 = vmatprep.subr.mxu0 0.0
      %5921 = vmatpush2.msra.mxu0 0.0
      %5922 = vmatprep.subr.mxu0 0.0
      %5923 = vmatpush2.msra.mxu0 0.0
      %5924 = vmatprep.subr.mxu0 0.0
      %5925 = vmatpush2.msra.mxu0 0.0
      %5926 = vmatprep.mubr.f32.mxu0 0.0
      %5927 = vmatmul.mubr.f32.gmra.mxu0 %v5857
      %v5928 = vpop.f32.mrf.mxu0
      %v5929 = vadd.f32 0.0, %v5928
      %v5930 = vpop.f32.mrf.mxu0
      %5931 = vdwg.mxu0
      %v5932 = vadd.f32 %v5849, %v5929
      %v5933 = vld [vmem:[%s849] sm:$0xf]
      %v5935 = vsel %vm612, %v5691, 0
      %v5938 = vsel %vm616, %v5933, 0
      %5940 = vmatprep.subr.mxu0 0.0
      %5941 = vmatpush1.msra.mxu0 0.0
      %5942 = vmatprep.subr.mxu0 0.0
      %5943 = vmatpush1.msra.mxu0 0.0
      %5944 = vmatprep.subr.mxu0 0.0
      %5945 = vmatpush1.msra.mxu0 0.0
      %5946 = vmatprep.subr.mxu0 0.0
      %5947 = vmatpush1.msra.mxu0 0.0
      %5948 = vmatprep.subr.mxu0 0.0
      %5949 = vmatpush1.msra.mxu0 0.0
      %5950 = vmatprep.subr.mxu0 0.0
      %5951 = vmatpush1.msra.mxu0 0.0
      %5952 = vmatprep.subr.mxu0 0.0
      %5953 = vmatpush1.msra.mxu0 0.0
      %5954 = vmatprep.subr.mxu0 0.0
      %5955 = vmatpush1.msra.mxu0 0.0
      %5956 = vmatprep.subr.mxu0 0.0
      %5957 = vmatpush1.msra.mxu0 0.0
      %5958 = vmatprep.subr.mxu0 0.0
      %5959 = vmatpush1.msra.mxu0 0.0
      %5960 = vmatprep.subr.mxu0 0.0
      %5961 = vmatpush1.msra.mxu0 0.0
      %5962 = vmatprep.subr.mxu0 0.0
      %5963 = vmatpush1.msra.mxu0 0.0
      %5964 = vmatprep.subr.mxu0 0.0
      %5965 = vmatpush1.msra.mxu0 0.0
      %5966 = vmatprep.subr.mxu0 0.0
      %5967 = vmatpush1.msra.mxu0 0.0
      %5968 = vmatprep.subr.mxu0 0.0
      %5969 = vmatpush1.msra.mxu0 0.0
      %5970 = vmatprep.subr.mxu0 0.0
      %5971 = vmatpush1.msra.mxu0 %v5938
      %5972 = vmatprep.subr.mxu0 0.0
      %5973 = vmatpush2.msra.mxu0 0.0
      %5974 = vmatprep.subr.mxu0 0.0
      %5975 = vmatpush2.msra.mxu0 0.0
      %5976 = vmatprep.subr.mxu0 0.0
      %5977 = vmatpush2.msra.mxu0 0.0
      %5978 = vmatprep.subr.mxu0 0.0
      %5979 = vmatpush2.msra.mxu0 0.0
      %5980 = vmatprep.subr.mxu0 0.0
      %5981 = vmatpush2.msra.mxu0 0.0
      %5982 = vmatprep.subr.mxu0 0.0
      %5983 = vmatpush2.msra.mxu0 0.0
      %5984 = vmatprep.subr.mxu0 0.0
      %5985 = vmatpush2.msra.mxu0 0.0
      %5986 = vmatprep.subr.mxu0 0.0
      %5987 = vmatpush2.msra.mxu0 0.0
      %5988 = vmatprep.subr.mxu0 0.0
      %5989 = vmatpush2.msra.mxu0 0.0
      %5990 = vmatprep.subr.mxu0 0.0
      %5991 = vmatpush2.msra.mxu0 0.0
      %5992 = vmatprep.subr.mxu0 0.0
      %5993 = vmatpush2.msra.mxu0 0.0
      %5994 = vmatprep.subr.mxu0 0.0
      %5995 = vmatpush2.msra.mxu0 0.0
      %5996 = vmatprep.subr.mxu0 0.0
      %5997 = vmatpush2.msra.mxu0 0.0
      %5998 = vmatprep.subr.mxu0 0.0
      %5999 = vmatpush2.msra.mxu0 0.0
      %6000 = vmatprep.subr.mxu0 0.0
      %6001 = vmatpush2.msra.mxu0 0.0
      %6002 = vmatprep.subr.mxu0 0.0
      %6003 = vmatpush2.msra.mxu0 0.0
      %6004 = vmatprep.mubr.f32.mxu0 0.0
      %6005 = vmatmul.mubr.f32.gmra.mxu0 %v5935
      %v6006 = vpop.f32.mrf.mxu0
      %v6007 = vadd.f32 0.0, %v6006
      %v6008 = vpop.f32.mrf.mxu0
      %6009 = vdwg.mxu0
      %v6010 = vadd.f32 %v5932, %v6007
      %v6011 = vld [vmem:[%s928] sm:$0xf]
      %v6013 = vsel %vm612, %v5694, 0
      %v6016 = vsel %vm616, %v6011, 0
      %6018 = vmatprep.subr.mxu0 0.0
      %6019 = vmatpush1.msra.mxu0 0.0
      %6020 = vmatprep.subr.mxu0 0.0
      %6021 = vmatpush1.msra.mxu0 0.0
      %6022 = vmatprep.subr.mxu0 0.0
      %6023 = vmatpush1.msra.mxu0 0.0
      %6024 = vmatprep.subr.mxu0 0.0
      %6025 = vmatpush1.msra.mxu0 0.0
      %6026 = vmatprep.subr.mxu0 0.0
      %6027 = vmatpush1.msra.mxu0 0.0
      %6028 = vmatprep.subr.mxu0 0.0
      %6029 = vmatpush1.msra.mxu0 0.0
      %6030 = vmatprep.subr.mxu0 0.0
      %6031 = vmatpush1.msra.mxu0 0.0
      %6032 = vmatprep.subr.mxu0 0.0
      %6033 = vmatpush1.msra.mxu0 0.0
      %6034 = vmatprep.subr.mxu0 0.0
      %6035 = vmatpush1.msra.mxu0 0.0
      %6036 = vmatprep.subr.mxu0 0.0
      %6037 = vmatpush1.msra.mxu0 0.0
      %6038 = vmatprep.subr.mxu0 0.0
      %6039 = vmatpush1.msra.mxu0 0.0
      %6040 = vmatprep.subr.mxu0 0.0
      %6041 = vmatpush1.msra.mxu0 0.0
      %6042 = vmatprep.subr.mxu0 0.0
      %6043 = vmatpush1.msra.mxu0 0.0
      %6044 = vmatprep.subr.mxu0 0.0
      %6045 = vmatpush1.msra.mxu0 0.0
      %6046 = vmatprep.subr.mxu0 0.0
      %6047 = vmatpush1.msra.mxu0 0.0
      %6048 = vmatprep.subr.mxu0 0.0
      %6049 = vmatpush1.msra.mxu0 %v6016
      %6050 = vmatprep.subr.mxu0 0.0
      %6051 = vmatpush2.msra.mxu0 0.0
      %6052 = vmatprep.subr.mxu0 0.0
      %6053 = vmatpush2.msra.mxu0 0.0
      %6054 = vmatprep.subr.mxu0 0.0
      %6055 = vmatpush2.msra.mxu0 0.0
      %6056 = vmatprep.subr.mxu0 0.0
      %6057 = vmatpush2.msra.mxu0 0.0
      %6058 = vmatprep.subr.mxu0 0.0
      %6059 = vmatpush2.msra.mxu0 0.0
      %6060 = vmatprep.subr.mxu0 0.0
      %6061 = vmatpush2.msra.mxu0 0.0
      %6062 = vmatprep.subr.mxu0 0.0
      %6063 = vmatpush2.msra.mxu0 0.0
      %6064 = vmatprep.subr.mxu0 0.0
      %6065 = vmatpush2.msra.mxu0 0.0
      %6066 = vmatprep.subr.mxu0 0.0
      %6067 = vmatpush2.msra.mxu0 0.0
      %6068 = vmatprep.subr.mxu0 0.0
      %6069 = vmatpush2.msra.mxu0 0.0
      %6070 = vmatprep.subr.mxu0 0.0
      %6071 = vmatpush2.msra.mxu0 0.0
      %6072 = vmatprep.subr.mxu0 0.0
      %6073 = vmatpush2.msra.mxu0 0.0
      %6074 = vmatprep.subr.mxu0 0.0
      %6075 = vmatpush2.msra.mxu0 0.0
      %6076 = vmatprep.subr.mxu0 0.0
      %6077 = vmatpush2.msra.mxu0 0.0
      %6078 = vmatprep.subr.mxu0 0.0
      %6079 = vmatpush2.msra.mxu0 0.0
      %6080 = vmatprep.subr.mxu0 0.0
      %6081 = vmatpush2.msra.mxu0 0.0
      %6082 = vmatprep.mubr.f32.mxu0 0.0
      %6083 = vmatmul.mubr.f32.gmra.mxu0 %v6013
      %v6084 = vpop.f32.mrf.mxu0
      %v6085 = vadd.f32 0.0, %v6084
      %v6086 = vpop.f32.mrf.mxu0
      %6087 = vdwg.mxu0
      %v6088 = vadd.f32 %v6010, %v6085
      %v6089 = vld [vmem:[%s1007] sm:$0xf]
      %v6091 = vrot.slane %v5691, 1
      %v6092 = vrot.slane %v5692, 1
      %v6093 = vsel %vm769, %v6091, %v6092
      %v6094 = vsel %vm612, %v6093, 0
      %v6097 = vsel %vm616, %v6089, 0
      %6099 = vmatprep.subr.mxu0 0.0
      %6100 = vmatpush1.msra.mxu0 0.0
      %6101 = vmatprep.subr.mxu0 0.0
      %6102 = vmatpush1.msra.mxu0 0.0
      %6103 = vmatprep.subr.mxu0 0.0
      %6104 = vmatpush1.msra.mxu0 0.0
      %6105 = vmatprep.subr.mxu0 0.0
      %6106 = vmatpush1.msra.mxu0 0.0
      %6107 = vmatprep.subr.mxu0 0.0
      %6108 = vmatpush1.msra.mxu0 0.0
      %6109 = vmatprep.subr.mxu0 0.0
      %6110 = vmatpush1.msra.mxu0 0.0
      %6111 = vmatprep.subr.mxu0 0.0
      %6112 = vmatpush1.msra.mxu0 0.0
      %6113 = vmatprep.subr.mxu0 0.0
      %6114 = vmatpush1.msra.mxu0 0.0
      %6115 = vmatprep.subr.mxu0 0.0
      %6116 = vmatpush1.msra.mxu0 0.0
      %6117 = vmatprep.subr.mxu0 0.0
      %6118 = vmatpush1.msra.mxu0 0.0
      %6119 = vmatprep.subr.mxu0 0.0
      %6120 = vmatpush1.msra.mxu0 0.0
      %6121 = vmatprep.subr.mxu0 0.0
      %6122 = vmatpush1.msra.mxu0 0.0
      %6123 = vmatprep.subr.mxu0 0.0
      %6124 = vmatpush1.msra.mxu0 0.0
      %6125 = vmatprep.subr.mxu0 0.0
      %6126 = vmatpush1.msra.mxu0 0.0
      %6127 = vmatprep.subr.mxu0 0.0
      %6128 = vmatpush1.msra.mxu0 0.0
      %6129 = vmatprep.subr.mxu0 0.0
      %6130 = vmatpush1.msra.mxu0 %v6097
      %6131 = vmatprep.subr.mxu0 0.0
      %6132 = vmatpush2.msra.mxu0 0.0
      %6133 = vmatprep.subr.mxu0 0.0
      %6134 = vmatpush2.msra.mxu0 0.0
      %6135 = vmatprep.subr.mxu0 0.0
      %6136 = vmatpush2.msra.mxu0 0.0
      %6137 = vmatprep.subr.mxu0 0.0
      %6138 = vmatpush2.msra.mxu0 0.0
      %6139 = vmatprep.subr.mxu0 0.0
      %6140 = vmatpush2.msra.mxu0 0.0
      %6141 = vmatprep.subr.mxu0 0.0
      %6142 = vmatpush2.msra.mxu0 0.0
      %6143 = vmatprep.subr.mxu0 0.0
      %6144 = vmatpush2.msra.mxu0 0.0
      %6145 = vmatprep.subr.mxu0 0.0
      %6146 = vmatpush2.msra.mxu0 0.0
      %6147 = vmatprep.subr.mxu0 0.0
      %6148 = vmatpush2.msra.mxu0 0.0
      %6149 = vmatprep.subr.mxu0 0.0
      %6150 = vmatpush2.msra.mxu0 0.0
      %6151 = vmatprep.subr.mxu0 0.0
      %6152 = vmatpush2.msra.mxu0 0.0
      %6153 = vmatprep.subr.mxu0 0.0
      %6154 = vmatpush2.msra.mxu0 0.0
      %6155 = vmatprep.subr.mxu0 0.0
      %6156 = vmatpush2.msra.mxu0 0.0
      %6157 = vmatprep.subr.mxu0 0.0
      %6158 = vmatpush2.msra.mxu0 0.0
      %6159 = vmatprep.subr.mxu0 0.0
      %6160 = vmatpush2.msra.mxu0 0.0
      %6161 = vmatprep.subr.mxu0 0.0
      %6162 = vmatpush2.msra.mxu0 0.0
      %6163 = vmatprep.mubr.f32.mxu0 0.0
      %6164 = vmatmul.mubr.f32.gmra.mxu0 %v6094
      %v6165 = vpop.f32.mrf.mxu0
      %v6166 = vadd.f32 0.0, %v6165
      %v6167 = vpop.f32.mrf.mxu0
      %6168 = vdwg.mxu0
      %v6169 = vadd.f32 %v6088, %v6166
      %v6170 = vld [vmem:[%s1089] sm:$0xf]
      %v6172 = vsel %vm612, %v5695, 0
      %v6175 = vsel %vm616, %v6170, 0
      %6177 = vmatprep.subr.mxu0 0.0
      %6178 = vmatpush1.msra.mxu0 0.0
      %6179 = vmatprep.subr.mxu0 0.0
      %6180 = vmatpush1.msra.mxu0 0.0
      %6181 = vmatprep.subr.mxu0 0.0
      %6182 = vmatpush1.msra.mxu0 0.0
      %6183 = vmatprep.subr.mxu0 0.0
      %6184 = vmatpush1.msra.mxu0 0.0
      %6185 = vmatprep.subr.mxu0 0.0
      %6186 = vmatpush1.msra.mxu0 0.0
      %6187 = vmatprep.subr.mxu0 0.0
      %6188 = vmatpush1.msra.mxu0 0.0
      %6189 = vmatprep.subr.mxu0 0.0
      %6190 = vmatpush1.msra.mxu0 0.0
      %6191 = vmatprep.subr.mxu0 0.0
      %6192 = vmatpush1.msra.mxu0 0.0
      %6193 = vmatprep.subr.mxu0 0.0
      %6194 = vmatpush1.msra.mxu0 0.0
      %6195 = vmatprep.subr.mxu0 0.0
      %6196 = vmatpush1.msra.mxu0 0.0
      %6197 = vmatprep.subr.mxu0 0.0
      %6198 = vmatpush1.msra.mxu0 0.0
      %6199 = vmatprep.subr.mxu0 0.0
      %6200 = vmatpush1.msra.mxu0 0.0
      %6201 = vmatprep.subr.mxu0 0.0
      %6202 = vmatpush1.msra.mxu0 0.0
      %6203 = vmatprep.subr.mxu0 0.0
      %6204 = vmatpush1.msra.mxu0 0.0
      %6205 = vmatprep.subr.mxu0 0.0
      %6206 = vmatpush1.msra.mxu0 0.0
      %6207 = vmatprep.subr.mxu0 0.0
      %6208 = vmatpush1.msra.mxu0 %v6175
      %6209 = vmatprep.subr.mxu0 0.0
      %6210 = vmatpush2.msra.mxu0 0.0
      %6211 = vmatprep.subr.mxu0 0.0
      %6212 = vmatpush2.msra.mxu0 0.0
      %6213 = vmatprep.subr.mxu0 0.0
      %6214 = vmatpush2.msra.mxu0 0.0
      %6215 = vmatprep.subr.mxu0 0.0
      %6216 = vmatpush2.msra.mxu0 0.0
      %6217 = vmatprep.subr.mxu0 0.0
      %6218 = vmatpush2.msra.mxu0 0.0
      %6219 = vmatprep.subr.mxu0 0.0
      %6220 = vmatpush2.msra.mxu0 0.0
      %6221 = vmatprep.subr.mxu0 0.0
      %6222 = vmatpush2.msra.mxu0 0.0
      %6223 = vmatprep.subr.mxu0 0.0
      %6224 = vmatpush2.msra.mxu0 0.0
      %6225 = vmatprep.subr.mxu0 0.0
      %6226 = vmatpush2.msra.mxu0 0.0
      %6227 = vmatprep.subr.mxu0 0.0
      %6228 = vmatpush2.msra.mxu0 0.0
      %6229 = vmatprep.subr.mxu0 0.0
      %6230 = vmatpush2.msra.mxu0 0.0
      %6231 = vmatprep.subr.mxu0 0.0
      %6232 = vmatpush2.msra.mxu0 0.0
      %6233 = vmatprep.subr.mxu0 0.0
      %6234 = vmatpush2.msra.mxu0 0.0
      %6235 = vmatprep.subr.mxu0 0.0
      %6236 = vmatpush2.msra.mxu0 0.0
      %6237 = vmatprep.subr.mxu0 0.0
      %6238 = vmatpush2.msra.mxu0 0.0
      %6239 = vmatprep.subr.mxu0 0.0
      %6240 = vmatpush2.msra.mxu0 0.0
      %6241 = vmatprep.mubr.f32.mxu0 0.0
      %6242 = vmatmul.mubr.f32.gmra.mxu0 %v6172
      %v6243 = vpop.f32.mrf.mxu0
      %v6244 = vadd.f32 0.0, %v6243
      %v6245 = vpop.f32.mrf.mxu0
      %6246 = vdwg.mxu0
      %v6247 = vadd.f32 %v6169, %v6244
      %v6248 = vld [vmem:[%s1168] sm:$0xf]
      %v6250 = vsel %vm612, %v5697, 0
      %v6253 = vsel %vm616, %v6248, 0
      %6255 = vmatprep.subr.mxu0 0.0
      %6256 = vmatpush1.msra.mxu0 0.0
      %6257 = vmatprep.subr.mxu0 0.0
      %6258 = vmatpush1.msra.mxu0 0.0
      %6259 = vmatprep.subr.mxu0 0.0
      %6260 = vmatpush1.msra.mxu0 0.0
      %6261 = vmatprep.subr.mxu0 0.0
      %6262 = vmatpush1.msra.mxu0 0.0
      %6263 = vmatprep.subr.mxu0 0.0
      %6264 = vmatpush1.msra.mxu0 0.0
      %6265 = vmatprep.subr.mxu0 0.0
      %6266 = vmatpush1.msra.mxu0 0.0
      %6267 = vmatprep.subr.mxu0 0.0
      %6268 = vmatpush1.msra.mxu0 0.0
      %6269 = vmatprep.subr.mxu0 0.0
      %6270 = vmatpush1.msra.mxu0 0.0
      %6271 = vmatprep.subr.mxu0 0.0
      %6272 = vmatpush1.msra.mxu0 0.0
      %6273 = vmatprep.subr.mxu0 0.0
      %6274 = vmatpush1.msra.mxu0 0.0
      %6275 = vmatprep.subr.mxu0 0.0
      %6276 = vmatpush1.msra.mxu0 0.0
      %6277 = vmatprep.subr.mxu0 0.0
      %6278 = vmatpush1.msra.mxu0 0.0
      %6279 = vmatprep.subr.mxu0 0.0
      %6280 = vmatpush1.msra.mxu0 0.0
      %6281 = vmatprep.subr.mxu0 0.0
      %6282 = vmatpush1.msra.mxu0 0.0
      %6283 = vmatprep.subr.mxu0 0.0
      %6284 = vmatpush1.msra.mxu0 0.0
      %6285 = vmatprep.subr.mxu0 0.0
      %6286 = vmatpush1.msra.mxu0 %v6253
      %6287 = vmatprep.subr.mxu0 0.0
      %6288 = vmatpush2.msra.mxu0 0.0
      %6289 = vmatprep.subr.mxu0 0.0
      %6290 = vmatpush2.msra.mxu0 0.0
      %6291 = vmatprep.subr.mxu0 0.0
      %6292 = vmatpush2.msra.mxu0 0.0
      %6293 = vmatprep.subr.mxu0 0.0
      %6294 = vmatpush2.msra.mxu0 0.0
      %6295 = vmatprep.subr.mxu0 0.0
      %6296 = vmatpush2.msra.mxu0 0.0
      %6297 = vmatprep.subr.mxu0 0.0
      %6298 = vmatpush2.msra.mxu0 0.0
      %6299 = vmatprep.subr.mxu0 0.0
      %6300 = vmatpush2.msra.mxu0 0.0
      %6301 = vmatprep.subr.mxu0 0.0
      %6302 = vmatpush2.msra.mxu0 0.0
      %6303 = vmatprep.subr.mxu0 0.0
      %6304 = vmatpush2.msra.mxu0 0.0
      %6305 = vmatprep.subr.mxu0 0.0
      %6306 = vmatpush2.msra.mxu0 0.0
      %6307 = vmatprep.subr.mxu0 0.0
      %6308 = vmatpush2.msra.mxu0 0.0
      %6309 = vmatprep.subr.mxu0 0.0
      %6310 = vmatpush2.msra.mxu0 0.0
      %6311 = vmatprep.subr.mxu0 0.0
      %6312 = vmatpush2.msra.mxu0 0.0
      %6313 = vmatprep.subr.mxu0 0.0
      %6314 = vmatpush2.msra.mxu0 0.0
      %6315 = vmatprep.subr.mxu0 0.0
      %6316 = vmatpush2.msra.mxu0 0.0
      %6317 = vmatprep.subr.mxu0 0.0
      %6318 = vmatpush2.msra.mxu0 0.0
      %6319 = vmatprep.mubr.f32.mxu0 0.0
      %6320 = vmatmul.mubr.f32.gmra.mxu0 %v6250
      %v6321 = vpop.f32.mrf.mxu0
      %v6322 = vadd.f32 0.0, %v6321
      %v6323 = vpop.f32.mrf.mxu0
      %6324 = vdwg.mxu0
      %v6325 = vadd.f32 %v6247, %v6322
      %v6326 = vld [vmem:[%s1247] sm:$0xf]
      %v6328 = vrot.slane %v5695, 1
      %v6329 = vrot.slane %v5696, 1
      %v6330 = vsel %vm769, %v6328, %v6329
      %v6331 = vsel %vm612, %v6330, 0
      %v6334 = vsel %vm616, %v6326, 0
      %6336 = vmatprep.subr.mxu0 0.0
      %6337 = vmatpush1.msra.mxu0 0.0
      %6338 = vmatprep.subr.mxu0 0.0
      %6339 = vmatpush1.msra.mxu0 0.0
      %6340 = vmatprep.subr.mxu0 0.0
      %6341 = vmatpush1.msra.mxu0 0.0
      %6342 = vmatprep.subr.mxu0 0.0
      %6343 = vmatpush1.msra.mxu0 0.0
      %6344 = vmatprep.subr.mxu0 0.0
      %6345 = vmatpush1.msra.mxu0 0.0
      %6346 = vmatprep.subr.mxu0 0.0
      %6347 = vmatpush1.msra.mxu0 0.0
      %6348 = vmatprep.subr.mxu0 0.0
      %6349 = vmatpush1.msra.mxu0 0.0
      %6350 = vmatprep.subr.mxu0 0.0
      %6351 = vmatpush1.msra.mxu0 0.0
      %6352 = vmatprep.subr.mxu0 0.0
      %6353 = vmatpush1.msra.mxu0 0.0
      %6354 = vmatprep.subr.mxu0 0.0
      %6355 = vmatpush1.msra.mxu0 0.0
      %6356 = vmatprep.subr.mxu0 0.0
      %6357 = vmatpush1.msra.mxu0 0.0
      %6358 = vmatprep.subr.mxu0 0.0
      %6359 = vmatpush1.msra.mxu0 0.0
      %6360 = vmatprep.subr.mxu0 0.0
      %6361 = vmatpush1.msra.mxu0 0.0
      %6362 = vmatprep.subr.mxu0 0.0
      %6363 = vmatpush1.msra.mxu0 0.0
      %6364 = vmatprep.subr.mxu0 0.0
      %6365 = vmatpush1.msra.mxu0 0.0
      %6366 = vmatprep.subr.mxu0 0.0
      %6367 = vmatpush1.msra.mxu0 %v6334
      %6368 = vmatprep.subr.mxu0 0.0
      %6369 = vmatpush2.msra.mxu0 0.0
      %6370 = vmatprep.subr.mxu0 0.0
      %6371 = vmatpush2.msra.mxu0 0.0
      %6372 = vmatprep.subr.mxu0 0.0
      %6373 = vmatpush2.msra.mxu0 0.0
      %6374 = vmatprep.subr.mxu0 0.0
      %6375 = vmatpush2.msra.mxu0 0.0
      %6376 = vmatprep.subr.mxu0 0.0
      %6377 = vmatpush2.msra.mxu0 0.0
      %6378 = vmatprep.subr.mxu0 0.0
      %6379 = vmatpush2.msra.mxu0 0.0
      %6380 = vmatprep.subr.mxu0 0.0
      %6381 = vmatpush2.msra.mxu0 0.0
      %6382 = vmatprep.subr.mxu0 0.0
      %6383 = vmatpush2.msra.mxu0 0.0
      %6384 = vmatprep.subr.mxu0 0.0
      %6385 = vmatpush2.msra.mxu0 0.0
      %6386 = vmatprep.subr.mxu0 0.0
      %6387 = vmatpush2.msra.mxu0 0.0
      %6388 = vmatprep.subr.mxu0 0.0
      %6389 = vmatpush2.msra.mxu0 0.0
      %6390 = vmatprep.subr.mxu0 0.0
      %6391 = vmatpush2.msra.mxu0 0.0
      %6392 = vmatprep.subr.mxu0 0.0
      %6393 = vmatpush2.msra.mxu0 0.0
      %6394 = vmatprep.subr.mxu0 0.0
      %6395 = vmatpush2.msra.mxu0 0.0
      %6396 = vmatprep.subr.mxu0 0.0
      %6397 = vmatpush2.msra.mxu0 0.0
      %6398 = vmatprep.subr.mxu0 0.0
      %6399 = vmatpush2.msra.mxu0 0.0
      %6400 = vmatprep.mubr.f32.mxu0 0.0
      %6401 = vmatmul.mubr.f32.gmra.mxu0 %v6331
      %v6402 = vpop.f32.mrf.mxu0
      %v6403 = vadd.f32 0.0, %v6402
      %v6404 = vpop.f32.mrf.mxu0
      %6405 = vdwg.mxu0
      %v6406 = vadd.f32 %v6325, %v6403
      %v6407 = vadd.f32 %v6406, %v1333
      %s6408 = scalar_lea.vmem %s595, 56
      %6409 = vst.msk [vmem:[%s6408] sm:$0xff] %vm612, %v6407
      %s6410 = smul.u32 8, %s24
      %p6411 = scmp.lt.s32.totalorder %s23, 1
      %s6412 = scalar_select %p6411, %s23, 1
      %p6413 = scmp.lt.s32.totalorder %s6410, 7
      %s6414 = scalar_select %p6413, %s6410, 7
      %s6415 = smul.addr %s6412, 8
      %s6416 = sadd.s32 %s6414, %s6415
      %s6417 = smul.addr %s6416, 8
      %s6418 = scalar_lea.vmem %s8, %s6417
      // Predicated region
      $region53: #{downsample_with_conv.1} parent=51 // pred_check
        %p6419 = pneg %p269
      $region54: #{downsample_with_conv.1} parent=51 // pred_check_branch
        %6421 = sbr.rel (%p6419) target = $region56
      $region55: #{downsample_with_conv.1} parent=51 // pred_region
        %s6422 = smul.u32 8, %s24
      $region56: #{downsample_with_conv.1} parent=51 // pred_fallthru
        _
    $region52: #{downsample_with_conv.1} parent=5 // pred_fallthru
      _
    %p6423 = scmp.le.s32.totalorder 2, %s14
    // Predicated region
    $region57: #{downsample_with_conv.1} parent=5 // pred_check
      %p6424 = pneg %p6423
    $region58: #{downsample_with_conv.1} parent=5 // pred_check_branch
      %6426 = sbr.rel (%p6424) target = $region60
    $region59: #{downsample_with_conv.1} parent=5 // pred_region
      %s6427 = ssub.s32 %s14, 2
      // Predicated region
      $region61: #{downsample_with_conv.1} parent=59 // pred_check
        %p6428 = pneg %p275
      $region62: #{downsample_with_conv.1} parent=59 // pred_check_branch
        %6430 = sbr.rel (%p6428) target = $region64
      $region63: #{downsample_with_conv.1} parent=59 // pred_region
        %s6431 = smul.u32 8, %s26
        %p6432 = scmp.lt.s32.totalorder %s25, 1
        %s6433 = scalar_select %p6432, %s25, 1
        %p6434 = scmp.lt.s32.totalorder %s6431, 7
        %s6435 = scalar_select %p6434, %s6431, 7
        %s6436 = smul.addr %s6433, 8
        %s6437 = sadd.s32 %s6435, %s6436
        %s6438 = smul.addr %s6437, 8
        %s6439 = scalar_lea.vmem %s8, %s6438
      $region64: #{downsample_with_conv.1} parent=59 // pred_fallthru
        _
    $region60: #{downsample_with_conv.1} parent=5 // pred_fallthru
      _
  $region6: #{downsample_with_conv.1} parent=0 // loop_footer
    %s18 = sadd.s32 1, %s14
  $region7: #{downsample_with_conv.1} parent=0 // loop_footer_branch
    %13 = sbr.rel target = $region3
  $region8: #{downsample_with_conv.1} parent=0 // loop_exit
    _

</llo_original>
